<compile_context>
chip_gen: v5e
topology: v5e:2x2
jax: 0.10.0
libtpu: 0.0.40
codegen_flags: <defaults>
</compile_context>

<pallas_src>
import jax
import jax.numpy as jnp
from jax import lax
from jax.experimental import pallas as pl
from jax.experimental.pallas import tpu as pltpu

ODE_UNFOLDS = 6
EPSILON = 1e-8


def _softplus(x):
    # nn.Softplus() == log(1 + exp(x))
    return jnp.logaddexp(x, 0.0)


def _ltc_kernel(x_ref, in_aff_ref, syn_s_ref, syn_r_ref, neuron_ref, out_ref):
    """One batch tile of the LTC cell forward (zero initial hidden state).

    x_ref      : (TB, S)      input batch tile
    in_aff_ref : (2, S)       rows = [input_w, input_b]
    syn_s_ref  : (5, S, U)    rows = [mu, sigma, w, erev, mask] (sensory synapses)
    syn_r_ref  : (5, U, U)    rows = [mu, sigma, w, erev, mask] (recurrent synapses)
    neuron_ref : (5, U)       rows = [gleak, vleak, cm, output_w_pad, output_b_pad]
    out_ref    : (TB, U)      lane-dense output (affine applied; wrapper slices motor)
    """
    tb = x_ref.shape[0]
    state_size = syn_r_ref.shape[-1]

    # ---- input mapping (affine) ----
    in_w = in_aff_ref[0:1, :]                                   # (1, S)
    in_b = in_aff_ref[1:2, :]                                   # (1, S)
    inputs = x_ref[...] * in_w + in_b                           # (TB, S)

    # ---- sensory synapses: loop-invariant, computed once ----
    s_mu = syn_s_ref[0]                                         # (S, U)
    s_sigma = syn_s_ref[1]
    s_w_pm = _softplus(syn_s_ref[2]) * syn_s_ref[4]             # softplus(w) * mask
    s_w_erev = s_w_pm * syn_s_ref[3]                            # * erev

    s_act = jax.nn.sigmoid(
        s_sigma[None, :, :] * (inputs[:, :, None] - s_mu[None, :, :]))   # (TB, S, U)
    w_num_sensory = jnp.sum(s_act * s_w_erev[None, :, :], axis=1)        # (TB, U)
    w_den_sensory = jnp.sum(s_act * s_w_pm[None, :, :], axis=1)          # (TB, U)

    # ---- recurrent synapse params (hoisted out of the ODE loop) ----
    mu = syn_r_ref[0]                                           # (U, U)
    sigma = syn_r_ref[1]
    w_pm = _softplus(syn_r_ref[2]) * syn_r_ref[4]               # softplus(w) * mask
    w_erev = w_pm * syn_r_ref[3]                                # * erev

    gleak = _softplus(neuron_ref[0:1, :])                       # (1, U)
    vleak = neuron_ref[1:2, :]                                  # (1, U)
    cm_t = _softplus(neuron_ref[2:3, :]) * float(ODE_UNFOLDS)   # elapsed_time = 1.0
    gleak_vleak = gleak * vleak                                 # (1, U)
    out_w = neuron_ref[3:4, :]                                  # (1, U) padded affine
    out_b = neuron_ref[4:5, :]                                  # (1, U)

    # ---- fused ODE solver, hidden_state starts at zero ----
    def body(_, v_pre):
        act = jax.nn.sigmoid(
            sigma[None, :, :] * (v_pre[:, :, None] - mu[None, :, :]))    # (TB, U, U)
        w_num = jnp.sum(act * w_erev[None, :, :], axis=1) + w_num_sensory
        w_den = jnp.sum(act * w_pm[None, :, :], axis=1) + w_den_sensory
        numerator = cm_t * v_pre + gleak_vleak + w_num
        denominator = cm_t + gleak + w_den
        return numerator / (denominator + EPSILON)

    v0 = jnp.zeros((tb, state_size), jnp.float32)
    v_pre = lax.fori_loop(0, ODE_UNFOLDS, body, v0, unroll=True)

    # ---- lane-dense output: affine padded to the full neuron width ----
    out_ref[...] = v_pre * out_w + out_b


def make_ltc_params(key, sensory_size, state_size, motor_size):
    """Deterministic synthetic init following ncps.torch.LTCCell init ranges."""
    ks = jax.random.split(key, 11)

    def u(k, shape, lo, hi):
        return jax.random.uniform(k, shape, jnp.float32, lo, hi)

    def polarity(k, shape):
        return jnp.where(jax.random.bernoulli(k, 0.5, shape), 1.0, -1.0).astype(jnp.float32)

    params = {
        "gleak": u(ks[0], (1, state_size), 0.001, 1.0),
        "vleak": u(ks[1], (1, state_size), -0.2, 0.2),
        "cm": u(ks[2], (1, state_size), 0.4, 0.6),
        "sigma": u(ks[3], (state_size, state_size), 3.0, 8.0),
        "mu": u(ks[4], (state_size, state_size), 0.3, 0.8),
        "w": u(ks[5], (state_size, state_size), 0.001, 1.0),
        "erev": polarity(ks[6], (state_size, state_size)),
        "mask": jnp.ones((state_size, state_size), jnp.float32),  # fully-connected wiring
        "sensory_sigma": u(ks[7], (sensory_size, state_size), 3.0, 8.0),
        "sensory_mu": u(ks[8], (sensory_size, state_size), 0.3, 0.8),
        "sensory_w": u(ks[9], (sensory_size, state_size), 0.001, 1.0),
        "sensory_erev": polarity(ks[10], (sensory_size, state_size)),
        "sensory_mask": jnp.ones((sensory_size, state_size), jnp.float32),
        "input_w": jnp.ones((1, sensory_size), jnp.float32),
        "input_b": jnp.zeros((1, sensory_size), jnp.float32),
        "output_w": jnp.ones((1, motor_size), jnp.float32),
        "output_b": jnp.zeros((1, motor_size), jnp.float32),
    }
    return params


def ncp_network_forward(x, params, *, batch_tile=8):
    """Pallas implementation of NCPNetwork.forward (zero hidden state, one LTC step)."""
    batch, sensory_size = x.shape
    state_size = params["mu"].shape[0]
    motor_size = params["output_w"].shape[-1]

    # ---- pack the 17 parameter tensors into 4 dense slabs (fewer DMAs) ----
    syn_s = jnp.stack(
        [params["sensory_mu"], params["sensory_sigma"], params["sensory_w"],
         params["sensory_erev"], params["sensory_mask"]], axis=0)          # (5, S, U)
    syn_r = jnp.stack(
        [params["mu"], params["sigma"], params["w"],
         params["erev"], params["mask"]], axis=0)                          # (5, U, U)
    pad = state_size - motor_size
    out_w_pad = jnp.pad(params["output_w"], ((0, 0), (0, pad)), constant_values=1.0)
    out_b_pad = jnp.pad(params["output_b"], ((0, 0), (0, pad)), constant_values=0.0)
    neuron = jnp.concatenate(
        [params["gleak"], params["vleak"], params["cm"], out_w_pad, out_b_pad],
        axis=0)                                                            # (5, U)
    in_aff = jnp.concatenate([params["input_w"], params["input_b"]], axis=0)  # (2, S)

    # ---- pad batch to a sublane-friendly multiple of the batch tile ----
    padded_batch = pl.cdiv(batch, batch_tile) * batch_tile
    x_pad = jnp.pad(x, ((0, padded_batch - batch), (0, 0)))
    grid = (padded_batch // batch_tile,)

    # ---- advisory cost estimate for the XLA scheduler ----
    cost = pl.CostEstimate(
        flops=int(padded_batch * (ODE_UNFOLDS * 6 * state_size * state_size
                                  + 6 * sensory_size * state_size
                                  + 10 * state_size)),
        transcendentals=int(padded_batch * (ODE_UNFOLDS * state_size * state_size
                                            + sensory_size * state_size)
                            + 2 * state_size * state_size
                            + 2 * sensory_size * state_size + 3 * state_size),
        bytes_accessed=int(4 * (x_pad.size + syn_s.size + syn_r.size
                                + neuron.size + in_aff.size
                                + padded_batch * state_size)),
    )

    out_full = pl.pallas_call(
        _ltc_kernel,
        out_shape=jax.ShapeDtypeStruct((padded_batch, state_size), jnp.float32),
        grid=grid,
        in_specs=[
            pl.BlockSpec((batch_tile, sensory_size), lambda i: (i, 0)),   # x (batch-tiled)
            pl.BlockSpec(in_aff.shape, lambda i: (0, 0)),                 # input affine
            pl.BlockSpec(syn_s.shape, lambda i: (0, 0, 0)),               # sensory synapses
            pl.BlockSpec(syn_r.shape, lambda i: (0, 0, 0)),               # recurrent synapses
            pl.BlockSpec(neuron.shape, lambda i: (0, 0)),                 # neuron + out affine
        ],
        out_specs=pl.BlockSpec((batch_tile, state_size), lambda i: (i, 0)),
        compiler_params=pltpu.CompilerParams(
            dimension_semantics=("parallel",),        # shards batch tiles across TCs on v7x
            vmem_limit_bytes=64 * 1024 * 1024,
        ),
        cost_estimate=cost,
    )(x_pad, in_aff, syn_s, syn_r, neuron)

    # motor neurons come first in the LTC state (matches ncps _map_outputs)
    return out_full[:batch, :motor_size]


def ncp_network_reference(x, params):
    """Pure-JAX reference of the original (un-hoisted) semantics, for validation."""
    inputs = x * params["input_w"] + params["input_b"]
    s_act = jax.nn.sigmoid(params["sensory_sigma"][None] * (inputs[:, :, None] - params["sensory_mu"][None]))
    s_w_act = _softplus(params["sensory_w"])[None] * s_act * params["sensory_mask"][None]
    w_num_sensory = jnp.sum(s_w_act * params["sensory_erev"][None], axis=1)
    w_den_sensory = jnp.sum(s_w_act, axis=1)

    cm_t = _softplus(params["cm"]) * float(ODE_UNFOLDS)
    w_pos = _softplus(params["w"])
    gleak = _softplus(params["gleak"])

    v = jnp.zeros((x.shape[0], params["mu"].shape[0]), jnp.float32)
    for _ in range(ODE_UNFOLDS):
        act = jax.nn.sigmoid(params["sigma"][None] * (v[:, :, None] - params["mu"][None]))
        w_act = w_pos[None] * act * params["mask"][None]
        w_num = jnp.sum(w_act * params["erev"][None], axis=1) + w_num_sensory
        w_den = jnp.sum(w_act, axis=1) + w_den_sensory
        v = (cm_t * v + gleak * params["vleak"] + w_num) / (cm_t + gleak + w_den + EPSILON)

    motor = params["output_w"].shape[-1]
    return v[:, :motor] * params["output_w"] + params["output_b"]


if __name__ == "__main__":
    batch, sensory_size, state_size, motor_size = 2, 8, 32, 4

    key = jax.random.PRNGKey(0)
    k_x, k_p = jax.random.split(key)
    x = jax.random.normal(k_x, (batch, sensory_size), jnp.float32)
    params = make_ltc_params(k_p, sensory_size, state_size, motor_size)

    out = jax.block_until_ready(ncp_network_forward(x, params))
    ref = jax.block_until_ready(ncp_network_reference(x, params))

    assert out.shape == (batch, motor_size), out.shape
    assert jnp.allclose(out, ref, atol=1e-5, rtol=1e-5), (out, ref)
    print("KERNEL_OK")
</pallas_src>

<mosaic_0001>
module attributes {stable_mosaic.version = 11 : i64} {
  func.func @_ltc_kernel(%arg0: i32, %arg1: memref<8x8xf32, #tpu.memory_space<vmem>>, %arg2: memref<2x8xf32, #tpu.memory_space<vmem>>, %arg3: memref<5x8x32xf32, #tpu.memory_space<vmem>>, %arg4: memref<5x32x32xf32, #tpu.memory_space<vmem>>, %arg5: memref<5x32xf32, #tpu.memory_space<vmem>>, %arg6: memref<8x32xf32, #tpu.memory_space<vmem>>) attributes {dimension_semantics = [#tpu.dimension_semantics<parallel>], iteration_bounds = array<i64: 1>, scalar_prefetch = 0 : i64, scratch_operands = 0 : i64, tpu.core_type = #tpu.core_type<tc>, window_params = [{transform_indices = @transform_0, window_bounds = array<i64: 8, 8>}, {pipeline_mode = #tpu.pipeline_mode<synchronous>, transform_indices = @transform_1, window_bounds = array<i64: 2, 8>}, {pipeline_mode = #tpu.pipeline_mode<synchronous>, transform_indices = @transform_2, window_bounds = array<i64: 5, 8, 32>}, {pipeline_mode = #tpu.pipeline_mode<synchronous>, transform_indices = @transform_3, window_bounds = array<i64: 5, 32, 32>}, {pipeline_mode = #tpu.pipeline_mode<synchronous>, transform_indices = @transform_4, window_bounds = array<i64: 5, 32>}, {transform_indices = @transform_5, window_bounds = array<i64: 8, 32>}]} {
    %c0 = arith.constant 0 : index
    %c0_0 = arith.constant 0 : index
    %0 = vector.load %arg2[%c0, %c0_0] : memref<2x8xf32, #tpu.memory_space<vmem>>, vector<1x8xf32>
    %c1 = arith.constant 1 : index
    %c0_1 = arith.constant 0 : index
    %1 = vector.load %arg2[%c1, %c0_1] : memref<2x8xf32, #tpu.memory_space<vmem>>, vector<1x8xf32>
    %c0_2 = arith.constant 0 : index
    %c0_3 = arith.constant 0 : index
    %2 = vector.load %arg1[%c0_2, %c0_3] : memref<8x8xf32, #tpu.memory_space<vmem>>, vector<8x8xf32>
    %3 = vector.broadcast %0 : vector<1x8xf32> to vector<8x8xf32>
    %4 = arith.mulf %2, %3 : vector<8x8xf32>
    %5 = vector.broadcast %1 : vector<1x8xf32> to vector<8x8xf32>
    %6 = arith.addf %4, %5 : vector<8x8xf32>
    %c0_4 = arith.constant 0 : index
    %c0_5 = arith.constant 0 : index
    %c0_6 = arith.constant 0 : index
    %7 = vector.load %arg3[%c0_4, %c0_5, %c0_6] : memref<5x8x32xf32, #tpu.memory_space<vmem>>, vector<1x8x32xf32>
    %8 = vector.shape_cast %7 : vector<1x8x32xf32> to vector<8x32xf32>
    %c1_7 = arith.constant 1 : index
    %c0_8 = arith.constant 0 : index
    %c0_9 = arith.constant 0 : index
    %9 = vector.load %arg3[%c1_7, %c0_8, %c0_9] : memref<5x8x32xf32, #tpu.memory_space<vmem>>, vector<1x8x32xf32>
    %10 = vector.shape_cast %9 : vector<1x8x32xf32> to vector<8x32xf32>
    %c2 = arith.constant 2 : index
    %c0_10 = arith.constant 0 : index
    %c0_11 = arith.constant 0 : index
    %11 = vector.load %arg3[%c2, %c0_10, %c0_11] : memref<5x8x32xf32, #tpu.memory_space<vmem>>, vector<1x8x32xf32>
    %12 = vector.shape_cast %11 : vector<1x8x32xf32> to vector<8x32xf32>
    %cst = arith.constant 0.000000e+00 : f32
    %13 = vector.broadcast %cst : f32 to vector<8x32xf32>
    %14 = arith.maximumf %12, %13 : vector<8x32xf32>
    %15 = vector.broadcast %cst : f32 to vector<8x32xf32>
    %16 = arith.subf %12, %15 : vector<8x32xf32>
    %17 = arith.cmpf one, %16, %16 : vector<8x32xf32>
    %18 = vector.broadcast %cst : f32 to vector<8x32xf32>
    %19 = arith.addf %12, %18 : vector<8x32xf32>
    %20 = math.absf %16 : vector<8x32xf32>
    %cst_12 = arith.constant 0.000000e+00 : f32
    %21 = vector.broadcast %cst_12 : f32 to vector<8x32xf32>
    %22 = arith.subf %21, %20 : vector<8x32xf32>
    %23 = math.exp %22 : vector<8x32xf32>
    %24 = math.log1p %23 : vector<8x32xf32>
    %25 = arith.addf %14, %24 : vector<8x32xf32>
    %26 = arith.select %17, %19, %25 : vector<8x32xi1>, vector<8x32xf32>
    %c4 = arith.constant 4 : index
    %c0_13 = arith.constant 0 : index
    %c0_14 = arith.constant 0 : index
    %27 = vector.load %arg3[%c4, %c0_13, %c0_14] : memref<5x8x32xf32, #tpu.memory_space<vmem>>, vector<1x8x32xf32>
    %28 = vector.shape_cast %27 : vector<1x8x32xf32> to vector<8x32xf32>
    %29 = arith.mulf %26, %28 : vector<8x32xf32>
    %c3 = arith.constant 3 : index
    %c0_15 = arith.constant 0 : index
    %c0_16 = arith.constant 0 : index
    %30 = vector.load %arg3[%c3, %c0_15, %c0_16] : memref<5x8x32xf32, #tpu.memory_space<vmem>>, vector<1x8x32xf32>
    %31 = vector.shape_cast %30 : vector<1x8x32xf32> to vector<8x32xf32>
    %32 = arith.mulf %29, %31 : vector<8x32xf32>
    %33 = vector.shape_cast %10 : vector<8x32xf32> to vector<1x8x32xf32>
    %34 = vector.shape_cast %6 : vector<8x8xf32> to vector<8x8x1xf32>
    %35 = vector.shape_cast %8 : vector<8x32xf32> to vector<1x8x32xf32>
    %36 = vector.broadcast %34 : vector<8x8x1xf32> to vector<8x8x32xf32>
    %37 = vector.broadcast %35 : vector<1x8x32xf32> to vector<8x8x32xf32>
    %38 = arith.subf %36, %37 : vector<8x8x32xf32>
    %39 = vector.broadcast %33 : vector<1x8x32xf32> to vector<8x8x32xf32>
    %40 = arith.mulf %39, %38 : vector<8x8x32xf32>
    %41 = arith.negf %40 : vector<8x8x32xf32>
    %42 = math.exp %41 : vector<8x8x32xf32>
    %cst_17 = arith.constant 1.000000e+00 : f32
    %43 = vector.broadcast %cst_17 : f32 to vector<8x8x32xf32>
    %44 = arith.addf %43, %42 : vector<8x8x32xf32>
    %45 = arith.divf %43, %44 : vector<8x8x32xf32>
    %46 = vector.shape_cast %32 : vector<8x32xf32> to vector<1x8x32xf32>
    %47 = vector.broadcast %46 : vector<1x8x32xf32> to vector<8x8x32xf32>
    %48 = arith.mulf %45, %47 : vector<8x8x32xf32>
    %cst_18 = arith.constant dense<0.000000e+00> : vector<8x32xf32>
    %49 = vector.multi_reduction <add>, %48, %cst_18 [1] : vector<8x8x32xf32> to vector<8x32xf32>
    %50 = vector.shape_cast %29 : vector<8x32xf32> to vector<1x8x32xf32>
    %51 = vector.broadcast %50 : vector<1x8x32xf32> to vector<8x8x32xf32>
    %52 = arith.mulf %45, %51 : vector<8x8x32xf32>
    %cst_19 = arith.constant dense<0.000000e+00> : vector<8x32xf32>
    %53 = vector.multi_reduction <add>, %52, %cst_19 [1] : vector<8x8x32xf32> to vector<8x32xf32>
    %c0_20 = arith.constant 0 : index
    %c0_21 = arith.constant 0 : index
    %c0_22 = arith.constant 0 : index
    %54 = vector.load %arg4[%c0_20, %c0_21, %c0_22] : memref<5x32x32xf32, #tpu.memory_space<vmem>>, vector<1x32x32xf32>
    %55 = vector.shape_cast %54 : vector<1x32x32xf32> to vector<32x32xf32>
    %c1_23 = arith.constant 1 : index
    %c0_24 = arith.constant 0 : index
    %c0_25 = arith.constant 0 : index
    %56 = vector.load %arg4[%c1_23, %c0_24, %c0_25] : memref<5x32x32xf32, #tpu.memory_space<vmem>>, vector<1x32x32xf32>
    %57 = vector.shape_cast %56 : vector<1x32x32xf32> to vector<32x32xf32>
    %c2_26 = arith.constant 2 : index
    %c0_27 = arith.constant 0 : index
    %c0_28 = arith.constant 0 : index
    %58 = vector.load %arg4[%c2_26, %c0_27, %c0_28] : memref<5x32x32xf32, #tpu.memory_space<vmem>>, vector<1x32x32xf32>
    %59 = vector.shape_cast %58 : vector<1x32x32xf32> to vector<32x32xf32>
    %cst_29 = arith.constant 0.000000e+00 : f32
    %60 = vector.broadcast %cst_29 : f32 to vector<32x32xf32>
    %61 = arith.maximumf %59, %60 : vector<32x32xf32>
    %62 = vector.broadcast %cst_29 : f32 to vector<32x32xf32>
    %63 = arith.subf %59, %62 : vector<32x32xf32>
    %64 = arith.cmpf one, %63, %63 : vector<32x32xf32>
    %65 = vector.broadcast %cst_29 : f32 to vector<32x32xf32>
    %66 = arith.addf %59, %65 : vector<32x32xf32>
    %67 = math.absf %63 : vector<32x32xf32>
    %cst_30 = arith.constant 0.000000e+00 : f32
    %68 = vector.broadcast %cst_30 : f32 to vector<32x32xf32>
    %69 = arith.subf %68, %67 : vector<32x32xf32>
    %70 = math.exp %69 : vector<32x32xf32>
    %71 = math.log1p %70 : vector<32x32xf32>
    %72 = arith.addf %61, %71 : vector<32x32xf32>
    %73 = arith.select %64, %66, %72 : vector<32x32xi1>, vector<32x32xf32>
    %c4_31 = arith.constant 4 : index
    %c0_32 = arith.constant 0 : index
    %c0_33 = arith.constant 0 : index
    %74 = vector.load %arg4[%c4_31, %c0_32, %c0_33] : memref<5x32x32xf32, #tpu.memory_space<vmem>>, vector<1x32x32xf32>
    %75 = vector.shape_cast %74 : vector<1x32x32xf32> to vector<32x32xf32>
    %76 = arith.mulf %73, %75 : vector<32x32xf32>
    %c3_34 = arith.constant 3 : index
    %c0_35 = arith.constant 0 : index
    %c0_36 = arith.constant 0 : index
    %77 = vector.load %arg4[%c3_34, %c0_35, %c0_36] : memref<5x32x32xf32, #tpu.memory_space<vmem>>, vector<1x32x32xf32>
    %78 = vector.shape_cast %77 : vector<1x32x32xf32> to vector<32x32xf32>
    %79 = arith.mulf %76, %78 : vector<32x32xf32>
    %c0_37 = arith.constant 0 : index
    %c0_38 = arith.constant 0 : index
    %80 = vector.load %arg5[%c0_37, %c0_38] : memref<5x32xf32, #tpu.memory_space<vmem>>, vector<1x32xf32>
    %cst_39 = arith.constant 0.000000e+00 : f32
    %81 = vector.broadcast %cst_39 : f32 to vector<1x32xf32>
    %82 = arith.maximumf %80, %81 : vector<1x32xf32>
    %83 = vector.broadcast %cst_39 : f32 to vector<1x32xf32>
    %84 = arith.subf %80, %83 : vector<1x32xf32>
    %85 = arith.cmpf one, %84, %84 : vector<1x32xf32>
    %86 = vector.broadcast %cst_39 : f32 to vector<1x32xf32>
    %87 = arith.addf %80, %86 : vector<1x32xf32>
    %88 = math.absf %84 : vector<1x32xf32>
    %cst_40 = arith.constant 0.000000e+00 : f32
    %89 = vector.broadcast %cst_40 : f32 to vector<1x32xf32>
    %90 = arith.subf %89, %88 : vector<1x32xf32>
    %91 = math.exp %90 : vector<1x32xf32>
    %92 = math.log1p %91 : vector<1x32xf32>
    %93 = arith.addf %82, %92 : vector<1x32xf32>
    %94 = arith.select %85, %87, %93 : vector<1x32xi1>, vector<1x32xf32>
    %c1_41 = arith.constant 1 : index
    %c0_42 = arith.constant 0 : index
    %95 = vector.load %arg5[%c1_41, %c0_42] : memref<5x32xf32, #tpu.memory_space<vmem>>, vector<1x32xf32>
    %c2_43 = arith.constant 2 : index
    %c0_44 = arith.constant 0 : index
    %96 = vector.load %arg5[%c2_43, %c0_44] : memref<5x32xf32, #tpu.memory_space<vmem>>, vector<1x32xf32>
    %cst_45 = arith.constant 0.000000e+00 : f32
    %97 = vector.broadcast %cst_45 : f32 to vector<1x32xf32>
    %98 = arith.maximumf %96, %97 : vector<1x32xf32>
    %99 = vector.broadcast %cst_45 : f32 to vector<1x32xf32>
    %100 = arith.subf %96, %99 : vector<1x32xf32>
    %101 = arith.cmpf one, %100, %100 : vector<1x32xf32>
    %102 = vector.broadcast %cst_45 : f32 to vector<1x32xf32>
    %103 = arith.addf %96, %102 : vector<1x32xf32>
    %104 = math.absf %100 : vector<1x32xf32>
    %cst_46 = arith.constant 0.000000e+00 : f32
    %105 = vector.broadcast %cst_46 : f32 to vector<1x32xf32>
    %106 = arith.subf %105, %104 : vector<1x32xf32>
    %107 = math.exp %106 : vector<1x32xf32>
    %108 = math.log1p %107 : vector<1x32xf32>
    %109 = arith.addf %98, %108 : vector<1x32xf32>
    %110 = arith.select %101, %103, %109 : vector<1x32xi1>, vector<1x32xf32>
    %cst_47 = arith.constant 6.000000e+00 : f32
    %111 = vector.broadcast %cst_47 : f32 to vector<1x32xf32>
    %112 = arith.mulf %110, %111 : vector<1x32xf32>
    %113 = arith.mulf %94, %95 : vector<1x32xf32>
    %c3_48 = arith.constant 3 : index
    %c0_49 = arith.constant 0 : index
    %114 = vector.load %arg5[%c3_48, %c0_49] : memref<5x32xf32, #tpu.memory_space<vmem>>, vector<1x32xf32>
    %c4_50 = arith.constant 4 : index
    %c0_51 = arith.constant 0 : index
    %115 = vector.load %arg5[%c4_50, %c0_51] : memref<5x32xf32, #tpu.memory_space<vmem>>, vector<1x32xf32>
    %cst_52 = arith.constant 0.000000e+00 : f32
    %116 = vector.broadcast %cst_52 : f32 to vector<8x32xf32>
    %c0_i32 = arith.constant 0 : i32
    %117 = vector.shape_cast %57 : vector<32x32xf32> to vector<1x32x32xf32>
    %118 = vector.shape_cast %116 : vector<8x32xf32> to vector<8x32x1xf32>
    %119 = vector.shape_cast %55 : vector<32x32xf32> to vector<1x32x32xf32>
    %120 = vector.broadcast %118 : vector<8x32x1xf32> to vector<8x32x32xf32>
    %121 = vector.broadcast %119 : vector<1x32x32xf32> to vector<8x32x32xf32>
    %122 = arith.subf %120, %121 : vector<8x32x32xf32>
    %123 = vector.broadcast %117 : vector<1x32x32xf32> to vector<8x32x32xf32>
    %124 = arith.mulf %123, %122 : vector<8x32x32xf32>
    %125 = arith.negf %124 : vector<8x32x32xf32>
    %126 = math.exp %125 : vector<8x32x32xf32>
    %cst_53 = arith.constant 1.000000e+00 : f32
    %127 = vector.broadcast %cst_53 : f32 to vector<8x32x32xf32>
    %128 = arith.addf %127, %126 : vector<8x32x32xf32>
    %129 = arith.divf %127, %128 : vector<8x32x32xf32>
    %130 = vector.shape_cast %79 : vector<32x32xf32> to vector<1x32x32xf32>
    %131 = vector.broadcast %130 : vector<1x32x32xf32> to vector<8x32x32xf32>
    %132 = arith.mulf %129, %131 : vector<8x32x32xf32>
    %cst_54 = arith.constant dense<0.000000e+00> : vector<8x32xf32>
    %133 = vector.multi_reduction <add>, %132, %cst_54 [1] : vector<8x32x32xf32> to vector<8x32xf32>
    %134 = arith.addf %133, %49 : vector<8x32xf32>
    %135 = vector.shape_cast %76 : vector<32x32xf32> to vector<1x32x32xf32>
    %136 = vector.broadcast %135 : vector<1x32x32xf32> to vector<8x32x32xf32>
    %137 = arith.mulf %129, %136 : vector<8x32x32xf32>
    %cst_55 = arith.constant dense<0.000000e+00> : vector<8x32xf32>
    %138 = vector.multi_reduction <add>, %137, %cst_55 [1] : vector<8x32x32xf32> to vector<8x32xf32>
    %139 = arith.addf %138, %53 : vector<8x32xf32>
    %140 = vector.broadcast %112 : vector<1x32xf32> to vector<8x32xf32>
    %141 = arith.mulf %140, %116 : vector<8x32xf32>
    %142 = vector.broadcast %113 : vector<1x32xf32> to vector<8x32xf32>
    %143 = arith.addf %141, %142 : vector<8x32xf32>
    %144 = arith.addf %143, %134 : vector<8x32xf32>
    %145 = arith.addf %112, %94 : vector<1x32xf32>
    %146 = vector.broadcast %145 : vector<1x32xf32> to vector<8x32xf32>
    %147 = arith.addf %146, %139 : vector<8x32xf32>
    %cst_56 = arith.constant 9.99999993E-9 : f32
    %148 = vector.broadcast %cst_56 : f32 to vector<8x32xf32>
    %149 = arith.addf %147, %148 : vector<8x32xf32>
    %150 = arith.divf %144, %149 : vector<8x32xf32>
    %c1_i32 = arith.constant 1 : i32
    %151 = vector.shape_cast %57 : vector<32x32xf32> to vector<1x32x32xf32>
    %152 = vector.shape_cast %150 : vector<8x32xf32> to vector<8x32x1xf32>
    %153 = vector.shape_cast %55 : vector<32x32xf32> to vector<1x32x32xf32>
    %154 = vector.broadcast %152 : vector<8x32x1xf32> to vector<8x32x32xf32>
    %155 = vector.broadcast %153 : vector<1x32x32xf32> to vector<8x32x32xf32>
    %156 = arith.subf %154, %155 : vector<8x32x32xf32>
    %157 = vector.broadcast %151 : vector<1x32x32xf32> to vector<8x32x32xf32>
    %158 = arith.mulf %157, %156 : vector<8x32x32xf32>
    %159 = arith.negf %158 : vector<8x32x32xf32>
    %160 = math.exp %159 : vector<8x32x32xf32>
    %cst_57 = arith.constant 1.000000e+00 : f32
    %161 = vector.broadcast %cst_57 : f32 to vector<8x32x32xf32>
    %162 = arith.addf %161, %160 : vector<8x32x32xf32>
    %163 = arith.divf %161, %162 : vector<8x32x32xf32>
    %164 = vector.shape_cast %79 : vector<32x32xf32> to vector<1x32x32xf32>
    %165 = vector.broadcast %164 : vector<1x32x32xf32> to vector<8x32x32xf32>
    %166 = arith.mulf %163, %165 : vector<8x32x32xf32>
    %cst_58 = arith.constant dense<0.000000e+00> : vector<8x32xf32>
    %167 = vector.multi_reduction <add>, %166, %cst_58 [1] : vector<8x32x32xf32> to vector<8x32xf32>
    %168 = arith.addf %167, %49 : vector<8x32xf32>
    %169 = vector.shape_cast %76 : vector<32x32xf32> to vector<1x32x32xf32>
    %170 = vector.broadcast %169 : vector<1x32x32xf32> to vector<8x32x32xf32>
    %171 = arith.mulf %163, %170 : vector<8x32x32xf32>
    %cst_59 = arith.constant dense<0.000000e+00> : vector<8x32xf32>
    %172 = vector.multi_reduction <add>, %171, %cst_59 [1] : vector<8x32x32xf32> to vector<8x32xf32>
    %173 = arith.addf %172, %53 : vector<8x32xf32>
    %174 = vector.broadcast %112 : vector<1x32xf32> to vector<8x32xf32>
    %175 = arith.mulf %174, %150 : vector<8x32xf32>
    %176 = vector.broadcast %113 : vector<1x32xf32> to vector<8x32xf32>
    %177 = arith.addf %175, %176 : vector<8x32xf32>
    %178 = arith.addf %177, %168 : vector<8x32xf32>
    %179 = arith.addf %112, %94 : vector<1x32xf32>
    %180 = vector.broadcast %179 : vector<1x32xf32> to vector<8x32xf32>
    %181 = arith.addf %180, %173 : vector<8x32xf32>
    %cst_60 = arith.constant 9.99999993E-9 : f32
    %182 = vector.broadcast %cst_60 : f32 to vector<8x32xf32>
    %183 = arith.addf %181, %182 : vector<8x32xf32>
    %184 = arith.divf %178, %183 : vector<8x32xf32>
    %c2_i32 = arith.constant 2 : i32
    %185 = vector.shape_cast %57 : vector<32x32xf32> to vector<1x32x32xf32>
    %186 = vector.shape_cast %184 : vector<8x32xf32> to vector<8x32x1xf32>
    %187 = vector.shape_cast %55 : vector<32x32xf32> to vector<1x32x32xf32>
    %188 = vector.broadcast %186 : vector<8x32x1xf32> to vector<8x32x32xf32>
    %189 = vector.broadcast %187 : vector<1x32x32xf32> to vector<8x32x32xf32>
    %190 = arith.subf %188, %189 : vector<8x32x32xf32>
    %191 = vector.broadcast %185 : vector<1x32x32xf32> to vector<8x32x32xf32>
    %192 = arith.mulf %191, %190 : vector<8x32x32xf32>
    %193 = arith.negf %192 : vector<8x32x32xf32>
    %194 = math.exp %193 : vector<8x32x32xf32>
    %cst_61 = arith.constant 1.000000e+00 : f32
    %195 = vector.broadcast %cst_61 : f32 to vector<8x32x32xf32>
    %196 = arith.addf %195, %194 : vector<8x32x32xf32>
    %197 = arith.divf %195, %196 : vector<8x32x32xf32>
    %198 = vector.shape_cast %79 : vector<32x32xf32> to vector<1x32x32xf32>
    %199 = vector.broadcast %198 : vector<1x32x32xf32> to vector<8x32x32xf32>
    %200 = arith.mulf %197, %199 : vector<8x32x32xf32>
    %cst_62 = arith.constant dense<0.000000e+00> : vector<8x32xf32>
    %201 = vector.multi_reduction <add>, %200, %cst_62 [1] : vector<8x32x32xf32> to vector<8x32xf32>
    %202 = arith.addf %201, %49 : vector<8x32xf32>
    %203 = vector.shape_cast %76 : vector<32x32xf32> to vector<1x32x32xf32>
    %204 = vector.broadcast %203 : vector<1x32x32xf32> to vector<8x32x32xf32>
    %205 = arith.mulf %197, %204 : vector<8x32x32xf32>
    %cst_63 = arith.constant dense<0.000000e+00> : vector<8x32xf32>
    %206 = vector.multi_reduction <add>, %205, %cst_63 [1] : vector<8x32x32xf32> to vector<8x32xf32>
    %207 = arith.addf %206, %53 : vector<8x32xf32>
    %208 = vector.broadcast %112 : vector<1x32xf32> to vector<8x32xf32>
    %209 = arith.mulf %208, %184 : vector<8x32xf32>
    %210 = vector.broadcast %113 : vector<1x32xf32> to vector<8x32xf32>
    %211 = arith.addf %209, %210 : vector<8x32xf32>
    %212 = arith.addf %211, %202 : vector<8x32xf32>
    %213 = arith.addf %112, %94 : vector<1x32xf32>
    %214 = vector.broadcast %213 : vector<1x32xf32> to vector<8x32xf32>
    %215 = arith.addf %214, %207 : vector<8x32xf32>
    %cst_64 = arith.constant 9.99999993E-9 : f32
    %216 = vector.broadcast %cst_64 : f32 to vector<8x32xf32>
    %217 = arith.addf %215, %216 : vector<8x32xf32>
    %218 = arith.divf %212, %217 : vector<8x32xf32>
    %c3_i32 = arith.constant 3 : i32
    %219 = vector.shape_cast %57 : vector<32x32xf32> to vector<1x32x32xf32>
    %220 = vector.shape_cast %218 : vector<8x32xf32> to vector<8x32x1xf32>
    %221 = vector.shape_cast %55 : vector<32x32xf32> to vector<1x32x32xf32>
    %222 = vector.broadcast %220 : vector<8x32x1xf32> to vector<8x32x32xf32>
    %223 = vector.broadcast %221 : vector<1x32x32xf32> to vector<8x32x32xf32>
    %224 = arith.subf %222, %223 : vector<8x32x32xf32>
    %225 = vector.broadcast %219 : vector<1x32x32xf32> to vector<8x32x32xf32>
    %226 = arith.mulf %225, %224 : vector<8x32x32xf32>
    %227 = arith.negf %226 : vector<8x32x32xf32>
    %228 = math.exp %227 : vector<8x32x32xf32>
    %cst_65 = arith.constant 1.000000e+00 : f32
    %229 = vector.broadcast %cst_65 : f32 to vector<8x32x32xf32>
    %230 = arith.addf %229, %228 : vector<8x32x32xf32>
    %231 = arith.divf %229, %230 : vector<8x32x32xf32>
    %232 = vector.shape_cast %79 : vector<32x32xf32> to vector<1x32x32xf32>
    %233 = vector.broadcast %232 : vector<1x32x32xf32> to vector<8x32x32xf32>
    %234 = arith.mulf %231, %233 : vector<8x32x32xf32>
    %cst_66 = arith.constant dense<0.000000e+00> : vector<8x32xf32>
    %235 = vector.multi_reduction <add>, %234, %cst_66 [1] : vector<8x32x32xf32> to vector<8x32xf32>
    %236 = arith.addf %235, %49 : vector<8x32xf32>
    %237 = vector.shape_cast %76 : vector<32x32xf32> to vector<1x32x32xf32>
    %238 = vector.broadcast %237 : vector<1x32x32xf32> to vector<8x32x32xf32>
    %239 = arith.mulf %231, %238 : vector<8x32x32xf32>
    %cst_67 = arith.constant dense<0.000000e+00> : vector<8x32xf32>
    %240 = vector.multi_reduction <add>, %239, %cst_67 [1] : vector<8x32x32xf32> to vector<8x32xf32>
    %241 = arith.addf %240, %53 : vector<8x32xf32>
    %242 = vector.broadcast %112 : vector<1x32xf32> to vector<8x32xf32>
    %243 = arith.mulf %242, %218 : vector<8x32xf32>
    %244 = vector.broadcast %113 : vector<1x32xf32> to vector<8x32xf32>
    %245 = arith.addf %243, %244 : vector<8x32xf32>
    %246 = arith.addf %245, %236 : vector<8x32xf32>
    %247 = arith.addf %112, %94 : vector<1x32xf32>
    %248 = vector.broadcast %247 : vector<1x32xf32> to vector<8x32xf32>
    %249 = arith.addf %248, %241 : vector<8x32xf32>
    %cst_68 = arith.constant 9.99999993E-9 : f32
    %250 = vector.broadcast %cst_68 : f32 to vector<8x32xf32>
    %251 = arith.addf %249, %250 : vector<8x32xf32>
    %252 = arith.divf %246, %251 : vector<8x32xf32>
    %c4_i32 = arith.constant 4 : i32
    %253 = vector.shape_cast %57 : vector<32x32xf32> to vector<1x32x32xf32>
    %254 = vector.shape_cast %252 : vector<8x32xf32> to vector<8x32x1xf32>
    %255 = vector.shape_cast %55 : vector<32x32xf32> to vector<1x32x32xf32>
    %256 = vector.broadcast %254 : vector<8x32x1xf32> to vector<8x32x32xf32>
    %257 = vector.broadcast %255 : vector<1x32x32xf32> to vector<8x32x32xf32>
    %258 = arith.subf %256, %257 : vector<8x32x32xf32>
    %259 = vector.broadcast %253 : vector<1x32x32xf32> to vector<8x32x32xf32>
    %260 = arith.mulf %259, %258 : vector<8x32x32xf32>
    %261 = arith.negf %260 : vector<8x32x32xf32>
    %262 = math.exp %261 : vector<8x32x32xf32>
    %cst_69 = arith.constant 1.000000e+00 : f32
    %263 = vector.broadcast %cst_69 : f32 to vector<8x32x32xf32>
    %264 = arith.addf %263, %262 : vector<8x32x32xf32>
    %265 = arith.divf %263, %264 : vector<8x32x32xf32>
    %266 = vector.shape_cast %79 : vector<32x32xf32> to vector<1x32x32xf32>
    %267 = vector.broadcast %266 : vector<1x32x32xf32> to vector<8x32x32xf32>
    %268 = arith.mulf %265, %267 : vector<8x32x32xf32>
    %cst_70 = arith.constant dense<0.000000e+00> : vector<8x32xf32>
    %269 = vector.multi_reduction <add>, %268, %cst_70 [1] : vector<8x32x32xf32> to vector<8x32xf32>
    %270 = arith.addf %269, %49 : vector<8x32xf32>
    %271 = vector.shape_cast %76 : vector<32x32xf32> to vector<1x32x32xf32>
    %272 = vector.broadcast %271 : vector<1x32x32xf32> to vector<8x32x32xf32>
    %273 = arith.mulf %265, %272 : vector<8x32x32xf32>
    %cst_71 = arith.constant dense<0.000000e+00> : vector<8x32xf32>
    %274 = vector.multi_reduction <add>, %273, %cst_71 [1] : vector<8x32x32xf32> to vector<8x32xf32>
    %275 = arith.addf %274, %53 : vector<8x32xf32>
    %276 = vector.broadcast %112 : vector<1x32xf32> to vector<8x32xf32>
    %277 = arith.mulf %276, %252 : vector<8x32xf32>
    %278 = vector.broadcast %113 : vector<1x32xf32> to vector<8x32xf32>
    %279 = arith.addf %277, %278 : vector<8x32xf32>
    %280 = arith.addf %279, %270 : vector<8x32xf32>
    %281 = arith.addf %112, %94 : vector<1x32xf32>
    %282 = vector.broadcast %281 : vector<1x32xf32> to vector<8x32xf32>
    %283 = arith.addf %282, %275 : vector<8x32xf32>
    %cst_72 = arith.constant 9.99999993E-9 : f32
    %284 = vector.broadcast %cst_72 : f32 to vector<8x32xf32>
    %285 = arith.addf %283, %284 : vector<8x32xf32>
    %286 = arith.divf %280, %285 : vector<8x32xf32>
    %c5_i32 = arith.constant 5 : i32
    %287 = vector.shape_cast %57 : vector<32x32xf32> to vector<1x32x32xf32>
    %288 = vector.shape_cast %286 : vector<8x32xf32> to vector<8x32x1xf32>
    %289 = vector.shape_cast %55 : vector<32x32xf32> to vector<1x32x32xf32>
    %290 = vector.broadcast %288 : vector<8x32x1xf32> to vector<8x32x32xf32>
    %291 = vector.broadcast %289 : vector<1x32x32xf32> to vector<8x32x32xf32>
    %292 = arith.subf %290, %291 : vector<8x32x32xf32>
    %293 = vector.broadcast %287 : vector<1x32x32xf32> to vector<8x32x32xf32>
    %294 = arith.mulf %293, %292 : vector<8x32x32xf32>
    %295 = arith.negf %294 : vector<8x32x32xf32>
    %296 = math.exp %295 : vector<8x32x32xf32>
    %cst_73 = arith.constant 1.000000e+00 : f32
    %297 = vector.broadcast %cst_73 : f32 to vector<8x32x32xf32>
    %298 = arith.addf %297, %296 : vector<8x32x32xf32>
    %299 = arith.divf %297, %298 : vector<8x32x32xf32>
    %300 = vector.shape_cast %79 : vector<32x32xf32> to vector<1x32x32xf32>
    %301 = vector.broadcast %300 : vector<1x32x32xf32> to vector<8x32x32xf32>
    %302 = arith.mulf %299, %301 : vector<8x32x32xf32>
    %cst_74 = arith.constant dense<0.000000e+00> : vector<8x32xf32>
    %303 = vector.multi_reduction <add>, %302, %cst_74 [1] : vector<8x32x32xf32> to vector<8x32xf32>
    %304 = arith.addf %303, %49 : vector<8x32xf32>
    %305 = vector.shape_cast %76 : vector<32x32xf32> to vector<1x32x32xf32>
    %306 = vector.broadcast %305 : vector<1x32x32xf32> to vector<8x32x32xf32>
    %307 = arith.mulf %299, %306 : vector<8x32x32xf32>
    %cst_75 = arith.constant dense<0.000000e+00> : vector<8x32xf32>
    %308 = vector.multi_reduction <add>, %307, %cst_75 [1] : vector<8x32x32xf32> to vector<8x32xf32>
    %309 = arith.addf %308, %53 : vector<8x32xf32>
    %310 = vector.broadcast %112 : vector<1x32xf32> to vector<8x32xf32>
    %311 = arith.mulf %310, %286 : vector<8x32xf32>
    %312 = vector.broadcast %113 : vector<1x32xf32> to vector<8x32xf32>
    %313 = arith.addf %311, %312 : vector<8x32xf32>
    %314 = arith.addf %313, %304 : vector<8x32xf32>
    %315 = arith.addf %112, %94 : vector<1x32xf32>
    %316 = vector.broadcast %315 : vector<1x32xf32> to vector<8x32xf32>
    %317 = arith.addf %316, %309 : vector<8x32xf32>
    %cst_76 = arith.constant 9.99999993E-9 : f32
    %318 = vector.broadcast %cst_76 : f32 to vector<8x32xf32>
    %319 = arith.addf %317, %318 : vector<8x32xf32>
    %320 = arith.divf %314, %319 : vector<8x32xf32>
    %321 = vector.broadcast %114 : vector<1x32xf32> to vector<8x32xf32>
    %322 = arith.mulf %320, %321 : vector<8x32xf32>
    %323 = vector.broadcast %115 : vector<1x32xf32> to vector<8x32xf32>
    %324 = arith.addf %322, %323 : vector<8x32xf32>
    %c0_77 = arith.constant 0 : index
    %c0_78 = arith.constant 0 : index
    %325 = vector.load %arg6[%c0_77, %c0_78] : memref<8x32xf32, #tpu.memory_space<vmem>>, vector<8x32xf32>
    tpu.vector_store %arg6[%c0_77, %c0_78], %324 {strides = array<i32>} : memref<8x32xf32, #tpu.memory_space<vmem>>, vector<8x32xf32>,
    return
  }
  func.func @transform_0(%arg0: i32) -> (i32, i32) {
    %c0_i32 = arith.constant 0 : i32
    %c0_i32_0 = arith.constant 0 : i32
    return %arg0, %c0_i32 : i32, i32
  }
  func.func @transform_1(%arg0: i32) -> (i32, i32) {
    %c0_i32 = arith.constant 0 : i32
    %c0_i32_0 = arith.constant 0 : i32
    %c0_i32_1 = arith.constant 0 : i32
    return %c0_i32, %c0_i32_0 : i32, i32
  }
  func.func @transform_2(%arg0: i32) -> (i32, i32, i32) {
    %c0_i32 = arith.constant 0 : i32
    %c0_i32_0 = arith.constant 0 : i32
    %c0_i32_1 = arith.constant 0 : i32
    %c0_i32_2 = arith.constant 0 : i32
    return %c0_i32, %c0_i32_0, %c0_i32_1 : i32, i32, i32
  }
  func.func @transform_3(%arg0: i32) -> (i32, i32, i32) {
    %c0_i32 = arith.constant 0 : i32
    %c0_i32_0 = arith.constant 0 : i32
    %c0_i32_1 = arith.constant 0 : i32
    %c0_i32_2 = arith.constant 0 : i32
    return %c0_i32, %c0_i32_0, %c0_i32_1 : i32, i32, i32
  }
  func.func @transform_4(%arg0: i32) -> (i32, i32) {
    %c0_i32 = arith.constant 0 : i32
    %c0_i32_0 = arith.constant 0 : i32
    %c0_i32_1 = arith.constant 0 : i32
    return %c0_i32, %c0_i32_0 : i32, i32
  }
  func.func @transform_5(%arg0: i32) -> (i32, i32) {
    %c0_i32 = arith.constant 0 : i32
    %c0_i32_0 = arith.constant 0 : i32
    return %arg0, %c0_i32 : i32, i32
  }
}

</mosaic_0001>

<llo_original>
// kernel: tpu_custom_call.1
$region0: #{tpu_custom_call.1}
  #allocation0 [shape = 'u32[]', space=smem, size = 0x4, offset = 0x4, fixed_abs, tag = 'smem constant byte address 0x4 - core index']
  #allocation1 [shape = 'u32[72,128]{1,0:T(1,128)}', space=vmem, size = 0x9000, scoped, tag = 'internal scratch']
  %s0 = inlined_call_operand.hbm [shape: f32[8,8], index: 0, kind: input, shape index: {}]
  %s1 = inlined_call_operand.hbm [shape: f32[2,8], index: 1, kind: input, shape index: {}]
  %s2 = inlined_call_operand.hbm [shape: f32[5,8,32], index: 2, kind: input, shape index: {}]
  %s3 = inlined_call_operand.hbm [shape: f32[5,32,32], index: 3, kind: input, shape index: {}]
  %s4 = inlined_call_operand.hbm [shape: f32[5,32], index: 4, kind: input, shape index: {}]
  %s5 = inlined_call_operand.hbm [shape: f32[8,32], index: 5, kind: output, shape index: {}]
  %s6 = sld [smem:[#allocation0]]
  $region50: #{tpu_custom_call.1} parent=0
    _
  %s8 = ssub.s32 1, %s6
  %s9 = scalar_select 0, %s8, %s6
  $region1: #{tpu_custom_call.1} parent=0
    #allocation2 [shape = 'u8[4096]{0}', space=vmem, size = 0x1000, scoped, tag = 'input window, operand 0, single buffered']
    #allocation3 [shape = 's32[1]{0}', space=sflag, size = 0x4, scoped, tag = 'scoped memory for tpu_custom_call.1']
    #allocation4 [shape = 's32[1]{0}', space=sflag, size = 0x4, scoped, tag = 'scoped memory for tpu_custom_call.1']
    #allocation5 [shape = 'u8[1024]{0}', space=vmem, size = 0x400, scoped, tag = 'input window, operand 1, single buffered']
    #allocation6 [shape = 's32[1]{0}', space=sflag, size = 0x4, scoped, tag = 'scoped memory for tpu_custom_call.1']
    #allocation7 [shape = 'u8[20480]{0}', space=vmem, size = 0x5000, scoped, tag = 'input window, operand 2, single buffered']
    #allocation8 [shape = 'u8[81920]{0}', space=vmem, size = 0x14000, scoped, tag = 'input window, operand 3, single buffered']
    #allocation9 [shape = 's32[1]{0}', space=sflag, size = 0x4, scoped, tag = 'scoped memory for tpu_custom_call.1']
    #allocation10 [shape = 'u8[4096]{0}', space=vmem, size = 0x1000, scoped, tag = 'input window, operand 4, single buffered']
    #allocation11 [shape = 'u8[4096]{0}', space=vmem, size = 0x1000, scoped, tag = 'output window, operand 0, single buffered']
    %10 = vsyncpa [#allocation3], 0
    %11 = vsyncpa [#allocation6], 0
    %12 = vsyncpa [#allocation9], 0
    %13 = vsyncpa [#allocation4], 0
    // Predicated region
    $region2: #{tpu_custom_call.1} parent=1 // pred_check
      _
    $region3: #{tpu_custom_call.1} parent=1 // pred_check_branch
      %15 = sbr.rel (0) target = $region5
    $region4: #{tpu_custom_call.1} parent=1 // pred_region
      %17 = vsyncadd [#allocation3], 0
      %s19 = sshll.u32 %s0, 4
      %s20 = int_to_ptr.hbm [resolvable:$true] %s19
      %s21 = sshll.u32 [#allocation2], 4
      %s22 = int_to_ptr.vmem [resolvable:$true] %s21
      %24 = dma.hbm_to_vmem [thread:$0]  %s20, 128, %s22, [#allocation3]
    $region5: #{tpu_custom_call.1} parent=1 // pred_fallthru
      _
    // Predicated region
    $region6: #{tpu_custom_call.1} parent=1 // pred_check
      _
    $region7: #{tpu_custom_call.1} parent=1 // pred_check_branch
      %26 = sbr.rel (0) target = $region9
    $region8: #{tpu_custom_call.1} parent=1 // pred_region
      %28 = vsyncadd [#allocation6], 0
      %s30 = sshll.u32 %s1, 4
      %s31 = int_to_ptr.hbm [resolvable:$true] %s30
      %s32 = sshll.u32 [#allocation5], 4
      %s33 = int_to_ptr.vmem [resolvable:$true] %s32
      %35 = dma.hbm_to_vmem [thread:$0]  %s31, 32, %s33, [#allocation6]
    $region9: #{tpu_custom_call.1} parent=1 // pred_fallthru
      _
    // Predicated region
    $region10: #{tpu_custom_call.1} parent=1 // pred_check
      _
    $region11: #{tpu_custom_call.1} parent=1 // pred_check_branch
      %37 = sbr.rel (0) target = $region13
    $region12: #{tpu_custom_call.1} parent=1 // pred_region
      %39 = vsyncadd [#allocation6], 0
      %s40 = sshll.u32 %s2, 4
      %s41 = int_to_ptr.hbm [resolvable:$true] %s40
      %s42 = sshll.u32 [#allocation7], 4
      %s43 = int_to_ptr.vmem [resolvable:$true] %s42
      %48 = dma.hbm_to_vmem [thread:$0]  %s41, 640, %s43, [#allocation6], 128, 128, 8
    $region13: #{tpu_custom_call.1} parent=1 // pred_fallthru
      _
    // Predicated region
    $region14: #{tpu_custom_call.1} parent=1 // pred_check
      _
    $region15: #{tpu_custom_call.1} parent=1 // pred_check_branch
      %50 = sbr.rel (0) target = $region17
    $region16: #{tpu_custom_call.1} parent=1 // pred_region
      %52 = vsyncadd [#allocation9], 0
      %s53 = sshll.u32 %s3, 4
      %s54 = int_to_ptr.hbm [resolvable:$true] %s53
      %s55 = sshll.u32 [#allocation8], 4
      %s56 = int_to_ptr.vmem [resolvable:$true] %s55
      %61 = dma.hbm_to_vmem [thread:$0]  %s54, 2560, %s56, [#allocation9], 128, 128, 8
    $region17: #{tpu_custom_call.1} parent=1 // pred_fallthru
      _
    // Predicated region
    $region18: #{tpu_custom_call.1} parent=1 // pred_check
      _
    $region19: #{tpu_custom_call.1} parent=1 // pred_check_branch
      %63 = sbr.rel (0) target = $region21
    $region20: #{tpu_custom_call.1} parent=1 // pred_region
      %65 = vsyncadd [#allocation9], 0
      %s67 = sshll.u32 %s4, 4
      %s68 = int_to_ptr.hbm [resolvable:$true] %s67
      %s69 = sshll.u32 [#allocation10], 4
      %s70 = int_to_ptr.vmem [resolvable:$true] %s69
      %72 = dma.hbm_to_vmem [thread:$0]  %s68, 128, %s70, [#allocation9]
    $region21: #{tpu_custom_call.1} parent=1 // pred_fallthru
      _
    // Predicated region
    $region22: #{tpu_custom_call.1} parent=1 // pred_check
      _
    $region23: #{tpu_custom_call.1} parent=1 // pred_check_branch
      %74 = sbr.rel (0) target = $region25
    $region24: #{tpu_custom_call.1} parent=1 // pred_region
      %76 = dma.done [#allocation3], 128
    $region25: #{tpu_custom_call.1} parent=1 // pred_fallthru
      _
    // Predicated region
    $region26: #{tpu_custom_call.1} parent=1 // pred_check
      _
    $region27: #{tpu_custom_call.1} parent=1 // pred_check_branch
      %78 = sbr.rel (0) target = $region29
    $region28: #{tpu_custom_call.1} parent=1 // pred_region
      %80 = dma.done [#allocation6], 32
    $region29: #{tpu_custom_call.1} parent=1 // pred_fallthru
      _
    // Predicated region
    $region30: #{tpu_custom_call.1} parent=1 // pred_check
      _
    $region31: #{tpu_custom_call.1} parent=1 // pred_check_branch
      %82 = sbr.rel (0) target = $region33
    $region32: #{tpu_custom_call.1} parent=1 // pred_region
      %84 = dma.done [#allocation6], 640
    $region33: #{tpu_custom_call.1} parent=1 // pred_fallthru
      _
    // Predicated region
    $region34: #{tpu_custom_call.1} parent=1 // pred_check
      _
    $region35: #{tpu_custom_call.1} parent=1 // pred_check_branch
      %86 = sbr.rel (0) target = $region37
    $region36: #{tpu_custom_call.1} parent=1 // pred_region
      %88 = dma.done [#allocation9], 2560
    $region37: #{tpu_custom_call.1} parent=1 // pred_fallthru
      _
    // Predicated region
    $region38: #{tpu_custom_call.1} parent=1 // pred_check
      _
    $region39: #{tpu_custom_call.1} parent=1 // pred_check_branch
      %90 = sbr.rel (0) target = $region41
    $region40: #{tpu_custom_call.1} parent=1 // pred_region
      %92 = dma.done [#allocation9], 128
    $region41: #{tpu_custom_call.1} parent=1 // pred_fallthru
      _
    %v93 = vld [vmem:[#allocation5] sm:$0x1]
    %v94 = vld [vmem:[#allocation5 + $0x1] sm:$0x1]
    %v95 = vld [vmem:[#allocation2] sm:$0xff]
    %v96 = vperm.slane %v93, 0
    %v97 = vmul.f32 %v95, %v96
    %v98 = vperm.slane %v94, 0
    %v99 = vadd.f32 %v97, %v98
    %v100 = vld [vmem:[#allocation7] sm:$0xff]
    %s101 = scalar_lea.vmem [#allocation7], 8
    %v102 = vld [vmem:[%s101] sm:$0xff]
    %s103 = scalar_lea.vmem [#allocation7], 16
    %v104 = vld [vmem:[%s103] sm:$0xff]
    %v105 = vmax.f32 %v104, 0.0
    %vm106 = vcmp.ne.f32.partialorder %v104, %v104
    %v107 = vadd.f32 %v104, 0.0
    %v108 = vand.u32 2147483647, %v104
    %v109 = vsub.f32 0.0, %v108
    %v110 = vmul.f32 %v109, 1.442695
    %v111 = vpow.pop %v110
    %v112 = vadd.f32 %v111, 1.0
    %v113 = vlog2.pop %v112
    %v114 = vmul.f32 %v113, 0.6931472
    %v115 = vmul.f32 -0.5, %v111
    %v116 = vadd.f32 %v115, 1.0
    %v117 = vmul.f32 %v116, %v111
    %v118 = vand.u32 2147483647, %v111
    %vm119 = vcmp.lt.f32.partialorder %v118, 0.0004427343
    %v120 = vsel %vm119, %v117, %v114
    %v121 = vadd.f32 %v105, %v120
    %v122 = vsel %vm106, %v107, %v121
    %s123 = scalar_lea.vmem [#allocation7], 32
    %v124 = vld [vmem:[%s123] sm:$0xff]
    %v125 = vmul.f32 %v122, %v124
    %s126 = scalar_lea.vmem [#allocation7], 24
    %v127 = vld [vmem:[%s126] sm:$0xff]
    %v128 = vmul.f32 %v125, %v127
    %v129 = vperm.slane %v99, 0
    %v130 = vlaneseq
    %v131 = vshrl.u32 %v130, 7
    %133 = vset.pattern.permute.xlu0 %v131
    %134 = vperm.xlu0 %133, %v129
    %v135 = vpop.permute.xlu0 %134
    %v136 = vperm.slane %v99, 1
    %v137 = vlaneseq
    %v138 = vshrl.u32 %v137, 7
    %140 = vset.pattern.permute.xlu0 %v138
    %141 = vperm.xlu0 %140, %v136
    %v142 = vpop.permute.xlu0 %141
    %v143 = vperm.slane %v99, 2
    %v144 = vlaneseq
    %v145 = vshrl.u32 %v144, 7
    %147 = vset.pattern.permute.xlu0 %v145
    %148 = vperm.xlu0 %147, %v143
    %v149 = vpop.permute.xlu0 %148
    %v150 = vperm.slane %v99, 3
    %v151 = vlaneseq
    %v152 = vshrl.u32 %v151, 7
    %154 = vset.pattern.permute.xlu0 %v152
    %155 = vperm.xlu0 %154, %v150
    %v156 = vpop.permute.xlu0 %155
    %v157 = vperm.slane %v99, 4
    %v158 = vlaneseq
    %v159 = vshrl.u32 %v158, 7
    %161 = vset.pattern.permute.xlu0 %v159
    %162 = vperm.xlu0 %161, %v157
    %v163 = vpop.permute.xlu0 %162
    %v164 = vperm.slane %v99, 5
    %v165 = vlaneseq
    %v166 = vshrl.u32 %v165, 7
    %168 = vset.pattern.permute.xlu0 %v166
    %169 = vperm.xlu0 %168, %v164
    %v170 = vpop.permute.xlu0 %169
    %v171 = vperm.slane %v99, 6
    %v172 = vlaneseq
    %v173 = vshrl.u32 %v172, 7
    %175 = vset.pattern.permute.xlu0 %v173
    %176 = vperm.xlu0 %175, %v171
    %v177 = vpop.permute.xlu0 %176
    %v178 = vperm.slane %v99, 7
    %v179 = vlaneseq
    %v180 = vshrl.u32 %v179, 7
    %182 = vset.pattern.permute.xlu0 %v180
    %183 = vperm.xlu0 %182, %v178
    %v184 = vpop.permute.xlu0 %183
    %v185 = vsub.f32 %v135, %v100
    %v186 = vsub.f32 %v142, %v100
    %v187 = vsub.f32 %v149, %v100
    %v188 = vsub.f32 %v156, %v100
    %v189 = vsub.f32 %v163, %v100
    %v190 = vsub.f32 %v170, %v100
    %v191 = vsub.f32 %v177, %v100
    %v192 = vsub.f32 %v184, %v100
    %v193 = vmul.f32 %v102, %v185
    %v194 = vmul.f32 %v102, %v186
    %v195 = vmul.f32 %v102, %v187
    %v196 = vmul.f32 %v102, %v188
    %v197 = vmul.f32 %v102, %v189
    %v198 = vmul.f32 %v102, %v190
    %v199 = vmul.f32 %v102, %v191
    %v200 = vmul.f32 %v102, %v192
    %v201 = vxor.u32 %v193, 2147483648
    %v202 = vxor.u32 %v194, 2147483648
    %v203 = vxor.u32 %v195, 2147483648
    %v204 = vxor.u32 %v196, 2147483648
    %v205 = vxor.u32 %v197, 2147483648
    %v206 = vxor.u32 %v198, 2147483648
    %v207 = vxor.u32 %v199, 2147483648
    %v208 = vxor.u32 %v200, 2147483648
    %v209 = vmul.f32 %v201, 1.442695
    %v210 = vpow.pop %v209
    %v211 = vmul.f32 %v202, 1.442695
    %v212 = vpow.pop %v211
    %v213 = vmul.f32 %v203, 1.442695
    %v214 = vpow.pop %v213
    %v215 = vmul.f32 %v204, 1.442695
    %v216 = vpow.pop %v215
    %v217 = vmul.f32 %v205, 1.442695
    %v218 = vpow.pop %v217
    %v219 = vmul.f32 %v206, 1.442695
    %v220 = vpow.pop %v219
    %v221 = vmul.f32 %v207, 1.442695
    %v222 = vpow.pop %v221
    %v223 = vmul.f32 %v208, 1.442695
    %v224 = vpow.pop %v223
    %v225 = vadd.f32 %v210, 1.0
    %v226 = vadd.f32 %v212, 1.0
    %v227 = vadd.f32 %v214, 1.0
    %v228 = vadd.f32 %v216, 1.0
    %v229 = vadd.f32 %v218, 1.0
    %v230 = vadd.f32 %v220, 1.0
    %v231 = vadd.f32 %v222, 1.0
    %v232 = vadd.f32 %v224, 1.0
    %v233 = vrcp.pop %v225
    %v234 = vmul.f32 %v225, %v233
    %v235 = vsub.f32 1.0, %v234
    %v236 = vmul.f32 %v233, %v235
    %v237 = vadd.f32 %v233, %v236
    %vm238 = vweird.f32 %v225
    %vm239 = vweird.f32 %v233
    %vm240 = vmor %vm238, %vm239
    %v241 = vsel %vm240, %v233, %v237
    %v242 = vand.u32 2147483647, %v225
    %vm243 = vcmp.eq.f32.partialorder %v242, 8.507059e+37
    %v244 = vand.u32 %v225, 2147483648
    %v245 = vor.u32 1.1754944e-38, %v244
    %v246 = vsel %vm243, %v245, %v241
    %v247 = vmul.f32 1.0, %v246
    %v248 = vrcp.pop %v226
    %v249 = vmul.f32 %v226, %v248
    %v250 = vsub.f32 1.0, %v249
    %v251 = vmul.f32 %v248, %v250
    %v252 = vadd.f32 %v248, %v251
    %vm253 = vweird.f32 %v226
    %vm254 = vweird.f32 %v248
    %vm255 = vmor %vm253, %vm254
    %v256 = vsel %vm255, %v248, %v252
    %v257 = vand.u32 2147483647, %v226
    %vm258 = vcmp.eq.f32.partialorder %v257, 8.507059e+37
    %v259 = vand.u32 %v226, 2147483648
    %v260 = vor.u32 1.1754944e-38, %v259
    %v261 = vsel %vm258, %v260, %v256
    %v262 = vmul.f32 1.0, %v261
    %v263 = vrcp.pop %v227
    %v264 = vmul.f32 %v227, %v263
    %v265 = vsub.f32 1.0, %v264
    %v266 = vmul.f32 %v263, %v265
    %v267 = vadd.f32 %v263, %v266
    %vm268 = vweird.f32 %v227
    %vm269 = vweird.f32 %v263
    %vm270 = vmor %vm268, %vm269
    %v271 = vsel %vm270, %v263, %v267
    %v272 = vand.u32 2147483647, %v227
    %vm273 = vcmp.eq.f32.partialorder %v272, 8.507059e+37
    %v274 = vand.u32 %v227, 2147483648
    %v275 = vor.u32 1.1754944e-38, %v274
    %v276 = vsel %vm273, %v275, %v271
    %v277 = vmul.f32 1.0, %v276
    %v278 = vrcp.pop %v228
    %v279 = vmul.f32 %v228, %v278
    %v280 = vsub.f32 1.0, %v279
    %v281 = vmul.f32 %v278, %v280
    %v282 = vadd.f32 %v278, %v281
    %vm283 = vweird.f32 %v228
    %vm284 = vweird.f32 %v278
    %vm285 = vmor %vm283, %vm284
    %v286 = vsel %vm285, %v278, %v282
    %v287 = vand.u32 2147483647, %v228
    %vm288 = vcmp.eq.f32.partialorder %v287, 8.507059e+37
    %v289 = vand.u32 %v228, 2147483648
    %v290 = vor.u32 1.1754944e-38, %v289
    %v291 = vsel %vm288, %v290, %v286
    %v292 = vmul.f32 1.0, %v291
    %v293 = vrcp.pop %v229
    %v294 = vmul.f32 %v229, %v293
    %v295 = vsub.f32 1.0, %v294
    %v296 = vmul.f32 %v293, %v295
    %v297 = vadd.f32 %v293, %v296
    %vm298 = vweird.f32 %v229
    %vm299 = vweird.f32 %v293
    %vm300 = vmor %vm298, %vm299
    %v301 = vsel %vm300, %v293, %v297
    %v302 = vand.u32 2147483647, %v229
    %vm303 = vcmp.eq.f32.partialorder %v302, 8.507059e+37
    %v304 = vand.u32 %v229, 2147483648
    %v305 = vor.u32 1.1754944e-38, %v304
    %v306 = vsel %vm303, %v305, %v301
    %v307 = vmul.f32 1.0, %v306
    %v308 = vrcp.pop %v230
    %v309 = vmul.f32 %v230, %v308
    %v310 = vsub.f32 1.0, %v309
    %v311 = vmul.f32 %v308, %v310
    %v312 = vadd.f32 %v308, %v311
    %vm313 = vweird.f32 %v230
    %vm314 = vweird.f32 %v308
    %vm315 = vmor %vm313, %vm314
    %v316 = vsel %vm315, %v308, %v312
    %v317 = vand.u32 2147483647, %v230
    %vm318 = vcmp.eq.f32.partialorder %v317, 8.507059e+37
    %v319 = vand.u32 %v230, 2147483648
    %v320 = vor.u32 1.1754944e-38, %v319
    %v321 = vsel %vm318, %v320, %v316
    %v322 = vmul.f32 1.0, %v321
    %v323 = vrcp.pop %v231
    %v324 = vmul.f32 %v231, %v323
    %v325 = vsub.f32 1.0, %v324
    %v326 = vmul.f32 %v323, %v325
    %v327 = vadd.f32 %v323, %v326
    %vm328 = vweird.f32 %v231
    %vm329 = vweird.f32 %v323
    %vm330 = vmor %vm328, %vm329
    %v331 = vsel %vm330, %v323, %v327
    %v332 = vand.u32 2147483647, %v231
    %vm333 = vcmp.eq.f32.partialorder %v332, 8.507059e+37
    %v334 = vand.u32 %v231, 2147483648
    %v335 = vor.u32 1.1754944e-38, %v334
    %v336 = vsel %vm333, %v335, %v331
    %v337 = vmul.f32 1.0, %v336
    %v338 = vrcp.pop %v232
    %v339 = vmul.f32 %v232, %v338
    %v340 = vsub.f32 1.0, %v339
    %v341 = vmul.f32 %v338, %v340
    %v342 = vadd.f32 %v338, %v341
    %vm343 = vweird.f32 %v232
    %vm344 = vweird.f32 %v338
    %vm345 = vmor %vm343, %vm344
    %v346 = vsel %vm345, %v338, %v342
    %v347 = vand.u32 2147483647, %v232
    %vm348 = vcmp.eq.f32.partialorder %v347, 8.507059e+37
    %v349 = vand.u32 %v232, 2147483648
    %v350 = vor.u32 1.1754944e-38, %v349
    %v351 = vsel %vm348, %v350, %v346
    %v352 = vmul.f32 1.0, %v351
    %v353 = vmul.f32 %v247, %v128
    %v354 = vmul.f32 %v262, %v128
    %v355 = vmul.f32 %v277, %v128
    %v356 = vmul.f32 %v292, %v128
    %v357 = vmul.f32 %v307, %v128
    %v358 = vmul.f32 %v322, %v128
    %v359 = vmul.f32 %v337, %v128
    %v360 = vmul.f32 %v352, %v128
    %vm361 = vcmask 261120
    %v362 = vsel %vm361, %v353, 0.0
    %v363 = vrot.slane %v362, 4
    %v364 = vadd.f32 %v362, %v363
    %v365 = vrot.slane %v364, 2
    %v366 = vadd.f32 %v364, %v365
    %v367 = vrot.slane %v366, 1
    %v368 = vadd.f32 %v366, %v367
    %v369 = vsel %vm361, %v354, 0.0
    %v370 = vrot.slane %v369, 4
    %v371 = vadd.f32 %v369, %v370
    %v372 = vrot.slane %v371, 2
    %v373 = vadd.f32 %v371, %v372
    %v374 = vrot.slane %v373, 1
    %v375 = vadd.f32 %v373, %v374
    %v376 = vsel %vm361, %v355, 0.0
    %v377 = vrot.slane %v376, 4
    %v378 = vadd.f32 %v376, %v377
    %v379 = vrot.slane %v378, 2
    %v380 = vadd.f32 %v378, %v379
    %v381 = vrot.slane %v380, 1
    %v382 = vadd.f32 %v380, %v381
    %v383 = vsel %vm361, %v356, 0.0
    %v384 = vrot.slane %v383, 4
    %v385 = vadd.f32 %v383, %v384
    %v386 = vrot.slane %v385, 2
    %v387 = vadd.f32 %v385, %v386
    %v388 = vrot.slane %v387, 1
    %v389 = vadd.f32 %v387, %v388
    %v390 = vsel %vm361, %v357, 0.0
    %v391 = vrot.slane %v390, 4
    %v392 = vadd.f32 %v390, %v391
    %v393 = vrot.slane %v392, 2
    %v394 = vadd.f32 %v392, %v393
    %v395 = vrot.slane %v394, 1
    %v396 = vadd.f32 %v394, %v395
    %v397 = vsel %vm361, %v358, 0.0
    %v398 = vrot.slane %v397, 4
    %v399 = vadd.f32 %v397, %v398
    %v400 = vrot.slane %v399, 2
    %v401 = vadd.f32 %v399, %v400
    %v402 = vrot.slane %v401, 1
    %v403 = vadd.f32 %v401, %v402
    %v404 = vsel %vm361, %v359, 0.0
    %v405 = vrot.slane %v404, 4
    %v406 = vadd.f32 %v404, %v405
    %v407 = vrot.slane %v406, 2
    %v408 = vadd.f32 %v406, %v407
    %v409 = vrot.slane %v408, 1
    %v410 = vadd.f32 %v408, %v409
    %v411 = vsel %vm361, %v360, 0.0
    %v412 = vrot.slane %v411, 4
    %v413 = vadd.f32 %v411, %v412
    %v414 = vrot.slane %v413, 2
    %v415 = vadd.f32 %v413, %v414
    %v416 = vrot.slane %v415, 1
    %v417 = vadd.f32 %v415, %v416
    %v418 = vmul.f32 %v247, %v125
    %v419 = vmul.f32 %v262, %v125
    %v420 = vmul.f32 %v277, %v125
    %v421 = vmul.f32 %v292, %v125
    %v422 = vmul.f32 %v307, %v125
    %v423 = vmul.f32 %v322, %v125
    %v424 = vmul.f32 %v337, %v125
    %v425 = vmul.f32 %v352, %v125
    %v426 = vsel %vm361, %v418, 0.0
    %v427 = vrot.slane %v426, 4
    %v428 = vadd.f32 %v426, %v427
    %v429 = vrot.slane %v428, 2
    %v430 = vadd.f32 %v428, %v429
    %v431 = vrot.slane %v430, 1
    %v432 = vadd.f32 %v430, %v431
    %v433 = vsel %vm361, %v419, 0.0
    %v434 = vrot.slane %v433, 4
    %v435 = vadd.f32 %v433, %v434
    %v436 = vrot.slane %v435, 2
    %v437 = vadd.f32 %v435, %v436
    %v438 = vrot.slane %v437, 1
    %v439 = vadd.f32 %v437, %v438
    %v440 = vsel %vm361, %v420, 0.0
    %v441 = vrot.slane %v440, 4
    %v442 = vadd.f32 %v440, %v441
    %v443 = vrot.slane %v442, 2
    %v444 = vadd.f32 %v442, %v443
    %v445 = vrot.slane %v444, 1
    %v446 = vadd.f32 %v444, %v445
    %v447 = vsel %vm361, %v421, 0.0
    %v448 = vrot.slane %v447, 4
    %v449 = vadd.f32 %v447, %v448
    %v450 = vrot.slane %v449, 2
    %v451 = vadd.f32 %v449, %v450
    %v452 = vrot.slane %v451, 1
    %v453 = vadd.f32 %v451, %v452
    %v454 = vsel %vm361, %v422, 0.0
    %v455 = vrot.slane %v454, 4
    %v456 = vadd.f32 %v454, %v455
    %v457 = vrot.slane %v456, 2
    %v458 = vadd.f32 %v456, %v457
    %v459 = vrot.slane %v458, 1
    %v460 = vadd.f32 %v458, %v459
    %v461 = vsel %vm361, %v423, 0.0
    %v462 = vrot.slane %v461, 4
    %v463 = vadd.f32 %v461, %v462
    %v464 = vrot.slane %v463, 2
    %v465 = vadd.f32 %v463, %v464
    %v466 = vrot.slane %v465, 1
    %v467 = vadd.f32 %v465, %v466
    %v468 = vsel %vm361, %v424, 0.0
    %v469 = vrot.slane %v468, 4
    %v470 = vadd.f32 %v468, %v469
    %v471 = vrot.slane %v470, 2
    %v472 = vadd.f32 %v470, %v471
    %v473 = vrot.slane %v472, 1
    %v474 = vadd.f32 %v472, %v473
    %v475 = vsel %vm361, %v425, 0.0
    %v476 = vrot.slane %v475, 4
    %v477 = vadd.f32 %v475, %v476
    %v478 = vrot.slane %v477, 2
    %v479 = vadd.f32 %v477, %v478
    %v480 = vrot.slane %v479, 1
    %v481 = vadd.f32 %v479, %v480
    %v482 = vld [vmem:[#allocation8] sm:$0xff]
    %v483 = vld [vmem:[#allocation8 + $0x8] sm:$0xff]
    %v484 = vld [vmem:[#allocation8 + $0x10] sm:$0xff]
    %v485 = vld [vmem:[#allocation8 + $0x18] sm:$0xff]
    %s486 = scalar_lea.vmem [#allocation8], 32
    %v487 = vld [vmem:[%s486] sm:$0xff]
    %v488 = vld [vmem:[%s486 + $0x8] sm:$0xff]
    %v489 = vld [vmem:[%s486 + $0x10] sm:$0xff]
    %v490 = vld [vmem:[%s486 + $0x18] sm:$0xff]
    %s491 = scalar_lea.vmem [#allocation8], 64
    %v492 = vld [vmem:[%s491] sm:$0xff]
    %v493 = vld [vmem:[%s491 + $0x8] sm:$0xff]
    %v494 = vld [vmem:[%s491 + $0x10] sm:$0xff]
    %v495 = vld [vmem:[%s491 + $0x18] sm:$0xff]
    %v496 = vmax.f32 %v492, 0.0
    %v497 = vmax.f32 %v493, 0.0
    %v498 = vmax.f32 %v494, 0.0
    %v499 = vmax.f32 %v495, 0.0
    %vm500 = vcmp.ne.f32.partialorder %v492, %v492
    %vm501 = vcmp.ne.f32.partialorder %v493, %v493
    %vm502 = vcmp.ne.f32.partialorder %v494, %v494
    %vm503 = vcmp.ne.f32.partialorder %v495, %v495
    %v504 = vadd.f32 %v492, 0.0
    %v505 = vadd.f32 %v493, 0.0
    %v506 = vadd.f32 %v494, 0.0
    %v507 = vadd.f32 %v495, 0.0
    %v508 = vand.u32 2147483647, %v492
    %v509 = vand.u32 2147483647, %v493
    %v510 = vand.u32 2147483647, %v494
    %v511 = vand.u32 2147483647, %v495
    %v512 = vsub.f32 0.0, %v508
    %v513 = vsub.f32 0.0, %v509
    %v514 = vsub.f32 0.0, %v510
    %v515 = vsub.f32 0.0, %v511
    %v516 = vmul.f32 %v512, 1.442695
    %v517 = vpow.pop %v516
    %v518 = vmul.f32 %v513, 1.442695
    %v519 = vpow.pop %v518
    %v520 = vmul.f32 %v514, 1.442695
    %v521 = vpow.pop %v520
    %v522 = vmul.f32 %v515, 1.442695
    %v523 = vpow.pop %v522
    %v524 = vadd.f32 %v517, 1.0
    %v525 = vlog2.pop %v524
    %v526 = vmul.f32 %v525, 0.6931472
    %v527 = vmul.f32 -0.5, %v517
    %v528 = vadd.f32 %v527, 1.0
    %v529 = vmul.f32 %v528, %v517
    %v530 = vand.u32 2147483647, %v517
    %vm531 = vcmp.lt.f32.partialorder %v530, 0.0004427343
    %v532 = vsel %vm531, %v529, %v526
    %v533 = vadd.f32 %v519, 1.0
    %v534 = vlog2.pop %v533
    %v535 = vmul.f32 %v534, 0.6931472
    %v536 = vmul.f32 -0.5, %v519
    %v537 = vadd.f32 %v536, 1.0
    %v538 = vmul.f32 %v537, %v519
    %v539 = vand.u32 2147483647, %v519
    %vm540 = vcmp.lt.f32.partialorder %v539, 0.0004427343
    %v541 = vsel %vm540, %v538, %v535
    %v542 = vadd.f32 %v521, 1.0
    %v543 = vlog2.pop %v542
    %v544 = vmul.f32 %v543, 0.6931472
    %v545 = vmul.f32 -0.5, %v521
    %v546 = vadd.f32 %v545, 1.0
    %v547 = vmul.f32 %v546, %v521
    %v548 = vand.u32 2147483647, %v521
    %vm549 = vcmp.lt.f32.partialorder %v548, 0.0004427343
    %v550 = vsel %vm549, %v547, %v544
    %v551 = vadd.f32 %v523, 1.0
    %v552 = vlog2.pop %v551
    %v553 = vmul.f32 %v552, 0.6931472
    %v554 = vmul.f32 -0.5, %v523
    %v555 = vadd.f32 %v554, 1.0
    %v556 = vmul.f32 %v555, %v523
    %v557 = vand.u32 2147483647, %v523
    %vm558 = vcmp.lt.f32.partialorder %v557, 0.0004427343
    %v559 = vsel %vm558, %v556, %v553
    %v560 = vadd.f32 %v496, %v532
    %v561 = vadd.f32 %v497, %v541
    %v562 = vadd.f32 %v498, %v550
    %v563 = vadd.f32 %v499, %v559
    %v564 = vsel %vm500, %v504, %v560
    %v565 = vsel %vm501, %v505, %v561
    %v566 = vsel %vm502, %v506, %v562
    %v567 = vsel %vm503, %v507, %v563
    %s568 = scalar_lea.vmem [#allocation8], 128
    %v569 = vld [vmem:[%s568] sm:$0xff]
    %v570 = vld [vmem:[%s568 + $0x8] sm:$0xff]
    %v571 = vld [vmem:[%s568 + $0x10] sm:$0xff]
    %v572 = vld [vmem:[%s568 + $0x18] sm:$0xff]
    %v573 = vmul.f32 %v564, %v569
    %v574 = vmul.f32 %v565, %v570
    %v575 = vmul.f32 %v566, %v571
    %v576 = vmul.f32 %v567, %v572
    %s577 = scalar_lea.vmem [#allocation8], 96
    %v578 = vld [vmem:[%s577] sm:$0xff]
    %v579 = vld [vmem:[%s577 + $0x8] sm:$0xff]
    %v580 = vld [vmem:[%s577 + $0x10] sm:$0xff]
    %v581 = vld [vmem:[%s577 + $0x18] sm:$0xff]
    %v582 = vmul.f32 %v573, %v578
    %v583 = vmul.f32 %v574, %v579
    %v584 = vmul.f32 %v575, %v580
    %v585 = vmul.f32 %v576, %v581
    %v586 = vld [vmem:[#allocation10] sm:$0x1]
    %v587 = vmax.f32 %v586, 0.0
    %vm588 = vcmp.ne.f32.partialorder %v586, %v586
    %v589 = vadd.f32 %v586, 0.0
    %v590 = vand.u32 2147483647, %v586
    %v591 = vsub.f32 0.0, %v590
    %v592 = vmul.f32 %v591, 1.442695
    %v593 = vpow.pop %v592
    %v594 = vadd.f32 %v593, 1.0
    %v595 = vlog2.pop %v594
    %v596 = vmul.f32 %v595, 0.6931472
    %v597 = vmul.f32 -0.5, %v593
    %v598 = vadd.f32 %v597, 1.0
    %v599 = vmul.f32 %v598, %v593
    %v600 = vand.u32 2147483647, %v593
    %vm601 = vcmp.lt.f32.partialorder %v600, 0.0004427343
    %v602 = vsel %vm601, %v599, %v596
    %v603 = vadd.f32 %v587, %v602
    %v604 = vsel %vm588, %v589, %v603
    %v605 = vld [vmem:[#allocation10 + $0x1] sm:$0x1]
    %v606 = vld [vmem:[#allocation10 + $0x2] sm:$0x1]
    %v607 = vmax.f32 %v606, 0.0
    %vm608 = vcmp.ne.f32.partialorder %v606, %v606
    %v609 = vadd.f32 %v606, 0.0
    %v610 = vand.u32 2147483647, %v606
    %v611 = vsub.f32 0.0, %v610
    %v612 = vmul.f32 %v611, 1.442695
    %v613 = vpow.pop %v612
    %v614 = vadd.f32 %v613, 1.0
    %v615 = vlog2.pop %v614
    %v616 = vmul.f32 %v615, 0.6931472
    %v617 = vmul.f32 -0.5, %v613
    %v618 = vadd.f32 %v617, 1.0
    %v619 = vmul.f32 %v618, %v613
    %v620 = vand.u32 2147483647, %v613
    %vm621 = vcmp.lt.f32.partialorder %v620, 0.0004427343
    %v622 = vsel %vm621, %v619, %v616
    %v623 = vadd.f32 %v607, %v622
    %v624 = vsel %vm608, %v609, %v623
    %v625 = vmul.f32 %v624, 6.0
    %v626 = vmul.f32 %v604, %v605
    %v627 = vld [vmem:[#allocation10 + $0x3] sm:$0x1]
    %v628 = vld [vmem:[#allocation10 + $0x4] sm:$0x1]
    %v629 = vsub.f32 0.0, %v482
    %v630 = vsub.f32 0.0, %v483
    %v631 = vsub.f32 0.0, %v484
    %v632 = vsub.f32 0.0, %v485
    %v633 = vmul.f32 %v487, %v629
    %v634 = vmul.f32 %v488, %v630
    %v635 = vmul.f32 %v489, %v631
    %v636 = vmul.f32 %v490, %v632
    %v637 = vxor.u32 %v633, 2147483648
    %v638 = vxor.u32 %v634, 2147483648
    %v639 = vxor.u32 %v635, 2147483648
    %v640 = vxor.u32 %v636, 2147483648
    %v641 = vmul.f32 %v637, 1.442695
    %v642 = vpow.pop %v641
    %v643 = vmul.f32 %v638, 1.442695
    %v644 = vpow.pop %v643
    %v645 = vmul.f32 %v639, 1.442695
    %v646 = vpow.pop %v645
    %v647 = vmul.f32 %v640, 1.442695
    %v648 = vpow.pop %v647
    %v649 = vadd.f32 %v642, 1.0
    %v650 = vadd.f32 %v644, 1.0
    %v651 = vadd.f32 %v646, 1.0
    %v652 = vadd.f32 %v648, 1.0
    %v653 = vrcp.pop %v649
    %v654 = vmul.f32 %v649, %v653
    %v655 = vsub.f32 1.0, %v654
    %v656 = vmul.f32 %v653, %v655
    %v657 = vadd.f32 %v653, %v656
    %vm658 = vweird.f32 %v649
    %vm659 = vweird.f32 %v653
    %vm660 = vmor %vm658, %vm659
    %v661 = vsel %vm660, %v653, %v657
    %v662 = vand.u32 2147483647, %v649
    %vm663 = vcmp.eq.f32.partialorder %v662, 8.507059e+37
    %v664 = vand.u32 %v649, 2147483648
    %v665 = vor.u32 1.1754944e-38, %v664
    %v666 = vsel %vm663, %v665, %v661
    %v667 = vmul.f32 1.0, %v666
    %v668 = vrcp.pop %v650
    %v669 = vmul.f32 %v650, %v668
    %v670 = vsub.f32 1.0, %v669
    %v671 = vmul.f32 %v668, %v670
    %v672 = vadd.f32 %v668, %v671
    %vm673 = vweird.f32 %v650
    %vm674 = vweird.f32 %v668
    %vm675 = vmor %vm673, %vm674
    %v676 = vsel %vm675, %v668, %v672
    %v677 = vand.u32 2147483647, %v650
    %vm678 = vcmp.eq.f32.partialorder %v677, 8.507059e+37
    %v679 = vand.u32 %v650, 2147483648
    %v680 = vor.u32 1.1754944e-38, %v679
    %v681 = vsel %vm678, %v680, %v676
    %v682 = vmul.f32 1.0, %v681
    %v683 = vrcp.pop %v651
    %v684 = vmul.f32 %v651, %v683
    %v685 = vsub.f32 1.0, %v684
    %v686 = vmul.f32 %v683, %v685
    %v687 = vadd.f32 %v683, %v686
    %vm688 = vweird.f32 %v651
    %vm689 = vweird.f32 %v683
    %vm690 = vmor %vm688, %vm689
    %v691 = vsel %vm690, %v683, %v687
    %v692 = vand.u32 2147483647, %v651
    %vm693 = vcmp.eq.f32.partialorder %v692, 8.507059e+37
    %v694 = vand.u32 %v651, 2147483648
    %v695 = vor.u32 1.1754944e-38, %v694
    %v696 = vsel %vm693, %v695, %v691
    %v697 = vmul.f32 1.0, %v696
    %v698 = vrcp.pop %v652
    %v699 = vmul.f32 %v652, %v698
    %v700 = vsub.f32 1.0, %v699
    %v701 = vmul.f32 %v698, %v700
    %v702 = vadd.f32 %v698, %v701
    %vm703 = vweird.f32 %v652
    %vm704 = vweird.f32 %v698
    %vm705 = vmor %vm703, %vm704
    %v706 = vsel %vm705, %v698, %v702
    %v707 = vand.u32 2147483647, %v652
    %vm708 = vcmp.eq.f32.partialorder %v707, 8.507059e+37
    %v709 = vand.u32 %v652, 2147483648
    %v710 = vor.u32 1.1754944e-38, %v709
    %v711 = vsel %vm708, %v710, %v706
    %v712 = vmul.f32 1.0, %v711
    %v713 = vmul.f32 %v667, %v582
    %v714 = vmul.f32 %v682, %v583
    %v715 = vmul.f32 %v697, %v584
    %v716 = vmul.f32 %v712, %v585
    %v717 = vsel %vm361, %v713, 0.0
    %v718 = vsel %vm361, %v714, 0.0
    %v719 = vadd.f32 %v717, %v718
    %v720 = vsel %vm361, %v715, 0.0
    %v721 = vadd.f32 %v719, %v720
    %v722 = vsel %vm361, %v716, 0.0
    %v723 = vadd.f32 %v721, %v722
    %v724 = vrot.slane %v723, 4
    %v725 = vadd.f32 %v723, %v724
    %v726 = vrot.slane %v725, 2
    %v727 = vadd.f32 %v725, %v726
    %v728 = vrot.slane %v727, 1
    %v729 = vadd.f32 %v727, %v728
    %v730 = vadd.f32 %v729, %v368
    %v731 = vadd.f32 %v729, %v375
    %v732 = vadd.f32 %v729, %v382
    %v733 = vadd.f32 %v729, %v389
    %v734 = vadd.f32 %v729, %v396
    %v735 = vadd.f32 %v729, %v403
    %v736 = vadd.f32 %v729, %v410
    %v737 = vadd.f32 %v729, %v417
    %v738 = vmul.f32 %v667, %v573
    %v739 = vmul.f32 %v682, %v574
    %v740 = vmul.f32 %v697, %v575
    %v741 = vmul.f32 %v712, %v576
    %v742 = vsel %vm361, %v738, 0.0
    %v743 = vsel %vm361, %v739, 0.0
    %v744 = vadd.f32 %v742, %v743
    %v745 = vsel %vm361, %v740, 0.0
    %v746 = vadd.f32 %v744, %v745
    %v747 = vsel %vm361, %v741, 0.0
    %v748 = vadd.f32 %v746, %v747
    %v749 = vrot.slane %v748, 4
    %v750 = vadd.f32 %v748, %v749
    %v751 = vrot.slane %v750, 2
    %v752 = vadd.f32 %v750, %v751
    %v753 = vrot.slane %v752, 1
    %v754 = vadd.f32 %v752, %v753
    %v755 = vadd.f32 %v754, %v432
    %v756 = vadd.f32 %v754, %v439
    %v757 = vadd.f32 %v754, %v446
    %v758 = vadd.f32 %v754, %v453
    %v759 = vadd.f32 %v754, %v460
    %v760 = vadd.f32 %v754, %v467
    %v761 = vadd.f32 %v754, %v474
    %v762 = vadd.f32 %v754, %v481
    %v763 = vperm.slane %v625, 0
    %v764 = vmul.f32 %v763, 0.0
    %v765 = vperm.slane %v626, 0
    %v766 = vadd.f32 %v764, %v765
    %vm775 = vcmask 1041409
    %v776 = vsel %vm775, %v731, %v730
    %vm777 = vcmask 1042434
    %v778 = vsel %vm777, %v732, %v776
    %vm779 = vcmask 1043459
    %v780 = vsel %vm779, %v733, %v778
    %vm781 = vcmask 1044484
    %v782 = vsel %vm781, %v734, %v780
    %vm783 = vcmask 1045509
    %v784 = vsel %vm783, %v735, %v782
    %vm785 = vcmask 1046534
    %v786 = vsel %vm785, %v736, %v784
    %vm787 = vcmask 1047559
    %v788 = vsel %vm787, %v737, %v786
    %v790 = vadd.f32 %v766, %v788
    %v791 = vadd.f32 %v625, %v604
    %v792 = vperm.slane %v791, 0
    %v801 = vsel %vm775, %v756, %v755
    %v802 = vsel %vm777, %v757, %v801
    %v803 = vsel %vm779, %v758, %v802
    %v804 = vsel %vm781, %v759, %v803
    %v805 = vsel %vm783, %v760, %v804
    %v806 = vsel %vm785, %v761, %v805
    %v807 = vsel %vm787, %v762, %v806
    %v809 = vadd.f32 %v792, %v807
    %v810 = vadd.f32 %v809, 1e-08
    %v811 = vrcp.pop %v810
    %v812 = vmul.f32 %v810, %v811
    %v813 = vsub.f32 1.0, %v812
    %v814 = vmul.f32 %v811, %v813
    %v815 = vadd.f32 %v811, %v814
    %vm816 = vweird.f32 %v810
    %vm817 = vweird.f32 %v811
    %vm818 = vmor %vm816, %vm817
    %v819 = vsel %vm818, %v811, %v815
    %v820 = vand.u32 2147483647, %v810
    %vm821 = vcmp.eq.f32.partialorder %v820, 8.507059e+37
    %v822 = vand.u32 %v810, 2147483648
    %v823 = vor.u32 1.1754944e-38, %v822
    %v824 = vsel %vm821, %v823, %v819
    %v825 = vmul.f32 %v790, %v824
    %v826 = vperm.slane %v825, 0
    %v827 = vlaneseq
    %v828 = vshrl.u32 %v827, 7
    %830 = vset.pattern.permute.xlu0 %v828
    %831 = vperm.xlu0 %830, %v826
    %v832 = vpop.permute.xlu0 %831
    %v833 = vlaneseq
    %v834 = vshrl.u32 %v833, 7
    %v835 = vadd.s32 %v834, 8
    %836 = vset.pattern.permute.xlu0 %v835
    %837 = vperm.xlu0 %836, %v826
    %v838 = vpop.permute.xlu0 %837
    %v839 = vlaneseq
    %v840 = vshrl.u32 %v839, 7
    %v841 = vadd.s32 %v840, 16
    %842 = vset.pattern.permute.xlu0 %v841
    %843 = vperm.xlu0 %842, %v826
    %v844 = vpop.permute.xlu0 %843
    %v845 = vlaneseq
    %v846 = vshrl.u32 %v845, 7
    %v847 = vadd.s32 %v846, 24
    %848 = vset.pattern.permute.xlu0 %v847
    %849 = vperm.xlu0 %848, %v826
    %v850 = vpop.permute.xlu0 %849
    %v851 = vperm.slane %v825, 1
    %v852 = vlaneseq
    %v853 = vshrl.u32 %v852, 7
    %855 = vset.pattern.permute.xlu0 %v853
    %856 = vperm.xlu0 %855, %v851
    %v857 = vpop.permute.xlu0 %856
    %v858 = vlaneseq
    %v859 = vshrl.u32 %v858, 7
    %v860 = vadd.s32 %v859, 8
    %861 = vset.pattern.permute.xlu0 %v860
    %862 = vperm.xlu0 %861, %v851
    %v863 = vpop.permute.xlu0 %862
    %v864 = vlaneseq
    %v865 = vshrl.u32 %v864, 7
    %v866 = vadd.s32 %v865, 16
    %867 = vset.pattern.permute.xlu0 %v866
    %868 = vperm.xlu0 %867, %v851
    %v869 = vpop.permute.xlu0 %868
    %v870 = vlaneseq
    %v871 = vshrl.u32 %v870, 7
    %v872 = vadd.s32 %v871, 24
    %873 = vset.pattern.permute.xlu0 %v872
    %874 = vperm.xlu0 %873, %v851
    %v875 = vpop.permute.xlu0 %874
    %v876 = vperm.slane %v825, 2
    %v877 = vlaneseq
    %v878 = vshrl.u32 %v877, 7
    %880 = vset.pattern.permute.xlu0 %v878
    %881 = vperm.xlu0 %880, %v876
    %v882 = vpop.permute.xlu0 %881
    %v883 = vlaneseq
    %v884 = vshrl.u32 %v883, 7
    %v885 = vadd.s32 %v884, 8
    %886 = vset.pattern.permute.xlu0 %v885
    %887 = vperm.xlu0 %886, %v876
    %v888 = vpop.permute.xlu0 %887
    %v889 = vlaneseq
    %v890 = vshrl.u32 %v889, 7
    %v891 = vadd.s32 %v890, 16
    %892 = vset.pattern.permute.xlu0 %v891
    %893 = vperm.xlu0 %892, %v876
    %v894 = vpop.permute.xlu0 %893
    %v895 = vlaneseq
    %v896 = vshrl.u32 %v895, 7
    %v897 = vadd.s32 %v896, 24
    %898 = vset.pattern.permute.xlu0 %v897
    %899 = vperm.xlu0 %898, %v876
    %v900 = vpop.permute.xlu0 %899
    %v901 = vperm.slane %v825, 3
    %v902 = vlaneseq
    %v903 = vshrl.u32 %v902, 7
    %905 = vset.pattern.permute.xlu0 %v903
    %906 = vperm.xlu0 %905, %v901
    %v907 = vpop.permute.xlu0 %906
    %v908 = vlaneseq
    %v909 = vshrl.u32 %v908, 7
    %v910 = vadd.s32 %v909, 8
    %911 = vset.pattern.permute.xlu0 %v910
    %912 = vperm.xlu0 %911, %v901
    %v913 = vpop.permute.xlu0 %912
    %v914 = vlaneseq
    %v915 = vshrl.u32 %v914, 7
    %v916 = vadd.s32 %v915, 16
    %917 = vset.pattern.permute.xlu0 %v916
    %918 = vperm.xlu0 %917, %v901
    %v919 = vpop.permute.xlu0 %918
    %v920 = vlaneseq
    %v921 = vshrl.u32 %v920, 7
    %v922 = vadd.s32 %v921, 24
    %923 = vset.pattern.permute.xlu0 %v922
    %924 = vperm.xlu0 %923, %v901
    %v925 = vpop.permute.xlu0 %924
    %v926 = vperm.slane %v825, 4
    %v927 = vlaneseq
    %v928 = vshrl.u32 %v927, 7
    %930 = vset.pattern.permute.xlu0 %v928
    %931 = vperm.xlu0 %930, %v926
    %v932 = vpop.permute.xlu0 %931
    %v933 = vlaneseq
    %v934 = vshrl.u32 %v933, 7
    %v935 = vadd.s32 %v934, 8
    %936 = vset.pattern.permute.xlu0 %v935
    %937 = vperm.xlu0 %936, %v926
    %v938 = vpop.permute.xlu0 %937
    %v939 = vlaneseq
    %v940 = vshrl.u32 %v939, 7
    %v941 = vadd.s32 %v940, 16
    %942 = vset.pattern.permute.xlu0 %v941
    %943 = vperm.xlu0 %942, %v926
    %v944 = vpop.permute.xlu0 %943
    %v945 = vlaneseq
    %v946 = vshrl.u32 %v945, 7
    %v947 = vadd.s32 %v946, 24
    %948 = vset.pattern.permute.xlu0 %v947
    %949 = vperm.xlu0 %948, %v926
    %v950 = vpop.permute.xlu0 %949
    %v951 = vperm.slane %v825, 5
    %v952 = vlaneseq
    %v953 = vshrl.u32 %v952, 7
    %955 = vset.pattern.permute.xlu0 %v953
    %956 = vperm.xlu0 %955, %v951
    %v957 = vpop.permute.xlu0 %956
    %v958 = vlaneseq
    %v959 = vshrl.u32 %v958, 7
    %v960 = vadd.s32 %v959, 8
    %961 = vset.pattern.permute.xlu0 %v960
    %962 = vperm.xlu0 %961, %v951
    %v963 = vpop.permute.xlu0 %962
    %v964 = vlaneseq
    %v965 = vshrl.u32 %v964, 7
    %v966 = vadd.s32 %v965, 16
    %967 = vset.pattern.permute.xlu0 %v966
    %968 = vperm.xlu0 %967, %v951
    %v969 = vpop.permute.xlu0 %968
    %v970 = vlaneseq
    %v971 = vshrl.u32 %v970, 7
    %v972 = vadd.s32 %v971, 24
    %973 = vset.pattern.permute.xlu0 %v972
    %974 = vperm.xlu0 %973, %v951
    %v975 = vpop.permute.xlu0 %974
    %v976 = vperm.slane %v825, 6
    %v977 = vlaneseq
    %v978 = vshrl.u32 %v977, 7
    %980 = vset.pattern.permute.xlu0 %v978
    %981 = vperm.xlu0 %980, %v976
    %v982 = vpop.permute.xlu0 %981
    %v983 = vlaneseq
    %v984 = vshrl.u32 %v983, 7
    %v985 = vadd.s32 %v984, 8
    %986 = vset.pattern.permute.xlu0 %v985
    %987 = vperm.xlu0 %986, %v976
    %v988 = vpop.permute.xlu0 %987
    %v989 = vlaneseq
    %v990 = vshrl.u32 %v989, 7
    %v991 = vadd.s32 %v990, 16
    %992 = vset.pattern.permute.xlu0 %v991
    %993 = vperm.xlu0 %992, %v976
    %v994 = vpop.permute.xlu0 %993
    %v995 = vlaneseq
    %v996 = vshrl.u32 %v995, 7
    %v997 = vadd.s32 %v996, 24
    %998 = vset.pattern.permute.xlu0 %v997
    %999 = vperm.xlu0 %998, %v976
    %v1000 = vpop.permute.xlu0 %999
    %v1001 = vperm.slane %v825, 7
    %v1002 = vlaneseq
    %v1003 = vshrl.u32 %v1002, 7
    %1005 = vset.pattern.permute.xlu0 %v1003
    %1006 = vperm.xlu0 %1005, %v1001
    %v1007 = vpop.permute.xlu0 %1006
    %v1008 = vlaneseq
    %v1009 = vshrl.u32 %v1008, 7
    %v1010 = vadd.s32 %v1009, 8
    %1011 = vset.pattern.permute.xlu0 %v1010
    %1012 = vperm.xlu0 %1011, %v1001
    %v1013 = vpop.permute.xlu0 %1012
    %v1014 = vlaneseq
    %v1015 = vshrl.u32 %v1014, 7
    %v1016 = vadd.s32 %v1015, 16
    %1017 = vset.pattern.permute.xlu0 %v1016
    %1018 = vperm.xlu0 %1017, %v1001
    %v1019 = vpop.permute.xlu0 %1018
    %v1020 = vlaneseq
    %v1021 = vshrl.u32 %v1020, 7
    %v1022 = vadd.s32 %v1021, 24
    %1023 = vset.pattern.permute.xlu0 %v1022
    %1024 = vperm.xlu0 %1023, %v1001
    %v1025 = vpop.permute.xlu0 %1024
    %v1026 = vsub.f32 %v832, %v482
    %v1027 = vsub.f32 %v838, %v483
    %v1028 = vsub.f32 %v844, %v484
    %v1029 = vsub.f32 %v850, %v485
    %v1030 = vsub.f32 %v857, %v482
    %v1031 = vsub.f32 %v863, %v483
    %v1032 = vsub.f32 %v869, %v484
    %v1033 = vsub.f32 %v875, %v485
    %v1034 = vsub.f32 %v882, %v482
    %v1035 = vsub.f32 %v888, %v483
    %v1036 = vsub.f32 %v894, %v484
    %v1037 = vsub.f32 %v900, %v485
    %v1038 = vsub.f32 %v907, %v482
    %v1039 = vsub.f32 %v913, %v483
    %v1040 = vsub.f32 %v919, %v484
    %v1041 = vsub.f32 %v925, %v485
    %v1042 = vsub.f32 %v932, %v482
    %v1043 = vsub.f32 %v938, %v483
    %v1044 = vsub.f32 %v944, %v484
    %v1045 = vsub.f32 %v950, %v485
    %v1046 = vsub.f32 %v957, %v482
    %v1047 = vsub.f32 %v963, %v483
    %v1048 = vsub.f32 %v969, %v484
    %v1049 = vsub.f32 %v975, %v485
    %v1050 = vsub.f32 %v982, %v482
    %v1051 = vsub.f32 %v988, %v483
    %v1052 = vsub.f32 %v994, %v484
    %v1053 = vsub.f32 %v1000, %v485
    %v1054 = vsub.f32 %v1007, %v482
    %v1055 = vsub.f32 %v1013, %v483
    %v1056 = vsub.f32 %v1019, %v484
    %v1057 = vsub.f32 %v1025, %v485
    %v1058 = vmul.f32 %v487, %v1026
    %v1059 = vmul.f32 %v488, %v1027
    %v1060 = vmul.f32 %v489, %v1028
    %v1061 = vmul.f32 %v490, %v1029
    %v1062 = vmul.f32 %v487, %v1030
    %v1063 = vmul.f32 %v488, %v1031
    %v1064 = vmul.f32 %v489, %v1032
    %v1065 = vmul.f32 %v490, %v1033
    %v1066 = vmul.f32 %v487, %v1034
    %v1067 = vmul.f32 %v488, %v1035
    %v1068 = vmul.f32 %v489, %v1036
    %v1069 = vmul.f32 %v490, %v1037
    %v1070 = vmul.f32 %v487, %v1038
    %v1071 = vmul.f32 %v488, %v1039
    %v1072 = vmul.f32 %v489, %v1040
    %v1073 = vmul.f32 %v490, %v1041
    %v1074 = vmul.f32 %v487, %v1042
    %v1075 = vmul.f32 %v488, %v1043
    %v1076 = vmul.f32 %v489, %v1044
    %v1077 = vmul.f32 %v490, %v1045
    %v1078 = vmul.f32 %v487, %v1046
    %v1079 = vmul.f32 %v488, %v1047
    %v1080 = vmul.f32 %v489, %v1048
    %v1081 = vmul.f32 %v490, %v1049
    %v1082 = vmul.f32 %v487, %v1050
    %v1083 = vmul.f32 %v488, %v1051
    %v1084 = vmul.f32 %v489, %v1052
    %v1085 = vmul.f32 %v490, %v1053
    %v1086 = vmul.f32 %v487, %v1054
    %v1087 = vmul.f32 %v488, %v1055
    %v1088 = vmul.f32 %v489, %v1056
    %v1089 = vmul.f32 %v490, %v1057
    %v1090 = vxor.u32 %v1058, 2147483648
    %v1091 = vxor.u32 %v1059, 2147483648
    %v1092 = vxor.u32 %v1060, 2147483648
    %v1093 = vxor.u32 %v1061, 2147483648
    %v1094 = vxor.u32 %v1062, 2147483648
    %v1095 = vxor.u32 %v1063, 2147483648
    %v1096 = vxor.u32 %v1064, 2147483648
    %v1097 = vxor.u32 %v1065, 2147483648
    %v1098 = vxor.u32 %v1066, 2147483648
    %v1099 = vxor.u32 %v1067, 2147483648
    %v1100 = vxor.u32 %v1068, 2147483648
    %v1101 = vxor.u32 %v1069, 2147483648
    %v1102 = vxor.u32 %v1070, 2147483648
    %v1103 = vxor.u32 %v1071, 2147483648
    %v1104 = vxor.u32 %v1072, 2147483648
    %v1105 = vxor.u32 %v1073, 2147483648
    %v1106 = vxor.u32 %v1074, 2147483648
    %v1107 = vxor.u32 %v1075, 2147483648
    %v1108 = vxor.u32 %v1076, 2147483648
    %v1109 = vxor.u32 %v1077, 2147483648
    %v1110 = vxor.u32 %v1078, 2147483648
    %v1111 = vxor.u32 %v1079, 2147483648
    %v1112 = vxor.u32 %v1080, 2147483648
    %v1113 = vxor.u32 %v1081, 2147483648
    %v1114 = vxor.u32 %v1082, 2147483648
    %v1115 = vxor.u32 %v1083, 2147483648
    %v1116 = vxor.u32 %v1084, 2147483648
    %v1117 = vxor.u32 %v1085, 2147483648
    %v1118 = vxor.u32 %v1086, 2147483648
    %v1119 = vxor.u32 %v1087, 2147483648
    %v1120 = vxor.u32 %v1088, 2147483648
    %v1121 = vxor.u32 %v1089, 2147483648
    %v1122 = vmul.f32 %v1090, 1.442695
    %v1123 = vpow.pop %v1122
    %v1124 = vmul.f32 %v1091, 1.442695
    %v1125 = vpow.pop %v1124
    %v1126 = vmul.f32 %v1092, 1.442695
    %v1127 = vpow.pop %v1126
    %v1128 = vmul.f32 %v1093, 1.442695
    %v1129 = vpow.pop %v1128
    %v1130 = vmul.f32 %v1094, 1.442695
    %v1131 = vpow.pop %v1130
    %v1132 = vmul.f32 %v1095, 1.442695
    %v1133 = vpow.pop %v1132
    %v1134 = vmul.f32 %v1096, 1.442695
    %v1135 = vpow.pop %v1134
    %v1136 = vmul.f32 %v1097, 1.442695
    %v1137 = vpow.pop %v1136
    %v1138 = vmul.f32 %v1098, 1.442695
    %v1139 = vpow.pop %v1138
    %v1140 = vmul.f32 %v1099, 1.442695
    %v1141 = vpow.pop %v1140
    %v1142 = vmul.f32 %v1100, 1.442695
    %v1143 = vpow.pop %v1142
    %v1144 = vmul.f32 %v1101, 1.442695
    %v1145 = vpow.pop %v1144
    %v1146 = vmul.f32 %v1102, 1.442695
    %v1147 = vpow.pop %v1146
    %v1148 = vmul.f32 %v1103, 1.442695
    %v1149 = vpow.pop %v1148
    %v1150 = vmul.f32 %v1104, 1.442695
    %v1151 = vpow.pop %v1150
    %v1152 = vmul.f32 %v1105, 1.442695
    %v1153 = vpow.pop %v1152
    %v1154 = vmul.f32 %v1106, 1.442695
    %v1155 = vpow.pop %v1154
    %v1156 = vmul.f32 %v1107, 1.442695
    %v1157 = vpow.pop %v1156
    %v1158 = vmul.f32 %v1108, 1.442695
    %v1159 = vpow.pop %v1158
    %v1160 = vmul.f32 %v1109, 1.442695
    %v1161 = vpow.pop %v1160
    %v1162 = vmul.f32 %v1110, 1.442695
    %v1163 = vpow.pop %v1162
    %v1164 = vmul.f32 %v1111, 1.442695
    %v1165 = vpow.pop %v1164
    %v1166 = vmul.f32 %v1112, 1.442695
    %v1167 = vpow.pop %v1166
    %v1168 = vmul.f32 %v1113, 1.442695
    %v1169 = vpow.pop %v1168
    %v1170 = vmul.f32 %v1114, 1.442695
    %v1171 = vpow.pop %v1170
    %v1172 = vmul.f32 %v1115, 1.442695
    %v1173 = vpow.pop %v1172
    %v1174 = vmul.f32 %v1116, 1.442695
    %v1175 = vpow.pop %v1174
    %v1176 = vmul.f32 %v1117, 1.442695
    %v1177 = vpow.pop %v1176
    %v1178 = vmul.f32 %v1118, 1.442695
    %v1179 = vpow.pop %v1178
    %v1180 = vmul.f32 %v1119, 1.442695
    %v1181 = vpow.pop %v1180
    %v1182 = vmul.f32 %v1120, 1.442695
    %v1183 = vpow.pop %v1182
    %v1184 = vmul.f32 %v1121, 1.442695
    %v1185 = vpow.pop %v1184
    %v1186 = vadd.f32 %v1123, 1.0
    %v1187 = vadd.f32 %v1125, 1.0
    %v1188 = vadd.f32 %v1127, 1.0
    %v1189 = vadd.f32 %v1129, 1.0
    %v1190 = vadd.f32 %v1131, 1.0
    %v1191 = vadd.f32 %v1133, 1.0
    %v1192 = vadd.f32 %v1135, 1.0
    %v1193 = vadd.f32 %v1137, 1.0
    %v1194 = vadd.f32 %v1139, 1.0
    %v1195 = vadd.f32 %v1141, 1.0
    %v1196 = vadd.f32 %v1143, 1.0
    %v1197 = vadd.f32 %v1145, 1.0
    %v1198 = vadd.f32 %v1147, 1.0
    %v1199 = vadd.f32 %v1149, 1.0
    %v1200 = vadd.f32 %v1151, 1.0
    %v1201 = vadd.f32 %v1153, 1.0
    %v1202 = vadd.f32 %v1155, 1.0
    %v1203 = vadd.f32 %v1157, 1.0
    %v1204 = vadd.f32 %v1159, 1.0
    %v1205 = vadd.f32 %v1161, 1.0
    %v1206 = vadd.f32 %v1163, 1.0
    %v1207 = vadd.f32 %v1165, 1.0
    %v1208 = vadd.f32 %v1167, 1.0
    %v1209 = vadd.f32 %v1169, 1.0
    %v1210 = vadd.f32 %v1171, 1.0
    %v1211 = vadd.f32 %v1173, 1.0
    %v1212 = vadd.f32 %v1175, 1.0
    %v1213 = vadd.f32 %v1177, 1.0
    %v1214 = vadd.f32 %v1179, 1.0
    %v1215 = vadd.f32 %v1181, 1.0
    %v1216 = vadd.f32 %v1183, 1.0
    %v1217 = vadd.f32 %v1185, 1.0
    %v1218 = vrcp.pop %v1186
    %v1219 = vmul.f32 %v1186, %v1218
    %v1220 = vsub.f32 1.0, %v1219
    %v1221 = vmul.f32 %v1218, %v1220
    %v1222 = vadd.f32 %v1218, %v1221
    %vm1223 = vweird.f32 %v1186
    %vm1224 = vweird.f32 %v1218
    %vm1225 = vmor %vm1223, %vm1224
    %v1226 = vsel %vm1225, %v1218, %v1222
    %v1227 = vand.u32 2147483647, %v1186
    %vm1228 = vcmp.eq.f32.partialorder %v1227, 8.507059e+37
    %v1229 = vand.u32 %v1186, 2147483648
    %v1230 = vor.u32 1.1754944e-38, %v1229
    %v1231 = vsel %vm1228, %v1230, %v1226
    %v1232 = vmul.f32 1.0, %v1231
    %v1233 = vrcp.pop %v1187
    %v1234 = vmul.f32 %v1187, %v1233
    %v1235 = vsub.f32 1.0, %v1234
    %v1236 = vmul.f32 %v1233, %v1235
    %v1237 = vadd.f32 %v1233, %v1236
    %vm1238 = vweird.f32 %v1187
    %vm1239 = vweird.f32 %v1233
    %vm1240 = vmor %vm1238, %vm1239
    %v1241 = vsel %vm1240, %v1233, %v1237
    %v1242 = vand.u32 2147483647, %v1187
    %vm1243 = vcmp.eq.f32.partialorder %v1242, 8.507059e+37
    %v1244 = vand.u32 %v1187, 2147483648
    %v1245 = vor.u32 1.1754944e-38, %v1244
    %v1246 = vsel %vm1243, %v1245, %v1241
    %v1247 = vmul.f32 1.0, %v1246
    %v1248 = vrcp.pop %v1188
    %v1249 = vmul.f32 %v1188, %v1248
    %v1250 = vsub.f32 1.0, %v1249
    %v1251 = vmul.f32 %v1248, %v1250
    %v1252 = vadd.f32 %v1248, %v1251
    %vm1253 = vweird.f32 %v1188
    %vm1254 = vweird.f32 %v1248
    %vm1255 = vmor %vm1253, %vm1254
    %v1256 = vsel %vm1255, %v1248, %v1252
    %v1257 = vand.u32 2147483647, %v1188
    %vm1258 = vcmp.eq.f32.partialorder %v1257, 8.507059e+37
    %v1259 = vand.u32 %v1188, 2147483648
    %v1260 = vor.u32 1.1754944e-38, %v1259
    %v1261 = vsel %vm1258, %v1260, %v1256
    %v1262 = vmul.f32 1.0, %v1261
    %v1263 = vrcp.pop %v1189
    %v1264 = vmul.f32 %v1189, %v1263
    %v1265 = vsub.f32 1.0, %v1264
    %v1266 = vmul.f32 %v1263, %v1265
    %v1267 = vadd.f32 %v1263, %v1266
    %vm1268 = vweird.f32 %v1189
    %vm1269 = vweird.f32 %v1263
    %vm1270 = vmor %vm1268, %vm1269
    %v1271 = vsel %vm1270, %v1263, %v1267
    %v1272 = vand.u32 2147483647, %v1189
    %vm1273 = vcmp.eq.f32.partialorder %v1272, 8.507059e+37
    %v1274 = vand.u32 %v1189, 2147483648
    %v1275 = vor.u32 1.1754944e-38, %v1274
    %v1276 = vsel %vm1273, %v1275, %v1271
    %v1277 = vmul.f32 1.0, %v1276
    %v1278 = vrcp.pop %v1190
    %v1279 = vmul.f32 %v1190, %v1278
    %v1280 = vsub.f32 1.0, %v1279
    %v1281 = vmul.f32 %v1278, %v1280
    %v1282 = vadd.f32 %v1278, %v1281
    %vm1283 = vweird.f32 %v1190
    %vm1284 = vweird.f32 %v1278
    %vm1285 = vmor %vm1283, %vm1284
    %v1286 = vsel %vm1285, %v1278, %v1282
    %v1287 = vand.u32 2147483647, %v1190
    %vm1288 = vcmp.eq.f32.partialorder %v1287, 8.507059e+37
    %v1289 = vand.u32 %v1190, 2147483648
    %v1290 = vor.u32 1.1754944e-38, %v1289
    %v1291 = vsel %vm1288, %v1290, %v1286
    %v1292 = vmul.f32 1.0, %v1291
    %v1293 = vrcp.pop %v1191
    %v1294 = vmul.f32 %v1191, %v1293
    %v1295 = vsub.f32 1.0, %v1294
    %v1296 = vmul.f32 %v1293, %v1295
    %v1297 = vadd.f32 %v1293, %v1296
    %vm1298 = vweird.f32 %v1191
    %vm1299 = vweird.f32 %v1293
    %vm1300 = vmor %vm1298, %vm1299
    %v1301 = vsel %vm1300, %v1293, %v1297
    %v1302 = vand.u32 2147483647, %v1191
    %vm1303 = vcmp.eq.f32.partialorder %v1302, 8.507059e+37
    %v1304 = vand.u32 %v1191, 2147483648
    %v1305 = vor.u32 1.1754944e-38, %v1304
    %v1306 = vsel %vm1303, %v1305, %v1301
    %v1307 = vmul.f32 1.0, %v1306
    %v1308 = vrcp.pop %v1192
    %v1309 = vmul.f32 %v1192, %v1308
    %v1310 = vsub.f32 1.0, %v1309
    %v1311 = vmul.f32 %v1308, %v1310
    %v1312 = vadd.f32 %v1308, %v1311
    %vm1313 = vweird.f32 %v1192
    %vm1314 = vweird.f32 %v1308
    %vm1315 = vmor %vm1313, %vm1314
    %v1316 = vsel %vm1315, %v1308, %v1312
    %v1317 = vand.u32 2147483647, %v1192
    %vm1318 = vcmp.eq.f32.partialorder %v1317, 8.507059e+37
    %v1319 = vand.u32 %v1192, 2147483648
    %v1320 = vor.u32 1.1754944e-38, %v1319
    %v1321 = vsel %vm1318, %v1320, %v1316
    %v1322 = vmul.f32 1.0, %v1321
    %v1323 = vrcp.pop %v1193
    %v1324 = vmul.f32 %v1193, %v1323
    %v1325 = vsub.f32 1.0, %v1324
    %v1326 = vmul.f32 %v1323, %v1325
    %v1327 = vadd.f32 %v1323, %v1326
    %vm1328 = vweird.f32 %v1193
    %vm1329 = vweird.f32 %v1323
    %vm1330 = vmor %vm1328, %vm1329
    %v1331 = vsel %vm1330, %v1323, %v1327
    %v1332 = vand.u32 2147483647, %v1193
    %vm1333 = vcmp.eq.f32.partialorder %v1332, 8.507059e+37
    %v1334 = vand.u32 %v1193, 2147483648
    %v1335 = vor.u32 1.1754944e-38, %v1334
    %v1336 = vsel %vm1333, %v1335, %v1331
    %v1337 = vmul.f32 1.0, %v1336
    %v1338 = vrcp.pop %v1194
    %v1339 = vmul.f32 %v1194, %v1338
    %v1340 = vsub.f32 1.0, %v1339
    %v1341 = vmul.f32 %v1338, %v1340
    %v1342 = vadd.f32 %v1338, %v1341
    %vm1343 = vweird.f32 %v1194
    %vm1344 = vweird.f32 %v1338
    %vm1345 = vmor %vm1343, %vm1344
    %v1346 = vsel %vm1345, %v1338, %v1342
    %v1347 = vand.u32 2147483647, %v1194
    %vm1348 = vcmp.eq.f32.partialorder %v1347, 8.507059e+37
    %v1349 = vand.u32 %v1194, 2147483648
    %v1350 = vor.u32 1.1754944e-38, %v1349
    %v1351 = vsel %vm1348, %v1350, %v1346
    %v1352 = vmul.f32 1.0, %v1351
    %v1353 = vrcp.pop %v1195
    %v1354 = vmul.f32 %v1195, %v1353
    %v1355 = vsub.f32 1.0, %v1354
    %v1356 = vmul.f32 %v1353, %v1355
    %v1357 = vadd.f32 %v1353, %v1356
    %vm1358 = vweird.f32 %v1195
    %vm1359 = vweird.f32 %v1353
    %vm1360 = vmor %vm1358, %vm1359
    %v1361 = vsel %vm1360, %v1353, %v1357
    %v1362 = vand.u32 2147483647, %v1195
    %vm1363 = vcmp.eq.f32.partialorder %v1362, 8.507059e+37
    %v1364 = vand.u32 %v1195, 2147483648
    %v1365 = vor.u32 1.1754944e-38, %v1364
    %v1366 = vsel %vm1363, %v1365, %v1361
    %v1367 = vmul.f32 1.0, %v1366
    %v1368 = vrcp.pop %v1196
    %v1369 = vmul.f32 %v1196, %v1368
    %v1370 = vsub.f32 1.0, %v1369
    %v1371 = vmul.f32 %v1368, %v1370
    %v1372 = vadd.f32 %v1368, %v1371
    %vm1373 = vweird.f32 %v1196
    %vm1374 = vweird.f32 %v1368
    %vm1375 = vmor %vm1373, %vm1374
    %v1376 = vsel %vm1375, %v1368, %v1372
    %v1377 = vand.u32 2147483647, %v1196
    %vm1378 = vcmp.eq.f32.partialorder %v1377, 8.507059e+37
    %v1379 = vand.u32 %v1196, 2147483648
    %v1380 = vor.u32 1.1754944e-38, %v1379
    %v1381 = vsel %vm1378, %v1380, %v1376
    %v1382 = vmul.f32 1.0, %v1381
    %v1383 = vrcp.pop %v1197
    %v1384 = vmul.f32 %v1197, %v1383
    %v1385 = vsub.f32 1.0, %v1384
    %v1386 = vmul.f32 %v1383, %v1385
    %v1387 = vadd.f32 %v1383, %v1386
    %vm1388 = vweird.f32 %v1197
    %vm1389 = vweird.f32 %v1383
    %vm1390 = vmor %vm1388, %vm1389
    %v1391 = vsel %vm1390, %v1383, %v1387
    %v1392 = vand.u32 2147483647, %v1197
    %vm1393 = vcmp.eq.f32.partialorder %v1392, 8.507059e+37
    %v1394 = vand.u32 %v1197, 2147483648
    %v1395 = vor.u32 1.1754944e-38, %v1394
    %v1396 = vsel %vm1393, %v1395, %v1391
    %v1397 = vmul.f32 1.0, %v1396
    %v1398 = vrcp.pop %v1198
    %v1399 = vmul.f32 %v1198, %v1398
    %v1400 = vsub.f32 1.0, %v1399
    %v1401 = vmul.f32 %v1398, %v1400
    %v1402 = vadd.f32 %v1398, %v1401
    %vm1403 = vweird.f32 %v1198
    %vm1404 = vweird.f32 %v1398
    %vm1405 = vmor %vm1403, %vm1404
    %v1406 = vsel %vm1405, %v1398, %v1402
    %v1407 = vand.u32 2147483647, %v1198
    %vm1408 = vcmp.eq.f32.partialorder %v1407, 8.507059e+37
    %v1409 = vand.u32 %v1198, 2147483648
    %v1410 = vor.u32 1.1754944e-38, %v1409
    %v1411 = vsel %vm1408, %v1410, %v1406
    %v1412 = vmul.f32 1.0, %v1411
    %v1413 = vrcp.pop %v1199
    %v1414 = vmul.f32 %v1199, %v1413
    %v1415 = vsub.f32 1.0, %v1414
    %v1416 = vmul.f32 %v1413, %v1415
    %v1417 = vadd.f32 %v1413, %v1416
    %vm1418 = vweird.f32 %v1199
    %vm1419 = vweird.f32 %v1413
    %vm1420 = vmor %vm1418, %vm1419
    %v1421 = vsel %vm1420, %v1413, %v1417
    %v1422 = vand.u32 2147483647, %v1199
    %vm1423 = vcmp.eq.f32.partialorder %v1422, 8.507059e+37
    %v1424 = vand.u32 %v1199, 2147483648
    %v1425 = vor.u32 1.1754944e-38, %v1424
    %v1426 = vsel %vm1423, %v1425, %v1421
    %v1427 = vmul.f32 1.0, %v1426
    %v1428 = vrcp.pop %v1200
    %v1429 = vmul.f32 %v1200, %v1428
    %v1430 = vsub.f32 1.0, %v1429
    %v1431 = vmul.f32 %v1428, %v1430
    %v1432 = vadd.f32 %v1428, %v1431
    %vm1433 = vweird.f32 %v1200
    %vm1434 = vweird.f32 %v1428
    %vm1435 = vmor %vm1433, %vm1434
    %v1436 = vsel %vm1435, %v1428, %v1432
    %v1437 = vand.u32 2147483647, %v1200
    %vm1438 = vcmp.eq.f32.partialorder %v1437, 8.507059e+37
    %v1439 = vand.u32 %v1200, 2147483648
    %v1440 = vor.u32 1.1754944e-38, %v1439
    %v1441 = vsel %vm1438, %v1440, %v1436
    %v1442 = vmul.f32 1.0, %v1441
    %v1443 = vrcp.pop %v1201
    %v1444 = vmul.f32 %v1201, %v1443
    %v1445 = vsub.f32 1.0, %v1444
    %v1446 = vmul.f32 %v1443, %v1445
    %v1447 = vadd.f32 %v1443, %v1446
    %vm1448 = vweird.f32 %v1201
    %vm1449 = vweird.f32 %v1443
    %vm1450 = vmor %vm1448, %vm1449
    %v1451 = vsel %vm1450, %v1443, %v1447
    %v1452 = vand.u32 2147483647, %v1201
    %vm1453 = vcmp.eq.f32.partialorder %v1452, 8.507059e+37
    %v1454 = vand.u32 %v1201, 2147483648
    %v1455 = vor.u32 1.1754944e-38, %v1454
    %v1456 = vsel %vm1453, %v1455, %v1451
    %v1457 = vmul.f32 1.0, %v1456
    %v1458 = vrcp.pop %v1202
    %v1459 = vmul.f32 %v1202, %v1458
    %v1460 = vsub.f32 1.0, %v1459
    %v1461 = vmul.f32 %v1458, %v1460
    %v1462 = vadd.f32 %v1458, %v1461
    %vm1463 = vweird.f32 %v1202
    %vm1464 = vweird.f32 %v1458
    %vm1465 = vmor %vm1463, %vm1464
    %v1466 = vsel %vm1465, %v1458, %v1462
    %v1467 = vand.u32 2147483647, %v1202
    %vm1468 = vcmp.eq.f32.partialorder %v1467, 8.507059e+37
    %v1469 = vand.u32 %v1202, 2147483648
    %v1470 = vor.u32 1.1754944e-38, %v1469
    %v1471 = vsel %vm1468, %v1470, %v1466
    %v1472 = vmul.f32 1.0, %v1471
    %v1473 = vrcp.pop %v1203
    %v1474 = vmul.f32 %v1203, %v1473
    %v1475 = vsub.f32 1.0, %v1474
    %v1476 = vmul.f32 %v1473, %v1475
    %v1477 = vadd.f32 %v1473, %v1476
    %vm1478 = vweird.f32 %v1203
    %vm1479 = vweird.f32 %v1473
    %vm1480 = vmor %vm1478, %vm1479
    %v1481 = vsel %vm1480, %v1473, %v1477
    %v1482 = vand.u32 2147483647, %v1203
    %vm1483 = vcmp.eq.f32.partialorder %v1482, 8.507059e+37
    %v1484 = vand.u32 %v1203, 2147483648
    %v1485 = vor.u32 1.1754944e-38, %v1484
    %v1486 = vsel %vm1483, %v1485, %v1481
    %v1487 = vmul.f32 1.0, %v1486
    %v1488 = vrcp.pop %v1204
    %v1489 = vmul.f32 %v1204, %v1488
    %v1490 = vsub.f32 1.0, %v1489
    %v1491 = vmul.f32 %v1488, %v1490
    %v1492 = vadd.f32 %v1488, %v1491
    %vm1493 = vweird.f32 %v1204
    %vm1494 = vweird.f32 %v1488
    %vm1495 = vmor %vm1493, %vm1494
    %v1496 = vsel %vm1495, %v1488, %v1492
    %v1497 = vand.u32 2147483647, %v1204
    %vm1498 = vcmp.eq.f32.partialorder %v1497, 8.507059e+37
    %v1499 = vand.u32 %v1204, 2147483648
    %v1500 = vor.u32 1.1754944e-38, %v1499
    %v1501 = vsel %vm1498, %v1500, %v1496
    %v1502 = vmul.f32 1.0, %v1501
    %v1503 = vrcp.pop %v1205
    %v1504 = vmul.f32 %v1205, %v1503
    %v1505 = vsub.f32 1.0, %v1504
    %v1506 = vmul.f32 %v1503, %v1505
    %v1507 = vadd.f32 %v1503, %v1506
    %vm1508 = vweird.f32 %v1205
    %vm1509 = vweird.f32 %v1503
    %vm1510 = vmor %vm1508, %vm1509
    %v1511 = vsel %vm1510, %v1503, %v1507
    %v1512 = vand.u32 2147483647, %v1205
    %vm1513 = vcmp.eq.f32.partialorder %v1512, 8.507059e+37
    %v1514 = vand.u32 %v1205, 2147483648
    %v1515 = vor.u32 1.1754944e-38, %v1514
    %v1516 = vsel %vm1513, %v1515, %v1511
    %v1517 = vmul.f32 1.0, %v1516
    %v1518 = vrcp.pop %v1206
    %v1519 = vmul.f32 %v1206, %v1518
    %v1520 = vsub.f32 1.0, %v1519
    %v1521 = vmul.f32 %v1518, %v1520
    %v1522 = vadd.f32 %v1518, %v1521
    %vm1523 = vweird.f32 %v1206
    %vm1524 = vweird.f32 %v1518
    %vm1525 = vmor %vm1523, %vm1524
    %v1526 = vsel %vm1525, %v1518, %v1522
    %v1527 = vand.u32 2147483647, %v1206
    %vm1528 = vcmp.eq.f32.partialorder %v1527, 8.507059e+37
    %v1529 = vand.u32 %v1206, 2147483648
    %v1530 = vor.u32 1.1754944e-38, %v1529
    %v1531 = vsel %vm1528, %v1530, %v1526
    %v1532 = vmul.f32 1.0, %v1531
    %v1533 = vrcp.pop %v1207
    %v1534 = vmul.f32 %v1207, %v1533
    %v1535 = vsub.f32 1.0, %v1534
    %v1536 = vmul.f32 %v1533, %v1535
    %v1537 = vadd.f32 %v1533, %v1536
    %vm1538 = vweird.f32 %v1207
    %vm1539 = vweird.f32 %v1533
    %vm1540 = vmor %vm1538, %vm1539
    %v1541 = vsel %vm1540, %v1533, %v1537
    %v1542 = vand.u32 2147483647, %v1207
    %vm1543 = vcmp.eq.f32.partialorder %v1542, 8.507059e+37
    %v1544 = vand.u32 %v1207, 2147483648
    %v1545 = vor.u32 1.1754944e-38, %v1544
    %v1546 = vsel %vm1543, %v1545, %v1541
    %v1547 = vmul.f32 1.0, %v1546
    %v1548 = vrcp.pop %v1208
    %v1549 = vmul.f32 %v1208, %v1548
    %v1550 = vsub.f32 1.0, %v1549
    %v1551 = vmul.f32 %v1548, %v1550
    %v1552 = vadd.f32 %v1548, %v1551
    %vm1553 = vweird.f32 %v1208
    %vm1554 = vweird.f32 %v1548
    %vm1555 = vmor %vm1553, %vm1554
    %v1556 = vsel %vm1555, %v1548, %v1552
    %v1557 = vand.u32 2147483647, %v1208
    %vm1558 = vcmp.eq.f32.partialorder %v1557, 8.507059e+37
    %v1559 = vand.u32 %v1208, 2147483648
    %v1560 = vor.u32 1.1754944e-38, %v1559
    %v1561 = vsel %vm1558, %v1560, %v1556
    %v1562 = vmul.f32 1.0, %v1561
    %v1563 = vrcp.pop %v1209
    %v1564 = vmul.f32 %v1209, %v1563
    %v1565 = vsub.f32 1.0, %v1564
    %v1566 = vmul.f32 %v1563, %v1565
    %v1567 = vadd.f32 %v1563, %v1566
    %vm1568 = vweird.f32 %v1209
    %vm1569 = vweird.f32 %v1563
    %vm1570 = vmor %vm1568, %vm1569
    %v1571 = vsel %vm1570, %v1563, %v1567
    %v1572 = vand.u32 2147483647, %v1209
    %vm1573 = vcmp.eq.f32.partialorder %v1572, 8.507059e+37
    %v1574 = vand.u32 %v1209, 2147483648
    %v1575 = vor.u32 1.1754944e-38, %v1574
    %v1576 = vsel %vm1573, %v1575, %v1571
    %v1577 = vmul.f32 1.0, %v1576
    %v1578 = vrcp.pop %v1210
    %v1579 = vmul.f32 %v1210, %v1578
    %v1580 = vsub.f32 1.0, %v1579
    %v1581 = vmul.f32 %v1578, %v1580
    %v1582 = vadd.f32 %v1578, %v1581
    %vm1583 = vweird.f32 %v1210
    %vm1584 = vweird.f32 %v1578
    %vm1585 = vmor %vm1583, %vm1584
    %v1586 = vsel %vm1585, %v1578, %v1582
    %v1587 = vand.u32 2147483647, %v1210
    %vm1588 = vcmp.eq.f32.partialorder %v1587, 8.507059e+37
    %v1589 = vand.u32 %v1210, 2147483648
    %v1590 = vor.u32 1.1754944e-38, %v1589
    %v1591 = vsel %vm1588, %v1590, %v1586
    %v1592 = vmul.f32 1.0, %v1591
    %v1593 = vrcp.pop %v1211
    %v1594 = vmul.f32 %v1211, %v1593
    %v1595 = vsub.f32 1.0, %v1594
    %v1596 = vmul.f32 %v1593, %v1595
    %v1597 = vadd.f32 %v1593, %v1596
    %vm1598 = vweird.f32 %v1211
    %vm1599 = vweird.f32 %v1593
    %vm1600 = vmor %vm1598, %vm1599
    %v1601 = vsel %vm1600, %v1593, %v1597
    %v1602 = vand.u32 2147483647, %v1211
    %vm1603 = vcmp.eq.f32.partialorder %v1602, 8.507059e+37
    %v1604 = vand.u32 %v1211, 2147483648
    %v1605 = vor.u32 1.1754944e-38, %v1604
    %v1606 = vsel %vm1603, %v1605, %v1601
    %v1607 = vmul.f32 1.0, %v1606
    %v1608 = vrcp.pop %v1212
    %v1609 = vmul.f32 %v1212, %v1608
    %v1610 = vsub.f32 1.0, %v1609
    %v1611 = vmul.f32 %v1608, %v1610
    %v1612 = vadd.f32 %v1608, %v1611
    %vm1613 = vweird.f32 %v1212
    %vm1614 = vweird.f32 %v1608
    %vm1615 = vmor %vm1613, %vm1614
    %v1616 = vsel %vm1615, %v1608, %v1612
    %v1617 = vand.u32 2147483647, %v1212
    %vm1618 = vcmp.eq.f32.partialorder %v1617, 8.507059e+37
    %v1619 = vand.u32 %v1212, 2147483648
    %v1620 = vor.u32 1.1754944e-38, %v1619
    %v1621 = vsel %vm1618, %v1620, %v1616
    %v1622 = vmul.f32 1.0, %v1621
    %v1623 = vrcp.pop %v1213
    %v1624 = vmul.f32 %v1213, %v1623
    %v1625 = vsub.f32 1.0, %v1624
    %v1626 = vmul.f32 %v1623, %v1625
    %v1627 = vadd.f32 %v1623, %v1626
    %vm1628 = vweird.f32 %v1213
    %vm1629 = vweird.f32 %v1623
    %vm1630 = vmor %vm1628, %vm1629
    %v1631 = vsel %vm1630, %v1623, %v1627
    %v1632 = vand.u32 2147483647, %v1213
    %vm1633 = vcmp.eq.f32.partialorder %v1632, 8.507059e+37
    %v1634 = vand.u32 %v1213, 2147483648
    %v1635 = vor.u32 1.1754944e-38, %v1634
    %v1636 = vsel %vm1633, %v1635, %v1631
    %v1637 = vmul.f32 1.0, %v1636
    %v1638 = vrcp.pop %v1214
    %v1639 = vmul.f32 %v1214, %v1638
    %v1640 = vsub.f32 1.0, %v1639
    %v1641 = vmul.f32 %v1638, %v1640
    %v1642 = vadd.f32 %v1638, %v1641
    %vm1643 = vweird.f32 %v1214
    %vm1644 = vweird.f32 %v1638
    %vm1645 = vmor %vm1643, %vm1644
    %v1646 = vsel %vm1645, %v1638, %v1642
    %v1647 = vand.u32 2147483647, %v1214
    %vm1648 = vcmp.eq.f32.partialorder %v1647, 8.507059e+37
    %v1649 = vand.u32 %v1214, 2147483648
    %v1650 = vor.u32 1.1754944e-38, %v1649
    %v1651 = vsel %vm1648, %v1650, %v1646
    %v1652 = vmul.f32 1.0, %v1651
    %v1653 = vrcp.pop %v1215
    %v1654 = vmul.f32 %v1215, %v1653
    %v1655 = vsub.f32 1.0, %v1654
    %v1656 = vmul.f32 %v1653, %v1655
    %v1657 = vadd.f32 %v1653, %v1656
    %vm1658 = vweird.f32 %v1215
    %vm1659 = vweird.f32 %v1653
    %vm1660 = vmor %vm1658, %vm1659
    %v1661 = vsel %vm1660, %v1653, %v1657
    %v1662 = vand.u32 2147483647, %v1215
    %vm1663 = vcmp.eq.f32.partialorder %v1662, 8.507059e+37
    %v1664 = vand.u32 %v1215, 2147483648
    %v1665 = vor.u32 1.1754944e-38, %v1664
    %v1666 = vsel %vm1663, %v1665, %v1661
    %v1667 = vmul.f32 1.0, %v1666
    %v1668 = vrcp.pop %v1216
    %v1669 = vmul.f32 %v1216, %v1668
    %v1670 = vsub.f32 1.0, %v1669
    %v1671 = vmul.f32 %v1668, %v1670
    %v1672 = vadd.f32 %v1668, %v1671
    %vm1673 = vweird.f32 %v1216
    %vm1674 = vweird.f32 %v1668
    %vm1675 = vmor %vm1673, %vm1674
    %v1676 = vsel %vm1675, %v1668, %v1672
    %v1677 = vand.u32 2147483647, %v1216
    %vm1678 = vcmp.eq.f32.partialorder %v1677, 8.507059e+37
    %v1679 = vand.u32 %v1216, 2147483648
    %v1680 = vor.u32 1.1754944e-38, %v1679
    %v1681 = vsel %vm1678, %v1680, %v1676
    %v1682 = vmul.f32 1.0, %v1681
    %v1683 = vrcp.pop %v1217
    %v1684 = vmul.f32 %v1217, %v1683
    %v1685 = vsub.f32 1.0, %v1684
    %v1686 = vmul.f32 %v1683, %v1685
    %v1687 = vadd.f32 %v1683, %v1686
    %vm1688 = vweird.f32 %v1217
    %vm1689 = vweird.f32 %v1683
    %vm1690 = vmor %vm1688, %vm1689
    %v1691 = vsel %vm1690, %v1683, %v1687
    %v1692 = vand.u32 2147483647, %v1217
    %vm1693 = vcmp.eq.f32.partialorder %v1692, 8.507059e+37
    %v1694 = vand.u32 %v1217, 2147483648
    %v1695 = vor.u32 1.1754944e-38, %v1694
    %v1696 = vsel %vm1693, %v1695, %v1691
    %v1697 = vmul.f32 1.0, %v1696
    %v1698 = vmul.f32 %v1232, %v582
    %v1699 = vmul.f32 %v1247, %v583
    %v1700 = vmul.f32 %v1262, %v584
    %v1701 = vmul.f32 %v1277, %v585
    %v1702 = vmul.f32 %v1292, %v582
    %v1703 = vmul.f32 %v1307, %v583
    %v1704 = vmul.f32 %v1322, %v584
    %v1705 = vmul.f32 %v1337, %v585
    %v1706 = vmul.f32 %v1352, %v582
    %v1707 = vmul.f32 %v1367, %v583
    %v1708 = vmul.f32 %v1382, %v584
    %v1709 = vmul.f32 %v1397, %v585
    %v1710 = vmul.f32 %v1412, %v582
    %v1711 = vmul.f32 %v1427, %v583
    %v1712 = vmul.f32 %v1442, %v584
    %v1713 = vmul.f32 %v1457, %v585
    %v1714 = vmul.f32 %v1472, %v582
    %v1715 = vmul.f32 %v1487, %v583
    %v1716 = vmul.f32 %v1502, %v584
    %v1717 = vmul.f32 %v1517, %v585
    %v1718 = vmul.f32 %v1532, %v582
    %v1719 = vmul.f32 %v1547, %v583
    %v1720 = vmul.f32 %v1562, %v584
    %v1721 = vmul.f32 %v1577, %v585
    %v1722 = vmul.f32 %v1592, %v582
    %v1723 = vmul.f32 %v1607, %v583
    %v1724 = vmul.f32 %v1622, %v584
    %v1725 = vmul.f32 %v1637, %v585
    %v1726 = vmul.f32 %v1652, %v582
    %v1727 = vmul.f32 %v1667, %v583
    %v1728 = vmul.f32 %v1682, %v584
    %v1729 = vmul.f32 %v1697, %v585
    %v1730 = vsel %vm361, %v1698, 0.0
    %v1731 = vsel %vm361, %v1699, 0.0
    %v1732 = vadd.f32 %v1730, %v1731
    %v1733 = vsel %vm361, %v1700, 0.0
    %v1734 = vadd.f32 %v1732, %v1733
    %v1735 = vsel %vm361, %v1701, 0.0
    %v1736 = vadd.f32 %v1734, %v1735
    %v1737 = vrot.slane %v1736, 4
    %v1738 = vadd.f32 %v1736, %v1737
    %v1739 = vrot.slane %v1738, 2
    %v1740 = vadd.f32 %v1738, %v1739
    %v1741 = vrot.slane %v1740, 1
    %v1742 = vadd.f32 %v1740, %v1741
    %v1743 = vsel %vm361, %v1702, 0.0
    %v1744 = vsel %vm361, %v1703, 0.0
    %v1745 = vadd.f32 %v1743, %v1744
    %v1746 = vsel %vm361, %v1704, 0.0
    %v1747 = vadd.f32 %v1745, %v1746
    %v1748 = vsel %vm361, %v1705, 0.0
    %v1749 = vadd.f32 %v1747, %v1748
    %v1750 = vrot.slane %v1749, 4
    %v1751 = vadd.f32 %v1749, %v1750
    %v1752 = vrot.slane %v1751, 2
    %v1753 = vadd.f32 %v1751, %v1752
    %v1754 = vrot.slane %v1753, 1
    %v1755 = vadd.f32 %v1753, %v1754
    %v1756 = vsel %vm361, %v1706, 0.0
    %v1757 = vsel %vm361, %v1707, 0.0
    %v1758 = vadd.f32 %v1756, %v1757
    %v1759 = vsel %vm361, %v1708, 0.0
    %v1760 = vadd.f32 %v1758, %v1759
    %v1761 = vsel %vm361, %v1709, 0.0
    %v1762 = vadd.f32 %v1760, %v1761
    %v1763 = vrot.slane %v1762, 4
    %v1764 = vadd.f32 %v1762, %v1763
    %v1765 = vrot.slane %v1764, 2
    %v1766 = vadd.f32 %v1764, %v1765
    %v1767 = vrot.slane %v1766, 1
    %v1768 = vadd.f32 %v1766, %v1767
    %v1769 = vsel %vm361, %v1710, 0.0
    %v1770 = vsel %vm361, %v1711, 0.0
    %v1771 = vadd.f32 %v1769, %v1770
    %v1772 = vsel %vm361, %v1712, 0.0
    %v1773 = vadd.f32 %v1771, %v1772
    %v1774 = vsel %vm361, %v1713, 0.0
    %v1775 = vadd.f32 %v1773, %v1774
    %v1776 = vrot.slane %v1775, 4
    %v1777 = vadd.f32 %v1775, %v1776
    %v1778 = vrot.slane %v1777, 2
    %v1779 = vadd.f32 %v1777, %v1778
    %v1780 = vrot.slane %v1779, 1
    %v1781 = vadd.f32 %v1779, %v1780
    %v1782 = vsel %vm361, %v1714, 0.0
    %v1783 = vsel %vm361, %v1715, 0.0
    %v1784 = vadd.f32 %v1782, %v1783
    %v1785 = vsel %vm361, %v1716, 0.0
    %v1786 = vadd.f32 %v1784, %v1785
    %v1787 = vsel %vm361, %v1717, 0.0
    %v1788 = vadd.f32 %v1786, %v1787
    %v1789 = vrot.slane %v1788, 4
    %v1790 = vadd.f32 %v1788, %v1789
    %v1791 = vrot.slane %v1790, 2
    %v1792 = vadd.f32 %v1790, %v1791
    %v1793 = vrot.slane %v1792, 1
    %v1794 = vadd.f32 %v1792, %v1793
    %v1795 = vsel %vm361, %v1718, 0.0
    %v1796 = vsel %vm361, %v1719, 0.0
    %v1797 = vadd.f32 %v1795, %v1796
    %v1798 = vsel %vm361, %v1720, 0.0
    %v1799 = vadd.f32 %v1797, %v1798
    %v1800 = vsel %vm361, %v1721, 0.0
    %v1801 = vadd.f32 %v1799, %v1800
    %v1802 = vrot.slane %v1801, 4
    %v1803 = vadd.f32 %v1801, %v1802
    %v1804 = vrot.slane %v1803, 2
    %v1805 = vadd.f32 %v1803, %v1804
    %v1806 = vrot.slane %v1805, 1
    %v1807 = vadd.f32 %v1805, %v1806
    %v1808 = vsel %vm361, %v1722, 0.0
    %v1809 = vsel %vm361, %v1723, 0.0
    %v1810 = vadd.f32 %v1808, %v1809
    %v1811 = vsel %vm361, %v1724, 0.0
    %v1812 = vadd.f32 %v1810, %v1811
    %v1813 = vsel %vm361, %v1725, 0.0
    %v1814 = vadd.f32 %v1812, %v1813
    %v1815 = vrot.slane %v1814, 4
    %v1816 = vadd.f32 %v1814, %v1815
    %v1817 = vrot.slane %v1816, 2
    %v1818 = vadd.f32 %v1816, %v1817
    %v1819 = vrot.slane %v1818, 1
    %v1820 = vadd.f32 %v1818, %v1819
    %v1821 = vsel %vm361, %v1726, 0.0
    %v1822 = vsel %vm361, %v1727, 0.0
    %v1823 = vadd.f32 %v1821, %v1822
    %v1824 = vsel %vm361, %v1728, 0.0
    %v1825 = vadd.f32 %v1823, %v1824
    %v1826 = vsel %vm361, %v1729, 0.0
    %v1827 = vadd.f32 %v1825, %v1826
    %v1828 = vrot.slane %v1827, 4
    %v1829 = vadd.f32 %v1827, %v1828
    %v1830 = vrot.slane %v1829, 2
    %v1831 = vadd.f32 %v1829, %v1830
    %v1832 = vrot.slane %v1831, 1
    %v1833 = vadd.f32 %v1831, %v1832
    %v1834 = vadd.f32 %v1742, %v368
    %v1835 = vadd.f32 %v1755, %v375
    %v1836 = vadd.f32 %v1768, %v382
    %v1837 = vadd.f32 %v1781, %v389
    %v1838 = vadd.f32 %v1794, %v396
    %v1839 = vadd.f32 %v1807, %v403
    %v1840 = vadd.f32 %v1820, %v410
    %v1841 = vadd.f32 %v1833, %v417
    %v1842 = vmul.f32 %v1232, %v573
    %v1843 = vmul.f32 %v1247, %v574
    %v1844 = vmul.f32 %v1262, %v575
    %v1845 = vmul.f32 %v1277, %v576
    %v1846 = vmul.f32 %v1292, %v573
    %v1847 = vmul.f32 %v1307, %v574
    %v1848 = vmul.f32 %v1322, %v575
    %v1849 = vmul.f32 %v1337, %v576
    %v1850 = vmul.f32 %v1352, %v573
    %v1851 = vmul.f32 %v1367, %v574
    %v1852 = vmul.f32 %v1382, %v575
    %v1853 = vmul.f32 %v1397, %v576
    %v1854 = vmul.f32 %v1412, %v573
    %v1855 = vmul.f32 %v1427, %v574
    %v1856 = vmul.f32 %v1442, %v575
    %v1857 = vmul.f32 %v1457, %v576
    %v1858 = vmul.f32 %v1472, %v573
    %v1859 = vmul.f32 %v1487, %v574
    %v1860 = vmul.f32 %v1502, %v575
    %v1861 = vmul.f32 %v1517, %v576
    %v1862 = vmul.f32 %v1532, %v573
    %v1863 = vmul.f32 %v1547, %v574
    %v1864 = vmul.f32 %v1562, %v575
    %v1865 = vmul.f32 %v1577, %v576
    %v1866 = vmul.f32 %v1592, %v573
    %v1867 = vmul.f32 %v1607, %v574
    %v1868 = vmul.f32 %v1622, %v575
    %v1869 = vmul.f32 %v1637, %v576
    %v1870 = vmul.f32 %v1652, %v573
    %v1871 = vmul.f32 %v1667, %v574
    %v1872 = vmul.f32 %v1682, %v575
    %v1873 = vmul.f32 %v1697, %v576
    %v1874 = vsel %vm361, %v1842, 0.0
    %v1875 = vsel %vm361, %v1843, 0.0
    %v1876 = vadd.f32 %v1874, %v1875
    %v1877 = vsel %vm361, %v1844, 0.0
    %v1878 = vadd.f32 %v1876, %v1877
    %v1879 = vsel %vm361, %v1845, 0.0
    %v1880 = vadd.f32 %v1878, %v1879
    %v1881 = vrot.slane %v1880, 4
    %v1882 = vadd.f32 %v1880, %v1881
    %v1883 = vrot.slane %v1882, 2
    %v1884 = vadd.f32 %v1882, %v1883
    %v1885 = vrot.slane %v1884, 1
    %v1886 = vadd.f32 %v1884, %v1885
    %v1887 = vsel %vm361, %v1846, 0.0
    %v1888 = vsel %vm361, %v1847, 0.0
    %v1889 = vadd.f32 %v1887, %v1888
    %v1890 = vsel %vm361, %v1848, 0.0
    %v1891 = vadd.f32 %v1889, %v1890
    %v1892 = vsel %vm361, %v1849, 0.0
    %v1893 = vadd.f32 %v1891, %v1892
    %v1894 = vrot.slane %v1893, 4
    %v1895 = vadd.f32 %v1893, %v1894
    %v1896 = vrot.slane %v1895, 2
    %v1897 = vadd.f32 %v1895, %v1896
    %v1898 = vrot.slane %v1897, 1
    %v1899 = vadd.f32 %v1897, %v1898
    %v1900 = vsel %vm361, %v1850, 0.0
    %v1901 = vsel %vm361, %v1851, 0.0
    %v1902 = vadd.f32 %v1900, %v1901
    %v1903 = vsel %vm361, %v1852, 0.0
    %v1904 = vadd.f32 %v1902, %v1903
    %v1905 = vsel %vm361, %v1853, 0.0
    %v1906 = vadd.f32 %v1904, %v1905
    %v1907 = vrot.slane %v1906, 4
    %v1908 = vadd.f32 %v1906, %v1907
    %v1909 = vrot.slane %v1908, 2
    %v1910 = vadd.f32 %v1908, %v1909
    %v1911 = vrot.slane %v1910, 1
    %v1912 = vadd.f32 %v1910, %v1911
    %v1913 = vsel %vm361, %v1854, 0.0
    %v1914 = vsel %vm361, %v1855, 0.0
    %v1915 = vadd.f32 %v1913, %v1914
    %v1916 = vsel %vm361, %v1856, 0.0
    %v1917 = vadd.f32 %v1915, %v1916
    %v1918 = vsel %vm361, %v1857, 0.0
    %v1919 = vadd.f32 %v1917, %v1918
    %v1920 = vrot.slane %v1919, 4
    %v1921 = vadd.f32 %v1919, %v1920
    %v1922 = vrot.slane %v1921, 2
    %v1923 = vadd.f32 %v1921, %v1922
    %v1924 = vrot.slane %v1923, 1
    %v1925 = vadd.f32 %v1923, %v1924
    %v1926 = vsel %vm361, %v1858, 0.0
    %v1927 = vsel %vm361, %v1859, 0.0
    %v1928 = vadd.f32 %v1926, %v1927
    %v1929 = vsel %vm361, %v1860, 0.0
    %v1930 = vadd.f32 %v1928, %v1929
    %v1931 = vsel %vm361, %v1861, 0.0
    %v1932 = vadd.f32 %v1930, %v1931
    %v1933 = vrot.slane %v1932, 4
    %v1934 = vadd.f32 %v1932, %v1933
    %v1935 = vrot.slane %v1934, 2
    %v1936 = vadd.f32 %v1934, %v1935
    %v1937 = vrot.slane %v1936, 1
    %v1938 = vadd.f32 %v1936, %v1937
    %v1939 = vsel %vm361, %v1862, 0.0
    %v1940 = vsel %vm361, %v1863, 0.0
    %v1941 = vadd.f32 %v1939, %v1940
    %v1942 = vsel %vm361, %v1864, 0.0
    %v1943 = vadd.f32 %v1941, %v1942
    %v1944 = vsel %vm361, %v1865, 0.0
    %v1945 = vadd.f32 %v1943, %v1944
    %v1946 = vrot.slane %v1945, 4
    %v1947 = vadd.f32 %v1945, %v1946
    %v1948 = vrot.slane %v1947, 2
    %v1949 = vadd.f32 %v1947, %v1948
    %v1950 = vrot.slane %v1949, 1
    %v1951 = vadd.f32 %v1949, %v1950
    %v1952 = vsel %vm361, %v1866, 0.0
    %v1953 = vsel %vm361, %v1867, 0.0
    %v1954 = vadd.f32 %v1952, %v1953
    %v1955 = vsel %vm361, %v1868, 0.0
    %v1956 = vadd.f32 %v1954, %v1955
    %v1957 = vsel %vm361, %v1869, 0.0
    %v1958 = vadd.f32 %v1956, %v1957
    %v1959 = vrot.slane %v1958, 4
    %v1960 = vadd.f32 %v1958, %v1959
    %v1961 = vrot.slane %v1960, 2
    %v1962 = vadd.f32 %v1960, %v1961
    %v1963 = vrot.slane %v1962, 1
    %v1964 = vadd.f32 %v1962, %v1963
    %v1965 = vsel %vm361, %v1870, 0.0
    %v1966 = vsel %vm361, %v1871, 0.0
    %v1967 = vadd.f32 %v1965, %v1966
    %v1968 = vsel %vm361, %v1872, 0.0
    %v1969 = vadd.f32 %v1967, %v1968
    %v1970 = vsel %vm361, %v1873, 0.0
    %v1971 = vadd.f32 %v1969, %v1970
    %v1972 = vrot.slane %v1971, 4
    %v1973 = vadd.f32 %v1971, %v1972
    %v1974 = vrot.slane %v1973, 2
    %v1975 = vadd.f32 %v1973, %v1974
    %v1976 = vrot.slane %v1975, 1
    %v1977 = vadd.f32 %v1975, %v1976
    %v1978 = vadd.f32 %v1886, %v432
    %v1979 = vadd.f32 %v1899, %v439
    %v1980 = vadd.f32 %v1912, %v446
    %v1981 = vadd.f32 %v1925, %v453
    %v1982 = vadd.f32 %v1938, %v460
    %v1983 = vadd.f32 %v1951, %v467
    %v1984 = vadd.f32 %v1964, %v474
    %v1985 = vadd.f32 %v1977, %v481
    %v1986 = vmul.f32 %v763, %v825
    %v1987 = vadd.f32 %v1986, %v765
    %v1996 = vsel %vm775, %v1835, %v1834
    %v1997 = vsel %vm777, %v1836, %v1996
    %v1998 = vsel %vm779, %v1837, %v1997
    %v1999 = vsel %vm781, %v1838, %v1998
    %v2000 = vsel %vm783, %v1839, %v1999
    %v2001 = vsel %vm785, %v1840, %v2000
    %v2002 = vsel %vm787, %v1841, %v2001
    %v2004 = vadd.f32 %v1987, %v2002
    %v2013 = vsel %vm775, %v1979, %v1978
    %v2014 = vsel %vm777, %v1980, %v2013
    %v2015 = vsel %vm779, %v1981, %v2014
    %v2016 = vsel %vm781, %v1982, %v2015
    %v2017 = vsel %vm783, %v1983, %v2016
    %v2018 = vsel %vm785, %v1984, %v2017
    %v2019 = vsel %vm787, %v1985, %v2018
    %v2021 = vadd.f32 %v792, %v2019
    %v2022 = vadd.f32 %v2021, 1e-08
    %v2023 = vrcp.pop %v2022
    %v2024 = vmul.f32 %v2022, %v2023
    %v2025 = vsub.f32 1.0, %v2024
    %v2026 = vmul.f32 %v2023, %v2025
    %v2027 = vadd.f32 %v2023, %v2026
    %vm2028 = vweird.f32 %v2022
    %vm2029 = vweird.f32 %v2023
    %vm2030 = vmor %vm2028, %vm2029
    %v2031 = vsel %vm2030, %v2023, %v2027
    %v2032 = vand.u32 2147483647, %v2022
    %vm2033 = vcmp.eq.f32.partialorder %v2032, 8.507059e+37
    %v2034 = vand.u32 %v2022, 2147483648
    %v2035 = vor.u32 1.1754944e-38, %v2034
    %v2036 = vsel %vm2033, %v2035, %v2031
    %v2037 = vmul.f32 %v2004, %v2036
    %v2038 = vperm.slane %v2037, 0
    %v2039 = vlaneseq
    %v2040 = vshrl.u32 %v2039, 7
    %2042 = vset.pattern.permute.xlu0 %v2040
    %2043 = vperm.xlu0 %2042, %v2038
    %v2044 = vpop.permute.xlu0 %2043
    %v2045 = vlaneseq
    %v2046 = vshrl.u32 %v2045, 7
    %v2047 = vadd.s32 %v2046, 8
    %2048 = vset.pattern.permute.xlu0 %v2047
    %2049 = vperm.xlu0 %2048, %v2038
    %v2050 = vpop.permute.xlu0 %2049
    %v2051 = vlaneseq
    %v2052 = vshrl.u32 %v2051, 7
    %v2053 = vadd.s32 %v2052, 16
    %2054 = vset.pattern.permute.xlu0 %v2053
    %2055 = vperm.xlu0 %2054, %v2038
    %v2056 = vpop.permute.xlu0 %2055
    %v2057 = vlaneseq
    %v2058 = vshrl.u32 %v2057, 7
    %v2059 = vadd.s32 %v2058, 24
    %2060 = vset.pattern.permute.xlu0 %v2059
    %2061 = vperm.xlu0 %2060, %v2038
    %v2062 = vpop.permute.xlu0 %2061
    %v2063 = vperm.slane %v2037, 1
    %v2064 = vlaneseq
    %v2065 = vshrl.u32 %v2064, 7
    %2067 = vset.pattern.permute.xlu0 %v2065
    %2068 = vperm.xlu0 %2067, %v2063
    %v2069 = vpop.permute.xlu0 %2068
    %v2070 = vlaneseq
    %v2071 = vshrl.u32 %v2070, 7
    %v2072 = vadd.s32 %v2071, 8
    %2073 = vset.pattern.permute.xlu0 %v2072
    %2074 = vperm.xlu0 %2073, %v2063
    %v2075 = vpop.permute.xlu0 %2074
    %v2076 = vlaneseq
    %v2077 = vshrl.u32 %v2076, 7
    %v2078 = vadd.s32 %v2077, 16
    %2079 = vset.pattern.permute.xlu0 %v2078
    %2080 = vperm.xlu0 %2079, %v2063
    %v2081 = vpop.permute.xlu0 %2080
    %v2082 = vlaneseq
    %v2083 = vshrl.u32 %v2082, 7
    %v2084 = vadd.s32 %v2083, 24
    %2085 = vset.pattern.permute.xlu0 %v2084
    %2086 = vperm.xlu0 %2085, %v2063
    %v2087 = vpop.permute.xlu0 %2086
    %v2088 = vperm.slane %v2037, 2
    %v2089 = vlaneseq
    %v2090 = vshrl.u32 %v2089, 7
    %2092 = vset.pattern.permute.xlu0 %v2090
    %2093 = vperm.xlu0 %2092, %v2088
    %v2094 = vpop.permute.xlu0 %2093
    %v2095 = vlaneseq
    %v2096 = vshrl.u32 %v2095, 7
    %v2097 = vadd.s32 %v2096, 8
    %2098 = vset.pattern.permute.xlu0 %v2097
    %2099 = vperm.xlu0 %2098, %v2088
    %v2100 = vpop.permute.xlu0 %2099
    %v2101 = vlaneseq
    %v2102 = vshrl.u32 %v2101, 7
    %v2103 = vadd.s32 %v2102, 16
    %2104 = vset.pattern.permute.xlu0 %v2103
    %2105 = vperm.xlu0 %2104, %v2088
    %v2106 = vpop.permute.xlu0 %2105
    %v2107 = vlaneseq
    %v2108 = vshrl.u32 %v2107, 7
    %v2109 = vadd.s32 %v2108, 24
    %2110 = vset.pattern.permute.xlu0 %v2109
    %2111 = vperm.xlu0 %2110, %v2088
    %v2112 = vpop.permute.xlu0 %2111
    %v2113 = vperm.slane %v2037, 3
    %v2114 = vlaneseq
    %v2115 = vshrl.u32 %v2114, 7
    %2117 = vset.pattern.permute.xlu0 %v2115
    %2118 = vperm.xlu0 %2117, %v2113
    %v2119 = vpop.permute.xlu0 %2118
    %v2120 = vlaneseq
    %v2121 = vshrl.u32 %v2120, 7
    %v2122 = vadd.s32 %v2121, 8
    %2123 = vset.pattern.permute.xlu0 %v2122
    %2124 = vperm.xlu0 %2123, %v2113
    %v2125 = vpop.permute.xlu0 %2124
    %v2126 = vlaneseq
    %v2127 = vshrl.u32 %v2126, 7
    %v2128 = vadd.s32 %v2127, 16
    %2129 = vset.pattern.permute.xlu0 %v2128
    %2130 = vperm.xlu0 %2129, %v2113
    %v2131 = vpop.permute.xlu0 %2130
    %v2132 = vlaneseq
    %v2133 = vshrl.u32 %v2132, 7
    %v2134 = vadd.s32 %v2133, 24
    %2135 = vset.pattern.permute.xlu0 %v2134
    %2136 = vperm.xlu0 %2135, %v2113
    %v2137 = vpop.permute.xlu0 %2136
    %v2138 = vperm.slane %v2037, 4
    %v2139 = vlaneseq
    %v2140 = vshrl.u32 %v2139, 7
    %2142 = vset.pattern.permute.xlu0 %v2140
    %2143 = vperm.xlu0 %2142, %v2138
    %v2144 = vpop.permute.xlu0 %2143
    %v2145 = vlaneseq
    %v2146 = vshrl.u32 %v2145, 7
    %v2147 = vadd.s32 %v2146, 8
    %2148 = vset.pattern.permute.xlu0 %v2147
    %2149 = vperm.xlu0 %2148, %v2138
    %v2150 = vpop.permute.xlu0 %2149
    %v2151 = vlaneseq
    %v2152 = vshrl.u32 %v2151, 7
    %v2153 = vadd.s32 %v2152, 16
    %2154 = vset.pattern.permute.xlu0 %v2153
    %2155 = vperm.xlu0 %2154, %v2138
    %v2156 = vpop.permute.xlu0 %2155
    %v2157 = vlaneseq
    %v2158 = vshrl.u32 %v2157, 7
    %v2159 = vadd.s32 %v2158, 24
    %2160 = vset.pattern.permute.xlu0 %v2159
    %2161 = vperm.xlu0 %2160, %v2138
    %v2162 = vpop.permute.xlu0 %2161
    %v2163 = vperm.slane %v2037, 5
    %v2164 = vlaneseq
    %v2165 = vshrl.u32 %v2164, 7
    %2167 = vset.pattern.permute.xlu0 %v2165
    %2168 = vperm.xlu0 %2167, %v2163
    %v2169 = vpop.permute.xlu0 %2168
    %v2170 = vlaneseq
    %v2171 = vshrl.u32 %v2170, 7
    %v2172 = vadd.s32 %v2171, 8
    %2173 = vset.pattern.permute.xlu0 %v2172
    %2174 = vperm.xlu0 %2173, %v2163
    %v2175 = vpop.permute.xlu0 %2174
    %v2176 = vlaneseq
    %v2177 = vshrl.u32 %v2176, 7
    %v2178 = vadd.s32 %v2177, 16
    %2179 = vset.pattern.permute.xlu0 %v2178
    %2180 = vperm.xlu0 %2179, %v2163
    %v2181 = vpop.permute.xlu0 %2180
    %v2182 = vlaneseq
    %v2183 = vshrl.u32 %v2182, 7
    %v2184 = vadd.s32 %v2183, 24
    %2185 = vset.pattern.permute.xlu0 %v2184
    %2186 = vperm.xlu0 %2185, %v2163
    %v2187 = vpop.permute.xlu0 %2186
    %v2188 = vperm.slane %v2037, 6
    %v2189 = vlaneseq
    %v2190 = vshrl.u32 %v2189, 7
    %2192 = vset.pattern.permute.xlu0 %v2190
    %2193 = vperm.xlu0 %2192, %v2188
    %v2194 = vpop.permute.xlu0 %2193
    %v2195 = vlaneseq
    %v2196 = vshrl.u32 %v2195, 7
    %v2197 = vadd.s32 %v2196, 8
    %2198 = vset.pattern.permute.xlu0 %v2197
    %2199 = vperm.xlu0 %2198, %v2188
    %v2200 = vpop.permute.xlu0 %2199
    %v2201 = vlaneseq
    %v2202 = vshrl.u32 %v2201, 7
    %v2203 = vadd.s32 %v2202, 16
    %2204 = vset.pattern.permute.xlu0 %v2203
    %2205 = vperm.xlu0 %2204, %v2188
    %v2206 = vpop.permute.xlu0 %2205
    %v2207 = vlaneseq
    %v2208 = vshrl.u32 %v2207, 7
    %v2209 = vadd.s32 %v2208, 24
    %2210 = vset.pattern.permute.xlu0 %v2209
    %2211 = vperm.xlu0 %2210, %v2188
    %v2212 = vpop.permute.xlu0 %2211
    %v2213 = vperm.slane %v2037, 7
    %v2214 = vlaneseq
    %v2215 = vshrl.u32 %v2214, 7
    %2217 = vset.pattern.permute.xlu0 %v2215
    %2218 = vperm.xlu0 %2217, %v2213
    %v2219 = vpop.permute.xlu0 %2218
    %v2220 = vlaneseq
    %v2221 = vshrl.u32 %v2220, 7
    %v2222 = vadd.s32 %v2221, 8
    %2223 = vset.pattern.permute.xlu0 %v2222
    %2224 = vperm.xlu0 %2223, %v2213
    %v2225 = vpop.permute.xlu0 %2224
    %v2226 = vlaneseq
    %v2227 = vshrl.u32 %v2226, 7
    %v2228 = vadd.s32 %v2227, 16
    %2229 = vset.pattern.permute.xlu0 %v2228
    %2230 = vperm.xlu0 %2229, %v2213
    %v2231 = vpop.permute.xlu0 %2230
    %v2232 = vlaneseq
    %v2233 = vshrl.u32 %v2232, 7
    %v2234 = vadd.s32 %v2233, 24
    %2235 = vset.pattern.permute.xlu0 %v2234
    %2236 = vperm.xlu0 %2235, %v2213
    %v2237 = vpop.permute.xlu0 %2236
    %v2238 = vsub.f32 %v2044, %v482
    %v2239 = vsub.f32 %v2050, %v483
    %v2240 = vsub.f32 %v2056, %v484
    %v2241 = vsub.f32 %v2062, %v485
    %v2242 = vsub.f32 %v2069, %v482
    %v2243 = vsub.f32 %v2075, %v483
    %v2244 = vsub.f32 %v2081, %v484
    %v2245 = vsub.f32 %v2087, %v485
    %v2246 = vsub.f32 %v2094, %v482
    %v2247 = vsub.f32 %v2100, %v483
    %v2248 = vsub.f32 %v2106, %v484
    %v2249 = vsub.f32 %v2112, %v485
    %v2250 = vsub.f32 %v2119, %v482
    %v2251 = vsub.f32 %v2125, %v483
    %v2252 = vsub.f32 %v2131, %v484
    %v2253 = vsub.f32 %v2137, %v485
    %v2254 = vsub.f32 %v2144, %v482
    %v2255 = vsub.f32 %v2150, %v483
    %v2256 = vsub.f32 %v2156, %v484
    %v2257 = vsub.f32 %v2162, %v485
    %v2258 = vsub.f32 %v2169, %v482
    %v2259 = vsub.f32 %v2175, %v483
    %v2260 = vsub.f32 %v2181, %v484
    %v2261 = vsub.f32 %v2187, %v485
    %v2262 = vsub.f32 %v2194, %v482
    %v2263 = vsub.f32 %v2200, %v483
    %v2264 = vsub.f32 %v2206, %v484
    %v2265 = vsub.f32 %v2212, %v485
    %v2266 = vsub.f32 %v2219, %v482
    %v2267 = vsub.f32 %v2225, %v483
    %v2268 = vsub.f32 %v2231, %v484
    %v2269 = vsub.f32 %v2237, %v485
    %v2270 = vmul.f32 %v487, %v2238
    %v2271 = vmul.f32 %v488, %v2239
    %v2272 = vmul.f32 %v489, %v2240
    %v2273 = vmul.f32 %v490, %v2241
    %v2274 = vmul.f32 %v487, %v2242
    %v2275 = vmul.f32 %v488, %v2243
    %v2276 = vmul.f32 %v489, %v2244
    %v2277 = vmul.f32 %v490, %v2245
    %v2278 = vmul.f32 %v487, %v2246
    %v2279 = vmul.f32 %v488, %v2247
    %v2280 = vmul.f32 %v489, %v2248
    %v2281 = vmul.f32 %v490, %v2249
    %v2282 = vmul.f32 %v487, %v2250
    %v2283 = vmul.f32 %v488, %v2251
    %v2284 = vmul.f32 %v489, %v2252
    %v2285 = vmul.f32 %v490, %v2253
    %v2286 = vmul.f32 %v487, %v2254
    %v2287 = vmul.f32 %v488, %v2255
    %v2288 = vmul.f32 %v489, %v2256
    %v2289 = vmul.f32 %v490, %v2257
    %v2290 = vmul.f32 %v487, %v2258
    %v2291 = vmul.f32 %v488, %v2259
    %v2292 = vmul.f32 %v489, %v2260
    %v2293 = vmul.f32 %v490, %v2261
    %v2294 = vmul.f32 %v487, %v2262
    %v2295 = vmul.f32 %v488, %v2263
    %v2296 = vmul.f32 %v489, %v2264
    %v2297 = vmul.f32 %v490, %v2265
    %v2298 = vmul.f32 %v487, %v2266
    %v2299 = vmul.f32 %v488, %v2267
    %v2300 = vmul.f32 %v489, %v2268
    %v2301 = vmul.f32 %v490, %v2269
    %v2302 = vxor.u32 %v2270, 2147483648
    %v2303 = vxor.u32 %v2271, 2147483648
    %v2304 = vxor.u32 %v2272, 2147483648
    %v2305 = vxor.u32 %v2273, 2147483648
    %v2306 = vxor.u32 %v2274, 2147483648
    %v2307 = vxor.u32 %v2275, 2147483648
    %v2308 = vxor.u32 %v2276, 2147483648
    %v2309 = vxor.u32 %v2277, 2147483648
    %v2310 = vxor.u32 %v2278, 2147483648
    %v2311 = vxor.u32 %v2279, 2147483648
    %v2312 = vxor.u32 %v2280, 2147483648
    %v2313 = vxor.u32 %v2281, 2147483648
    %v2314 = vxor.u32 %v2282, 2147483648
    %v2315 = vxor.u32 %v2283, 2147483648
    %v2316 = vxor.u32 %v2284, 2147483648
    %v2317 = vxor.u32 %v2285, 2147483648
    %v2318 = vxor.u32 %v2286, 2147483648
    %v2319 = vxor.u32 %v2287, 2147483648
    %v2320 = vxor.u32 %v2288, 2147483648
    %v2321 = vxor.u32 %v2289, 2147483648
    %v2322 = vxor.u32 %v2290, 2147483648
    %v2323 = vxor.u32 %v2291, 2147483648
    %v2324 = vxor.u32 %v2292, 2147483648
    %v2325 = vxor.u32 %v2293, 2147483648
    %v2326 = vxor.u32 %v2294, 2147483648
    %v2327 = vxor.u32 %v2295, 2147483648
    %v2328 = vxor.u32 %v2296, 2147483648
    %v2329 = vxor.u32 %v2297, 2147483648
    %v2330 = vxor.u32 %v2298, 2147483648
    %v2331 = vxor.u32 %v2299, 2147483648
    %v2332 = vxor.u32 %v2300, 2147483648
    %v2333 = vxor.u32 %v2301, 2147483648
    %v2334 = vmul.f32 %v2302, 1.442695
    %v2335 = vpow.pop %v2334
    %v2336 = vmul.f32 %v2303, 1.442695
    %v2337 = vpow.pop %v2336
    %v2338 = vmul.f32 %v2304, 1.442695
    %v2339 = vpow.pop %v2338
    %v2340 = vmul.f32 %v2305, 1.442695
    %v2341 = vpow.pop %v2340
    %v2342 = vmul.f32 %v2306, 1.442695
    %v2343 = vpow.pop %v2342
    %v2344 = vmul.f32 %v2307, 1.442695
    %v2345 = vpow.pop %v2344
    %v2346 = vmul.f32 %v2308, 1.442695
    %v2347 = vpow.pop %v2346
    %v2348 = vmul.f32 %v2309, 1.442695
    %v2349 = vpow.pop %v2348
    %v2350 = vmul.f32 %v2310, 1.442695
    %v2351 = vpow.pop %v2350
    %v2352 = vmul.f32 %v2311, 1.442695
    %v2353 = vpow.pop %v2352
    %v2354 = vmul.f32 %v2312, 1.442695
    %v2355 = vpow.pop %v2354
    %v2356 = vmul.f32 %v2313, 1.442695
    %v2357 = vpow.pop %v2356
    %v2358 = vmul.f32 %v2314, 1.442695
    %v2359 = vpow.pop %v2358
    %v2360 = vmul.f32 %v2315, 1.442695
    %v2361 = vpow.pop %v2360
    %v2362 = vmul.f32 %v2316, 1.442695
    %v2363 = vpow.pop %v2362
    %v2364 = vmul.f32 %v2317, 1.442695
    %v2365 = vpow.pop %v2364
    %v2366 = vmul.f32 %v2318, 1.442695
    %v2367 = vpow.pop %v2366
    %v2368 = vmul.f32 %v2319, 1.442695
    %v2369 = vpow.pop %v2368
    %v2370 = vmul.f32 %v2320, 1.442695
    %v2371 = vpow.pop %v2370
    %v2372 = vmul.f32 %v2321, 1.442695
    %v2373 = vpow.pop %v2372
    %v2374 = vmul.f32 %v2322, 1.442695
    %v2375 = vpow.pop %v2374
    %v2376 = vmul.f32 %v2323, 1.442695
    %v2377 = vpow.pop %v2376
    %v2378 = vmul.f32 %v2324, 1.442695
    %v2379 = vpow.pop %v2378
    %v2380 = vmul.f32 %v2325, 1.442695
    %v2381 = vpow.pop %v2380
    %v2382 = vmul.f32 %v2326, 1.442695
    %v2383 = vpow.pop %v2382
    %v2384 = vmul.f32 %v2327, 1.442695
    %v2385 = vpow.pop %v2384
    %v2386 = vmul.f32 %v2328, 1.442695
    %v2387 = vpow.pop %v2386
    %v2388 = vmul.f32 %v2329, 1.442695
    %v2389 = vpow.pop %v2388
    %v2390 = vmul.f32 %v2330, 1.442695
    %v2391 = vpow.pop %v2390
    %v2392 = vmul.f32 %v2331, 1.442695
    %v2393 = vpow.pop %v2392
    %v2394 = vmul.f32 %v2332, 1.442695
    %v2395 = vpow.pop %v2394
    %v2396 = vmul.f32 %v2333, 1.442695
    %v2397 = vpow.pop %v2396
    %v2398 = vadd.f32 %v2335, 1.0
    %v2399 = vadd.f32 %v2337, 1.0
    %v2400 = vadd.f32 %v2339, 1.0
    %v2401 = vadd.f32 %v2341, 1.0
    %v2402 = vadd.f32 %v2343, 1.0
    %v2403 = vadd.f32 %v2345, 1.0
    %v2404 = vadd.f32 %v2347, 1.0
    %v2405 = vadd.f32 %v2349, 1.0
    %v2406 = vadd.f32 %v2351, 1.0
    %v2407 = vadd.f32 %v2353, 1.0
    %v2408 = vadd.f32 %v2355, 1.0
    %v2409 = vadd.f32 %v2357, 1.0
    %v2410 = vadd.f32 %v2359, 1.0
    %v2411 = vadd.f32 %v2361, 1.0
    %v2412 = vadd.f32 %v2363, 1.0
    %v2413 = vadd.f32 %v2365, 1.0
    %v2414 = vadd.f32 %v2367, 1.0
    %v2415 = vadd.f32 %v2369, 1.0
    %v2416 = vadd.f32 %v2371, 1.0
    %v2417 = vadd.f32 %v2373, 1.0
    %v2418 = vadd.f32 %v2375, 1.0
    %v2419 = vadd.f32 %v2377, 1.0
    %v2420 = vadd.f32 %v2379, 1.0
    %v2421 = vadd.f32 %v2381, 1.0
    %v2422 = vadd.f32 %v2383, 1.0
    %v2423 = vadd.f32 %v2385, 1.0
    %v2424 = vadd.f32 %v2387, 1.0
    %v2425 = vadd.f32 %v2389, 1.0
    %v2426 = vadd.f32 %v2391, 1.0
    %v2427 = vadd.f32 %v2393, 1.0
    %v2428 = vadd.f32 %v2395, 1.0
    %v2429 = vadd.f32 %v2397, 1.0
    %v2430 = vrcp.pop %v2398
    %v2431 = vmul.f32 %v2398, %v2430
    %v2432 = vsub.f32 1.0, %v2431
    %v2433 = vmul.f32 %v2430, %v2432
    %v2434 = vadd.f32 %v2430, %v2433
    %vm2435 = vweird.f32 %v2398
    %vm2436 = vweird.f32 %v2430
    %vm2437 = vmor %vm2435, %vm2436
    %v2438 = vsel %vm2437, %v2430, %v2434
    %v2439 = vand.u32 2147483647, %v2398
    %vm2440 = vcmp.eq.f32.partialorder %v2439, 8.507059e+37
    %v2441 = vand.u32 %v2398, 2147483648
    %v2442 = vor.u32 1.1754944e-38, %v2441
    %v2443 = vsel %vm2440, %v2442, %v2438
    %v2444 = vmul.f32 1.0, %v2443
    %v2445 = vrcp.pop %v2399
    %v2446 = vmul.f32 %v2399, %v2445
    %v2447 = vsub.f32 1.0, %v2446
    %v2448 = vmul.f32 %v2445, %v2447
    %v2449 = vadd.f32 %v2445, %v2448
    %vm2450 = vweird.f32 %v2399
    %vm2451 = vweird.f32 %v2445
    %vm2452 = vmor %vm2450, %vm2451
    %v2453 = vsel %vm2452, %v2445, %v2449
    %v2454 = vand.u32 2147483647, %v2399
    %vm2455 = vcmp.eq.f32.partialorder %v2454, 8.507059e+37
    %v2456 = vand.u32 %v2399, 2147483648
    %v2457 = vor.u32 1.1754944e-38, %v2456
    %v2458 = vsel %vm2455, %v2457, %v2453
    %v2459 = vmul.f32 1.0, %v2458
    %v2460 = vrcp.pop %v2400
    %v2461 = vmul.f32 %v2400, %v2460
    %v2462 = vsub.f32 1.0, %v2461
    %v2463 = vmul.f32 %v2460, %v2462
    %v2464 = vadd.f32 %v2460, %v2463
    %vm2465 = vweird.f32 %v2400
    %vm2466 = vweird.f32 %v2460
    %vm2467 = vmor %vm2465, %vm2466
    %v2468 = vsel %vm2467, %v2460, %v2464
    %v2469 = vand.u32 2147483647, %v2400
    %vm2470 = vcmp.eq.f32.partialorder %v2469, 8.507059e+37
    %v2471 = vand.u32 %v2400, 2147483648
    %v2472 = vor.u32 1.1754944e-38, %v2471
    %v2473 = vsel %vm2470, %v2472, %v2468
    %v2474 = vmul.f32 1.0, %v2473
    %v2475 = vrcp.pop %v2401
    %v2476 = vmul.f32 %v2401, %v2475
    %v2477 = vsub.f32 1.0, %v2476
    %v2478 = vmul.f32 %v2475, %v2477
    %v2479 = vadd.f32 %v2475, %v2478
    %vm2480 = vweird.f32 %v2401
    %vm2481 = vweird.f32 %v2475
    %vm2482 = vmor %vm2480, %vm2481
    %v2483 = vsel %vm2482, %v2475, %v2479
    %v2484 = vand.u32 2147483647, %v2401
    %vm2485 = vcmp.eq.f32.partialorder %v2484, 8.507059e+37
    %v2486 = vand.u32 %v2401, 2147483648
    %v2487 = vor.u32 1.1754944e-38, %v2486
    %v2488 = vsel %vm2485, %v2487, %v2483
    %v2489 = vmul.f32 1.0, %v2488
    %v2490 = vrcp.pop %v2402
    %v2491 = vmul.f32 %v2402, %v2490
    %v2492 = vsub.f32 1.0, %v2491
    %v2493 = vmul.f32 %v2490, %v2492
    %v2494 = vadd.f32 %v2490, %v2493
    %vm2495 = vweird.f32 %v2402
    %vm2496 = vweird.f32 %v2490
    %vm2497 = vmor %vm2495, %vm2496
    %v2498 = vsel %vm2497, %v2490, %v2494
    %v2499 = vand.u32 2147483647, %v2402
    %vm2500 = vcmp.eq.f32.partialorder %v2499, 8.507059e+37
    %v2501 = vand.u32 %v2402, 2147483648
    %v2502 = vor.u32 1.1754944e-38, %v2501
    %v2503 = vsel %vm2500, %v2502, %v2498
    %v2504 = vmul.f32 1.0, %v2503
    %v2505 = vrcp.pop %v2403
    %v2506 = vmul.f32 %v2403, %v2505
    %v2507 = vsub.f32 1.0, %v2506
    %v2508 = vmul.f32 %v2505, %v2507
    %v2509 = vadd.f32 %v2505, %v2508
    %vm2510 = vweird.f32 %v2403
    %vm2511 = vweird.f32 %v2505
    %vm2512 = vmor %vm2510, %vm2511
    %v2513 = vsel %vm2512, %v2505, %v2509
    %v2514 = vand.u32 2147483647, %v2403
    %vm2515 = vcmp.eq.f32.partialorder %v2514, 8.507059e+37
    %v2516 = vand.u32 %v2403, 2147483648
    %v2517 = vor.u32 1.1754944e-38, %v2516
    %v2518 = vsel %vm2515, %v2517, %v2513
    %v2519 = vmul.f32 1.0, %v2518
    %v2520 = vrcp.pop %v2404
    %v2521 = vmul.f32 %v2404, %v2520
    %v2522 = vsub.f32 1.0, %v2521
    %v2523 = vmul.f32 %v2520, %v2522
    %v2524 = vadd.f32 %v2520, %v2523
    %vm2525 = vweird.f32 %v2404
    %vm2526 = vweird.f32 %v2520
    %vm2527 = vmor %vm2525, %vm2526
    %v2528 = vsel %vm2527, %v2520, %v2524
    %v2529 = vand.u32 2147483647, %v2404
    %vm2530 = vcmp.eq.f32.partialorder %v2529, 8.507059e+37
    %v2531 = vand.u32 %v2404, 2147483648
    %v2532 = vor.u32 1.1754944e-38, %v2531
    %v2533 = vsel %vm2530, %v2532, %v2528
    %v2534 = vmul.f32 1.0, %v2533
    %v2535 = vrcp.pop %v2405
    %v2536 = vmul.f32 %v2405, %v2535
    %v2537 = vsub.f32 1.0, %v2536
    %v2538 = vmul.f32 %v2535, %v2537
    %v2539 = vadd.f32 %v2535, %v2538
    %vm2540 = vweird.f32 %v2405
    %vm2541 = vweird.f32 %v2535
    %vm2542 = vmor %vm2540, %vm2541
    %v2543 = vsel %vm2542, %v2535, %v2539
    %v2544 = vand.u32 2147483647, %v2405
    %vm2545 = vcmp.eq.f32.partialorder %v2544, 8.507059e+37
    %v2546 = vand.u32 %v2405, 2147483648
    %v2547 = vor.u32 1.1754944e-38, %v2546
    %v2548 = vsel %vm2545, %v2547, %v2543
    %v2549 = vmul.f32 1.0, %v2548
    %v2550 = vrcp.pop %v2406
    %v2551 = vmul.f32 %v2406, %v2550
    %v2552 = vsub.f32 1.0, %v2551
    %v2553 = vmul.f32 %v2550, %v2552
    %v2554 = vadd.f32 %v2550, %v2553
    %vm2555 = vweird.f32 %v2406
    %vm2556 = vweird.f32 %v2550
    %vm2557 = vmor %vm2555, %vm2556
    %v2558 = vsel %vm2557, %v2550, %v2554
    %v2559 = vand.u32 2147483647, %v2406
    %vm2560 = vcmp.eq.f32.partialorder %v2559, 8.507059e+37
    %v2561 = vand.u32 %v2406, 2147483648
    %v2562 = vor.u32 1.1754944e-38, %v2561
    %v2563 = vsel %vm2560, %v2562, %v2558
    %v2564 = vmul.f32 1.0, %v2563
    %v2565 = vrcp.pop %v2407
    %v2566 = vmul.f32 %v2407, %v2565
    %v2567 = vsub.f32 1.0, %v2566
    %v2568 = vmul.f32 %v2565, %v2567
    %v2569 = vadd.f32 %v2565, %v2568
    %vm2570 = vweird.f32 %v2407
    %vm2571 = vweird.f32 %v2565
    %vm2572 = vmor %vm2570, %vm2571
    %v2573 = vsel %vm2572, %v2565, %v2569
    %v2574 = vand.u32 2147483647, %v2407
    %vm2575 = vcmp.eq.f32.partialorder %v2574, 8.507059e+37
    %v2576 = vand.u32 %v2407, 2147483648
    %v2577 = vor.u32 1.1754944e-38, %v2576
    %v2578 = vsel %vm2575, %v2577, %v2573
    %v2579 = vmul.f32 1.0, %v2578
    %v2580 = vrcp.pop %v2408
    %v2581 = vmul.f32 %v2408, %v2580
    %v2582 = vsub.f32 1.0, %v2581
    %v2583 = vmul.f32 %v2580, %v2582
    %v2584 = vadd.f32 %v2580, %v2583
    %vm2585 = vweird.f32 %v2408
    %vm2586 = vweird.f32 %v2580
    %vm2587 = vmor %vm2585, %vm2586
    %v2588 = vsel %vm2587, %v2580, %v2584
    %v2589 = vand.u32 2147483647, %v2408
    %vm2590 = vcmp.eq.f32.partialorder %v2589, 8.507059e+37
    %v2591 = vand.u32 %v2408, 2147483648
    %v2592 = vor.u32 1.1754944e-38, %v2591
    %v2593 = vsel %vm2590, %v2592, %v2588
    %v2594 = vmul.f32 1.0, %v2593
    %v2595 = vrcp.pop %v2409
    %v2596 = vmul.f32 %v2409, %v2595
    %v2597 = vsub.f32 1.0, %v2596
    %v2598 = vmul.f32 %v2595, %v2597
    %v2599 = vadd.f32 %v2595, %v2598
    %vm2600 = vweird.f32 %v2409
    %vm2601 = vweird.f32 %v2595
    %vm2602 = vmor %vm2600, %vm2601
    %v2603 = vsel %vm2602, %v2595, %v2599
    %v2604 = vand.u32 2147483647, %v2409
    %vm2605 = vcmp.eq.f32.partialorder %v2604, 8.507059e+37
    %v2606 = vand.u32 %v2409, 2147483648
    %v2607 = vor.u32 1.1754944e-38, %v2606
    %v2608 = vsel %vm2605, %v2607, %v2603
    %v2609 = vmul.f32 1.0, %v2608
    %v2610 = vrcp.pop %v2410
    %v2611 = vmul.f32 %v2410, %v2610
    %v2612 = vsub.f32 1.0, %v2611
    %v2613 = vmul.f32 %v2610, %v2612
    %v2614 = vadd.f32 %v2610, %v2613
    %vm2615 = vweird.f32 %v2410
    %vm2616 = vweird.f32 %v2610
    %vm2617 = vmor %vm2615, %vm2616
    %v2618 = vsel %vm2617, %v2610, %v2614
    %v2619 = vand.u32 2147483647, %v2410
    %vm2620 = vcmp.eq.f32.partialorder %v2619, 8.507059e+37
    %v2621 = vand.u32 %v2410, 2147483648
    %v2622 = vor.u32 1.1754944e-38, %v2621
    %v2623 = vsel %vm2620, %v2622, %v2618
    %v2624 = vmul.f32 1.0, %v2623
    %v2625 = vrcp.pop %v2411
    %v2626 = vmul.f32 %v2411, %v2625
    %v2627 = vsub.f32 1.0, %v2626
    %v2628 = vmul.f32 %v2625, %v2627
    %v2629 = vadd.f32 %v2625, %v2628
    %vm2630 = vweird.f32 %v2411
    %vm2631 = vweird.f32 %v2625
    %vm2632 = vmor %vm2630, %vm2631
    %v2633 = vsel %vm2632, %v2625, %v2629
    %v2634 = vand.u32 2147483647, %v2411
    %vm2635 = vcmp.eq.f32.partialorder %v2634, 8.507059e+37
    %v2636 = vand.u32 %v2411, 2147483648
    %v2637 = vor.u32 1.1754944e-38, %v2636
    %v2638 = vsel %vm2635, %v2637, %v2633
    %v2639 = vmul.f32 1.0, %v2638
    %v2640 = vrcp.pop %v2412
    %v2641 = vmul.f32 %v2412, %v2640
    %v2642 = vsub.f32 1.0, %v2641
    %v2643 = vmul.f32 %v2640, %v2642
    %v2644 = vadd.f32 %v2640, %v2643
    %vm2645 = vweird.f32 %v2412
    %vm2646 = vweird.f32 %v2640
    %vm2647 = vmor %vm2645, %vm2646
    %v2648 = vsel %vm2647, %v2640, %v2644
    %v2649 = vand.u32 2147483647, %v2412
    %vm2650 = vcmp.eq.f32.partialorder %v2649, 8.507059e+37
    %v2651 = vand.u32 %v2412, 2147483648
    %v2652 = vor.u32 1.1754944e-38, %v2651
    %v2653 = vsel %vm2650, %v2652, %v2648
    %v2654 = vmul.f32 1.0, %v2653
    %v2655 = vrcp.pop %v2413
    %v2656 = vmul.f32 %v2413, %v2655
    %v2657 = vsub.f32 1.0, %v2656
    %v2658 = vmul.f32 %v2655, %v2657
    %v2659 = vadd.f32 %v2655, %v2658
    %vm2660 = vweird.f32 %v2413
    %vm2661 = vweird.f32 %v2655
    %vm2662 = vmor %vm2660, %vm2661
    %v2663 = vsel %vm2662, %v2655, %v2659
    %v2664 = vand.u32 2147483647, %v2413
    %vm2665 = vcmp.eq.f32.partialorder %v2664, 8.507059e+37
    %v2666 = vand.u32 %v2413, 2147483648
    %v2667 = vor.u32 1.1754944e-38, %v2666
    %v2668 = vsel %vm2665, %v2667, %v2663
    %v2669 = vmul.f32 1.0, %v2668
    %v2670 = vrcp.pop %v2414
    %v2671 = vmul.f32 %v2414, %v2670
    %v2672 = vsub.f32 1.0, %v2671
    %v2673 = vmul.f32 %v2670, %v2672
    %v2674 = vadd.f32 %v2670, %v2673
    %vm2675 = vweird.f32 %v2414
    %vm2676 = vweird.f32 %v2670
    %vm2677 = vmor %vm2675, %vm2676
    %v2678 = vsel %vm2677, %v2670, %v2674
    %v2679 = vand.u32 2147483647, %v2414
    %vm2680 = vcmp.eq.f32.partialorder %v2679, 8.507059e+37
    %v2681 = vand.u32 %v2414, 2147483648
    %v2682 = vor.u32 1.1754944e-38, %v2681
    %v2683 = vsel %vm2680, %v2682, %v2678
    %v2684 = vmul.f32 1.0, %v2683
    %v2685 = vrcp.pop %v2415
    %v2686 = vmul.f32 %v2415, %v2685
    %v2687 = vsub.f32 1.0, %v2686
    %v2688 = vmul.f32 %v2685, %v2687
    %v2689 = vadd.f32 %v2685, %v2688
    %vm2690 = vweird.f32 %v2415
    %vm2691 = vweird.f32 %v2685
    %vm2692 = vmor %vm2690, %vm2691
    %v2693 = vsel %vm2692, %v2685, %v2689
    %v2694 = vand.u32 2147483647, %v2415
    %vm2695 = vcmp.eq.f32.partialorder %v2694, 8.507059e+37
    %v2696 = vand.u32 %v2415, 2147483648
    %v2697 = vor.u32 1.1754944e-38, %v2696
    %v2698 = vsel %vm2695, %v2697, %v2693
    %v2699 = vmul.f32 1.0, %v2698
    %v2700 = vrcp.pop %v2416
    %v2701 = vmul.f32 %v2416, %v2700
    %v2702 = vsub.f32 1.0, %v2701
    %v2703 = vmul.f32 %v2700, %v2702
    %v2704 = vadd.f32 %v2700, %v2703
    %vm2705 = vweird.f32 %v2416
    %vm2706 = vweird.f32 %v2700
    %vm2707 = vmor %vm2705, %vm2706
    %v2708 = vsel %vm2707, %v2700, %v2704
    %v2709 = vand.u32 2147483647, %v2416
    %vm2710 = vcmp.eq.f32.partialorder %v2709, 8.507059e+37
    %v2711 = vand.u32 %v2416, 2147483648
    %v2712 = vor.u32 1.1754944e-38, %v2711
    %v2713 = vsel %vm2710, %v2712, %v2708
    %v2714 = vmul.f32 1.0, %v2713
    %v2715 = vrcp.pop %v2417
    %v2716 = vmul.f32 %v2417, %v2715
    %v2717 = vsub.f32 1.0, %v2716
    %v2718 = vmul.f32 %v2715, %v2717
    %v2719 = vadd.f32 %v2715, %v2718
    %vm2720 = vweird.f32 %v2417
    %vm2721 = vweird.f32 %v2715
    %vm2722 = vmor %vm2720, %vm2721
    %v2723 = vsel %vm2722, %v2715, %v2719
    %v2724 = vand.u32 2147483647, %v2417
    %vm2725 = vcmp.eq.f32.partialorder %v2724, 8.507059e+37
    %v2726 = vand.u32 %v2417, 2147483648
    %v2727 = vor.u32 1.1754944e-38, %v2726
    %v2728 = vsel %vm2725, %v2727, %v2723
    %v2729 = vmul.f32 1.0, %v2728
    %v2730 = vrcp.pop %v2418
    %v2731 = vmul.f32 %v2418, %v2730
    %v2732 = vsub.f32 1.0, %v2731
    %v2733 = vmul.f32 %v2730, %v2732
    %v2734 = vadd.f32 %v2730, %v2733
    %vm2735 = vweird.f32 %v2418
    %vm2736 = vweird.f32 %v2730
    %vm2737 = vmor %vm2735, %vm2736
    %v2738 = vsel %vm2737, %v2730, %v2734
    %v2739 = vand.u32 2147483647, %v2418
    %vm2740 = vcmp.eq.f32.partialorder %v2739, 8.507059e+37
    %v2741 = vand.u32 %v2418, 2147483648
    %v2742 = vor.u32 1.1754944e-38, %v2741
    %v2743 = vsel %vm2740, %v2742, %v2738
    %v2744 = vmul.f32 1.0, %v2743
    %v2745 = vrcp.pop %v2419
    %v2746 = vmul.f32 %v2419, %v2745
    %v2747 = vsub.f32 1.0, %v2746
    %v2748 = vmul.f32 %v2745, %v2747
    %v2749 = vadd.f32 %v2745, %v2748
    %vm2750 = vweird.f32 %v2419
    %vm2751 = vweird.f32 %v2745
    %vm2752 = vmor %vm2750, %vm2751
    %v2753 = vsel %vm2752, %v2745, %v2749
    %v2754 = vand.u32 2147483647, %v2419
    %vm2755 = vcmp.eq.f32.partialorder %v2754, 8.507059e+37
    %v2756 = vand.u32 %v2419, 2147483648
    %v2757 = vor.u32 1.1754944e-38, %v2756
    %v2758 = vsel %vm2755, %v2757, %v2753
    %v2759 = vmul.f32 1.0, %v2758
    %v2760 = vrcp.pop %v2420
    %v2761 = vmul.f32 %v2420, %v2760
    %v2762 = vsub.f32 1.0, %v2761
    %v2763 = vmul.f32 %v2760, %v2762
    %v2764 = vadd.f32 %v2760, %v2763
    %vm2765 = vweird.f32 %v2420
    %vm2766 = vweird.f32 %v2760
    %vm2767 = vmor %vm2765, %vm2766
    %v2768 = vsel %vm2767, %v2760, %v2764
    %v2769 = vand.u32 2147483647, %v2420
    %vm2770 = vcmp.eq.f32.partialorder %v2769, 8.507059e+37
    %v2771 = vand.u32 %v2420, 2147483648
    %v2772 = vor.u32 1.1754944e-38, %v2771
    %v2773 = vsel %vm2770, %v2772, %v2768
    %v2774 = vmul.f32 1.0, %v2773
    %v2775 = vrcp.pop %v2421
    %v2776 = vmul.f32 %v2421, %v2775
    %v2777 = vsub.f32 1.0, %v2776
    %v2778 = vmul.f32 %v2775, %v2777
    %v2779 = vadd.f32 %v2775, %v2778
    %vm2780 = vweird.f32 %v2421
    %vm2781 = vweird.f32 %v2775
    %vm2782 = vmor %vm2780, %vm2781
    %v2783 = vsel %vm2782, %v2775, %v2779
    %v2784 = vand.u32 2147483647, %v2421
    %vm2785 = vcmp.eq.f32.partialorder %v2784, 8.507059e+37
    %v2786 = vand.u32 %v2421, 2147483648
    %v2787 = vor.u32 1.1754944e-38, %v2786
    %v2788 = vsel %vm2785, %v2787, %v2783
    %v2789 = vmul.f32 1.0, %v2788
    %v2790 = vrcp.pop %v2422
    %v2791 = vmul.f32 %v2422, %v2790
    %v2792 = vsub.f32 1.0, %v2791
    %v2793 = vmul.f32 %v2790, %v2792
    %v2794 = vadd.f32 %v2790, %v2793
    %vm2795 = vweird.f32 %v2422
    %vm2796 = vweird.f32 %v2790
    %vm2797 = vmor %vm2795, %vm2796
    %v2798 = vsel %vm2797, %v2790, %v2794
    %v2799 = vand.u32 2147483647, %v2422
    %vm2800 = vcmp.eq.f32.partialorder %v2799, 8.507059e+37
    %v2801 = vand.u32 %v2422, 2147483648
    %v2802 = vor.u32 1.1754944e-38, %v2801
    %v2803 = vsel %vm2800, %v2802, %v2798
    %v2804 = vmul.f32 1.0, %v2803
    %v2805 = vrcp.pop %v2423
    %v2806 = vmul.f32 %v2423, %v2805
    %v2807 = vsub.f32 1.0, %v2806
    %v2808 = vmul.f32 %v2805, %v2807
    %v2809 = vadd.f32 %v2805, %v2808
    %vm2810 = vweird.f32 %v2423
    %vm2811 = vweird.f32 %v2805
    %vm2812 = vmor %vm2810, %vm2811
    %v2813 = vsel %vm2812, %v2805, %v2809
    %v2814 = vand.u32 2147483647, %v2423
    %vm2815 = vcmp.eq.f32.partialorder %v2814, 8.507059e+37
    %v2816 = vand.u32 %v2423, 2147483648
    %v2817 = vor.u32 1.1754944e-38, %v2816
    %v2818 = vsel %vm2815, %v2817, %v2813
    %v2819 = vmul.f32 1.0, %v2818
    %v2820 = vrcp.pop %v2424
    %v2821 = vmul.f32 %v2424, %v2820
    %v2822 = vsub.f32 1.0, %v2821
    %v2823 = vmul.f32 %v2820, %v2822
    %v2824 = vadd.f32 %v2820, %v2823
    %vm2825 = vweird.f32 %v2424
    %vm2826 = vweird.f32 %v2820
    %vm2827 = vmor %vm2825, %vm2826
    %v2828 = vsel %vm2827, %v2820, %v2824
    %v2829 = vand.u32 2147483647, %v2424
    %vm2830 = vcmp.eq.f32.partialorder %v2829, 8.507059e+37
    %v2831 = vand.u32 %v2424, 2147483648
    %v2832 = vor.u32 1.1754944e-38, %v2831
    %v2833 = vsel %vm2830, %v2832, %v2828
    %v2834 = vmul.f32 1.0, %v2833
    %v2835 = vrcp.pop %v2425
    %v2836 = vmul.f32 %v2425, %v2835
    %v2837 = vsub.f32 1.0, %v2836
    %v2838 = vmul.f32 %v2835, %v2837
    %v2839 = vadd.f32 %v2835, %v2838
    %vm2840 = vweird.f32 %v2425
    %vm2841 = vweird.f32 %v2835
    %vm2842 = vmor %vm2840, %vm2841
    %v2843 = vsel %vm2842, %v2835, %v2839
    %v2844 = vand.u32 2147483647, %v2425
    %vm2845 = vcmp.eq.f32.partialorder %v2844, 8.507059e+37
    %v2846 = vand.u32 %v2425, 2147483648
    %v2847 = vor.u32 1.1754944e-38, %v2846
    %v2848 = vsel %vm2845, %v2847, %v2843
    %v2849 = vmul.f32 1.0, %v2848
    %v2850 = vrcp.pop %v2426
    %v2851 = vmul.f32 %v2426, %v2850
    %v2852 = vsub.f32 1.0, %v2851
    %v2853 = vmul.f32 %v2850, %v2852
    %v2854 = vadd.f32 %v2850, %v2853
    %vm2855 = vweird.f32 %v2426
    %vm2856 = vweird.f32 %v2850
    %vm2857 = vmor %vm2855, %vm2856
    %v2858 = vsel %vm2857, %v2850, %v2854
    %v2859 = vand.u32 2147483647, %v2426
    %vm2860 = vcmp.eq.f32.partialorder %v2859, 8.507059e+37
    %v2861 = vand.u32 %v2426, 2147483648
    %v2862 = vor.u32 1.1754944e-38, %v2861
    %v2863 = vsel %vm2860, %v2862, %v2858
    %v2864 = vmul.f32 1.0, %v2863
    %v2865 = vrcp.pop %v2427
    %v2866 = vmul.f32 %v2427, %v2865
    %v2867 = vsub.f32 1.0, %v2866
    %v2868 = vmul.f32 %v2865, %v2867
    %v2869 = vadd.f32 %v2865, %v2868
    %vm2870 = vweird.f32 %v2427
    %vm2871 = vweird.f32 %v2865
    %vm2872 = vmor %vm2870, %vm2871
    %v2873 = vsel %vm2872, %v2865, %v2869
    %v2874 = vand.u32 2147483647, %v2427
    %vm2875 = vcmp.eq.f32.partialorder %v2874, 8.507059e+37
    %v2876 = vand.u32 %v2427, 2147483648
    %v2877 = vor.u32 1.1754944e-38, %v2876
    %v2878 = vsel %vm2875, %v2877, %v2873
    %v2879 = vmul.f32 1.0, %v2878
    %v2880 = vrcp.pop %v2428
    %v2881 = vmul.f32 %v2428, %v2880
    %v2882 = vsub.f32 1.0, %v2881
    %v2883 = vmul.f32 %v2880, %v2882
    %v2884 = vadd.f32 %v2880, %v2883
    %vm2885 = vweird.f32 %v2428
    %vm2886 = vweird.f32 %v2880
    %vm2887 = vmor %vm2885, %vm2886
    %v2888 = vsel %vm2887, %v2880, %v2884
    %v2889 = vand.u32 2147483647, %v2428
    %vm2890 = vcmp.eq.f32.partialorder %v2889, 8.507059e+37
    %v2891 = vand.u32 %v2428, 2147483648
    %v2892 = vor.u32 1.1754944e-38, %v2891
    %v2893 = vsel %vm2890, %v2892, %v2888
    %v2894 = vmul.f32 1.0, %v2893
    %v2895 = vrcp.pop %v2429
    %v2896 = vmul.f32 %v2429, %v2895
    %v2897 = vsub.f32 1.0, %v2896
    %v2898 = vmul.f32 %v2895, %v2897
    %v2899 = vadd.f32 %v2895, %v2898
    %vm2900 = vweird.f32 %v2429
    %vm2901 = vweird.f32 %v2895
    %vm2902 = vmor %vm2900, %vm2901
    %v2903 = vsel %vm2902, %v2895, %v2899
    %v2904 = vand.u32 2147483647, %v2429
    %vm2905 = vcmp.eq.f32.partialorder %v2904, 8.507059e+37
    %v2906 = vand.u32 %v2429, 2147483648
    %v2907 = vor.u32 1.1754944e-38, %v2906
    %v2908 = vsel %vm2905, %v2907, %v2903
    %v2909 = vmul.f32 1.0, %v2908
    %v2910 = vmul.f32 %v2444, %v582
    %v2911 = vmul.f32 %v2459, %v583
    %v2912 = vmul.f32 %v2474, %v584
    %v2913 = vmul.f32 %v2489, %v585
    %v2914 = vmul.f32 %v2504, %v582
    %v2915 = vmul.f32 %v2519, %v583
    %v2916 = vmul.f32 %v2534, %v584
    %v2917 = vmul.f32 %v2549, %v585
    %v2918 = vmul.f32 %v2564, %v582
    %v2919 = vmul.f32 %v2579, %v583
    %v2920 = vmul.f32 %v2594, %v584
    %v2921 = vmul.f32 %v2609, %v585
    %v2922 = vmul.f32 %v2624, %v582
    %v2923 = vmul.f32 %v2639, %v583
    %v2924 = vmul.f32 %v2654, %v584
    %v2925 = vmul.f32 %v2669, %v585
    %v2926 = vmul.f32 %v2684, %v582
    %v2927 = vmul.f32 %v2699, %v583
    %v2928 = vmul.f32 %v2714, %v584
    %v2929 = vmul.f32 %v2729, %v585
    %v2930 = vmul.f32 %v2744, %v582
    %v2931 = vmul.f32 %v2759, %v583
    %v2932 = vmul.f32 %v2774, %v584
    %v2933 = vmul.f32 %v2789, %v585
    %v2934 = vmul.f32 %v2804, %v582
    %v2935 = vmul.f32 %v2819, %v583
    %v2936 = vmul.f32 %v2834, %v584
    %v2937 = vmul.f32 %v2849, %v585
    %v2938 = vmul.f32 %v2864, %v582
    %v2939 = vmul.f32 %v2879, %v583
    %v2940 = vmul.f32 %v2894, %v584
    %v2941 = vmul.f32 %v2909, %v585
    %v2942 = vsel %vm361, %v2910, 0.0
    %v2943 = vsel %vm361, %v2911, 0.0
    %v2944 = vadd.f32 %v2942, %v2943
    %v2945 = vsel %vm361, %v2912, 0.0
    %v2946 = vadd.f32 %v2944, %v2945
    %v2947 = vsel %vm361, %v2913, 0.0
    %v2948 = vadd.f32 %v2946, %v2947
    %v2949 = vrot.slane %v2948, 4
    %v2950 = vadd.f32 %v2948, %v2949
    %v2951 = vrot.slane %v2950, 2
    %v2952 = vadd.f32 %v2950, %v2951
    %v2953 = vrot.slane %v2952, 1
    %v2954 = vadd.f32 %v2952, %v2953
    %v2955 = vsel %vm361, %v2914, 0.0
    %v2956 = vsel %vm361, %v2915, 0.0
    %v2957 = vadd.f32 %v2955, %v2956
    %v2958 = vsel %vm361, %v2916, 0.0
    %v2959 = vadd.f32 %v2957, %v2958
    %v2960 = vsel %vm361, %v2917, 0.0
    %v2961 = vadd.f32 %v2959, %v2960
    %v2962 = vrot.slane %v2961, 4
    %v2963 = vadd.f32 %v2961, %v2962
    %v2964 = vrot.slane %v2963, 2
    %v2965 = vadd.f32 %v2963, %v2964
    %v2966 = vrot.slane %v2965, 1
    %v2967 = vadd.f32 %v2965, %v2966
    %v2968 = vsel %vm361, %v2918, 0.0
    %v2969 = vsel %vm361, %v2919, 0.0
    %v2970 = vadd.f32 %v2968, %v2969
    %v2971 = vsel %vm361, %v2920, 0.0
    %v2972 = vadd.f32 %v2970, %v2971
    %v2973 = vsel %vm361, %v2921, 0.0
    %v2974 = vadd.f32 %v2972, %v2973
    %v2975 = vrot.slane %v2974, 4
    %v2976 = vadd.f32 %v2974, %v2975
    %v2977 = vrot.slane %v2976, 2
    %v2978 = vadd.f32 %v2976, %v2977
    %v2979 = vrot.slane %v2978, 1
    %v2980 = vadd.f32 %v2978, %v2979
    %v2981 = vsel %vm361, %v2922, 0.0
    %v2982 = vsel %vm361, %v2923, 0.0
    %v2983 = vadd.f32 %v2981, %v2982
    %v2984 = vsel %vm361, %v2924, 0.0
    %v2985 = vadd.f32 %v2983, %v2984
    %v2986 = vsel %vm361, %v2925, 0.0
    %v2987 = vadd.f32 %v2985, %v2986
    %v2988 = vrot.slane %v2987, 4
    %v2989 = vadd.f32 %v2987, %v2988
    %v2990 = vrot.slane %v2989, 2
    %v2991 = vadd.f32 %v2989, %v2990
    %v2992 = vrot.slane %v2991, 1
    %v2993 = vadd.f32 %v2991, %v2992
    %v2994 = vsel %vm361, %v2926, 0.0
    %v2995 = vsel %vm361, %v2927, 0.0
    %v2996 = vadd.f32 %v2994, %v2995
    %v2997 = vsel %vm361, %v2928, 0.0
    %v2998 = vadd.f32 %v2996, %v2997
    %v2999 = vsel %vm361, %v2929, 0.0
    %v3000 = vadd.f32 %v2998, %v2999
    %v3001 = vrot.slane %v3000, 4
    %v3002 = vadd.f32 %v3000, %v3001
    %v3003 = vrot.slane %v3002, 2
    %v3004 = vadd.f32 %v3002, %v3003
    %v3005 = vrot.slane %v3004, 1
    %v3006 = vadd.f32 %v3004, %v3005
    %v3007 = vsel %vm361, %v2930, 0.0
    %v3008 = vsel %vm361, %v2931, 0.0
    %v3009 = vadd.f32 %v3007, %v3008
    %v3010 = vsel %vm361, %v2932, 0.0
    %v3011 = vadd.f32 %v3009, %v3010
    %v3012 = vsel %vm361, %v2933, 0.0
    %v3013 = vadd.f32 %v3011, %v3012
    %v3014 = vrot.slane %v3013, 4
    %v3015 = vadd.f32 %v3013, %v3014
    %v3016 = vrot.slane %v3015, 2
    %v3017 = vadd.f32 %v3015, %v3016
    %v3018 = vrot.slane %v3017, 1
    %v3019 = vadd.f32 %v3017, %v3018
    %v3020 = vsel %vm361, %v2934, 0.0
    %v3021 = vsel %vm361, %v2935, 0.0
    %v3022 = vadd.f32 %v3020, %v3021
    %v3023 = vsel %vm361, %v2936, 0.0
    %v3024 = vadd.f32 %v3022, %v3023
    %v3025 = vsel %vm361, %v2937, 0.0
    %v3026 = vadd.f32 %v3024, %v3025
    %v3027 = vrot.slane %v3026, 4
    %v3028 = vadd.f32 %v3026, %v3027
    %v3029 = vrot.slane %v3028, 2
    %v3030 = vadd.f32 %v3028, %v3029
    %v3031 = vrot.slane %v3030, 1
    %v3032 = vadd.f32 %v3030, %v3031
    %v3033 = vsel %vm361, %v2938, 0.0
    %v3034 = vsel %vm361, %v2939, 0.0
    %v3035 = vadd.f32 %v3033, %v3034
    %v3036 = vsel %vm361, %v2940, 0.0
    %v3037 = vadd.f32 %v3035, %v3036
    %v3038 = vsel %vm361, %v2941, 0.0
    %v3039 = vadd.f32 %v3037, %v3038
    %v3040 = vrot.slane %v3039, 4
    %v3041 = vadd.f32 %v3039, %v3040
    %v3042 = vrot.slane %v3041, 2
    %v3043 = vadd.f32 %v3041, %v3042
    %v3044 = vrot.slane %v3043, 1
    %v3045 = vadd.f32 %v3043, %v3044
    %v3046 = vadd.f32 %v2954, %v368
    %v3047 = vadd.f32 %v2967, %v375
    %v3048 = vadd.f32 %v2980, %v382
    %v3049 = vadd.f32 %v2993, %v389
    %v3050 = vadd.f32 %v3006, %v396
    %v3051 = vadd.f32 %v3019, %v403
    %v3052 = vadd.f32 %v3032, %v410
    %v3053 = vadd.f32 %v3045, %v417
    %v3054 = vmul.f32 %v2444, %v573
    %v3055 = vmul.f32 %v2459, %v574
    %v3056 = vmul.f32 %v2474, %v575
    %v3057 = vmul.f32 %v2489, %v576
    %v3058 = vmul.f32 %v2504, %v573
    %v3059 = vmul.f32 %v2519, %v574
    %v3060 = vmul.f32 %v2534, %v575
    %v3061 = vmul.f32 %v2549, %v576
    %v3062 = vmul.f32 %v2564, %v573
    %v3063 = vmul.f32 %v2579, %v574
    %v3064 = vmul.f32 %v2594, %v575
    %v3065 = vmul.f32 %v2609, %v576
    %v3066 = vmul.f32 %v2624, %v573
    %v3067 = vmul.f32 %v2639, %v574
    %v3068 = vmul.f32 %v2654, %v575
    %v3069 = vmul.f32 %v2669, %v576
    %v3070 = vmul.f32 %v2684, %v573
    %v3071 = vmul.f32 %v2699, %v574
    %v3072 = vmul.f32 %v2714, %v575
    %v3073 = vmul.f32 %v2729, %v576
    %v3074 = vmul.f32 %v2744, %v573
    %v3075 = vmul.f32 %v2759, %v574
    %v3076 = vmul.f32 %v2774, %v575
    %v3077 = vmul.f32 %v2789, %v576
    %v3078 = vmul.f32 %v2804, %v573
    %v3079 = vmul.f32 %v2819, %v574
    %v3080 = vmul.f32 %v2834, %v575
    %v3081 = vmul.f32 %v2849, %v576
    %v3082 = vmul.f32 %v2864, %v573
    %v3083 = vmul.f32 %v2879, %v574
    %v3084 = vmul.f32 %v2894, %v575
    %v3085 = vmul.f32 %v2909, %v576
    %v3086 = vsel %vm361, %v3054, 0.0
    %v3087 = vsel %vm361, %v3055, 0.0
    %v3088 = vadd.f32 %v3086, %v3087
    %v3089 = vsel %vm361, %v3056, 0.0
    %v3090 = vadd.f32 %v3088, %v3089
    %v3091 = vsel %vm361, %v3057, 0.0
    %v3092 = vadd.f32 %v3090, %v3091
    %v3093 = vrot.slane %v3092, 4
    %v3094 = vadd.f32 %v3092, %v3093
    %v3095 = vrot.slane %v3094, 2
    %v3096 = vadd.f32 %v3094, %v3095
    %v3097 = vrot.slane %v3096, 1
    %v3098 = vadd.f32 %v3096, %v3097
    %v3099 = vsel %vm361, %v3058, 0.0
    %v3100 = vsel %vm361, %v3059, 0.0
    %v3101 = vadd.f32 %v3099, %v3100
    %v3102 = vsel %vm361, %v3060, 0.0
    %v3103 = vadd.f32 %v3101, %v3102
    %v3104 = vsel %vm361, %v3061, 0.0
    %v3105 = vadd.f32 %v3103, %v3104
    %v3106 = vrot.slane %v3105, 4
    %v3107 = vadd.f32 %v3105, %v3106
    %v3108 = vrot.slane %v3107, 2
    %v3109 = vadd.f32 %v3107, %v3108
    %v3110 = vrot.slane %v3109, 1
    %v3111 = vadd.f32 %v3109, %v3110
    %v3112 = vsel %vm361, %v3062, 0.0
    %v3113 = vsel %vm361, %v3063, 0.0
    %v3114 = vadd.f32 %v3112, %v3113
    %v3115 = vsel %vm361, %v3064, 0.0
    %v3116 = vadd.f32 %v3114, %v3115
    %v3117 = vsel %vm361, %v3065, 0.0
    %v3118 = vadd.f32 %v3116, %v3117
    %v3119 = vrot.slane %v3118, 4
    %v3120 = vadd.f32 %v3118, %v3119
    %v3121 = vrot.slane %v3120, 2
    %v3122 = vadd.f32 %v3120, %v3121
    %v3123 = vrot.slane %v3122, 1
    %v3124 = vadd.f32 %v3122, %v3123
    %v3125 = vsel %vm361, %v3066, 0.0
    %v3126 = vsel %vm361, %v3067, 0.0
    %v3127 = vadd.f32 %v3125, %v3126
    %v3128 = vsel %vm361, %v3068, 0.0
    %v3129 = vadd.f32 %v3127, %v3128
    %v3130 = vsel %vm361, %v3069, 0.0
    %v3131 = vadd.f32 %v3129, %v3130
    %v3132 = vrot.slane %v3131, 4
    %v3133 = vadd.f32 %v3131, %v3132
    %v3134 = vrot.slane %v3133, 2
    %v3135 = vadd.f32 %v3133, %v3134
    %v3136 = vrot.slane %v3135, 1
    %v3137 = vadd.f32 %v3135, %v3136
    %v3138 = vsel %vm361, %v3070, 0.0
    %v3139 = vsel %vm361, %v3071, 0.0
    %v3140 = vadd.f32 %v3138, %v3139
    %v3141 = vsel %vm361, %v3072, 0.0
    %v3142 = vadd.f32 %v3140, %v3141
    %v3143 = vsel %vm361, %v3073, 0.0
    %v3144 = vadd.f32 %v3142, %v3143
    %v3145 = vrot.slane %v3144, 4
    %v3146 = vadd.f32 %v3144, %v3145
    %v3147 = vrot.slane %v3146, 2
    %v3148 = vadd.f32 %v3146, %v3147
    %v3149 = vrot.slane %v3148, 1
    %v3150 = vadd.f32 %v3148, %v3149
    %v3151 = vsel %vm361, %v3074, 0.0
    %v3152 = vsel %vm361, %v3075, 0.0
    %v3153 = vadd.f32 %v3151, %v3152
    %v3154 = vsel %vm361, %v3076, 0.0
    %v3155 = vadd.f32 %v3153, %v3154
    %v3156 = vsel %vm361, %v3077, 0.0
    %v3157 = vadd.f32 %v3155, %v3156
    %v3158 = vrot.slane %v3157, 4
    %v3159 = vadd.f32 %v3157, %v3158
    %v3160 = vrot.slane %v3159, 2
    %v3161 = vadd.f32 %v3159, %v3160
    %v3162 = vrot.slane %v3161, 1
    %v3163 = vadd.f32 %v3161, %v3162
    %v3164 = vsel %vm361, %v3078, 0.0
    %v3165 = vsel %vm361, %v3079, 0.0
    %v3166 = vadd.f32 %v3164, %v3165
    %v3167 = vsel %vm361, %v3080, 0.0
    %v3168 = vadd.f32 %v3166, %v3167
    %v3169 = vsel %vm361, %v3081, 0.0
    %v3170 = vadd.f32 %v3168, %v3169
    %v3171 = vrot.slane %v3170, 4
    %v3172 = vadd.f32 %v3170, %v3171
    %v3173 = vrot.slane %v3172, 2
    %v3174 = vadd.f32 %v3172, %v3173
    %v3175 = vrot.slane %v3174, 1
    %v3176 = vadd.f32 %v3174, %v3175
    %v3177 = vsel %vm361, %v3082, 0.0
    %v3178 = vsel %vm361, %v3083, 0.0
    %v3179 = vadd.f32 %v3177, %v3178
    %v3180 = vsel %vm361, %v3084, 0.0
    %v3181 = vadd.f32 %v3179, %v3180
    %v3182 = vsel %vm361, %v3085, 0.0
    %v3183 = vadd.f32 %v3181, %v3182
    %v3184 = vrot.slane %v3183, 4
    %v3185 = vadd.f32 %v3183, %v3184
    %v3186 = vrot.slane %v3185, 2
    %v3187 = vadd.f32 %v3185, %v3186
    %v3188 = vrot.slane %v3187, 1
    %v3189 = vadd.f32 %v3187, %v3188
    %v3190 = vadd.f32 %v3098, %v432
    %v3191 = vadd.f32 %v3111, %v439
    %v3192 = vadd.f32 %v3124, %v446
    %v3193 = vadd.f32 %v3137, %v453
    %v3194 = vadd.f32 %v3150, %v460
    %v3195 = vadd.f32 %v3163, %v467
    %v3196 = vadd.f32 %v3176, %v474
    %v3197 = vadd.f32 %v3189, %v481
    %v3198 = vmul.f32 %v763, %v2037
    %v3199 = vadd.f32 %v3198, %v765
    %v3208 = vsel %vm775, %v3047, %v3046
    %v3209 = vsel %vm777, %v3048, %v3208
    %v3210 = vsel %vm779, %v3049, %v3209
    %v3211 = vsel %vm781, %v3050, %v3210
    %v3212 = vsel %vm783, %v3051, %v3211
    %v3213 = vsel %vm785, %v3052, %v3212
    %v3214 = vsel %vm787, %v3053, %v3213
    %v3216 = vadd.f32 %v3199, %v3214
    %v3225 = vsel %vm775, %v3191, %v3190
    %v3226 = vsel %vm777, %v3192, %v3225
    %v3227 = vsel %vm779, %v3193, %v3226
    %v3228 = vsel %vm781, %v3194, %v3227
    %v3229 = vsel %vm783, %v3195, %v3228
    %v3230 = vsel %vm785, %v3196, %v3229
    %v3231 = vsel %vm787, %v3197, %v3230
    %v3233 = vadd.f32 %v792, %v3231
    %v3234 = vadd.f32 %v3233, 1e-08
    %v3235 = vrcp.pop %v3234
    %v3236 = vmul.f32 %v3234, %v3235
    %v3237 = vsub.f32 1.0, %v3236
    %v3238 = vmul.f32 %v3235, %v3237
    %v3239 = vadd.f32 %v3235, %v3238
    %vm3240 = vweird.f32 %v3234
    %vm3241 = vweird.f32 %v3235
    %vm3242 = vmor %vm3240, %vm3241
    %v3243 = vsel %vm3242, %v3235, %v3239
    %v3244 = vand.u32 2147483647, %v3234
    %vm3245 = vcmp.eq.f32.partialorder %v3244, 8.507059e+37
    %v3246 = vand.u32 %v3234, 2147483648
    %v3247 = vor.u32 1.1754944e-38, %v3246
    %v3248 = vsel %vm3245, %v3247, %v3243
    %v3249 = vmul.f32 %v3216, %v3248
    %v3250 = vperm.slane %v3249, 0
    %v3251 = vlaneseq
    %v3252 = vshrl.u32 %v3251, 7
    %3254 = vset.pattern.permute.xlu0 %v3252
    %3255 = vperm.xlu0 %3254, %v3250
    %v3256 = vpop.permute.xlu0 %3255
    %v3257 = vlaneseq
    %v3258 = vshrl.u32 %v3257, 7
    %v3259 = vadd.s32 %v3258, 8
    %3260 = vset.pattern.permute.xlu0 %v3259
    %3261 = vperm.xlu0 %3260, %v3250
    %v3262 = vpop.permute.xlu0 %3261
    %v3263 = vlaneseq
    %v3264 = vshrl.u32 %v3263, 7
    %v3265 = vadd.s32 %v3264, 16
    %3266 = vset.pattern.permute.xlu0 %v3265
    %3267 = vperm.xlu0 %3266, %v3250
    %v3268 = vpop.permute.xlu0 %3267
    %v3269 = vlaneseq
    %v3270 = vshrl.u32 %v3269, 7
    %v3271 = vadd.s32 %v3270, 24
    %3272 = vset.pattern.permute.xlu0 %v3271
    %3273 = vperm.xlu0 %3272, %v3250
    %v3274 = vpop.permute.xlu0 %3273
    %v3275 = vperm.slane %v3249, 1
    %v3276 = vlaneseq
    %v3277 = vshrl.u32 %v3276, 7
    %3279 = vset.pattern.permute.xlu0 %v3277
    %3280 = vperm.xlu0 %3279, %v3275
    %v3281 = vpop.permute.xlu0 %3280
    %v3282 = vlaneseq
    %v3283 = vshrl.u32 %v3282, 7
    %v3284 = vadd.s32 %v3283, 8
    %3285 = vset.pattern.permute.xlu0 %v3284
    %3286 = vperm.xlu0 %3285, %v3275
    %v3287 = vpop.permute.xlu0 %3286
    %v3288 = vlaneseq
    %v3289 = vshrl.u32 %v3288, 7
    %v3290 = vadd.s32 %v3289, 16
    %3291 = vset.pattern.permute.xlu0 %v3290
    %3292 = vperm.xlu0 %3291, %v3275
    %v3293 = vpop.permute.xlu0 %3292
    %v3294 = vlaneseq
    %v3295 = vshrl.u32 %v3294, 7
    %v3296 = vadd.s32 %v3295, 24
    %3297 = vset.pattern.permute.xlu0 %v3296
    %3298 = vperm.xlu0 %3297, %v3275
    %v3299 = vpop.permute.xlu0 %3298
    %v3300 = vperm.slane %v3249, 2
    %v3301 = vlaneseq
    %v3302 = vshrl.u32 %v3301, 7
    %3304 = vset.pattern.permute.xlu0 %v3302
    %3305 = vperm.xlu0 %3304, %v3300
    %v3306 = vpop.permute.xlu0 %3305
    %v3307 = vlaneseq
    %v3308 = vshrl.u32 %v3307, 7
    %v3309 = vadd.s32 %v3308, 8
    %3310 = vset.pattern.permute.xlu0 %v3309
    %3311 = vperm.xlu0 %3310, %v3300
    %v3312 = vpop.permute.xlu0 %3311
    %v3313 = vlaneseq
    %v3314 = vshrl.u32 %v3313, 7
    %v3315 = vadd.s32 %v3314, 16
    %3316 = vset.pattern.permute.xlu0 %v3315
    %3317 = vperm.xlu0 %3316, %v3300
    %v3318 = vpop.permute.xlu0 %3317
    %v3319 = vlaneseq
    %v3320 = vshrl.u32 %v3319, 7
    %v3321 = vadd.s32 %v3320, 24
    %3322 = vset.pattern.permute.xlu0 %v3321
    %3323 = vperm.xlu0 %3322, %v3300
    %v3324 = vpop.permute.xlu0 %3323
    %v3325 = vperm.slane %v3249, 3
    %v3326 = vlaneseq
    %v3327 = vshrl.u32 %v3326, 7
    %3329 = vset.pattern.permute.xlu0 %v3327
    %3330 = vperm.xlu0 %3329, %v3325
    %v3331 = vpop.permute.xlu0 %3330
    %v3332 = vlaneseq
    %v3333 = vshrl.u32 %v3332, 7
    %v3334 = vadd.s32 %v3333, 8
    %3335 = vset.pattern.permute.xlu0 %v3334
    %3336 = vperm.xlu0 %3335, %v3325
    %v3337 = vpop.permute.xlu0 %3336
    %v3338 = vlaneseq
    %v3339 = vshrl.u32 %v3338, 7
    %v3340 = vadd.s32 %v3339, 16
    %3341 = vset.pattern.permute.xlu0 %v3340
    %3342 = vperm.xlu0 %3341, %v3325
    %v3343 = vpop.permute.xlu0 %3342
    %v3344 = vlaneseq
    %v3345 = vshrl.u32 %v3344, 7
    %v3346 = vadd.s32 %v3345, 24
    %3347 = vset.pattern.permute.xlu0 %v3346
    %3348 = vperm.xlu0 %3347, %v3325
    %v3349 = vpop.permute.xlu0 %3348
    %v3350 = vperm.slane %v3249, 4
    %v3351 = vlaneseq
    %v3352 = vshrl.u32 %v3351, 7
    %3354 = vset.pattern.permute.xlu0 %v3352
    %3355 = vperm.xlu0 %3354, %v3350
    %v3356 = vpop.permute.xlu0 %3355
    %v3357 = vlaneseq
    %v3358 = vshrl.u32 %v3357, 7
    %v3359 = vadd.s32 %v3358, 8
    %3360 = vset.pattern.permute.xlu0 %v3359
    %3361 = vperm.xlu0 %3360, %v3350
    %v3362 = vpop.permute.xlu0 %3361
    %v3363 = vlaneseq
    %v3364 = vshrl.u32 %v3363, 7
    %v3365 = vadd.s32 %v3364, 16
    %3366 = vset.pattern.permute.xlu0 %v3365
    %3367 = vperm.xlu0 %3366, %v3350
    %v3368 = vpop.permute.xlu0 %3367
    %v3369 = vlaneseq
    %v3370 = vshrl.u32 %v3369, 7
    %v3371 = vadd.s32 %v3370, 24
    %3372 = vset.pattern.permute.xlu0 %v3371
    %3373 = vperm.xlu0 %3372, %v3350
    %v3374 = vpop.permute.xlu0 %3373
    %v3375 = vperm.slane %v3249, 5
    %v3376 = vlaneseq
    %v3377 = vshrl.u32 %v3376, 7
    %3379 = vset.pattern.permute.xlu0 %v3377
    %3380 = vperm.xlu0 %3379, %v3375
    %v3381 = vpop.permute.xlu0 %3380
    %v3382 = vlaneseq
    %v3383 = vshrl.u32 %v3382, 7
    %v3384 = vadd.s32 %v3383, 8
    %3385 = vset.pattern.permute.xlu0 %v3384
    %3386 = vperm.xlu0 %3385, %v3375
    %v3387 = vpop.permute.xlu0 %3386
    %v3388 = vlaneseq
    %v3389 = vshrl.u32 %v3388, 7
    %v3390 = vadd.s32 %v3389, 16
    %3391 = vset.pattern.permute.xlu0 %v3390
    %3392 = vperm.xlu0 %3391, %v3375
    %v3393 = vpop.permute.xlu0 %3392
    %v3394 = vlaneseq
    %v3395 = vshrl.u32 %v3394, 7
    %v3396 = vadd.s32 %v3395, 24
    %3397 = vset.pattern.permute.xlu0 %v3396
    %3398 = vperm.xlu0 %3397, %v3375
    %v3399 = vpop.permute.xlu0 %3398
    %v3400 = vperm.slane %v3249, 6
    %v3401 = vlaneseq
    %v3402 = vshrl.u32 %v3401, 7
    %3404 = vset.pattern.permute.xlu0 %v3402
    %3405 = vperm.xlu0 %3404, %v3400
    %v3406 = vpop.permute.xlu0 %3405
    %v3407 = vlaneseq
    %v3408 = vshrl.u32 %v3407, 7
    %v3409 = vadd.s32 %v3408, 8
    %3410 = vset.pattern.permute.xlu0 %v3409
    %3411 = vperm.xlu0 %3410, %v3400
    %v3412 = vpop.permute.xlu0 %3411
    %v3413 = vlaneseq
    %v3414 = vshrl.u32 %v3413, 7
    %v3415 = vadd.s32 %v3414, 16
    %3416 = vset.pattern.permute.xlu0 %v3415
    %3417 = vperm.xlu0 %3416, %v3400
    %v3418 = vpop.permute.xlu0 %3417
    %v3419 = vlaneseq
    %v3420 = vshrl.u32 %v3419, 7
    %v3421 = vadd.s32 %v3420, 24
    %3422 = vset.pattern.permute.xlu0 %v3421
    %3423 = vperm.xlu0 %3422, %v3400
    %v3424 = vpop.permute.xlu0 %3423
    %v3425 = vperm.slane %v3249, 7
    %v3426 = vlaneseq
    %v3427 = vshrl.u32 %v3426, 7
    %3429 = vset.pattern.permute.xlu0 %v3427
    %3430 = vperm.xlu0 %3429, %v3425
    %v3431 = vpop.permute.xlu0 %3430
    %v3432 = vlaneseq
    %v3433 = vshrl.u32 %v3432, 7
    %v3434 = vadd.s32 %v3433, 8
    %3435 = vset.pattern.permute.xlu0 %v3434
    %3436 = vperm.xlu0 %3435, %v3425
    %v3437 = vpop.permute.xlu0 %3436
    %v3438 = vlaneseq
    %v3439 = vshrl.u32 %v3438, 7
    %v3440 = vadd.s32 %v3439, 16
    %3441 = vset.pattern.permute.xlu0 %v3440
    %3442 = vperm.xlu0 %3441, %v3425
    %v3443 = vpop.permute.xlu0 %3442
    %v3444 = vlaneseq
    %v3445 = vshrl.u32 %v3444, 7
    %v3446 = vadd.s32 %v3445, 24
    %3447 = vset.pattern.permute.xlu0 %v3446
    %3448 = vperm.xlu0 %3447, %v3425
    %v3449 = vpop.permute.xlu0 %3448
    %v3450 = vsub.f32 %v3256, %v482
    %v3451 = vsub.f32 %v3262, %v483
    %v3452 = vsub.f32 %v3268, %v484
    %v3453 = vsub.f32 %v3274, %v485
    %v3454 = vsub.f32 %v3281, %v482
    %v3455 = vsub.f32 %v3287, %v483
    %v3456 = vsub.f32 %v3293, %v484
    %v3457 = vsub.f32 %v3299, %v485
    %v3458 = vsub.f32 %v3306, %v482
    %v3459 = vsub.f32 %v3312, %v483
    %v3460 = vsub.f32 %v3318, %v484
    %v3461 = vsub.f32 %v3324, %v485
    %v3462 = vsub.f32 %v3331, %v482
    %v3463 = vsub.f32 %v3337, %v483
    %v3464 = vsub.f32 %v3343, %v484
    %v3465 = vsub.f32 %v3349, %v485
    %v3466 = vsub.f32 %v3356, %v482
    %v3467 = vsub.f32 %v3362, %v483
    %v3468 = vsub.f32 %v3368, %v484
    %v3469 = vsub.f32 %v3374, %v485
    %v3470 = vsub.f32 %v3381, %v482
    %v3471 = vsub.f32 %v3387, %v483
    %v3472 = vsub.f32 %v3393, %v484
    %v3473 = vsub.f32 %v3399, %v485
    %v3474 = vsub.f32 %v3406, %v482
    %v3475 = vsub.f32 %v3412, %v483
    %v3476 = vsub.f32 %v3418, %v484
    %v3477 = vsub.f32 %v3424, %v485
    %v3478 = vsub.f32 %v3431, %v482
    %v3479 = vsub.f32 %v3437, %v483
    %v3480 = vsub.f32 %v3443, %v484
    %v3481 = vsub.f32 %v3449, %v485
    %v3482 = vmul.f32 %v487, %v3450
    %v3483 = vmul.f32 %v488, %v3451
    %v3484 = vmul.f32 %v489, %v3452
    %v3485 = vmul.f32 %v490, %v3453
    %v3486 = vmul.f32 %v487, %v3454
    %v3487 = vmul.f32 %v488, %v3455
    %v3488 = vmul.f32 %v489, %v3456
    %v3489 = vmul.f32 %v490, %v3457
    %v3490 = vmul.f32 %v487, %v3458
    %v3491 = vmul.f32 %v488, %v3459
    %v3492 = vmul.f32 %v489, %v3460
    %v3493 = vmul.f32 %v490, %v3461
    %v3494 = vmul.f32 %v487, %v3462
    %v3495 = vmul.f32 %v488, %v3463
    %v3496 = vmul.f32 %v489, %v3464
    %v3497 = vmul.f32 %v490, %v3465
    %v3498 = vmul.f32 %v487, %v3466
    %v3499 = vmul.f32 %v488, %v3467
    %v3500 = vmul.f32 %v489, %v3468
    %v3501 = vmul.f32 %v490, %v3469
    %v3502 = vmul.f32 %v487, %v3470
    %v3503 = vmul.f32 %v488, %v3471
    %v3504 = vmul.f32 %v489, %v3472
    %v3505 = vmul.f32 %v490, %v3473
    %v3506 = vmul.f32 %v487, %v3474
    %v3507 = vmul.f32 %v488, %v3475
    %v3508 = vmul.f32 %v489, %v3476
    %v3509 = vmul.f32 %v490, %v3477
    %v3510 = vmul.f32 %v487, %v3478
    %v3511 = vmul.f32 %v488, %v3479
    %v3512 = vmul.f32 %v489, %v3480
    %v3513 = vmul.f32 %v490, %v3481
    %v3514 = vxor.u32 %v3482, 2147483648
    %v3515 = vxor.u32 %v3483, 2147483648
    %v3516 = vxor.u32 %v3484, 2147483648
    %v3517 = vxor.u32 %v3485, 2147483648
    %v3518 = vxor.u32 %v3486, 2147483648
    %v3519 = vxor.u32 %v3487, 2147483648
    %v3520 = vxor.u32 %v3488, 2147483648
    %v3521 = vxor.u32 %v3489, 2147483648
    %v3522 = vxor.u32 %v3490, 2147483648
    %v3523 = vxor.u32 %v3491, 2147483648
    %v3524 = vxor.u32 %v3492, 2147483648
    %v3525 = vxor.u32 %v3493, 2147483648
    %v3526 = vxor.u32 %v3494, 2147483648
    %v3527 = vxor.u32 %v3495, 2147483648
    %v3528 = vxor.u32 %v3496, 2147483648
    %v3529 = vxor.u32 %v3497, 2147483648
    %v3530 = vxor.u32 %v3498, 2147483648
    %v3531 = vxor.u32 %v3499, 2147483648
    %v3532 = vxor.u32 %v3500, 2147483648
    %v3533 = vxor.u32 %v3501, 2147483648
    %v3534 = vxor.u32 %v3502, 2147483648
    %v3535 = vxor.u32 %v3503, 2147483648
    %v3536 = vxor.u32 %v3504, 2147483648
    %v3537 = vxor.u32 %v3505, 2147483648
    %v3538 = vxor.u32 %v3506, 2147483648
    %v3539 = vxor.u32 %v3507, 2147483648
    %v3540 = vxor.u32 %v3508, 2147483648
    %v3541 = vxor.u32 %v3509, 2147483648
    %v3542 = vxor.u32 %v3510, 2147483648
    %v3543 = vxor.u32 %v3511, 2147483648
    %v3544 = vxor.u32 %v3512, 2147483648
    %v3545 = vxor.u32 %v3513, 2147483648
    %v3546 = vmul.f32 %v3514, 1.442695
    %v3547 = vpow.pop %v3546
    %v3548 = vmul.f32 %v3515, 1.442695
    %v3549 = vpow.pop %v3548
    %v3550 = vmul.f32 %v3516, 1.442695
    %v3551 = vpow.pop %v3550
    %v3552 = vmul.f32 %v3517, 1.442695
    %v3553 = vpow.pop %v3552
    %v3554 = vmul.f32 %v3518, 1.442695
    %v3555 = vpow.pop %v3554
    %v3556 = vmul.f32 %v3519, 1.442695
    %v3557 = vpow.pop %v3556
    %v3558 = vmul.f32 %v3520, 1.442695
    %v3559 = vpow.pop %v3558
    %v3560 = vmul.f32 %v3521, 1.442695
    %v3561 = vpow.pop %v3560
    %v3562 = vmul.f32 %v3522, 1.442695
    %v3563 = vpow.pop %v3562
    %v3564 = vmul.f32 %v3523, 1.442695
    %v3565 = vpow.pop %v3564
    %v3566 = vmul.f32 %v3524, 1.442695
    %v3567 = vpow.pop %v3566
    %v3568 = vmul.f32 %v3525, 1.442695
    %v3569 = vpow.pop %v3568
    %v3570 = vmul.f32 %v3526, 1.442695
    %v3571 = vpow.pop %v3570
    %v3572 = vmul.f32 %v3527, 1.442695
    %v3573 = vpow.pop %v3572
    %v3574 = vmul.f32 %v3528, 1.442695
    %v3575 = vpow.pop %v3574
    %v3576 = vmul.f32 %v3529, 1.442695
    %v3577 = vpow.pop %v3576
    %v3578 = vmul.f32 %v3530, 1.442695
    %v3579 = vpow.pop %v3578
    %v3580 = vmul.f32 %v3531, 1.442695
    %v3581 = vpow.pop %v3580
    %v3582 = vmul.f32 %v3532, 1.442695
    %v3583 = vpow.pop %v3582
    %v3584 = vmul.f32 %v3533, 1.442695
    %v3585 = vpow.pop %v3584
    %v3586 = vmul.f32 %v3534, 1.442695
    %v3587 = vpow.pop %v3586
    %v3588 = vmul.f32 %v3535, 1.442695
    %v3589 = vpow.pop %v3588
    %v3590 = vmul.f32 %v3536, 1.442695
    %v3591 = vpow.pop %v3590
    %v3592 = vmul.f32 %v3537, 1.442695
    %v3593 = vpow.pop %v3592
    %v3594 = vmul.f32 %v3538, 1.442695
    %v3595 = vpow.pop %v3594
    %v3596 = vmul.f32 %v3539, 1.442695
    %v3597 = vpow.pop %v3596
    %v3598 = vmul.f32 %v3540, 1.442695
    %v3599 = vpow.pop %v3598
    %v3600 = vmul.f32 %v3541, 1.442695
    %v3601 = vpow.pop %v3600
    %v3602 = vmul.f32 %v3542, 1.442695
    %v3603 = vpow.pop %v3602
    %v3604 = vmul.f32 %v3543, 1.442695
    %v3605 = vpow.pop %v3604
    %v3606 = vmul.f32 %v3544, 1.442695
    %v3607 = vpow.pop %v3606
    %v3608 = vmul.f32 %v3545, 1.442695
    %v3609 = vpow.pop %v3608
    %v3610 = vadd.f32 %v3547, 1.0
    %v3611 = vadd.f32 %v3549, 1.0
    %v3612 = vadd.f32 %v3551, 1.0
    %v3613 = vadd.f32 %v3553, 1.0
    %v3614 = vadd.f32 %v3555, 1.0
    %v3615 = vadd.f32 %v3557, 1.0
    %v3616 = vadd.f32 %v3559, 1.0
    %v3617 = vadd.f32 %v3561, 1.0
    %v3618 = vadd.f32 %v3563, 1.0
    %v3619 = vadd.f32 %v3565, 1.0
    %v3620 = vadd.f32 %v3567, 1.0
    %v3621 = vadd.f32 %v3569, 1.0
    %v3622 = vadd.f32 %v3571, 1.0
    %v3623 = vadd.f32 %v3573, 1.0
    %v3624 = vadd.f32 %v3575, 1.0
    %v3625 = vadd.f32 %v3577, 1.0
    %v3626 = vadd.f32 %v3579, 1.0
    %v3627 = vadd.f32 %v3581, 1.0
    %v3628 = vadd.f32 %v3583, 1.0
    %v3629 = vadd.f32 %v3585, 1.0
    %v3630 = vadd.f32 %v3587, 1.0
    %v3631 = vadd.f32 %v3589, 1.0
    %v3632 = vadd.f32 %v3591, 1.0
    %v3633 = vadd.f32 %v3593, 1.0
    %v3634 = vadd.f32 %v3595, 1.0
    %v3635 = vadd.f32 %v3597, 1.0
    %v3636 = vadd.f32 %v3599, 1.0
    %v3637 = vadd.f32 %v3601, 1.0
    %v3638 = vadd.f32 %v3603, 1.0
    %v3639 = vadd.f32 %v3605, 1.0
    %v3640 = vadd.f32 %v3607, 1.0
    %v3641 = vadd.f32 %v3609, 1.0
    %v3642 = vrcp.pop %v3610
    %v3643 = vmul.f32 %v3610, %v3642
    %v3644 = vsub.f32 1.0, %v3643
    %v3645 = vmul.f32 %v3642, %v3644
    %v3646 = vadd.f32 %v3642, %v3645
    %vm3647 = vweird.f32 %v3610
    %vm3648 = vweird.f32 %v3642
    %vm3649 = vmor %vm3647, %vm3648
    %v3650 = vsel %vm3649, %v3642, %v3646
    %v3651 = vand.u32 2147483647, %v3610
    %vm3652 = vcmp.eq.f32.partialorder %v3651, 8.507059e+37
    %v3653 = vand.u32 %v3610, 2147483648
    %v3654 = vor.u32 1.1754944e-38, %v3653
    %v3655 = vsel %vm3652, %v3654, %v3650
    %v3656 = vmul.f32 1.0, %v3655
    %v3657 = vrcp.pop %v3611
    %v3658 = vmul.f32 %v3611, %v3657
    %v3659 = vsub.f32 1.0, %v3658
    %v3660 = vmul.f32 %v3657, %v3659
    %v3661 = vadd.f32 %v3657, %v3660
    %vm3662 = vweird.f32 %v3611
    %vm3663 = vweird.f32 %v3657
    %vm3664 = vmor %vm3662, %vm3663
    %v3665 = vsel %vm3664, %v3657, %v3661
    %v3666 = vand.u32 2147483647, %v3611
    %vm3667 = vcmp.eq.f32.partialorder %v3666, 8.507059e+37
    %v3668 = vand.u32 %v3611, 2147483648
    %v3669 = vor.u32 1.1754944e-38, %v3668
    %v3670 = vsel %vm3667, %v3669, %v3665
    %v3671 = vmul.f32 1.0, %v3670
    %v3672 = vrcp.pop %v3612
    %v3673 = vmul.f32 %v3612, %v3672
    %v3674 = vsub.f32 1.0, %v3673
    %v3675 = vmul.f32 %v3672, %v3674
    %v3676 = vadd.f32 %v3672, %v3675
    %vm3677 = vweird.f32 %v3612
    %vm3678 = vweird.f32 %v3672
    %vm3679 = vmor %vm3677, %vm3678
    %v3680 = vsel %vm3679, %v3672, %v3676
    %v3681 = vand.u32 2147483647, %v3612
    %vm3682 = vcmp.eq.f32.partialorder %v3681, 8.507059e+37
    %v3683 = vand.u32 %v3612, 2147483648
    %v3684 = vor.u32 1.1754944e-38, %v3683
    %v3685 = vsel %vm3682, %v3684, %v3680
    %v3686 = vmul.f32 1.0, %v3685
    %v3687 = vrcp.pop %v3613
    %v3688 = vmul.f32 %v3613, %v3687
    %v3689 = vsub.f32 1.0, %v3688
    %v3690 = vmul.f32 %v3687, %v3689
    %v3691 = vadd.f32 %v3687, %v3690
    %vm3692 = vweird.f32 %v3613
    %vm3693 = vweird.f32 %v3687
    %vm3694 = vmor %vm3692, %vm3693
    %v3695 = vsel %vm3694, %v3687, %v3691
    %v3696 = vand.u32 2147483647, %v3613
    %vm3697 = vcmp.eq.f32.partialorder %v3696, 8.507059e+37
    %v3698 = vand.u32 %v3613, 2147483648
    %v3699 = vor.u32 1.1754944e-38, %v3698
    %v3700 = vsel %vm3697, %v3699, %v3695
    %v3701 = vmul.f32 1.0, %v3700
    %v3702 = vrcp.pop %v3614
    %v3703 = vmul.f32 %v3614, %v3702
    %v3704 = vsub.f32 1.0, %v3703
    %v3705 = vmul.f32 %v3702, %v3704
    %v3706 = vadd.f32 %v3702, %v3705
    %vm3707 = vweird.f32 %v3614
    %vm3708 = vweird.f32 %v3702
    %vm3709 = vmor %vm3707, %vm3708
    %v3710 = vsel %vm3709, %v3702, %v3706
    %v3711 = vand.u32 2147483647, %v3614
    %vm3712 = vcmp.eq.f32.partialorder %v3711, 8.507059e+37
    %v3713 = vand.u32 %v3614, 2147483648
    %v3714 = vor.u32 1.1754944e-38, %v3713
    %v3715 = vsel %vm3712, %v3714, %v3710
    %v3716 = vmul.f32 1.0, %v3715
    %v3717 = vrcp.pop %v3615
    %v3718 = vmul.f32 %v3615, %v3717
    %v3719 = vsub.f32 1.0, %v3718
    %v3720 = vmul.f32 %v3717, %v3719
    %v3721 = vadd.f32 %v3717, %v3720
    %vm3722 = vweird.f32 %v3615
    %vm3723 = vweird.f32 %v3717
    %vm3724 = vmor %vm3722, %vm3723
    %v3725 = vsel %vm3724, %v3717, %v3721
    %v3726 = vand.u32 2147483647, %v3615
    %vm3727 = vcmp.eq.f32.partialorder %v3726, 8.507059e+37
    %v3728 = vand.u32 %v3615, 2147483648
    %v3729 = vor.u32 1.1754944e-38, %v3728
    %v3730 = vsel %vm3727, %v3729, %v3725
    %v3731 = vmul.f32 1.0, %v3730
    %v3732 = vrcp.pop %v3616
    %v3733 = vmul.f32 %v3616, %v3732
    %v3734 = vsub.f32 1.0, %v3733
    %v3735 = vmul.f32 %v3732, %v3734
    %v3736 = vadd.f32 %v3732, %v3735
    %vm3737 = vweird.f32 %v3616
    %vm3738 = vweird.f32 %v3732
    %vm3739 = vmor %vm3737, %vm3738
    %v3740 = vsel %vm3739, %v3732, %v3736
    %v3741 = vand.u32 2147483647, %v3616
    %vm3742 = vcmp.eq.f32.partialorder %v3741, 8.507059e+37
    %v3743 = vand.u32 %v3616, 2147483648
    %v3744 = vor.u32 1.1754944e-38, %v3743
    %v3745 = vsel %vm3742, %v3744, %v3740
    %v3746 = vmul.f32 1.0, %v3745
    %v3747 = vrcp.pop %v3617
    %v3748 = vmul.f32 %v3617, %v3747
    %v3749 = vsub.f32 1.0, %v3748
    %v3750 = vmul.f32 %v3747, %v3749
    %v3751 = vadd.f32 %v3747, %v3750
    %vm3752 = vweird.f32 %v3617
    %vm3753 = vweird.f32 %v3747
    %vm3754 = vmor %vm3752, %vm3753
    %v3755 = vsel %vm3754, %v3747, %v3751
    %v3756 = vand.u32 2147483647, %v3617
    %vm3757 = vcmp.eq.f32.partialorder %v3756, 8.507059e+37
    %v3758 = vand.u32 %v3617, 2147483648
    %v3759 = vor.u32 1.1754944e-38, %v3758
    %v3760 = vsel %vm3757, %v3759, %v3755
    %v3761 = vmul.f32 1.0, %v3760
    %v3762 = vrcp.pop %v3618
    %v3763 = vmul.f32 %v3618, %v3762
    %v3764 = vsub.f32 1.0, %v3763
    %v3765 = vmul.f32 %v3762, %v3764
    %v3766 = vadd.f32 %v3762, %v3765
    %vm3767 = vweird.f32 %v3618
    %vm3768 = vweird.f32 %v3762
    %vm3769 = vmor %vm3767, %vm3768
    %v3770 = vsel %vm3769, %v3762, %v3766
    %v3771 = vand.u32 2147483647, %v3618
    %vm3772 = vcmp.eq.f32.partialorder %v3771, 8.507059e+37
    %v3773 = vand.u32 %v3618, 2147483648
    %v3774 = vor.u32 1.1754944e-38, %v3773
    %v3775 = vsel %vm3772, %v3774, %v3770
    %v3776 = vmul.f32 1.0, %v3775
    %v3777 = vrcp.pop %v3619
    %v3778 = vmul.f32 %v3619, %v3777
    %v3779 = vsub.f32 1.0, %v3778
    %v3780 = vmul.f32 %v3777, %v3779
    %v3781 = vadd.f32 %v3777, %v3780
    %vm3782 = vweird.f32 %v3619
    %vm3783 = vweird.f32 %v3777
    %vm3784 = vmor %vm3782, %vm3783
    %v3785 = vsel %vm3784, %v3777, %v3781
    %v3786 = vand.u32 2147483647, %v3619
    %vm3787 = vcmp.eq.f32.partialorder %v3786, 8.507059e+37
    %v3788 = vand.u32 %v3619, 2147483648
    %v3789 = vor.u32 1.1754944e-38, %v3788
    %v3790 = vsel %vm3787, %v3789, %v3785
    %v3791 = vmul.f32 1.0, %v3790
    %v3792 = vrcp.pop %v3620
    %v3793 = vmul.f32 %v3620, %v3792
    %v3794 = vsub.f32 1.0, %v3793
    %v3795 = vmul.f32 %v3792, %v3794
    %v3796 = vadd.f32 %v3792, %v3795
    %vm3797 = vweird.f32 %v3620
    %vm3798 = vweird.f32 %v3792
    %vm3799 = vmor %vm3797, %vm3798
    %v3800 = vsel %vm3799, %v3792, %v3796
    %v3801 = vand.u32 2147483647, %v3620
    %vm3802 = vcmp.eq.f32.partialorder %v3801, 8.507059e+37
    %v3803 = vand.u32 %v3620, 2147483648
    %v3804 = vor.u32 1.1754944e-38, %v3803
    %v3805 = vsel %vm3802, %v3804, %v3800
    %v3806 = vmul.f32 1.0, %v3805
    %v3807 = vrcp.pop %v3621
    %v3808 = vmul.f32 %v3621, %v3807
    %v3809 = vsub.f32 1.0, %v3808
    %v3810 = vmul.f32 %v3807, %v3809
    %v3811 = vadd.f32 %v3807, %v3810
    %vm3812 = vweird.f32 %v3621
    %vm3813 = vweird.f32 %v3807
    %vm3814 = vmor %vm3812, %vm3813
    %v3815 = vsel %vm3814, %v3807, %v3811
    %v3816 = vand.u32 2147483647, %v3621
    %vm3817 = vcmp.eq.f32.partialorder %v3816, 8.507059e+37
    %v3818 = vand.u32 %v3621, 2147483648
    %v3819 = vor.u32 1.1754944e-38, %v3818
    %v3820 = vsel %vm3817, %v3819, %v3815
    %v3821 = vmul.f32 1.0, %v3820
    %v3822 = vrcp.pop %v3622
    %v3823 = vmul.f32 %v3622, %v3822
    %v3824 = vsub.f32 1.0, %v3823
    %v3825 = vmul.f32 %v3822, %v3824
    %v3826 = vadd.f32 %v3822, %v3825
    %vm3827 = vweird.f32 %v3622
    %vm3828 = vweird.f32 %v3822
    %vm3829 = vmor %vm3827, %vm3828
    %v3830 = vsel %vm3829, %v3822, %v3826
    %v3831 = vand.u32 2147483647, %v3622
    %vm3832 = vcmp.eq.f32.partialorder %v3831, 8.507059e+37
    %v3833 = vand.u32 %v3622, 2147483648
    %v3834 = vor.u32 1.1754944e-38, %v3833
    %v3835 = vsel %vm3832, %v3834, %v3830
    %v3836 = vmul.f32 1.0, %v3835
    %v3837 = vrcp.pop %v3623
    %v3838 = vmul.f32 %v3623, %v3837
    %v3839 = vsub.f32 1.0, %v3838
    %v3840 = vmul.f32 %v3837, %v3839
    %v3841 = vadd.f32 %v3837, %v3840
    %vm3842 = vweird.f32 %v3623
    %vm3843 = vweird.f32 %v3837
    %vm3844 = vmor %vm3842, %vm3843
    %v3845 = vsel %vm3844, %v3837, %v3841
    %v3846 = vand.u32 2147483647, %v3623
    %vm3847 = vcmp.eq.f32.partialorder %v3846, 8.507059e+37
    %v3848 = vand.u32 %v3623, 2147483648
    %v3849 = vor.u32 1.1754944e-38, %v3848
    %v3850 = vsel %vm3847, %v3849, %v3845
    %v3851 = vmul.f32 1.0, %v3850
    %v3852 = vrcp.pop %v3624
    %v3853 = vmul.f32 %v3624, %v3852
    %v3854 = vsub.f32 1.0, %v3853
    %v3855 = vmul.f32 %v3852, %v3854
    %v3856 = vadd.f32 %v3852, %v3855
    %vm3857 = vweird.f32 %v3624
    %vm3858 = vweird.f32 %v3852
    %vm3859 = vmor %vm3857, %vm3858
    %v3860 = vsel %vm3859, %v3852, %v3856
    %v3861 = vand.u32 2147483647, %v3624
    %vm3862 = vcmp.eq.f32.partialorder %v3861, 8.507059e+37
    %v3863 = vand.u32 %v3624, 2147483648
    %v3864 = vor.u32 1.1754944e-38, %v3863
    %v3865 = vsel %vm3862, %v3864, %v3860
    %v3866 = vmul.f32 1.0, %v3865
    %v3867 = vrcp.pop %v3625
    %v3868 = vmul.f32 %v3625, %v3867
    %v3869 = vsub.f32 1.0, %v3868
    %v3870 = vmul.f32 %v3867, %v3869
    %v3871 = vadd.f32 %v3867, %v3870
    %vm3872 = vweird.f32 %v3625
    %vm3873 = vweird.f32 %v3867
    %vm3874 = vmor %vm3872, %vm3873
    %v3875 = vsel %vm3874, %v3867, %v3871
    %v3876 = vand.u32 2147483647, %v3625
    %vm3877 = vcmp.eq.f32.partialorder %v3876, 8.507059e+37
    %v3878 = vand.u32 %v3625, 2147483648
    %v3879 = vor.u32 1.1754944e-38, %v3878
    %v3880 = vsel %vm3877, %v3879, %v3875
    %v3881 = vmul.f32 1.0, %v3880
    %v3882 = vrcp.pop %v3626
    %v3883 = vmul.f32 %v3626, %v3882
    %v3884 = vsub.f32 1.0, %v3883
    %v3885 = vmul.f32 %v3882, %v3884
    %v3886 = vadd.f32 %v3882, %v3885
    %vm3887 = vweird.f32 %v3626
    %vm3888 = vweird.f32 %v3882
    %vm3889 = vmor %vm3887, %vm3888
    %v3890 = vsel %vm3889, %v3882, %v3886
    %v3891 = vand.u32 2147483647, %v3626
    %vm3892 = vcmp.eq.f32.partialorder %v3891, 8.507059e+37
    %v3893 = vand.u32 %v3626, 2147483648
    %v3894 = vor.u32 1.1754944e-38, %v3893
    %v3895 = vsel %vm3892, %v3894, %v3890
    %v3896 = vmul.f32 1.0, %v3895
    %v3897 = vrcp.pop %v3627
    %v3898 = vmul.f32 %v3627, %v3897
    %v3899 = vsub.f32 1.0, %v3898
    %v3900 = vmul.f32 %v3897, %v3899
    %v3901 = vadd.f32 %v3897, %v3900
    %vm3902 = vweird.f32 %v3627
    %vm3903 = vweird.f32 %v3897
    %vm3904 = vmor %vm3902, %vm3903
    %v3905 = vsel %vm3904, %v3897, %v3901
    %v3906 = vand.u32 2147483647, %v3627
    %vm3907 = vcmp.eq.f32.partialorder %v3906, 8.507059e+37
    %v3908 = vand.u32 %v3627, 2147483648
    %v3909 = vor.u32 1.1754944e-38, %v3908
    %v3910 = vsel %vm3907, %v3909, %v3905
    %v3911 = vmul.f32 1.0, %v3910
    %v3912 = vrcp.pop %v3628
    %v3913 = vmul.f32 %v3628, %v3912
    %v3914 = vsub.f32 1.0, %v3913
    %v3915 = vmul.f32 %v3912, %v3914
    %v3916 = vadd.f32 %v3912, %v3915
    %vm3917 = vweird.f32 %v3628
    %vm3918 = vweird.f32 %v3912
    %vm3919 = vmor %vm3917, %vm3918
    %v3920 = vsel %vm3919, %v3912, %v3916
    %v3921 = vand.u32 2147483647, %v3628
    %vm3922 = vcmp.eq.f32.partialorder %v3921, 8.507059e+37
    %v3923 = vand.u32 %v3628, 2147483648
    %v3924 = vor.u32 1.1754944e-38, %v3923
    %v3925 = vsel %vm3922, %v3924, %v3920
    %v3926 = vmul.f32 1.0, %v3925
    %v3927 = vrcp.pop %v3629
    %v3928 = vmul.f32 %v3629, %v3927
    %v3929 = vsub.f32 1.0, %v3928
    %v3930 = vmul.f32 %v3927, %v3929
    %v3931 = vadd.f32 %v3927, %v3930
    %vm3932 = vweird.f32 %v3629
    %vm3933 = vweird.f32 %v3927
    %vm3934 = vmor %vm3932, %vm3933
    %v3935 = vsel %vm3934, %v3927, %v3931
    %v3936 = vand.u32 2147483647, %v3629
    %vm3937 = vcmp.eq.f32.partialorder %v3936, 8.507059e+37
    %v3938 = vand.u32 %v3629, 2147483648
    %v3939 = vor.u32 1.1754944e-38, %v3938
    %v3940 = vsel %vm3937, %v3939, %v3935
    %v3941 = vmul.f32 1.0, %v3940
    %v3942 = vrcp.pop %v3630
    %v3943 = vmul.f32 %v3630, %v3942
    %v3944 = vsub.f32 1.0, %v3943
    %v3945 = vmul.f32 %v3942, %v3944
    %v3946 = vadd.f32 %v3942, %v3945
    %vm3947 = vweird.f32 %v3630
    %vm3948 = vweird.f32 %v3942
    %vm3949 = vmor %vm3947, %vm3948
    %v3950 = vsel %vm3949, %v3942, %v3946
    %v3951 = vand.u32 2147483647, %v3630
    %vm3952 = vcmp.eq.f32.partialorder %v3951, 8.507059e+37
    %v3953 = vand.u32 %v3630, 2147483648
    %v3954 = vor.u32 1.1754944e-38, %v3953
    %v3955 = vsel %vm3952, %v3954, %v3950
    %v3956 = vmul.f32 1.0, %v3955
    %v3957 = vrcp.pop %v3631
    %v3958 = vmul.f32 %v3631, %v3957
    %v3959 = vsub.f32 1.0, %v3958
    %v3960 = vmul.f32 %v3957, %v3959
    %v3961 = vadd.f32 %v3957, %v3960
    %vm3962 = vweird.f32 %v3631
    %vm3963 = vweird.f32 %v3957
    %vm3964 = vmor %vm3962, %vm3963
    %v3965 = vsel %vm3964, %v3957, %v3961
    %v3966 = vand.u32 2147483647, %v3631
    %vm3967 = vcmp.eq.f32.partialorder %v3966, 8.507059e+37
    %v3968 = vand.u32 %v3631, 2147483648
    %v3969 = vor.u32 1.1754944e-38, %v3968
    %v3970 = vsel %vm3967, %v3969, %v3965
    %v3971 = vmul.f32 1.0, %v3970
    %v3972 = vrcp.pop %v3632
    %v3973 = vmul.f32 %v3632, %v3972
    %v3974 = vsub.f32 1.0, %v3973
    %v3975 = vmul.f32 %v3972, %v3974
    %v3976 = vadd.f32 %v3972, %v3975
    %vm3977 = vweird.f32 %v3632
    %vm3978 = vweird.f32 %v3972
    %vm3979 = vmor %vm3977, %vm3978
    %v3980 = vsel %vm3979, %v3972, %v3976
    %v3981 = vand.u32 2147483647, %v3632
    %vm3982 = vcmp.eq.f32.partialorder %v3981, 8.507059e+37
    %v3983 = vand.u32 %v3632, 2147483648
    %v3984 = vor.u32 1.1754944e-38, %v3983
    %v3985 = vsel %vm3982, %v3984, %v3980
    %v3986 = vmul.f32 1.0, %v3985
    %v3987 = vrcp.pop %v3633
    %v3988 = vmul.f32 %v3633, %v3987
    %v3989 = vsub.f32 1.0, %v3988
    %v3990 = vmul.f32 %v3987, %v3989
    %v3991 = vadd.f32 %v3987, %v3990
    %vm3992 = vweird.f32 %v3633
    %vm3993 = vweird.f32 %v3987
    %vm3994 = vmor %vm3992, %vm3993
    %v3995 = vsel %vm3994, %v3987, %v3991
    %v3996 = vand.u32 2147483647, %v3633
    %vm3997 = vcmp.eq.f32.partialorder %v3996, 8.507059e+37
    %v3998 = vand.u32 %v3633, 2147483648
    %v3999 = vor.u32 1.1754944e-38, %v3998
    %v4000 = vsel %vm3997, %v3999, %v3995
    %v4001 = vmul.f32 1.0, %v4000
    %v4002 = vrcp.pop %v3634
    %v4003 = vmul.f32 %v3634, %v4002
    %v4004 = vsub.f32 1.0, %v4003
    %v4005 = vmul.f32 %v4002, %v4004
    %v4006 = vadd.f32 %v4002, %v4005
    %vm4007 = vweird.f32 %v3634
    %vm4008 = vweird.f32 %v4002
    %vm4009 = vmor %vm4007, %vm4008
    %v4010 = vsel %vm4009, %v4002, %v4006
    %v4011 = vand.u32 2147483647, %v3634
    %vm4012 = vcmp.eq.f32.partialorder %v4011, 8.507059e+37
    %v4013 = vand.u32 %v3634, 2147483648
    %v4014 = vor.u32 1.1754944e-38, %v4013
    %v4015 = vsel %vm4012, %v4014, %v4010
    %v4016 = vmul.f32 1.0, %v4015
    %v4017 = vrcp.pop %v3635
    %v4018 = vmul.f32 %v3635, %v4017
    %v4019 = vsub.f32 1.0, %v4018
    %v4020 = vmul.f32 %v4017, %v4019
    %v4021 = vadd.f32 %v4017, %v4020
    %vm4022 = vweird.f32 %v3635
    %vm4023 = vweird.f32 %v4017
    %vm4024 = vmor %vm4022, %vm4023
    %v4025 = vsel %vm4024, %v4017, %v4021
    %v4026 = vand.u32 2147483647, %v3635
    %vm4027 = vcmp.eq.f32.partialorder %v4026, 8.507059e+37
    %v4028 = vand.u32 %v3635, 2147483648
    %v4029 = vor.u32 1.1754944e-38, %v4028
    %v4030 = vsel %vm4027, %v4029, %v4025
    %v4031 = vmul.f32 1.0, %v4030
    %v4032 = vrcp.pop %v3636
    %v4033 = vmul.f32 %v3636, %v4032
    %v4034 = vsub.f32 1.0, %v4033
    %v4035 = vmul.f32 %v4032, %v4034
    %v4036 = vadd.f32 %v4032, %v4035
    %vm4037 = vweird.f32 %v3636
    %vm4038 = vweird.f32 %v4032
    %vm4039 = vmor %vm4037, %vm4038
    %v4040 = vsel %vm4039, %v4032, %v4036
    %v4041 = vand.u32 2147483647, %v3636
    %vm4042 = vcmp.eq.f32.partialorder %v4041, 8.507059e+37
    %v4043 = vand.u32 %v3636, 2147483648
    %v4044 = vor.u32 1.1754944e-38, %v4043
    %v4045 = vsel %vm4042, %v4044, %v4040
    %v4046 = vmul.f32 1.0, %v4045
    %v4047 = vrcp.pop %v3637
    %v4048 = vmul.f32 %v3637, %v4047
    %v4049 = vsub.f32 1.0, %v4048
    %v4050 = vmul.f32 %v4047, %v4049
    %v4051 = vadd.f32 %v4047, %v4050
    %vm4052 = vweird.f32 %v3637
    %vm4053 = vweird.f32 %v4047
    %vm4054 = vmor %vm4052, %vm4053
    %v4055 = vsel %vm4054, %v4047, %v4051
    %v4056 = vand.u32 2147483647, %v3637
    %vm4057 = vcmp.eq.f32.partialorder %v4056, 8.507059e+37
    %v4058 = vand.u32 %v3637, 2147483648
    %v4059 = vor.u32 1.1754944e-38, %v4058
    %v4060 = vsel %vm4057, %v4059, %v4055
    %v4061 = vmul.f32 1.0, %v4060
    %v4062 = vrcp.pop %v3638
    %v4063 = vmul.f32 %v3638, %v4062
    %v4064 = vsub.f32 1.0, %v4063
    %v4065 = vmul.f32 %v4062, %v4064
    %v4066 = vadd.f32 %v4062, %v4065
    %vm4067 = vweird.f32 %v3638
    %vm4068 = vweird.f32 %v4062
    %vm4069 = vmor %vm4067, %vm4068
    %v4070 = vsel %vm4069, %v4062, %v4066
    %v4071 = vand.u32 2147483647, %v3638
    %vm4072 = vcmp.eq.f32.partialorder %v4071, 8.507059e+37
    %v4073 = vand.u32 %v3638, 2147483648
    %v4074 = vor.u32 1.1754944e-38, %v4073
    %v4075 = vsel %vm4072, %v4074, %v4070
    %v4076 = vmul.f32 1.0, %v4075
    %v4077 = vrcp.pop %v3639
    %v4078 = vmul.f32 %v3639, %v4077
    %v4079 = vsub.f32 1.0, %v4078
    %v4080 = vmul.f32 %v4077, %v4079
    %v4081 = vadd.f32 %v4077, %v4080
    %vm4082 = vweird.f32 %v3639
    %vm4083 = vweird.f32 %v4077
    %vm4084 = vmor %vm4082, %vm4083
    %v4085 = vsel %vm4084, %v4077, %v4081
    %v4086 = vand.u32 2147483647, %v3639
    %vm4087 = vcmp.eq.f32.partialorder %v4086, 8.507059e+37
    %v4088 = vand.u32 %v3639, 2147483648
    %v4089 = vor.u32 1.1754944e-38, %v4088
    %v4090 = vsel %vm4087, %v4089, %v4085
    %v4091 = vmul.f32 1.0, %v4090
    %v4092 = vrcp.pop %v3640
    %v4093 = vmul.f32 %v3640, %v4092
    %v4094 = vsub.f32 1.0, %v4093
    %v4095 = vmul.f32 %v4092, %v4094
    %v4096 = vadd.f32 %v4092, %v4095
    %vm4097 = vweird.f32 %v3640
    %vm4098 = vweird.f32 %v4092
    %vm4099 = vmor %vm4097, %vm4098
    %v4100 = vsel %vm4099, %v4092, %v4096
    %v4101 = vand.u32 2147483647, %v3640
    %vm4102 = vcmp.eq.f32.partialorder %v4101, 8.507059e+37
    %v4103 = vand.u32 %v3640, 2147483648
    %v4104 = vor.u32 1.1754944e-38, %v4103
    %v4105 = vsel %vm4102, %v4104, %v4100
    %v4106 = vmul.f32 1.0, %v4105
    %v4107 = vrcp.pop %v3641
    %v4108 = vmul.f32 %v3641, %v4107
    %v4109 = vsub.f32 1.0, %v4108
    %v4110 = vmul.f32 %v4107, %v4109
    %v4111 = vadd.f32 %v4107, %v4110
    %vm4112 = vweird.f32 %v3641
    %vm4113 = vweird.f32 %v4107
    %vm4114 = vmor %vm4112, %vm4113
    %v4115 = vsel %vm4114, %v4107, %v4111
    %v4116 = vand.u32 2147483647, %v3641
    %vm4117 = vcmp.eq.f32.partialorder %v4116, 8.507059e+37
    %v4118 = vand.u32 %v3641, 2147483648
    %v4119 = vor.u32 1.1754944e-38, %v4118
    %v4120 = vsel %vm4117, %v4119, %v4115
    %v4121 = vmul.f32 1.0, %v4120
    %v4122 = vmul.f32 %v3656, %v582
    %v4123 = vmul.f32 %v3671, %v583
    %v4124 = vmul.f32 %v3686, %v584
    %v4125 = vmul.f32 %v3701, %v585
    %v4126 = vmul.f32 %v3716, %v582
    %v4127 = vmul.f32 %v3731, %v583
    %v4128 = vmul.f32 %v3746, %v584
    %v4129 = vmul.f32 %v3761, %v585
    %v4130 = vmul.f32 %v3776, %v582
    %v4131 = vmul.f32 %v3791, %v583
    %v4132 = vmul.f32 %v3806, %v584
    %v4133 = vmul.f32 %v3821, %v585
    %v4134 = vmul.f32 %v3836, %v582
    %v4135 = vmul.f32 %v3851, %v583
    %v4136 = vmul.f32 %v3866, %v584
    %v4137 = vmul.f32 %v3881, %v585
    %v4138 = vmul.f32 %v3896, %v582
    %v4139 = vmul.f32 %v3911, %v583
    %v4140 = vmul.f32 %v3926, %v584
    %v4141 = vmul.f32 %v3941, %v585
    %v4142 = vmul.f32 %v3956, %v582
    %v4143 = vmul.f32 %v3971, %v583
    %v4144 = vmul.f32 %v3986, %v584
    %v4145 = vmul.f32 %v4001, %v585
    %v4146 = vmul.f32 %v4016, %v582
    %v4147 = vmul.f32 %v4031, %v583
    %v4148 = vmul.f32 %v4046, %v584
    %v4149 = vmul.f32 %v4061, %v585
    %v4150 = vmul.f32 %v4076, %v582
    %v4151 = vmul.f32 %v4091, %v583
    %v4152 = vmul.f32 %v4106, %v584
    %v4153 = vmul.f32 %v4121, %v585
    %v4154 = vsel %vm361, %v4122, 0.0
    %v4155 = vsel %vm361, %v4123, 0.0
    %v4156 = vadd.f32 %v4154, %v4155
    %v4157 = vsel %vm361, %v4124, 0.0
    %v4158 = vadd.f32 %v4156, %v4157
    %v4159 = vsel %vm361, %v4125, 0.0
    %v4160 = vadd.f32 %v4158, %v4159
    %v4161 = vrot.slane %v4160, 4
    %v4162 = vadd.f32 %v4160, %v4161
    %v4163 = vrot.slane %v4162, 2
    %v4164 = vadd.f32 %v4162, %v4163
    %v4165 = vrot.slane %v4164, 1
    %v4166 = vadd.f32 %v4164, %v4165
    %v4167 = vsel %vm361, %v4126, 0.0
    %v4168 = vsel %vm361, %v4127, 0.0
    %v4169 = vadd.f32 %v4167, %v4168
    %v4170 = vsel %vm361, %v4128, 0.0
    %v4171 = vadd.f32 %v4169, %v4170
    %v4172 = vsel %vm361, %v4129, 0.0
    %v4173 = vadd.f32 %v4171, %v4172
    %v4174 = vrot.slane %v4173, 4
    %v4175 = vadd.f32 %v4173, %v4174
    %v4176 = vrot.slane %v4175, 2
    %v4177 = vadd.f32 %v4175, %v4176
    %v4178 = vrot.slane %v4177, 1
    %v4179 = vadd.f32 %v4177, %v4178
    %v4180 = vsel %vm361, %v4130, 0.0
    %v4181 = vsel %vm361, %v4131, 0.0
    %v4182 = vadd.f32 %v4180, %v4181
    %v4183 = vsel %vm361, %v4132, 0.0
    %v4184 = vadd.f32 %v4182, %v4183
    %v4185 = vsel %vm361, %v4133, 0.0
    %v4186 = vadd.f32 %v4184, %v4185
    %v4187 = vrot.slane %v4186, 4
    %v4188 = vadd.f32 %v4186, %v4187
    %v4189 = vrot.slane %v4188, 2
    %v4190 = vadd.f32 %v4188, %v4189
    %v4191 = vrot.slane %v4190, 1
    %v4192 = vadd.f32 %v4190, %v4191
    %v4193 = vsel %vm361, %v4134, 0.0
    %v4194 = vsel %vm361, %v4135, 0.0
    %v4195 = vadd.f32 %v4193, %v4194
    %v4196 = vsel %vm361, %v4136, 0.0
    %v4197 = vadd.f32 %v4195, %v4196
    %v4198 = vsel %vm361, %v4137, 0.0
    %v4199 = vadd.f32 %v4197, %v4198
    %v4200 = vrot.slane %v4199, 4
    %v4201 = vadd.f32 %v4199, %v4200
    %v4202 = vrot.slane %v4201, 2
    %v4203 = vadd.f32 %v4201, %v4202
    %v4204 = vrot.slane %v4203, 1
    %v4205 = vadd.f32 %v4203, %v4204
    %v4206 = vsel %vm361, %v4138, 0.0
    %v4207 = vsel %vm361, %v4139, 0.0
    %v4208 = vadd.f32 %v4206, %v4207
    %v4209 = vsel %vm361, %v4140, 0.0
    %v4210 = vadd.f32 %v4208, %v4209
    %v4211 = vsel %vm361, %v4141, 0.0
    %v4212 = vadd.f32 %v4210, %v4211
    %v4213 = vrot.slane %v4212, 4
    %v4214 = vadd.f32 %v4212, %v4213
    %v4215 = vrot.slane %v4214, 2
    %v4216 = vadd.f32 %v4214, %v4215
    %v4217 = vrot.slane %v4216, 1
    %v4218 = vadd.f32 %v4216, %v4217
    %v4219 = vsel %vm361, %v4142, 0.0
    %v4220 = vsel %vm361, %v4143, 0.0
    %v4221 = vadd.f32 %v4219, %v4220
    %v4222 = vsel %vm361, %v4144, 0.0
    %v4223 = vadd.f32 %v4221, %v4222
    %v4224 = vsel %vm361, %v4145, 0.0
    %v4225 = vadd.f32 %v4223, %v4224
    %v4226 = vrot.slane %v4225, 4
    %v4227 = vadd.f32 %v4225, %v4226
    %v4228 = vrot.slane %v4227, 2
    %v4229 = vadd.f32 %v4227, %v4228
    %v4230 = vrot.slane %v4229, 1
    %v4231 = vadd.f32 %v4229, %v4230
    %v4232 = vsel %vm361, %v4146, 0.0
    %v4233 = vsel %vm361, %v4147, 0.0
    %v4234 = vadd.f32 %v4232, %v4233
    %v4235 = vsel %vm361, %v4148, 0.0
    %v4236 = vadd.f32 %v4234, %v4235
    %v4237 = vsel %vm361, %v4149, 0.0
    %v4238 = vadd.f32 %v4236, %v4237
    %v4239 = vrot.slane %v4238, 4
    %v4240 = vadd.f32 %v4238, %v4239
    %v4241 = vrot.slane %v4240, 2
    %v4242 = vadd.f32 %v4240, %v4241
    %v4243 = vrot.slane %v4242, 1
    %v4244 = vadd.f32 %v4242, %v4243
    %v4245 = vsel %vm361, %v4150, 0.0
    %v4246 = vsel %vm361, %v4151, 0.0
    %v4247 = vadd.f32 %v4245, %v4246
    %v4248 = vsel %vm361, %v4152, 0.0
    %v4249 = vadd.f32 %v4247, %v4248
    %v4250 = vsel %vm361, %v4153, 0.0
    %v4251 = vadd.f32 %v4249, %v4250
    %v4252 = vrot.slane %v4251, 4
    %v4253 = vadd.f32 %v4251, %v4252
    %v4254 = vrot.slane %v4253, 2
    %v4255 = vadd.f32 %v4253, %v4254
    %v4256 = vrot.slane %v4255, 1
    %v4257 = vadd.f32 %v4255, %v4256
    %v4258 = vadd.f32 %v4166, %v368
    %v4259 = vadd.f32 %v4179, %v375
    %v4260 = vadd.f32 %v4192, %v382
    %v4261 = vadd.f32 %v4205, %v389
    %v4262 = vadd.f32 %v4218, %v396
    %v4263 = vadd.f32 %v4231, %v403
    %v4264 = vadd.f32 %v4244, %v410
    %v4265 = vadd.f32 %v4257, %v417
    %v4266 = vmul.f32 %v3656, %v573
    %v4267 = vmul.f32 %v3671, %v574
    %v4268 = vmul.f32 %v3686, %v575
    %v4269 = vmul.f32 %v3701, %v576
    %v4270 = vmul.f32 %v3716, %v573
    %v4271 = vmul.f32 %v3731, %v574
    %v4272 = vmul.f32 %v3746, %v575
    %v4273 = vmul.f32 %v3761, %v576
    %v4274 = vmul.f32 %v3776, %v573
    %v4275 = vmul.f32 %v3791, %v574
    %v4276 = vmul.f32 %v3806, %v575
    %v4277 = vmul.f32 %v3821, %v576
    %v4278 = vmul.f32 %v3836, %v573
    %v4279 = vmul.f32 %v3851, %v574
    %v4280 = vmul.f32 %v3866, %v575
    %v4281 = vmul.f32 %v3881, %v576
    %v4282 = vmul.f32 %v3896, %v573
    %v4283 = vmul.f32 %v3911, %v574
    %v4284 = vmul.f32 %v3926, %v575
    %v4285 = vmul.f32 %v3941, %v576
    %v4286 = vmul.f32 %v3956, %v573
    %v4287 = vmul.f32 %v3971, %v574
    %v4288 = vmul.f32 %v3986, %v575
    %v4289 = vmul.f32 %v4001, %v576
    %v4290 = vmul.f32 %v4016, %v573
    %v4291 = vmul.f32 %v4031, %v574
    %v4292 = vmul.f32 %v4046, %v575
    %v4293 = vmul.f32 %v4061, %v576
    %v4294 = vmul.f32 %v4076, %v573
    %v4295 = vmul.f32 %v4091, %v574
    %v4296 = vmul.f32 %v4106, %v575
    %v4297 = vmul.f32 %v4121, %v576
    %v4298 = vsel %vm361, %v4266, 0.0
    %v4299 = vsel %vm361, %v4267, 0.0
    %v4300 = vadd.f32 %v4298, %v4299
    %v4301 = vsel %vm361, %v4268, 0.0
    %v4302 = vadd.f32 %v4300, %v4301
    %v4303 = vsel %vm361, %v4269, 0.0
    %v4304 = vadd.f32 %v4302, %v4303
    %v4305 = vrot.slane %v4304, 4
    %v4306 = vadd.f32 %v4304, %v4305
    %v4307 = vrot.slane %v4306, 2
    %v4308 = vadd.f32 %v4306, %v4307
    %v4309 = vrot.slane %v4308, 1
    %v4310 = vadd.f32 %v4308, %v4309
    %v4311 = vsel %vm361, %v4270, 0.0
    %v4312 = vsel %vm361, %v4271, 0.0
    %v4313 = vadd.f32 %v4311, %v4312
    %v4314 = vsel %vm361, %v4272, 0.0
    %v4315 = vadd.f32 %v4313, %v4314
    %v4316 = vsel %vm361, %v4273, 0.0
    %v4317 = vadd.f32 %v4315, %v4316
    %v4318 = vrot.slane %v4317, 4
    %v4319 = vadd.f32 %v4317, %v4318
    %v4320 = vrot.slane %v4319, 2
    %v4321 = vadd.f32 %v4319, %v4320
    %v4322 = vrot.slane %v4321, 1
    %v4323 = vadd.f32 %v4321, %v4322
    %v4324 = vsel %vm361, %v4274, 0.0
    %v4325 = vsel %vm361, %v4275, 0.0
    %v4326 = vadd.f32 %v4324, %v4325
    %v4327 = vsel %vm361, %v4276, 0.0
    %v4328 = vadd.f32 %v4326, %v4327
    %v4329 = vsel %vm361, %v4277, 0.0
    %v4330 = vadd.f32 %v4328, %v4329
    %v4331 = vrot.slane %v4330, 4
    %v4332 = vadd.f32 %v4330, %v4331
    %v4333 = vrot.slane %v4332, 2
    %v4334 = vadd.f32 %v4332, %v4333
    %v4335 = vrot.slane %v4334, 1
    %v4336 = vadd.f32 %v4334, %v4335
    %v4337 = vsel %vm361, %v4278, 0.0
    %v4338 = vsel %vm361, %v4279, 0.0
    %v4339 = vadd.f32 %v4337, %v4338
    %v4340 = vsel %vm361, %v4280, 0.0
    %v4341 = vadd.f32 %v4339, %v4340
    %v4342 = vsel %vm361, %v4281, 0.0
    %v4343 = vadd.f32 %v4341, %v4342
    %v4344 = vrot.slane %v4343, 4
    %v4345 = vadd.f32 %v4343, %v4344
    %v4346 = vrot.slane %v4345, 2
    %v4347 = vadd.f32 %v4345, %v4346
    %v4348 = vrot.slane %v4347, 1
    %v4349 = vadd.f32 %v4347, %v4348
    %v4350 = vsel %vm361, %v4282, 0.0
    %v4351 = vsel %vm361, %v4283, 0.0
    %v4352 = vadd.f32 %v4350, %v4351
    %v4353 = vsel %vm361, %v4284, 0.0
    %v4354 = vadd.f32 %v4352, %v4353
    %v4355 = vsel %vm361, %v4285, 0.0
    %v4356 = vadd.f32 %v4354, %v4355
    %v4357 = vrot.slane %v4356, 4
    %v4358 = vadd.f32 %v4356, %v4357
    %v4359 = vrot.slane %v4358, 2
    %v4360 = vadd.f32 %v4358, %v4359
    %v4361 = vrot.slane %v4360, 1
    %v4362 = vadd.f32 %v4360, %v4361
    %v4363 = vsel %vm361, %v4286, 0.0
    %v4364 = vsel %vm361, %v4287, 0.0
    %v4365 = vadd.f32 %v4363, %v4364
    %v4366 = vsel %vm361, %v4288, 0.0
    %v4367 = vadd.f32 %v4365, %v4366
    %v4368 = vsel %vm361, %v4289, 0.0
    %v4369 = vadd.f32 %v4367, %v4368
    %v4370 = vrot.slane %v4369, 4
    %v4371 = vadd.f32 %v4369, %v4370
    %v4372 = vrot.slane %v4371, 2
    %v4373 = vadd.f32 %v4371, %v4372
    %v4374 = vrot.slane %v4373, 1
    %v4375 = vadd.f32 %v4373, %v4374
    %v4376 = vsel %vm361, %v4290, 0.0
    %v4377 = vsel %vm361, %v4291, 0.0
    %v4378 = vadd.f32 %v4376, %v4377
    %v4379 = vsel %vm361, %v4292, 0.0
    %v4380 = vadd.f32 %v4378, %v4379
    %v4381 = vsel %vm361, %v4293, 0.0
    %v4382 = vadd.f32 %v4380, %v4381
    %v4383 = vrot.slane %v4382, 4
    %v4384 = vadd.f32 %v4382, %v4383
    %v4385 = vrot.slane %v4384, 2
    %v4386 = vadd.f32 %v4384, %v4385
    %v4387 = vrot.slane %v4386, 1
    %v4388 = vadd.f32 %v4386, %v4387
    %v4389 = vsel %vm361, %v4294, 0.0
    %v4390 = vsel %vm361, %v4295, 0.0
    %v4391 = vadd.f32 %v4389, %v4390
    %v4392 = vsel %vm361, %v4296, 0.0
    %v4393 = vadd.f32 %v4391, %v4392
    %v4394 = vsel %vm361, %v4297, 0.0
    %v4395 = vadd.f32 %v4393, %v4394
    %v4396 = vrot.slane %v4395, 4
    %v4397 = vadd.f32 %v4395, %v4396
    %v4398 = vrot.slane %v4397, 2
    %v4399 = vadd.f32 %v4397, %v4398
    %v4400 = vrot.slane %v4399, 1
    %v4401 = vadd.f32 %v4399, %v4400
    %v4402 = vadd.f32 %v4310, %v432
    %v4403 = vadd.f32 %v4323, %v439
    %v4404 = vadd.f32 %v4336, %v446
    %v4405 = vadd.f32 %v4349, %v453
    %v4406 = vadd.f32 %v4362, %v460
    %v4407 = vadd.f32 %v4375, %v467
    %v4408 = vadd.f32 %v4388, %v474
    %v4409 = vadd.f32 %v4401, %v481
    %v4410 = vmul.f32 %v763, %v3249
    %v4411 = vadd.f32 %v4410, %v765
    %v4420 = vsel %vm775, %v4259, %v4258
    %v4421 = vsel %vm777, %v4260, %v4420
    %v4422 = vsel %vm779, %v4261, %v4421
    %v4423 = vsel %vm781, %v4262, %v4422
    %v4424 = vsel %vm783, %v4263, %v4423
    %v4425 = vsel %vm785, %v4264, %v4424
    %v4426 = vsel %vm787, %v4265, %v4425
    %v4428 = vadd.f32 %v4411, %v4426
    %v4437 = vsel %vm775, %v4403, %v4402
    %v4438 = vsel %vm777, %v4404, %v4437
    %v4439 = vsel %vm779, %v4405, %v4438
    %v4440 = vsel %vm781, %v4406, %v4439
    %v4441 = vsel %vm783, %v4407, %v4440
    %v4442 = vsel %vm785, %v4408, %v4441
    %v4443 = vsel %vm787, %v4409, %v4442
    %v4445 = vadd.f32 %v792, %v4443
    %v4446 = vadd.f32 %v4445, 1e-08
    %v4447 = vrcp.pop %v4446
    %v4448 = vmul.f32 %v4446, %v4447
    %v4449 = vsub.f32 1.0, %v4448
    %v4450 = vmul.f32 %v4447, %v4449
    %v4451 = vadd.f32 %v4447, %v4450
    %vm4452 = vweird.f32 %v4446
    %vm4453 = vweird.f32 %v4447
    %vm4454 = vmor %vm4452, %vm4453
    %v4455 = vsel %vm4454, %v4447, %v4451
    %v4456 = vand.u32 2147483647, %v4446
    %vm4457 = vcmp.eq.f32.partialorder %v4456, 8.507059e+37
    %v4458 = vand.u32 %v4446, 2147483648
    %v4459 = vor.u32 1.1754944e-38, %v4458
    %v4460 = vsel %vm4457, %v4459, %v4455
    %v4461 = vmul.f32 %v4428, %v4460
    %v4462 = vperm.slane %v4461, 0
    %v4463 = vlaneseq
    %v4464 = vshrl.u32 %v4463, 7
    %4466 = vset.pattern.permute.xlu0 %v4464
    %4467 = vperm.xlu0 %4466, %v4462
    %v4468 = vpop.permute.xlu0 %4467
    %v4469 = vlaneseq
    %v4470 = vshrl.u32 %v4469, 7
    %v4471 = vadd.s32 %v4470, 8
    %4472 = vset.pattern.permute.xlu0 %v4471
    %4473 = vperm.xlu0 %4472, %v4462
    %v4474 = vpop.permute.xlu0 %4473
    %v4475 = vlaneseq
    %v4476 = vshrl.u32 %v4475, 7
    %v4477 = vadd.s32 %v4476, 16
    %4478 = vset.pattern.permute.xlu0 %v4477
    %4479 = vperm.xlu0 %4478, %v4462
    %v4480 = vpop.permute.xlu0 %4479
    %v4481 = vlaneseq
    %v4482 = vshrl.u32 %v4481, 7
    %v4483 = vadd.s32 %v4482, 24
    %4484 = vset.pattern.permute.xlu0 %v4483
    %4485 = vperm.xlu0 %4484, %v4462
    %v4486 = vpop.permute.xlu0 %4485
    %v4487 = vperm.slane %v4461, 1
    %v4488 = vlaneseq
    %v4489 = vshrl.u32 %v4488, 7
    %4491 = vset.pattern.permute.xlu0 %v4489
    %4492 = vperm.xlu0 %4491, %v4487
    %v4493 = vpop.permute.xlu0 %4492
    %v4494 = vlaneseq
    %v4495 = vshrl.u32 %v4494, 7
    %v4496 = vadd.s32 %v4495, 8
    %4497 = vset.pattern.permute.xlu0 %v4496
    %4498 = vperm.xlu0 %4497, %v4487
    %v4499 = vpop.permute.xlu0 %4498
    %v4500 = vlaneseq
    %v4501 = vshrl.u32 %v4500, 7
    %v4502 = vadd.s32 %v4501, 16
    %4503 = vset.pattern.permute.xlu0 %v4502
    %4504 = vperm.xlu0 %4503, %v4487
    %v4505 = vpop.permute.xlu0 %4504
    %v4506 = vlaneseq
    %v4507 = vshrl.u32 %v4506, 7
    %v4508 = vadd.s32 %v4507, 24
    %4509 = vset.pattern.permute.xlu0 %v4508
    %4510 = vperm.xlu0 %4509, %v4487
    %v4511 = vpop.permute.xlu0 %4510
    %v4512 = vperm.slane %v4461, 2
    %v4513 = vlaneseq
    %v4514 = vshrl.u32 %v4513, 7
    %4516 = vset.pattern.permute.xlu0 %v4514
    %4517 = vperm.xlu0 %4516, %v4512
    %v4518 = vpop.permute.xlu0 %4517
    %v4519 = vlaneseq
    %v4520 = vshrl.u32 %v4519, 7
    %v4521 = vadd.s32 %v4520, 8
    %4522 = vset.pattern.permute.xlu0 %v4521
    %4523 = vperm.xlu0 %4522, %v4512
    %v4524 = vpop.permute.xlu0 %4523
    %v4525 = vlaneseq
    %v4526 = vshrl.u32 %v4525, 7
    %v4527 = vadd.s32 %v4526, 16
    %4528 = vset.pattern.permute.xlu0 %v4527
    %4529 = vperm.xlu0 %4528, %v4512
    %v4530 = vpop.permute.xlu0 %4529
    %v4531 = vlaneseq
    %v4532 = vshrl.u32 %v4531, 7
    %v4533 = vadd.s32 %v4532, 24
    %4534 = vset.pattern.permute.xlu0 %v4533
    %4535 = vperm.xlu0 %4534, %v4512
    %v4536 = vpop.permute.xlu0 %4535
    %v4537 = vperm.slane %v4461, 3
    %v4538 = vlaneseq
    %v4539 = vshrl.u32 %v4538, 7
    %4541 = vset.pattern.permute.xlu0 %v4539
    %4542 = vperm.xlu0 %4541, %v4537
    %v4543 = vpop.permute.xlu0 %4542
    %v4544 = vlaneseq
    %v4545 = vshrl.u32 %v4544, 7
    %v4546 = vadd.s32 %v4545, 8
    %4547 = vset.pattern.permute.xlu0 %v4546
    %4548 = vperm.xlu0 %4547, %v4537
    %v4549 = vpop.permute.xlu0 %4548
    %v4550 = vlaneseq
    %v4551 = vshrl.u32 %v4550, 7
    %v4552 = vadd.s32 %v4551, 16
    %4553 = vset.pattern.permute.xlu0 %v4552
    %4554 = vperm.xlu0 %4553, %v4537
    %v4555 = vpop.permute.xlu0 %4554
    %v4556 = vlaneseq
    %v4557 = vshrl.u32 %v4556, 7
    %v4558 = vadd.s32 %v4557, 24
    %4559 = vset.pattern.permute.xlu0 %v4558
    %4560 = vperm.xlu0 %4559, %v4537
    %v4561 = vpop.permute.xlu0 %4560
    %v4562 = vperm.slane %v4461, 4
    %v4563 = vlaneseq
    %v4564 = vshrl.u32 %v4563, 7
    %4566 = vset.pattern.permute.xlu0 %v4564
    %4567 = vperm.xlu0 %4566, %v4562
    %v4568 = vpop.permute.xlu0 %4567
    %v4569 = vlaneseq
    %v4570 = vshrl.u32 %v4569, 7
    %v4571 = vadd.s32 %v4570, 8
    %4572 = vset.pattern.permute.xlu0 %v4571
    %4573 = vperm.xlu0 %4572, %v4562
    %v4574 = vpop.permute.xlu0 %4573
    %v4575 = vlaneseq
    %v4576 = vshrl.u32 %v4575, 7
    %v4577 = vadd.s32 %v4576, 16
    %4578 = vset.pattern.permute.xlu0 %v4577
    %4579 = vperm.xlu0 %4578, %v4562
    %v4580 = vpop.permute.xlu0 %4579
    %v4581 = vlaneseq
    %v4582 = vshrl.u32 %v4581, 7
    %v4583 = vadd.s32 %v4582, 24
    %4584 = vset.pattern.permute.xlu0 %v4583
    %4585 = vperm.xlu0 %4584, %v4562
    %v4586 = vpop.permute.xlu0 %4585
    %v4587 = vperm.slane %v4461, 5
    %v4588 = vlaneseq
    %v4589 = vshrl.u32 %v4588, 7
    %4591 = vset.pattern.permute.xlu0 %v4589
    %4592 = vperm.xlu0 %4591, %v4587
    %v4593 = vpop.permute.xlu0 %4592
    %v4594 = vlaneseq
    %v4595 = vshrl.u32 %v4594, 7
    %v4596 = vadd.s32 %v4595, 8
    %4597 = vset.pattern.permute.xlu0 %v4596
    %4598 = vperm.xlu0 %4597, %v4587
    %v4599 = vpop.permute.xlu0 %4598
    %v4600 = vlaneseq
    %v4601 = vshrl.u32 %v4600, 7
    %v4602 = vadd.s32 %v4601, 16
    %4603 = vset.pattern.permute.xlu0 %v4602
    %4604 = vperm.xlu0 %4603, %v4587
    %v4605 = vpop.permute.xlu0 %4604
    %v4606 = vlaneseq
    %v4607 = vshrl.u32 %v4606, 7
    %v4608 = vadd.s32 %v4607, 24
    %4609 = vset.pattern.permute.xlu0 %v4608
    %4610 = vperm.xlu0 %4609, %v4587
    %v4611 = vpop.permute.xlu0 %4610
    %v4612 = vperm.slane %v4461, 6
    %v4613 = vlaneseq
    %v4614 = vshrl.u32 %v4613, 7
    %4616 = vset.pattern.permute.xlu0 %v4614
    %4617 = vperm.xlu0 %4616, %v4612
    %v4618 = vpop.permute.xlu0 %4617
    %v4619 = vlaneseq
    %v4620 = vshrl.u32 %v4619, 7
    %v4621 = vadd.s32 %v4620, 8
    %4622 = vset.pattern.permute.xlu0 %v4621
    %4623 = vperm.xlu0 %4622, %v4612
    %v4624 = vpop.permute.xlu0 %4623
    %v4625 = vlaneseq
    %v4626 = vshrl.u32 %v4625, 7
    %v4627 = vadd.s32 %v4626, 16
    %4628 = vset.pattern.permute.xlu0 %v4627
    %4629 = vperm.xlu0 %4628, %v4612
    %v4630 = vpop.permute.xlu0 %4629
    %v4631 = vlaneseq
    %v4632 = vshrl.u32 %v4631, 7
    %v4633 = vadd.s32 %v4632, 24
    %4634 = vset.pattern.permute.xlu0 %v4633
    %4635 = vperm.xlu0 %4634, %v4612
    %v4636 = vpop.permute.xlu0 %4635
    %v4637 = vperm.slane %v4461, 7
    %v4638 = vlaneseq
    %v4639 = vshrl.u32 %v4638, 7
    %4641 = vset.pattern.permute.xlu0 %v4639
    %4642 = vperm.xlu0 %4641, %v4637
    %v4643 = vpop.permute.xlu0 %4642
    %v4644 = vlaneseq
    %v4645 = vshrl.u32 %v4644, 7
    %v4646 = vadd.s32 %v4645, 8
    %4647 = vset.pattern.permute.xlu0 %v4646
    %4648 = vperm.xlu0 %4647, %v4637
    %v4649 = vpop.permute.xlu0 %4648
    %v4650 = vlaneseq
    %v4651 = vshrl.u32 %v4650, 7
    %v4652 = vadd.s32 %v4651, 16
    %4653 = vset.pattern.permute.xlu0 %v4652
    %4654 = vperm.xlu0 %4653, %v4637
    %v4655 = vpop.permute.xlu0 %4654
    %v4656 = vlaneseq
    %v4657 = vshrl.u32 %v4656, 7
    %v4658 = vadd.s32 %v4657, 24
    %4659 = vset.pattern.permute.xlu0 %v4658
    %4660 = vperm.xlu0 %4659, %v4637
    %v4661 = vpop.permute.xlu0 %4660
    %v4662 = vsub.f32 %v4468, %v482
    %v4663 = vsub.f32 %v4474, %v483
    %v4664 = vsub.f32 %v4480, %v484
    %v4665 = vsub.f32 %v4486, %v485
    %v4666 = vsub.f32 %v4493, %v482
    %v4667 = vsub.f32 %v4499, %v483
    %v4668 = vsub.f32 %v4505, %v484
    %v4669 = vsub.f32 %v4511, %v485
    %v4670 = vsub.f32 %v4518, %v482
    %v4671 = vsub.f32 %v4524, %v483
    %v4672 = vsub.f32 %v4530, %v484
    %v4673 = vsub.f32 %v4536, %v485
    %v4674 = vsub.f32 %v4543, %v482
    %v4675 = vsub.f32 %v4549, %v483
    %v4676 = vsub.f32 %v4555, %v484
    %v4677 = vsub.f32 %v4561, %v485
    %v4678 = vsub.f32 %v4568, %v482
    %v4679 = vsub.f32 %v4574, %v483
    %v4680 = vsub.f32 %v4580, %v484
    %v4681 = vsub.f32 %v4586, %v485
    %v4682 = vsub.f32 %v4593, %v482
    %v4683 = vsub.f32 %v4599, %v483
    %v4684 = vsub.f32 %v4605, %v484
    %v4685 = vsub.f32 %v4611, %v485
    %v4686 = vsub.f32 %v4618, %v482
    %v4687 = vsub.f32 %v4624, %v483
    %v4688 = vsub.f32 %v4630, %v484
    %v4689 = vsub.f32 %v4636, %v485
    %v4690 = vsub.f32 %v4643, %v482
    %v4691 = vsub.f32 %v4649, %v483
    %v4692 = vsub.f32 %v4655, %v484
    %v4693 = vsub.f32 %v4661, %v485
    %v4694 = vmul.f32 %v487, %v4662
    %v4695 = vmul.f32 %v488, %v4663
    %v4696 = vmul.f32 %v489, %v4664
    %v4697 = vmul.f32 %v490, %v4665
    %v4698 = vmul.f32 %v487, %v4666
    %v4699 = vmul.f32 %v488, %v4667
    %v4700 = vmul.f32 %v489, %v4668
    %v4701 = vmul.f32 %v490, %v4669
    %v4702 = vmul.f32 %v487, %v4670
    %v4703 = vmul.f32 %v488, %v4671
    %v4704 = vmul.f32 %v489, %v4672
    %v4705 = vmul.f32 %v490, %v4673
    %v4706 = vmul.f32 %v487, %v4674
    %v4707 = vmul.f32 %v488, %v4675
    %v4708 = vmul.f32 %v489, %v4676
    %v4709 = vmul.f32 %v490, %v4677
    %v4710 = vmul.f32 %v487, %v4678
    %v4711 = vmul.f32 %v488, %v4679
    %v4712 = vmul.f32 %v489, %v4680
    %v4713 = vmul.f32 %v490, %v4681
    %v4714 = vmul.f32 %v487, %v4682
    %v4715 = vmul.f32 %v488, %v4683
    %v4716 = vmul.f32 %v489, %v4684
    %v4717 = vmul.f32 %v490, %v4685
    %v4718 = vmul.f32 %v487, %v4686
    %v4719 = vmul.f32 %v488, %v4687
    %v4720 = vmul.f32 %v489, %v4688
    %v4721 = vmul.f32 %v490, %v4689
    %v4722 = vmul.f32 %v487, %v4690
    %v4723 = vmul.f32 %v488, %v4691
    %v4724 = vmul.f32 %v489, %v4692
    %v4725 = vmul.f32 %v490, %v4693
    %v4726 = vxor.u32 %v4694, 2147483648
    %v4727 = vxor.u32 %v4695, 2147483648
    %v4728 = vxor.u32 %v4696, 2147483648
    %v4729 = vxor.u32 %v4697, 2147483648
    %v4730 = vxor.u32 %v4698, 2147483648
    %v4731 = vxor.u32 %v4699, 2147483648
    %v4732 = vxor.u32 %v4700, 2147483648
    %v4733 = vxor.u32 %v4701, 2147483648
    %v4734 = vxor.u32 %v4702, 2147483648
    %v4735 = vxor.u32 %v4703, 2147483648
    %v4736 = vxor.u32 %v4704, 2147483648
    %v4737 = vxor.u32 %v4705, 2147483648
    %v4738 = vxor.u32 %v4706, 2147483648
    %v4739 = vxor.u32 %v4707, 2147483648
    %v4740 = vxor.u32 %v4708, 2147483648
    %v4741 = vxor.u32 %v4709, 2147483648
    %v4742 = vxor.u32 %v4710, 2147483648
    %v4743 = vxor.u32 %v4711, 2147483648
    %v4744 = vxor.u32 %v4712, 2147483648
    %v4745 = vxor.u32 %v4713, 2147483648
    %v4746 = vxor.u32 %v4714, 2147483648
    %v4747 = vxor.u32 %v4715, 2147483648
    %v4748 = vxor.u32 %v4716, 2147483648
    %v4749 = vxor.u32 %v4717, 2147483648
    %v4750 = vxor.u32 %v4718, 2147483648
    %v4751 = vxor.u32 %v4719, 2147483648
    %v4752 = vxor.u32 %v4720, 2147483648
    %v4753 = vxor.u32 %v4721, 2147483648
    %v4754 = vxor.u32 %v4722, 2147483648
    %v4755 = vxor.u32 %v4723, 2147483648
    %v4756 = vxor.u32 %v4724, 2147483648
    %v4757 = vxor.u32 %v4725, 2147483648
    %v4758 = vmul.f32 %v4726, 1.442695
    %v4759 = vpow.pop %v4758
    %v4760 = vmul.f32 %v4727, 1.442695
    %v4761 = vpow.pop %v4760
    %v4762 = vmul.f32 %v4728, 1.442695
    %v4763 = vpow.pop %v4762
    %v4764 = vmul.f32 %v4729, 1.442695
    %v4765 = vpow.pop %v4764
    %v4766 = vmul.f32 %v4730, 1.442695
    %v4767 = vpow.pop %v4766
    %v4768 = vmul.f32 %v4731, 1.442695
    %v4769 = vpow.pop %v4768
    %v4770 = vmul.f32 %v4732, 1.442695
    %v4771 = vpow.pop %v4770
    %v4772 = vmul.f32 %v4733, 1.442695
    %v4773 = vpow.pop %v4772
    %v4774 = vmul.f32 %v4734, 1.442695
    %v4775 = vpow.pop %v4774
    %v4776 = vmul.f32 %v4735, 1.442695
    %v4777 = vpow.pop %v4776
    %v4778 = vmul.f32 %v4736, 1.442695
    %v4779 = vpow.pop %v4778
    %v4780 = vmul.f32 %v4737, 1.442695
    %v4781 = vpow.pop %v4780
    %v4782 = vmul.f32 %v4738, 1.442695
    %v4783 = vpow.pop %v4782
    %v4784 = vmul.f32 %v4739, 1.442695
    %v4785 = vpow.pop %v4784
    %v4786 = vmul.f32 %v4740, 1.442695
    %v4787 = vpow.pop %v4786
    %v4788 = vmul.f32 %v4741, 1.442695
    %v4789 = vpow.pop %v4788
    %v4790 = vmul.f32 %v4742, 1.442695
    %v4791 = vpow.pop %v4790
    %v4792 = vmul.f32 %v4743, 1.442695
    %v4793 = vpow.pop %v4792
    %v4794 = vmul.f32 %v4744, 1.442695
    %v4795 = vpow.pop %v4794
    %v4796 = vmul.f32 %v4745, 1.442695
    %v4797 = vpow.pop %v4796
    %v4798 = vmul.f32 %v4746, 1.442695
    %v4799 = vpow.pop %v4798
    %v4800 = vmul.f32 %v4747, 1.442695
    %v4801 = vpow.pop %v4800
    %v4802 = vmul.f32 %v4748, 1.442695
    %v4803 = vpow.pop %v4802
    %v4804 = vmul.f32 %v4749, 1.442695
    %v4805 = vpow.pop %v4804
    %v4806 = vmul.f32 %v4750, 1.442695
    %v4807 = vpow.pop %v4806
    %v4808 = vmul.f32 %v4751, 1.442695
    %v4809 = vpow.pop %v4808
    %v4810 = vmul.f32 %v4752, 1.442695
    %v4811 = vpow.pop %v4810
    %v4812 = vmul.f32 %v4753, 1.442695
    %v4813 = vpow.pop %v4812
    %v4814 = vmul.f32 %v4754, 1.442695
    %v4815 = vpow.pop %v4814
    %v4816 = vmul.f32 %v4755, 1.442695
    %v4817 = vpow.pop %v4816
    %v4818 = vmul.f32 %v4756, 1.442695
    %v4819 = vpow.pop %v4818
    %v4820 = vmul.f32 %v4757, 1.442695
    %v4821 = vpow.pop %v4820
    %v4822 = vadd.f32 %v4759, 1.0
    %v4823 = vadd.f32 %v4761, 1.0
    %v4824 = vadd.f32 %v4763, 1.0
    %v4825 = vadd.f32 %v4765, 1.0
    %v4826 = vadd.f32 %v4767, 1.0
    %v4827 = vadd.f32 %v4769, 1.0
    %v4828 = vadd.f32 %v4771, 1.0
    %v4829 = vadd.f32 %v4773, 1.0
    %v4830 = vadd.f32 %v4775, 1.0
    %v4831 = vadd.f32 %v4777, 1.0
    %v4832 = vadd.f32 %v4779, 1.0
    %v4833 = vadd.f32 %v4781, 1.0
    %v4834 = vadd.f32 %v4783, 1.0
    %v4835 = vadd.f32 %v4785, 1.0
    %v4836 = vadd.f32 %v4787, 1.0
    %v4837 = vadd.f32 %v4789, 1.0
    %v4838 = vadd.f32 %v4791, 1.0
    %v4839 = vadd.f32 %v4793, 1.0
    %v4840 = vadd.f32 %v4795, 1.0
    %v4841 = vadd.f32 %v4797, 1.0
    %v4842 = vadd.f32 %v4799, 1.0
    %v4843 = vadd.f32 %v4801, 1.0
    %v4844 = vadd.f32 %v4803, 1.0
    %v4845 = vadd.f32 %v4805, 1.0
    %v4846 = vadd.f32 %v4807, 1.0
    %v4847 = vadd.f32 %v4809, 1.0
    %v4848 = vadd.f32 %v4811, 1.0
    %v4849 = vadd.f32 %v4813, 1.0
    %v4850 = vadd.f32 %v4815, 1.0
    %v4851 = vadd.f32 %v4817, 1.0
    %v4852 = vadd.f32 %v4819, 1.0
    %v4853 = vadd.f32 %v4821, 1.0
    %v4854 = vrcp.pop %v4822
    %v4855 = vmul.f32 %v4822, %v4854
    %v4856 = vsub.f32 1.0, %v4855
    %v4857 = vmul.f32 %v4854, %v4856
    %v4858 = vadd.f32 %v4854, %v4857
    %vm4859 = vweird.f32 %v4822
    %vm4860 = vweird.f32 %v4854
    %vm4861 = vmor %vm4859, %vm4860
    %v4862 = vsel %vm4861, %v4854, %v4858
    %v4863 = vand.u32 2147483647, %v4822
    %vm4864 = vcmp.eq.f32.partialorder %v4863, 8.507059e+37
    %v4865 = vand.u32 %v4822, 2147483648
    %v4866 = vor.u32 1.1754944e-38, %v4865
    %v4867 = vsel %vm4864, %v4866, %v4862
    %v4868 = vmul.f32 1.0, %v4867
    %v4869 = vrcp.pop %v4823
    %v4870 = vmul.f32 %v4823, %v4869
    %v4871 = vsub.f32 1.0, %v4870
    %v4872 = vmul.f32 %v4869, %v4871
    %v4873 = vadd.f32 %v4869, %v4872
    %vm4874 = vweird.f32 %v4823
    %vm4875 = vweird.f32 %v4869
    %vm4876 = vmor %vm4874, %vm4875
    %v4877 = vsel %vm4876, %v4869, %v4873
    %v4878 = vand.u32 2147483647, %v4823
    %vm4879 = vcmp.eq.f32.partialorder %v4878, 8.507059e+37
    %v4880 = vand.u32 %v4823, 2147483648
    %v4881 = vor.u32 1.1754944e-38, %v4880
    %v4882 = vsel %vm4879, %v4881, %v4877
    %v4883 = vmul.f32 1.0, %v4882
    %v4884 = vrcp.pop %v4824
    %v4885 = vmul.f32 %v4824, %v4884
    %v4886 = vsub.f32 1.0, %v4885
    %v4887 = vmul.f32 %v4884, %v4886
    %v4888 = vadd.f32 %v4884, %v4887
    %vm4889 = vweird.f32 %v4824
    %vm4890 = vweird.f32 %v4884
    %vm4891 = vmor %vm4889, %vm4890
    %v4892 = vsel %vm4891, %v4884, %v4888
    %v4893 = vand.u32 2147483647, %v4824
    %vm4894 = vcmp.eq.f32.partialorder %v4893, 8.507059e+37
    %v4895 = vand.u32 %v4824, 2147483648
    %v4896 = vor.u32 1.1754944e-38, %v4895
    %v4897 = vsel %vm4894, %v4896, %v4892
    %v4898 = vmul.f32 1.0, %v4897
    %v4899 = vrcp.pop %v4825
    %v4900 = vmul.f32 %v4825, %v4899
    %v4901 = vsub.f32 1.0, %v4900
    %v4902 = vmul.f32 %v4899, %v4901
    %v4903 = vadd.f32 %v4899, %v4902
    %vm4904 = vweird.f32 %v4825
    %vm4905 = vweird.f32 %v4899
    %vm4906 = vmor %vm4904, %vm4905
    %v4907 = vsel %vm4906, %v4899, %v4903
    %v4908 = vand.u32 2147483647, %v4825
    %vm4909 = vcmp.eq.f32.partialorder %v4908, 8.507059e+37
    %v4910 = vand.u32 %v4825, 2147483648
    %v4911 = vor.u32 1.1754944e-38, %v4910
    %v4912 = vsel %vm4909, %v4911, %v4907
    %v4913 = vmul.f32 1.0, %v4912
    %v4914 = vrcp.pop %v4826
    %v4915 = vmul.f32 %v4826, %v4914
    %v4916 = vsub.f32 1.0, %v4915
    %v4917 = vmul.f32 %v4914, %v4916
    %v4918 = vadd.f32 %v4914, %v4917
    %vm4919 = vweird.f32 %v4826
    %vm4920 = vweird.f32 %v4914
    %vm4921 = vmor %vm4919, %vm4920
    %v4922 = vsel %vm4921, %v4914, %v4918
    %v4923 = vand.u32 2147483647, %v4826
    %vm4924 = vcmp.eq.f32.partialorder %v4923, 8.507059e+37
    %v4925 = vand.u32 %v4826, 2147483648
    %v4926 = vor.u32 1.1754944e-38, %v4925
    %v4927 = vsel %vm4924, %v4926, %v4922
    %v4928 = vmul.f32 1.0, %v4927
    %v4929 = vrcp.pop %v4827
    %v4930 = vmul.f32 %v4827, %v4929
    %v4931 = vsub.f32 1.0, %v4930
    %v4932 = vmul.f32 %v4929, %v4931
    %v4933 = vadd.f32 %v4929, %v4932
    %vm4934 = vweird.f32 %v4827
    %vm4935 = vweird.f32 %v4929
    %vm4936 = vmor %vm4934, %vm4935
    %v4937 = vsel %vm4936, %v4929, %v4933
    %v4938 = vand.u32 2147483647, %v4827
    %vm4939 = vcmp.eq.f32.partialorder %v4938, 8.507059e+37
    %v4940 = vand.u32 %v4827, 2147483648
    %v4941 = vor.u32 1.1754944e-38, %v4940
    %v4942 = vsel %vm4939, %v4941, %v4937
    %v4943 = vmul.f32 1.0, %v4942
    %v4944 = vrcp.pop %v4828
    %v4945 = vmul.f32 %v4828, %v4944
    %v4946 = vsub.f32 1.0, %v4945
    %v4947 = vmul.f32 %v4944, %v4946
    %v4948 = vadd.f32 %v4944, %v4947
    %vm4949 = vweird.f32 %v4828
    %vm4950 = vweird.f32 %v4944
    %vm4951 = vmor %vm4949, %vm4950
    %v4952 = vsel %vm4951, %v4944, %v4948
    %v4953 = vand.u32 2147483647, %v4828
    %vm4954 = vcmp.eq.f32.partialorder %v4953, 8.507059e+37
    %v4955 = vand.u32 %v4828, 2147483648
    %v4956 = vor.u32 1.1754944e-38, %v4955
    %v4957 = vsel %vm4954, %v4956, %v4952
    %v4958 = vmul.f32 1.0, %v4957
    %v4959 = vrcp.pop %v4829
    %v4960 = vmul.f32 %v4829, %v4959
    %v4961 = vsub.f32 1.0, %v4960
    %v4962 = vmul.f32 %v4959, %v4961
    %v4963 = vadd.f32 %v4959, %v4962
    %vm4964 = vweird.f32 %v4829
    %vm4965 = vweird.f32 %v4959
    %vm4966 = vmor %vm4964, %vm4965
    %v4967 = vsel %vm4966, %v4959, %v4963
    %v4968 = vand.u32 2147483647, %v4829
    %vm4969 = vcmp.eq.f32.partialorder %v4968, 8.507059e+37
    %v4970 = vand.u32 %v4829, 2147483648
    %v4971 = vor.u32 1.1754944e-38, %v4970
    %v4972 = vsel %vm4969, %v4971, %v4967
    %v4973 = vmul.f32 1.0, %v4972
    %v4974 = vrcp.pop %v4830
    %v4975 = vmul.f32 %v4830, %v4974
    %v4976 = vsub.f32 1.0, %v4975
    %v4977 = vmul.f32 %v4974, %v4976
    %v4978 = vadd.f32 %v4974, %v4977
    %vm4979 = vweird.f32 %v4830
    %vm4980 = vweird.f32 %v4974
    %vm4981 = vmor %vm4979, %vm4980
    %v4982 = vsel %vm4981, %v4974, %v4978
    %v4983 = vand.u32 2147483647, %v4830
    %vm4984 = vcmp.eq.f32.partialorder %v4983, 8.507059e+37
    %v4985 = vand.u32 %v4830, 2147483648
    %v4986 = vor.u32 1.1754944e-38, %v4985
    %v4987 = vsel %vm4984, %v4986, %v4982
    %v4988 = vmul.f32 1.0, %v4987
    %v4989 = vrcp.pop %v4831
    %v4990 = vmul.f32 %v4831, %v4989
    %v4991 = vsub.f32 1.0, %v4990
    %v4992 = vmul.f32 %v4989, %v4991
    %v4993 = vadd.f32 %v4989, %v4992
    %vm4994 = vweird.f32 %v4831
    %vm4995 = vweird.f32 %v4989
    %vm4996 = vmor %vm4994, %vm4995
    %v4997 = vsel %vm4996, %v4989, %v4993
    %v4998 = vand.u32 2147483647, %v4831
    %vm4999 = vcmp.eq.f32.partialorder %v4998, 8.507059e+37
    %v5000 = vand.u32 %v4831, 2147483648
    %v5001 = vor.u32 1.1754944e-38, %v5000
    %v5002 = vsel %vm4999, %v5001, %v4997
    %v5003 = vmul.f32 1.0, %v5002
    %v5004 = vrcp.pop %v4832
    %v5005 = vmul.f32 %v4832, %v5004
    %v5006 = vsub.f32 1.0, %v5005
    %v5007 = vmul.f32 %v5004, %v5006
    %v5008 = vadd.f32 %v5004, %v5007
    %vm5009 = vweird.f32 %v4832
    %vm5010 = vweird.f32 %v5004
    %vm5011 = vmor %vm5009, %vm5010
    %v5012 = vsel %vm5011, %v5004, %v5008
    %v5013 = vand.u32 2147483647, %v4832
    %vm5014 = vcmp.eq.f32.partialorder %v5013, 8.507059e+37
    %v5015 = vand.u32 %v4832, 2147483648
    %v5016 = vor.u32 1.1754944e-38, %v5015
    %v5017 = vsel %vm5014, %v5016, %v5012
    %v5018 = vmul.f32 1.0, %v5017
    %v5019 = vrcp.pop %v4833
    %v5020 = vmul.f32 %v4833, %v5019
    %v5021 = vsub.f32 1.0, %v5020
    %v5022 = vmul.f32 %v5019, %v5021
    %v5023 = vadd.f32 %v5019, %v5022
    %vm5024 = vweird.f32 %v4833
    %vm5025 = vweird.f32 %v5019
    %vm5026 = vmor %vm5024, %vm5025
    %v5027 = vsel %vm5026, %v5019, %v5023
    %v5028 = vand.u32 2147483647, %v4833
    %vm5029 = vcmp.eq.f32.partialorder %v5028, 8.507059e+37
    %v5030 = vand.u32 %v4833, 2147483648
    %v5031 = vor.u32 1.1754944e-38, %v5030
    %v5032 = vsel %vm5029, %v5031, %v5027
    %v5033 = vmul.f32 1.0, %v5032
    %v5034 = vrcp.pop %v4834
    %v5035 = vmul.f32 %v4834, %v5034
    %v5036 = vsub.f32 1.0, %v5035
    %v5037 = vmul.f32 %v5034, %v5036
    %v5038 = vadd.f32 %v5034, %v5037
    %vm5039 = vweird.f32 %v4834
    %vm5040 = vweird.f32 %v5034
    %vm5041 = vmor %vm5039, %vm5040
    %v5042 = vsel %vm5041, %v5034, %v5038
    %v5043 = vand.u32 2147483647, %v4834
    %vm5044 = vcmp.eq.f32.partialorder %v5043, 8.507059e+37
    %v5045 = vand.u32 %v4834, 2147483648
    %v5046 = vor.u32 1.1754944e-38, %v5045
    %v5047 = vsel %vm5044, %v5046, %v5042
    %v5048 = vmul.f32 1.0, %v5047
    %v5049 = vrcp.pop %v4835
    %v5050 = vmul.f32 %v4835, %v5049
    %v5051 = vsub.f32 1.0, %v5050
    %v5052 = vmul.f32 %v5049, %v5051
    %v5053 = vadd.f32 %v5049, %v5052
    %vm5054 = vweird.f32 %v4835
    %vm5055 = vweird.f32 %v5049
    %vm5056 = vmor %vm5054, %vm5055
    %v5057 = vsel %vm5056, %v5049, %v5053
    %v5058 = vand.u32 2147483647, %v4835
    %vm5059 = vcmp.eq.f32.partialorder %v5058, 8.507059e+37
    %v5060 = vand.u32 %v4835, 2147483648
    %v5061 = vor.u32 1.1754944e-38, %v5060
    %v5062 = vsel %vm5059, %v5061, %v5057
    %v5063 = vmul.f32 1.0, %v5062
    %v5064 = vrcp.pop %v4836
    %v5065 = vmul.f32 %v4836, %v5064
    %v5066 = vsub.f32 1.0, %v5065
    %v5067 = vmul.f32 %v5064, %v5066
    %v5068 = vadd.f32 %v5064, %v5067
    %vm5069 = vweird.f32 %v4836
    %vm5070 = vweird.f32 %v5064
    %vm5071 = vmor %vm5069, %vm5070
    %v5072 = vsel %vm5071, %v5064, %v5068
    %v5073 = vand.u32 2147483647, %v4836
    %vm5074 = vcmp.eq.f32.partialorder %v5073, 8.507059e+37
    %v5075 = vand.u32 %v4836, 2147483648
    %v5076 = vor.u32 1.1754944e-38, %v5075
    %v5077 = vsel %vm5074, %v5076, %v5072
    %v5078 = vmul.f32 1.0, %v5077
    %v5079 = vrcp.pop %v4837
    %v5080 = vmul.f32 %v4837, %v5079
    %v5081 = vsub.f32 1.0, %v5080
    %v5082 = vmul.f32 %v5079, %v5081
    %v5083 = vadd.f32 %v5079, %v5082
    %vm5084 = vweird.f32 %v4837
    %vm5085 = vweird.f32 %v5079
    %vm5086 = vmor %vm5084, %vm5085
    %v5087 = vsel %vm5086, %v5079, %v5083
    %v5088 = vand.u32 2147483647, %v4837
    %vm5089 = vcmp.eq.f32.partialorder %v5088, 8.507059e+37
    %v5090 = vand.u32 %v4837, 2147483648
    %v5091 = vor.u32 1.1754944e-38, %v5090
    %v5092 = vsel %vm5089, %v5091, %v5087
    %v5093 = vmul.f32 1.0, %v5092
    %v5094 = vrcp.pop %v4838
    %v5095 = vmul.f32 %v4838, %v5094
    %v5096 = vsub.f32 1.0, %v5095
    %v5097 = vmul.f32 %v5094, %v5096
    %v5098 = vadd.f32 %v5094, %v5097
    %vm5099 = vweird.f32 %v4838
    %vm5100 = vweird.f32 %v5094
    %vm5101 = vmor %vm5099, %vm5100
    %v5102 = vsel %vm5101, %v5094, %v5098
    %v5103 = vand.u32 2147483647, %v4838
    %vm5104 = vcmp.eq.f32.partialorder %v5103, 8.507059e+37
    %v5105 = vand.u32 %v4838, 2147483648
    %v5106 = vor.u32 1.1754944e-38, %v5105
    %v5107 = vsel %vm5104, %v5106, %v5102
    %v5108 = vmul.f32 1.0, %v5107
    %v5109 = vrcp.pop %v4839
    %v5110 = vmul.f32 %v4839, %v5109
    %v5111 = vsub.f32 1.0, %v5110
    %v5112 = vmul.f32 %v5109, %v5111
    %v5113 = vadd.f32 %v5109, %v5112
    %vm5114 = vweird.f32 %v4839
    %vm5115 = vweird.f32 %v5109
    %vm5116 = vmor %vm5114, %vm5115
    %v5117 = vsel %vm5116, %v5109, %v5113
    %v5118 = vand.u32 2147483647, %v4839
    %vm5119 = vcmp.eq.f32.partialorder %v5118, 8.507059e+37
    %v5120 = vand.u32 %v4839, 2147483648
    %v5121 = vor.u32 1.1754944e-38, %v5120
    %v5122 = vsel %vm5119, %v5121, %v5117
    %v5123 = vmul.f32 1.0, %v5122
    %v5124 = vrcp.pop %v4840
    %v5125 = vmul.f32 %v4840, %v5124
    %v5126 = vsub.f32 1.0, %v5125
    %v5127 = vmul.f32 %v5124, %v5126
    %v5128 = vadd.f32 %v5124, %v5127
    %vm5129 = vweird.f32 %v4840
    %vm5130 = vweird.f32 %v5124
    %vm5131 = vmor %vm5129, %vm5130
    %v5132 = vsel %vm5131, %v5124, %v5128
    %v5133 = vand.u32 2147483647, %v4840
    %vm5134 = vcmp.eq.f32.partialorder %v5133, 8.507059e+37
    %v5135 = vand.u32 %v4840, 2147483648
    %v5136 = vor.u32 1.1754944e-38, %v5135
    %v5137 = vsel %vm5134, %v5136, %v5132
    %v5138 = vmul.f32 1.0, %v5137
    %v5139 = vrcp.pop %v4841
    %v5140 = vmul.f32 %v4841, %v5139
    %v5141 = vsub.f32 1.0, %v5140
    %v5142 = vmul.f32 %v5139, %v5141
    %v5143 = vadd.f32 %v5139, %v5142
    %vm5144 = vweird.f32 %v4841
    %vm5145 = vweird.f32 %v5139
    %vm5146 = vmor %vm5144, %vm5145
    %v5147 = vsel %vm5146, %v5139, %v5143
    %v5148 = vand.u32 2147483647, %v4841
    %vm5149 = vcmp.eq.f32.partialorder %v5148, 8.507059e+37
    %v5150 = vand.u32 %v4841, 2147483648
    %v5151 = vor.u32 1.1754944e-38, %v5150
    %v5152 = vsel %vm5149, %v5151, %v5147
    %v5153 = vmul.f32 1.0, %v5152
    %v5154 = vrcp.pop %v4842
    %v5155 = vmul.f32 %v4842, %v5154
    %v5156 = vsub.f32 1.0, %v5155
    %v5157 = vmul.f32 %v5154, %v5156
    %v5158 = vadd.f32 %v5154, %v5157
    %vm5159 = vweird.f32 %v4842
    %vm5160 = vweird.f32 %v5154
    %vm5161 = vmor %vm5159, %vm5160
    %v5162 = vsel %vm5161, %v5154, %v5158
    %v5163 = vand.u32 2147483647, %v4842
    %vm5164 = vcmp.eq.f32.partialorder %v5163, 8.507059e+37
    %v5165 = vand.u32 %v4842, 2147483648
    %v5166 = vor.u32 1.1754944e-38, %v5165
    %v5167 = vsel %vm5164, %v5166, %v5162
    %v5168 = vmul.f32 1.0, %v5167
    %v5169 = vrcp.pop %v4843
    %v5170 = vmul.f32 %v4843, %v5169
    %v5171 = vsub.f32 1.0, %v5170
    %v5172 = vmul.f32 %v5169, %v5171
    %v5173 = vadd.f32 %v5169, %v5172
    %vm5174 = vweird.f32 %v4843
    %vm5175 = vweird.f32 %v5169
    %vm5176 = vmor %vm5174, %vm5175
    %v5177 = vsel %vm5176, %v5169, %v5173
    %v5178 = vand.u32 2147483647, %v4843
    %vm5179 = vcmp.eq.f32.partialorder %v5178, 8.507059e+37
    %v5180 = vand.u32 %v4843, 2147483648
    %v5181 = vor.u32 1.1754944e-38, %v5180
    %v5182 = vsel %vm5179, %v5181, %v5177
    %v5183 = vmul.f32 1.0, %v5182
    %v5184 = vrcp.pop %v4844
    %v5185 = vmul.f32 %v4844, %v5184
    %v5186 = vsub.f32 1.0, %v5185
    %v5187 = vmul.f32 %v5184, %v5186
    %v5188 = vadd.f32 %v5184, %v5187
    %vm5189 = vweird.f32 %v4844
    %vm5190 = vweird.f32 %v5184
    %vm5191 = vmor %vm5189, %vm5190
    %v5192 = vsel %vm5191, %v5184, %v5188
    %v5193 = vand.u32 2147483647, %v4844
    %vm5194 = vcmp.eq.f32.partialorder %v5193, 8.507059e+37
    %v5195 = vand.u32 %v4844, 2147483648
    %v5196 = vor.u32 1.1754944e-38, %v5195
    %v5197 = vsel %vm5194, %v5196, %v5192
    %v5198 = vmul.f32 1.0, %v5197
    %v5199 = vrcp.pop %v4845
    %v5200 = vmul.f32 %v4845, %v5199
    %v5201 = vsub.f32 1.0, %v5200
    %v5202 = vmul.f32 %v5199, %v5201
    %v5203 = vadd.f32 %v5199, %v5202
    %vm5204 = vweird.f32 %v4845
    %vm5205 = vweird.f32 %v5199
    %vm5206 = vmor %vm5204, %vm5205
    %v5207 = vsel %vm5206, %v5199, %v5203
    %v5208 = vand.u32 2147483647, %v4845
    %vm5209 = vcmp.eq.f32.partialorder %v5208, 8.507059e+37
    %v5210 = vand.u32 %v4845, 2147483648
    %v5211 = vor.u32 1.1754944e-38, %v5210
    %v5212 = vsel %vm5209, %v5211, %v5207
    %v5213 = vmul.f32 1.0, %v5212
    %v5214 = vrcp.pop %v4846
    %v5215 = vmul.f32 %v4846, %v5214
    %v5216 = vsub.f32 1.0, %v5215
    %v5217 = vmul.f32 %v5214, %v5216
    %v5218 = vadd.f32 %v5214, %v5217
    %vm5219 = vweird.f32 %v4846
    %vm5220 = vweird.f32 %v5214
    %vm5221 = vmor %vm5219, %vm5220
    %v5222 = vsel %vm5221, %v5214, %v5218
    %v5223 = vand.u32 2147483647, %v4846
    %vm5224 = vcmp.eq.f32.partialorder %v5223, 8.507059e+37
    %v5225 = vand.u32 %v4846, 2147483648
    %v5226 = vor.u32 1.1754944e-38, %v5225
    %v5227 = vsel %vm5224, %v5226, %v5222
    %v5228 = vmul.f32 1.0, %v5227
    %v5229 = vrcp.pop %v4847
    %v5230 = vmul.f32 %v4847, %v5229
    %v5231 = vsub.f32 1.0, %v5230
    %v5232 = vmul.f32 %v5229, %v5231
    %v5233 = vadd.f32 %v5229, %v5232
    %vm5234 = vweird.f32 %v4847
    %vm5235 = vweird.f32 %v5229
    %vm5236 = vmor %vm5234, %vm5235
    %v5237 = vsel %vm5236, %v5229, %v5233
    %v5238 = vand.u32 2147483647, %v4847
    %vm5239 = vcmp.eq.f32.partialorder %v5238, 8.507059e+37
    %v5240 = vand.u32 %v4847, 2147483648
    %v5241 = vor.u32 1.1754944e-38, %v5240
    %v5242 = vsel %vm5239, %v5241, %v5237
    %v5243 = vmul.f32 1.0, %v5242
    %v5244 = vrcp.pop %v4848
    %v5245 = vmul.f32 %v4848, %v5244
    %v5246 = vsub.f32 1.0, %v5245
    %v5247 = vmul.f32 %v5244, %v5246
    %v5248 = vadd.f32 %v5244, %v5247
    %vm5249 = vweird.f32 %v4848
    %vm5250 = vweird.f32 %v5244
    %vm5251 = vmor %vm5249, %vm5250
    %v5252 = vsel %vm5251, %v5244, %v5248
    %v5253 = vand.u32 2147483647, %v4848
    %vm5254 = vcmp.eq.f32.partialorder %v5253, 8.507059e+37
    %v5255 = vand.u32 %v4848, 2147483648
    %v5256 = vor.u32 1.1754944e-38, %v5255
    %v5257 = vsel %vm5254, %v5256, %v5252
    %v5258 = vmul.f32 1.0, %v5257
    %v5259 = vrcp.pop %v4849
    %v5260 = vmul.f32 %v4849, %v5259
    %v5261 = vsub.f32 1.0, %v5260
    %v5262 = vmul.f32 %v5259, %v5261
    %v5263 = vadd.f32 %v5259, %v5262
    %vm5264 = vweird.f32 %v4849
    %vm5265 = vweird.f32 %v5259
    %vm5266 = vmor %vm5264, %vm5265
    %v5267 = vsel %vm5266, %v5259, %v5263
    %v5268 = vand.u32 2147483647, %v4849
    %vm5269 = vcmp.eq.f32.partialorder %v5268, 8.507059e+37
    %v5270 = vand.u32 %v4849, 2147483648
    %v5271 = vor.u32 1.1754944e-38, %v5270
    %v5272 = vsel %vm5269, %v5271, %v5267
    %v5273 = vmul.f32 1.0, %v5272
    %v5274 = vrcp.pop %v4850
    %v5275 = vmul.f32 %v4850, %v5274
    %v5276 = vsub.f32 1.0, %v5275
    %v5277 = vmul.f32 %v5274, %v5276
    %v5278 = vadd.f32 %v5274, %v5277
    %vm5279 = vweird.f32 %v4850
    %vm5280 = vweird.f32 %v5274
    %vm5281 = vmor %vm5279, %vm5280
    %v5282 = vsel %vm5281, %v5274, %v5278
    %v5283 = vand.u32 2147483647, %v4850
    %vm5284 = vcmp.eq.f32.partialorder %v5283, 8.507059e+37
    %v5285 = vand.u32 %v4850, 2147483648
    %v5286 = vor.u32 1.1754944e-38, %v5285
    %v5287 = vsel %vm5284, %v5286, %v5282
    %v5288 = vmul.f32 1.0, %v5287
    %v5289 = vrcp.pop %v4851
    %v5290 = vmul.f32 %v4851, %v5289
    %v5291 = vsub.f32 1.0, %v5290
    %v5292 = vmul.f32 %v5289, %v5291
    %v5293 = vadd.f32 %v5289, %v5292
    %vm5294 = vweird.f32 %v4851
    %vm5295 = vweird.f32 %v5289
    %vm5296 = vmor %vm5294, %vm5295
    %v5297 = vsel %vm5296, %v5289, %v5293
    %v5298 = vand.u32 2147483647, %v4851
    %vm5299 = vcmp.eq.f32.partialorder %v5298, 8.507059e+37
    %v5300 = vand.u32 %v4851, 2147483648
    %v5301 = vor.u32 1.1754944e-38, %v5300
    %v5302 = vsel %vm5299, %v5301, %v5297
    %v5303 = vmul.f32 1.0, %v5302
    %v5304 = vrcp.pop %v4852
    %v5305 = vmul.f32 %v4852, %v5304
    %v5306 = vsub.f32 1.0, %v5305
    %v5307 = vmul.f32 %v5304, %v5306
    %v5308 = vadd.f32 %v5304, %v5307
    %vm5309 = vweird.f32 %v4852
    %vm5310 = vweird.f32 %v5304
    %vm5311 = vmor %vm5309, %vm5310
    %v5312 = vsel %vm5311, %v5304, %v5308
    %v5313 = vand.u32 2147483647, %v4852
    %vm5314 = vcmp.eq.f32.partialorder %v5313, 8.507059e+37
    %v5315 = vand.u32 %v4852, 2147483648
    %v5316 = vor.u32 1.1754944e-38, %v5315
    %v5317 = vsel %vm5314, %v5316, %v5312
    %v5318 = vmul.f32 1.0, %v5317
    %v5319 = vrcp.pop %v4853
    %v5320 = vmul.f32 %v4853, %v5319
    %v5321 = vsub.f32 1.0, %v5320
    %v5322 = vmul.f32 %v5319, %v5321
    %v5323 = vadd.f32 %v5319, %v5322
    %vm5324 = vweird.f32 %v4853
    %vm5325 = vweird.f32 %v5319
    %vm5326 = vmor %vm5324, %vm5325
    %v5327 = vsel %vm5326, %v5319, %v5323
    %v5328 = vand.u32 2147483647, %v4853
    %vm5329 = vcmp.eq.f32.partialorder %v5328, 8.507059e+37
    %v5330 = vand.u32 %v4853, 2147483648
    %v5331 = vor.u32 1.1754944e-38, %v5330
    %v5332 = vsel %vm5329, %v5331, %v5327
    %v5333 = vmul.f32 1.0, %v5332
    %v5334 = vmul.f32 %v4868, %v582
    %v5335 = vmul.f32 %v4883, %v583
    %v5336 = vmul.f32 %v4898, %v584
    %v5337 = vmul.f32 %v4913, %v585
    %v5338 = vmul.f32 %v4928, %v582
    %v5339 = vmul.f32 %v4943, %v583
    %v5340 = vmul.f32 %v4958, %v584
    %v5341 = vmul.f32 %v4973, %v585
    %v5342 = vmul.f32 %v4988, %v582
    %v5343 = vmul.f32 %v5003, %v583
    %v5344 = vmul.f32 %v5018, %v584
    %v5345 = vmul.f32 %v5033, %v585
    %v5346 = vmul.f32 %v5048, %v582
    %v5347 = vmul.f32 %v5063, %v583
    %v5348 = vmul.f32 %v5078, %v584
    %v5349 = vmul.f32 %v5093, %v585
    %v5350 = vmul.f32 %v5108, %v582
    %v5351 = vmul.f32 %v5123, %v583
    %v5352 = vmul.f32 %v5138, %v584
    %v5353 = vmul.f32 %v5153, %v585
    %v5354 = vmul.f32 %v5168, %v582
    %v5355 = vmul.f32 %v5183, %v583
    %v5356 = vmul.f32 %v5198, %v584
    %v5357 = vmul.f32 %v5213, %v585
    %v5358 = vmul.f32 %v5228, %v582
    %v5359 = vmul.f32 %v5243, %v583
    %v5360 = vmul.f32 %v5258, %v584
    %v5361 = vmul.f32 %v5273, %v585
    %v5362 = vmul.f32 %v5288, %v582
    %v5363 = vmul.f32 %v5303, %v583
    %v5364 = vmul.f32 %v5318, %v584
    %v5365 = vmul.f32 %v5333, %v585
    %v5366 = vsel %vm361, %v5334, 0.0
    %v5367 = vsel %vm361, %v5335, 0.0
    %v5368 = vadd.f32 %v5366, %v5367
    %v5369 = vsel %vm361, %v5336, 0.0
    %v5370 = vadd.f32 %v5368, %v5369
    %v5371 = vsel %vm361, %v5337, 0.0
    %v5372 = vadd.f32 %v5370, %v5371
    %v5373 = vrot.slane %v5372, 4
    %v5374 = vadd.f32 %v5372, %v5373
    %v5375 = vrot.slane %v5374, 2
    %v5376 = vadd.f32 %v5374, %v5375
    %v5377 = vrot.slane %v5376, 1
    %v5378 = vadd.f32 %v5376, %v5377
    %v5379 = vsel %vm361, %v5338, 0.0
    %v5380 = vsel %vm361, %v5339, 0.0
    %v5381 = vadd.f32 %v5379, %v5380
    %v5382 = vsel %vm361, %v5340, 0.0
    %v5383 = vadd.f32 %v5381, %v5382
    %v5384 = vsel %vm361, %v5341, 0.0
    %v5385 = vadd.f32 %v5383, %v5384
    %v5386 = vrot.slane %v5385, 4
    %v5387 = vadd.f32 %v5385, %v5386
    %v5388 = vrot.slane %v5387, 2
    %v5389 = vadd.f32 %v5387, %v5388
    %v5390 = vrot.slane %v5389, 1
    %v5391 = vadd.f32 %v5389, %v5390
    %v5392 = vsel %vm361, %v5342, 0.0
    %v5393 = vsel %vm361, %v5343, 0.0
    %v5394 = vadd.f32 %v5392, %v5393
    %v5395 = vsel %vm361, %v5344, 0.0
    %v5396 = vadd.f32 %v5394, %v5395
    %v5397 = vsel %vm361, %v5345, 0.0
    %v5398 = vadd.f32 %v5396, %v5397
    %v5399 = vrot.slane %v5398, 4
    %v5400 = vadd.f32 %v5398, %v5399
    %v5401 = vrot.slane %v5400, 2
    %v5402 = vadd.f32 %v5400, %v5401
    %v5403 = vrot.slane %v5402, 1
    %v5404 = vadd.f32 %v5402, %v5403
    %v5405 = vsel %vm361, %v5346, 0.0
    %v5406 = vsel %vm361, %v5347, 0.0
    %v5407 = vadd.f32 %v5405, %v5406
    %v5408 = vsel %vm361, %v5348, 0.0
    %v5409 = vadd.f32 %v5407, %v5408
    %v5410 = vsel %vm361, %v5349, 0.0
    %v5411 = vadd.f32 %v5409, %v5410
    %v5412 = vrot.slane %v5411, 4
    %v5413 = vadd.f32 %v5411, %v5412
    %v5414 = vrot.slane %v5413, 2
    %v5415 = vadd.f32 %v5413, %v5414
    %v5416 = vrot.slane %v5415, 1
    %v5417 = vadd.f32 %v5415, %v5416
    %v5418 = vsel %vm361, %v5350, 0.0
    %v5419 = vsel %vm361, %v5351, 0.0
    %v5420 = vadd.f32 %v5418, %v5419
    %v5421 = vsel %vm361, %v5352, 0.0
    %v5422 = vadd.f32 %v5420, %v5421
    %v5423 = vsel %vm361, %v5353, 0.0
    %v5424 = vadd.f32 %v5422, %v5423
    %v5425 = vrot.slane %v5424, 4
    %v5426 = vadd.f32 %v5424, %v5425
    %v5427 = vrot.slane %v5426, 2
    %v5428 = vadd.f32 %v5426, %v5427
    %v5429 = vrot.slane %v5428, 1
    %v5430 = vadd.f32 %v5428, %v5429
    %v5431 = vsel %vm361, %v5354, 0.0
    %v5432 = vsel %vm361, %v5355, 0.0
    %v5433 = vadd.f32 %v5431, %v5432
    %v5434 = vsel %vm361, %v5356, 0.0
    %v5435 = vadd.f32 %v5433, %v5434
    %v5436 = vsel %vm361, %v5357, 0.0
    %v5437 = vadd.f32 %v5435, %v5436
    %v5438 = vrot.slane %v5437, 4
    %v5439 = vadd.f32 %v5437, %v5438
    %v5440 = vrot.slane %v5439, 2
    %v5441 = vadd.f32 %v5439, %v5440
    %v5442 = vrot.slane %v5441, 1
    %v5443 = vadd.f32 %v5441, %v5442
    %v5444 = vsel %vm361, %v5358, 0.0
    %v5445 = vsel %vm361, %v5359, 0.0
    %v5446 = vadd.f32 %v5444, %v5445
    %v5447 = vsel %vm361, %v5360, 0.0
    %v5448 = vadd.f32 %v5446, %v5447
    %v5449 = vsel %vm361, %v5361, 0.0
    %v5450 = vadd.f32 %v5448, %v5449
    %v5451 = vrot.slane %v5450, 4
    %v5452 = vadd.f32 %v5450, %v5451
    %v5453 = vrot.slane %v5452, 2
    %v5454 = vadd.f32 %v5452, %v5453
    %v5455 = vrot.slane %v5454, 1
    %v5456 = vadd.f32 %v5454, %v5455
    %v5457 = vsel %vm361, %v5362, 0.0
    %v5458 = vsel %vm361, %v5363, 0.0
    %v5459 = vadd.f32 %v5457, %v5458
    %v5460 = vsel %vm361, %v5364, 0.0
    %v5461 = vadd.f32 %v5459, %v5460
    %v5462 = vsel %vm361, %v5365, 0.0
    %v5463 = vadd.f32 %v5461, %v5462
    %v5464 = vrot.slane %v5463, 4
    %v5465 = vadd.f32 %v5463, %v5464
    %v5466 = vrot.slane %v5465, 2
    %v5467 = vadd.f32 %v5465, %v5466
    %v5468 = vrot.slane %v5467, 1
    %v5469 = vadd.f32 %v5467, %v5468
    %v5470 = vadd.f32 %v5378, %v368
    %v5471 = vadd.f32 %v5391, %v375
    %v5472 = vadd.f32 %v5404, %v382
    %v5473 = vadd.f32 %v5417, %v389
    %v5474 = vadd.f32 %v5430, %v396
    %v5475 = vadd.f32 %v5443, %v403
    %v5476 = vadd.f32 %v5456, %v410
    %v5477 = vadd.f32 %v5469, %v417
    %v5478 = vmul.f32 %v4868, %v573
    %v5479 = vmul.f32 %v4883, %v574
    %v5480 = vmul.f32 %v4898, %v575
    %v5481 = vmul.f32 %v4913, %v576
    %v5482 = vmul.f32 %v4928, %v573
    %v5483 = vmul.f32 %v4943, %v574
    %v5484 = vmul.f32 %v4958, %v575
    %v5485 = vmul.f32 %v4973, %v576
    %v5486 = vmul.f32 %v4988, %v573
    %v5487 = vmul.f32 %v5003, %v574
    %v5488 = vmul.f32 %v5018, %v575
    %v5489 = vmul.f32 %v5033, %v576
    %v5490 = vmul.f32 %v5048, %v573
    %v5491 = vmul.f32 %v5063, %v574
    %v5492 = vmul.f32 %v5078, %v575
    %v5493 = vmul.f32 %v5093, %v576
    %v5494 = vmul.f32 %v5108, %v573
    %v5495 = vmul.f32 %v5123, %v574
    %v5496 = vmul.f32 %v5138, %v575
    %v5497 = vmul.f32 %v5153, %v576
    %v5498 = vmul.f32 %v5168, %v573
    %v5499 = vmul.f32 %v5183, %v574
    %v5500 = vmul.f32 %v5198, %v575
    %v5501 = vmul.f32 %v5213, %v576
    %v5502 = vmul.f32 %v5228, %v573
    %v5503 = vmul.f32 %v5243, %v574
    %v5504 = vmul.f32 %v5258, %v575
    %v5505 = vmul.f32 %v5273, %v576
    %v5506 = vmul.f32 %v5288, %v573
    %v5507 = vmul.f32 %v5303, %v574
    %v5508 = vmul.f32 %v5318, %v575
    %v5509 = vmul.f32 %v5333, %v576
    %v5510 = vsel %vm361, %v5478, 0.0
    %v5511 = vsel %vm361, %v5479, 0.0
    %v5512 = vadd.f32 %v5510, %v5511
    %v5513 = vsel %vm361, %v5480, 0.0
    %v5514 = vadd.f32 %v5512, %v5513
    %v5515 = vsel %vm361, %v5481, 0.0
    %v5516 = vadd.f32 %v5514, %v5515
    %v5517 = vrot.slane %v5516, 4
    %v5518 = vadd.f32 %v5516, %v5517
    %v5519 = vrot.slane %v5518, 2
    %v5520 = vadd.f32 %v5518, %v5519
    %v5521 = vrot.slane %v5520, 1
    %v5522 = vadd.f32 %v5520, %v5521
    %v5523 = vsel %vm361, %v5482, 0.0
    %v5524 = vsel %vm361, %v5483, 0.0
    %v5525 = vadd.f32 %v5523, %v5524
    %v5526 = vsel %vm361, %v5484, 0.0
    %v5527 = vadd.f32 %v5525, %v5526
    %v5528 = vsel %vm361, %v5485, 0.0
    %v5529 = vadd.f32 %v5527, %v5528
    %v5530 = vrot.slane %v5529, 4
    %v5531 = vadd.f32 %v5529, %v5530
    %v5532 = vrot.slane %v5531, 2
    %v5533 = vadd.f32 %v5531, %v5532
    %v5534 = vrot.slane %v5533, 1
    %v5535 = vadd.f32 %v5533, %v5534
    %v5536 = vsel %vm361, %v5486, 0.0
    %v5537 = vsel %vm361, %v5487, 0.0
    %v5538 = vadd.f32 %v5536, %v5537
    %v5539 = vsel %vm361, %v5488, 0.0
    %v5540 = vadd.f32 %v5538, %v5539
    %v5541 = vsel %vm361, %v5489, 0.0
    %v5542 = vadd.f32 %v5540, %v5541
    %v5543 = vrot.slane %v5542, 4
    %v5544 = vadd.f32 %v5542, %v5543
    %v5545 = vrot.slane %v5544, 2
    %v5546 = vadd.f32 %v5544, %v5545
    %v5547 = vrot.slane %v5546, 1
    %v5548 = vadd.f32 %v5546, %v5547
    %v5549 = vsel %vm361, %v5490, 0.0
    %v5550 = vsel %vm361, %v5491, 0.0
    %v5551 = vadd.f32 %v5549, %v5550
    %v5552 = vsel %vm361, %v5492, 0.0
    %v5553 = vadd.f32 %v5551, %v5552
    %v5554 = vsel %vm361, %v5493, 0.0
    %v5555 = vadd.f32 %v5553, %v5554
    %v5556 = vrot.slane %v5555, 4
    %v5557 = vadd.f32 %v5555, %v5556
    %v5558 = vrot.slane %v5557, 2
    %v5559 = vadd.f32 %v5557, %v5558
    %v5560 = vrot.slane %v5559, 1
    %v5561 = vadd.f32 %v5559, %v5560
    %v5562 = vsel %vm361, %v5494, 0.0
    %v5563 = vsel %vm361, %v5495, 0.0
    %v5564 = vadd.f32 %v5562, %v5563
    %v5565 = vsel %vm361, %v5496, 0.0
    %v5566 = vadd.f32 %v5564, %v5565
    %v5567 = vsel %vm361, %v5497, 0.0
    %v5568 = vadd.f32 %v5566, %v5567
    %v5569 = vrot.slane %v5568, 4
    %v5570 = vadd.f32 %v5568, %v5569
    %v5571 = vrot.slane %v5570, 2
    %v5572 = vadd.f32 %v5570, %v5571
    %v5573 = vrot.slane %v5572, 1
    %v5574 = vadd.f32 %v5572, %v5573
    %v5575 = vsel %vm361, %v5498, 0.0
    %v5576 = vsel %vm361, %v5499, 0.0
    %v5577 = vadd.f32 %v5575, %v5576
    %v5578 = vsel %vm361, %v5500, 0.0
    %v5579 = vadd.f32 %v5577, %v5578
    %v5580 = vsel %vm361, %v5501, 0.0
    %v5581 = vadd.f32 %v5579, %v5580
    %v5582 = vrot.slane %v5581, 4
    %v5583 = vadd.f32 %v5581, %v5582
    %v5584 = vrot.slane %v5583, 2
    %v5585 = vadd.f32 %v5583, %v5584
    %v5586 = vrot.slane %v5585, 1
    %v5587 = vadd.f32 %v5585, %v5586
    %v5588 = vsel %vm361, %v5502, 0.0
    %v5589 = vsel %vm361, %v5503, 0.0
    %v5590 = vadd.f32 %v5588, %v5589
    %v5591 = vsel %vm361, %v5504, 0.0
    %v5592 = vadd.f32 %v5590, %v5591
    %v5593 = vsel %vm361, %v5505, 0.0
    %v5594 = vadd.f32 %v5592, %v5593
    %v5595 = vrot.slane %v5594, 4
    %v5596 = vadd.f32 %v5594, %v5595
    %v5597 = vrot.slane %v5596, 2
    %v5598 = vadd.f32 %v5596, %v5597
    %v5599 = vrot.slane %v5598, 1
    %v5600 = vadd.f32 %v5598, %v5599
    %v5601 = vsel %vm361, %v5506, 0.0
    %v5602 = vsel %vm361, %v5507, 0.0
    %v5603 = vadd.f32 %v5601, %v5602
    %v5604 = vsel %vm361, %v5508, 0.0
    %v5605 = vadd.f32 %v5603, %v5604
    %v5606 = vsel %vm361, %v5509, 0.0
    %v5607 = vadd.f32 %v5605, %v5606
    %v5608 = vrot.slane %v5607, 4
    %v5609 = vadd.f32 %v5607, %v5608
    %v5610 = vrot.slane %v5609, 2
    %v5611 = vadd.f32 %v5609, %v5610
    %v5612 = vrot.slane %v5611, 1
    %v5613 = vadd.f32 %v5611, %v5612
    %v5614 = vadd.f32 %v5522, %v432
    %v5615 = vadd.f32 %v5535, %v439
    %v5616 = vadd.f32 %v5548, %v446
    %v5617 = vadd.f32 %v5561, %v453
    %v5618 = vadd.f32 %v5574, %v460
    %v5619 = vadd.f32 %v5587, %v467
    %v5620 = vadd.f32 %v5600, %v474
    %v5621 = vadd.f32 %v5613, %v481
    %v5622 = vmul.f32 %v763, %v4461
    %v5623 = vadd.f32 %v5622, %v765
    %v5632 = vsel %vm775, %v5471, %v5470
    %v5633 = vsel %vm777, %v5472, %v5632
    %v5634 = vsel %vm779, %v5473, %v5633
    %v5635 = vsel %vm781, %v5474, %v5634
    %v5636 = vsel %vm783, %v5475, %v5635
    %v5637 = vsel %vm785, %v5476, %v5636
    %v5638 = vsel %vm787, %v5477, %v5637
    %v5640 = vadd.f32 %v5623, %v5638
    %v5649 = vsel %vm775, %v5615, %v5614
    %v5650 = vsel %vm777, %v5616, %v5649
    %v5651 = vsel %vm779, %v5617, %v5650
    %v5652 = vsel %vm781, %v5618, %v5651
    %v5653 = vsel %vm783, %v5619, %v5652
    %v5654 = vsel %vm785, %v5620, %v5653
    %v5655 = vsel %vm787, %v5621, %v5654
    %v5657 = vadd.f32 %v792, %v5655
    %v5658 = vadd.f32 %v5657, 1e-08
    %v5659 = vrcp.pop %v5658
    %v5660 = vmul.f32 %v5658, %v5659
    %v5661 = vsub.f32 1.0, %v5660
    %v5662 = vmul.f32 %v5659, %v5661
    %v5663 = vadd.f32 %v5659, %v5662
    %vm5664 = vweird.f32 %v5658
    %vm5665 = vweird.f32 %v5659
    %vm5666 = vmor %vm5664, %vm5665
    %v5667 = vsel %vm5666, %v5659, %v5663
    %v5668 = vand.u32 2147483647, %v5658
    %vm5669 = vcmp.eq.f32.partialorder %v5668, 8.507059e+37
    %v5670 = vand.u32 %v5658, 2147483648
    %v5671 = vor.u32 1.1754944e-38, %v5670
    %v5672 = vsel %vm5669, %v5671, %v5667
    %v5673 = vmul.f32 %v5640, %v5672
    %v5674 = vperm.slane %v5673, 0
    %v5675 = vlaneseq
    %v5676 = vshrl.u32 %v5675, 7
    %5678 = vset.pattern.permute.xlu0 %v5676
    %5679 = vperm.xlu0 %5678, %v5674
    %v5680 = vpop.permute.xlu0 %5679
    %v5681 = vlaneseq
    %v5682 = vshrl.u32 %v5681, 7
    %v5683 = vadd.s32 %v5682, 8
    %5684 = vset.pattern.permute.xlu0 %v5683
    %5685 = vperm.xlu0 %5684, %v5674
    %v5686 = vpop.permute.xlu0 %5685
    %v5687 = vlaneseq
    %v5688 = vshrl.u32 %v5687, 7
    %v5689 = vadd.s32 %v5688, 16
    %5690 = vset.pattern.permute.xlu0 %v5689
    %5691 = vperm.xlu0 %5690, %v5674
    %v5692 = vpop.permute.xlu0 %5691
    %v5693 = vlaneseq
    %v5694 = vshrl.u32 %v5693, 7
    %v5695 = vadd.s32 %v5694, 24
    %5696 = vset.pattern.permute.xlu0 %v5695
    %5697 = vperm.xlu0 %5696, %v5674
    %v5698 = vpop.permute.xlu0 %5697
    %v5699 = vperm.slane %v5673, 1
    %v5700 = vlaneseq
    %v5701 = vshrl.u32 %v5700, 7
    %5703 = vset.pattern.permute.xlu0 %v5701
    %5704 = vperm.xlu0 %5703, %v5699
    %v5705 = vpop.permute.xlu0 %5704
    %v5706 = vlaneseq
    %v5707 = vshrl.u32 %v5706, 7
    %v5708 = vadd.s32 %v5707, 8
    %5709 = vset.pattern.permute.xlu0 %v5708
    %5710 = vperm.xlu0 %5709, %v5699
    %v5711 = vpop.permute.xlu0 %5710
    %v5712 = vlaneseq
    %v5713 = vshrl.u32 %v5712, 7
    %v5714 = vadd.s32 %v5713, 16
    %5715 = vset.pattern.permute.xlu0 %v5714
    %5716 = vperm.xlu0 %5715, %v5699
    %v5717 = vpop.permute.xlu0 %5716
    %v5718 = vlaneseq
    %v5719 = vshrl.u32 %v5718, 7
    %v5720 = vadd.s32 %v5719, 24
    %5721 = vset.pattern.permute.xlu0 %v5720
    %5722 = vperm.xlu0 %5721, %v5699
    %v5723 = vpop.permute.xlu0 %5722
    %v5724 = vperm.slane %v5673, 2
    %v5725 = vlaneseq
    %v5726 = vshrl.u32 %v5725, 7
    %5728 = vset.pattern.permute.xlu0 %v5726
    %5729 = vperm.xlu0 %5728, %v5724
    %v5730 = vpop.permute.xlu0 %5729
    %v5731 = vlaneseq
    %v5732 = vshrl.u32 %v5731, 7
    %v5733 = vadd.s32 %v5732, 8
    %5734 = vset.pattern.permute.xlu0 %v5733
    %5735 = vperm.xlu0 %5734, %v5724
    %v5736 = vpop.permute.xlu0 %5735
    %v5737 = vlaneseq
    %v5738 = vshrl.u32 %v5737, 7
    %v5739 = vadd.s32 %v5738, 16
    %5740 = vset.pattern.permute.xlu0 %v5739
    %5741 = vperm.xlu0 %5740, %v5724
    %v5742 = vpop.permute.xlu0 %5741
    %v5743 = vlaneseq
    %v5744 = vshrl.u32 %v5743, 7
    %v5745 = vadd.s32 %v5744, 24
    %5746 = vset.pattern.permute.xlu0 %v5745
    %5747 = vperm.xlu0 %5746, %v5724
    %v5748 = vpop.permute.xlu0 %5747
    %v5749 = vperm.slane %v5673, 3
    %v5750 = vlaneseq
    %v5751 = vshrl.u32 %v5750, 7
    %5753 = vset.pattern.permute.xlu0 %v5751
    %5754 = vperm.xlu0 %5753, %v5749
    %v5755 = vpop.permute.xlu0 %5754
    %v5756 = vlaneseq
    %v5757 = vshrl.u32 %v5756, 7
    %v5758 = vadd.s32 %v5757, 8
    %5759 = vset.pattern.permute.xlu0 %v5758
    %5760 = vperm.xlu0 %5759, %v5749
    %v5761 = vpop.permute.xlu0 %5760
    %v5762 = vlaneseq
    %v5763 = vshrl.u32 %v5762, 7
    %v5764 = vadd.s32 %v5763, 16
    %5765 = vset.pattern.permute.xlu0 %v5764
    %5766 = vperm.xlu0 %5765, %v5749
    %v5767 = vpop.permute.xlu0 %5766
    %v5768 = vlaneseq
    %v5769 = vshrl.u32 %v5768, 7
    %v5770 = vadd.s32 %v5769, 24
    %5771 = vset.pattern.permute.xlu0 %v5770
    %5772 = vperm.xlu0 %5771, %v5749
    %v5773 = vpop.permute.xlu0 %5772
    %v5774 = vperm.slane %v5673, 4
    %v5775 = vlaneseq
    %v5776 = vshrl.u32 %v5775, 7
    %5778 = vset.pattern.permute.xlu0 %v5776
    %5779 = vperm.xlu0 %5778, %v5774
    %v5780 = vpop.permute.xlu0 %5779
    %v5781 = vlaneseq
    %v5782 = vshrl.u32 %v5781, 7
    %v5783 = vadd.s32 %v5782, 8
    %5784 = vset.pattern.permute.xlu0 %v5783
    %5785 = vperm.xlu0 %5784, %v5774
    %v5786 = vpop.permute.xlu0 %5785
    %v5787 = vlaneseq
    %v5788 = vshrl.u32 %v5787, 7
    %v5789 = vadd.s32 %v5788, 16
    %5790 = vset.pattern.permute.xlu0 %v5789
    %5791 = vperm.xlu0 %5790, %v5774
    %v5792 = vpop.permute.xlu0 %5791
    %v5793 = vlaneseq
    %v5794 = vshrl.u32 %v5793, 7
    %v5795 = vadd.s32 %v5794, 24
    %5796 = vset.pattern.permute.xlu0 %v5795
    %5797 = vperm.xlu0 %5796, %v5774
    %v5798 = vpop.permute.xlu0 %5797
    %v5799 = vperm.slane %v5673, 5
    %v5800 = vlaneseq
    %v5801 = vshrl.u32 %v5800, 7
    %5803 = vset.pattern.permute.xlu0 %v5801
    %5804 = vperm.xlu0 %5803, %v5799
    %v5805 = vpop.permute.xlu0 %5804
    %v5806 = vlaneseq
    %v5807 = vshrl.u32 %v5806, 7
    %v5808 = vadd.s32 %v5807, 8
    %5809 = vset.pattern.permute.xlu0 %v5808
    %5810 = vperm.xlu0 %5809, %v5799
    %v5811 = vpop.permute.xlu0 %5810
    %v5812 = vlaneseq
    %v5813 = vshrl.u32 %v5812, 7
    %v5814 = vadd.s32 %v5813, 16
    %5815 = vset.pattern.permute.xlu0 %v5814
    %5816 = vperm.xlu0 %5815, %v5799
    %v5817 = vpop.permute.xlu0 %5816
    %v5818 = vlaneseq
    %v5819 = vshrl.u32 %v5818, 7
    %v5820 = vadd.s32 %v5819, 24
    %5821 = vset.pattern.permute.xlu0 %v5820
    %5822 = vperm.xlu0 %5821, %v5799
    %v5823 = vpop.permute.xlu0 %5822
    %v5824 = vperm.slane %v5673, 6
    %v5825 = vlaneseq
    %v5826 = vshrl.u32 %v5825, 7
    %5828 = vset.pattern.permute.xlu0 %v5826
    %5829 = vperm.xlu0 %5828, %v5824
    %v5830 = vpop.permute.xlu0 %5829
    %v5831 = vlaneseq
    %v5832 = vshrl.u32 %v5831, 7
    %v5833 = vadd.s32 %v5832, 8
    %5834 = vset.pattern.permute.xlu0 %v5833
    %5835 = vperm.xlu0 %5834, %v5824
    %v5836 = vpop.permute.xlu0 %5835
    %v5837 = vlaneseq
    %v5838 = vshrl.u32 %v5837, 7
    %v5839 = vadd.s32 %v5838, 16
    %5840 = vset.pattern.permute.xlu0 %v5839
    %5841 = vperm.xlu0 %5840, %v5824
    %v5842 = vpop.permute.xlu0 %5841
    %v5843 = vlaneseq
    %v5844 = vshrl.u32 %v5843, 7
    %v5845 = vadd.s32 %v5844, 24
    %5846 = vset.pattern.permute.xlu0 %v5845
    %5847 = vperm.xlu0 %5846, %v5824
    %v5848 = vpop.permute.xlu0 %5847
    %v5849 = vperm.slane %v5673, 7
    %v5850 = vlaneseq
    %v5851 = vshrl.u32 %v5850, 7
    %5853 = vset.pattern.permute.xlu0 %v5851
    %5854 = vperm.xlu0 %5853, %v5849
    %v5855 = vpop.permute.xlu0 %5854
    %v5856 = vlaneseq
    %v5857 = vshrl.u32 %v5856, 7
    %v5858 = vadd.s32 %v5857, 8
    %5859 = vset.pattern.permute.xlu0 %v5858
    %5860 = vperm.xlu0 %5859, %v5849
    %v5861 = vpop.permute.xlu0 %5860
    %v5862 = vlaneseq
    %v5863 = vshrl.u32 %v5862, 7
    %v5864 = vadd.s32 %v5863, 16
    %5865 = vset.pattern.permute.xlu0 %v5864
    %5866 = vperm.xlu0 %5865, %v5849
    %v5867 = vpop.permute.xlu0 %5866
    %v5868 = vlaneseq
    %v5869 = vshrl.u32 %v5868, 7
    %v5870 = vadd.s32 %v5869, 24
    %5871 = vset.pattern.permute.xlu0 %v5870
    %5872 = vperm.xlu0 %5871, %v5849
    %v5873 = vpop.permute.xlu0 %5872
    %v5874 = vsub.f32 %v5680, %v482
    %v5875 = vsub.f32 %v5686, %v483
    %v5876 = vsub.f32 %v5692, %v484
    %v5877 = vsub.f32 %v5698, %v485
    %v5878 = vsub.f32 %v5705, %v482
    %v5879 = vsub.f32 %v5711, %v483
    %v5880 = vsub.f32 %v5717, %v484
    %v5881 = vsub.f32 %v5723, %v485
    %v5882 = vsub.f32 %v5730, %v482
    %v5883 = vsub.f32 %v5736, %v483
    %v5884 = vsub.f32 %v5742, %v484
    %v5885 = vsub.f32 %v5748, %v485
    %v5886 = vsub.f32 %v5755, %v482
    %v5887 = vsub.f32 %v5761, %v483
    %v5888 = vsub.f32 %v5767, %v484
    %v5889 = vsub.f32 %v5773, %v485
    %v5890 = vsub.f32 %v5780, %v482
    %v5891 = vsub.f32 %v5786, %v483
    %v5892 = vsub.f32 %v5792, %v484
    %v5893 = vsub.f32 %v5798, %v485
    %v5894 = vsub.f32 %v5805, %v482
    %v5895 = vsub.f32 %v5811, %v483
    %v5896 = vsub.f32 %v5817, %v484
    %v5897 = vsub.f32 %v5823, %v485
    %v5898 = vsub.f32 %v5830, %v482
    %v5899 = vsub.f32 %v5836, %v483
    %v5900 = vsub.f32 %v5842, %v484
    %v5901 = vsub.f32 %v5848, %v485
    %v5902 = vsub.f32 %v5855, %v482
    %v5903 = vsub.f32 %v5861, %v483
    %v5904 = vsub.f32 %v5867, %v484
    %v5905 = vsub.f32 %v5873, %v485
    %v5906 = vmul.f32 %v487, %v5874
    %v5907 = vmul.f32 %v488, %v5875
    %v5908 = vmul.f32 %v489, %v5876
    %v5909 = vmul.f32 %v490, %v5877
    %v5910 = vmul.f32 %v487, %v5878
    %v5911 = vmul.f32 %v488, %v5879
    %v5912 = vmul.f32 %v489, %v5880
    %v5913 = vmul.f32 %v490, %v5881
    %v5914 = vmul.f32 %v487, %v5882
    %v5915 = vmul.f32 %v488, %v5883
    %v5916 = vmul.f32 %v489, %v5884
    %v5917 = vmul.f32 %v490, %v5885
    %v5918 = vmul.f32 %v487, %v5886
    %v5919 = vmul.f32 %v488, %v5887
    %v5920 = vmul.f32 %v489, %v5888
    %v5921 = vmul.f32 %v490, %v5889
    %v5922 = vmul.f32 %v487, %v5890
    %v5923 = vmul.f32 %v488, %v5891
    %v5924 = vmul.f32 %v489, %v5892
    %v5925 = vmul.f32 %v490, %v5893
    %v5926 = vmul.f32 %v487, %v5894
    %v5927 = vmul.f32 %v488, %v5895
    %v5928 = vmul.f32 %v489, %v5896
    %v5929 = vmul.f32 %v490, %v5897
    %v5930 = vmul.f32 %v487, %v5898
    %v5931 = vmul.f32 %v488, %v5899
    %v5932 = vmul.f32 %v489, %v5900
    %v5933 = vmul.f32 %v490, %v5901
    %v5934 = vmul.f32 %v487, %v5902
    %v5935 = vmul.f32 %v488, %v5903
    %v5936 = vmul.f32 %v489, %v5904
    %v5937 = vmul.f32 %v490, %v5905
    %v5938 = vxor.u32 %v5906, 2147483648
    %v5939 = vxor.u32 %v5907, 2147483648
    %v5940 = vxor.u32 %v5908, 2147483648
    %v5941 = vxor.u32 %v5909, 2147483648
    %v5942 = vxor.u32 %v5910, 2147483648
    %v5943 = vxor.u32 %v5911, 2147483648
    %v5944 = vxor.u32 %v5912, 2147483648
    %v5945 = vxor.u32 %v5913, 2147483648
    %v5946 = vxor.u32 %v5914, 2147483648
    %v5947 = vxor.u32 %v5915, 2147483648
    %v5948 = vxor.u32 %v5916, 2147483648
    %v5949 = vxor.u32 %v5917, 2147483648
    %v5950 = vxor.u32 %v5918, 2147483648
    %v5951 = vxor.u32 %v5919, 2147483648
    %v5952 = vxor.u32 %v5920, 2147483648
    %v5953 = vxor.u32 %v5921, 2147483648
    %v5954 = vxor.u32 %v5922, 2147483648
    %v5955 = vxor.u32 %v5923, 2147483648
    %v5956 = vxor.u32 %v5924, 2147483648
    %v5957 = vxor.u32 %v5925, 2147483648
    %v5958 = vxor.u32 %v5926, 2147483648
    %v5959 = vxor.u32 %v5927, 2147483648
    %v5960 = vxor.u32 %v5928, 2147483648
    %v5961 = vxor.u32 %v5929, 2147483648
    %v5962 = vxor.u32 %v5930, 2147483648
    %v5963 = vxor.u32 %v5931, 2147483648
    %v5964 = vxor.u32 %v5932, 2147483648
    %v5965 = vxor.u32 %v5933, 2147483648
    %v5966 = vxor.u32 %v5934, 2147483648
    %v5967 = vxor.u32 %v5935, 2147483648
    %v5968 = vxor.u32 %v5936, 2147483648
    %v5969 = vxor.u32 %v5937, 2147483648
    %v5970 = vmul.f32 %v5938, 1.442695
    %v5971 = vpow.pop %v5970
    %v5972 = vmul.f32 %v5939, 1.442695
    %v5973 = vpow.pop %v5972
    %v5974 = vmul.f32 %v5940, 1.442695
    %v5975 = vpow.pop %v5974
    %v5976 = vmul.f32 %v5941, 1.442695
    %v5977 = vpow.pop %v5976
    %v5978 = vmul.f32 %v5942, 1.442695
    %v5979 = vpow.pop %v5978
    %v5980 = vmul.f32 %v5943, 1.442695
    %v5981 = vpow.pop %v5980
    %v5982 = vmul.f32 %v5944, 1.442695
    %v5983 = vpow.pop %v5982
    %v5984 = vmul.f32 %v5945, 1.442695
    %v5985 = vpow.pop %v5984
    %v5986 = vmul.f32 %v5946, 1.442695
    %v5987 = vpow.pop %v5986
    %v5988 = vmul.f32 %v5947, 1.442695
    %v5989 = vpow.pop %v5988
    %v5990 = vmul.f32 %v5948, 1.442695
    %v5991 = vpow.pop %v5990
    %v5992 = vmul.f32 %v5949, 1.442695
    %v5993 = vpow.pop %v5992
    %v5994 = vmul.f32 %v5950, 1.442695
    %v5995 = vpow.pop %v5994
    %v5996 = vmul.f32 %v5951, 1.442695
    %v5997 = vpow.pop %v5996
    %v5998 = vmul.f32 %v5952, 1.442695
    %v5999 = vpow.pop %v5998
    %v6000 = vmul.f32 %v5953, 1.442695
    %v6001 = vpow.pop %v6000
    %v6002 = vmul.f32 %v5954, 1.442695
    %v6003 = vpow.pop %v6002
    %v6004 = vmul.f32 %v5955, 1.442695
    %v6005 = vpow.pop %v6004
    %v6006 = vmul.f32 %v5956, 1.442695
    %v6007 = vpow.pop %v6006
    %v6008 = vmul.f32 %v5957, 1.442695
    %v6009 = vpow.pop %v6008
    %v6010 = vmul.f32 %v5958, 1.442695
    %v6011 = vpow.pop %v6010
    %v6012 = vmul.f32 %v5959, 1.442695
    %v6013 = vpow.pop %v6012
    %v6014 = vmul.f32 %v5960, 1.442695
    %v6015 = vpow.pop %v6014
    %v6016 = vmul.f32 %v5961, 1.442695
    %v6017 = vpow.pop %v6016
    %v6018 = vmul.f32 %v5962, 1.442695
    %v6019 = vpow.pop %v6018
    %v6020 = vmul.f32 %v5963, 1.442695
    %v6021 = vpow.pop %v6020
    %v6022 = vmul.f32 %v5964, 1.442695
    %v6023 = vpow.pop %v6022
    %v6024 = vmul.f32 %v5965, 1.442695
    %v6025 = vpow.pop %v6024
    %v6026 = vmul.f32 %v5966, 1.442695
    %v6027 = vpow.pop %v6026
    %v6028 = vmul.f32 %v5967, 1.442695
    %v6029 = vpow.pop %v6028
    %v6030 = vmul.f32 %v5968, 1.442695
    %v6031 = vpow.pop %v6030
    %v6032 = vmul.f32 %v5969, 1.442695
    %v6033 = vpow.pop %v6032
    %v6034 = vadd.f32 %v5971, 1.0
    %v6035 = vadd.f32 %v5973, 1.0
    %v6036 = vadd.f32 %v5975, 1.0
    %v6037 = vadd.f32 %v5977, 1.0
    %v6038 = vadd.f32 %v5979, 1.0
    %v6039 = vadd.f32 %v5981, 1.0
    %v6040 = vadd.f32 %v5983, 1.0
    %v6041 = vadd.f32 %v5985, 1.0
    %v6042 = vadd.f32 %v5987, 1.0
    %v6043 = vadd.f32 %v5989, 1.0
    %v6044 = vadd.f32 %v5991, 1.0
    %v6045 = vadd.f32 %v5993, 1.0
    %v6046 = vadd.f32 %v5995, 1.0
    %v6047 = vadd.f32 %v5997, 1.0
    %v6048 = vadd.f32 %v5999, 1.0
    %v6049 = vadd.f32 %v6001, 1.0
    %v6050 = vadd.f32 %v6003, 1.0
    %v6051 = vadd.f32 %v6005, 1.0
    %v6052 = vadd.f32 %v6007, 1.0
    %v6053 = vadd.f32 %v6009, 1.0
    %v6054 = vadd.f32 %v6011, 1.0
    %v6055 = vadd.f32 %v6013, 1.0
    %v6056 = vadd.f32 %v6015, 1.0
    %v6057 = vadd.f32 %v6017, 1.0
    %v6058 = vadd.f32 %v6019, 1.0
    %v6059 = vadd.f32 %v6021, 1.0
    %v6060 = vadd.f32 %v6023, 1.0
    %v6061 = vadd.f32 %v6025, 1.0
    %v6062 = vadd.f32 %v6027, 1.0
    %v6063 = vadd.f32 %v6029, 1.0
    %v6064 = vadd.f32 %v6031, 1.0
    %v6065 = vadd.f32 %v6033, 1.0
    %v6066 = vrcp.pop %v6034
    %v6067 = vmul.f32 %v6034, %v6066
    %v6068 = vsub.f32 1.0, %v6067
    %v6069 = vmul.f32 %v6066, %v6068
    %v6070 = vadd.f32 %v6066, %v6069
    %vm6071 = vweird.f32 %v6034
    %vm6072 = vweird.f32 %v6066
    %vm6073 = vmor %vm6071, %vm6072
    %v6074 = vsel %vm6073, %v6066, %v6070
    %v6075 = vand.u32 2147483647, %v6034
    %vm6076 = vcmp.eq.f32.partialorder %v6075, 8.507059e+37
    %v6077 = vand.u32 %v6034, 2147483648
    %v6078 = vor.u32 1.1754944e-38, %v6077
    %v6079 = vsel %vm6076, %v6078, %v6074
    %v6080 = vmul.f32 1.0, %v6079
    %v6081 = vrcp.pop %v6035
    %v6082 = vmul.f32 %v6035, %v6081
    %v6083 = vsub.f32 1.0, %v6082
    %v6084 = vmul.f32 %v6081, %v6083
    %v6085 = vadd.f32 %v6081, %v6084
    %vm6086 = vweird.f32 %v6035
    %vm6087 = vweird.f32 %v6081
    %vm6088 = vmor %vm6086, %vm6087
    %v6089 = vsel %vm6088, %v6081, %v6085
    %v6090 = vand.u32 2147483647, %v6035
    %vm6091 = vcmp.eq.f32.partialorder %v6090, 8.507059e+37
    %v6092 = vand.u32 %v6035, 2147483648
    %v6093 = vor.u32 1.1754944e-38, %v6092
    %v6094 = vsel %vm6091, %v6093, %v6089
    %v6095 = vmul.f32 1.0, %v6094
    %v6096 = vrcp.pop %v6036
    %v6097 = vmul.f32 %v6036, %v6096
    %v6098 = vsub.f32 1.0, %v6097
    %v6099 = vmul.f32 %v6096, %v6098
    %v6100 = vadd.f32 %v6096, %v6099
    %vm6101 = vweird.f32 %v6036
    %vm6102 = vweird.f32 %v6096
    %vm6103 = vmor %vm6101, %vm6102
    %v6104 = vsel %vm6103, %v6096, %v6100
    %v6105 = vand.u32 2147483647, %v6036
    %vm6106 = vcmp.eq.f32.partialorder %v6105, 8.507059e+37
    %v6107 = vand.u32 %v6036, 2147483648
    %v6108 = vor.u32 1.1754944e-38, %v6107
    %v6109 = vsel %vm6106, %v6108, %v6104
    %v6110 = vmul.f32 1.0, %v6109
    %v6111 = vrcp.pop %v6037
    %v6112 = vmul.f32 %v6037, %v6111
    %v6113 = vsub.f32 1.0, %v6112
    %v6114 = vmul.f32 %v6111, %v6113
    %v6115 = vadd.f32 %v6111, %v6114
    %vm6116 = vweird.f32 %v6037
    %vm6117 = vweird.f32 %v6111
    %vm6118 = vmor %vm6116, %vm6117
    %v6119 = vsel %vm6118, %v6111, %v6115
    %v6120 = vand.u32 2147483647, %v6037
    %vm6121 = vcmp.eq.f32.partialorder %v6120, 8.507059e+37
    %v6122 = vand.u32 %v6037, 2147483648
    %v6123 = vor.u32 1.1754944e-38, %v6122
    %v6124 = vsel %vm6121, %v6123, %v6119
    %v6125 = vmul.f32 1.0, %v6124
    %v6126 = vrcp.pop %v6038
    %v6127 = vmul.f32 %v6038, %v6126
    %v6128 = vsub.f32 1.0, %v6127
    %v6129 = vmul.f32 %v6126, %v6128
    %v6130 = vadd.f32 %v6126, %v6129
    %vm6131 = vweird.f32 %v6038
    %vm6132 = vweird.f32 %v6126
    %vm6133 = vmor %vm6131, %vm6132
    %v6134 = vsel %vm6133, %v6126, %v6130
    %v6135 = vand.u32 2147483647, %v6038
    %vm6136 = vcmp.eq.f32.partialorder %v6135, 8.507059e+37
    %v6137 = vand.u32 %v6038, 2147483648
    %v6138 = vor.u32 1.1754944e-38, %v6137
    %v6139 = vsel %vm6136, %v6138, %v6134
    %v6140 = vmul.f32 1.0, %v6139
    %v6141 = vrcp.pop %v6039
    %v6142 = vmul.f32 %v6039, %v6141
    %v6143 = vsub.f32 1.0, %v6142
    %v6144 = vmul.f32 %v6141, %v6143
    %v6145 = vadd.f32 %v6141, %v6144
    %vm6146 = vweird.f32 %v6039
    %vm6147 = vweird.f32 %v6141
    %vm6148 = vmor %vm6146, %vm6147
    %v6149 = vsel %vm6148, %v6141, %v6145
    %v6150 = vand.u32 2147483647, %v6039
    %vm6151 = vcmp.eq.f32.partialorder %v6150, 8.507059e+37
    %v6152 = vand.u32 %v6039, 2147483648
    %v6153 = vor.u32 1.1754944e-38, %v6152
    %v6154 = vsel %vm6151, %v6153, %v6149
    %v6155 = vmul.f32 1.0, %v6154
    %v6156 = vrcp.pop %v6040
    %v6157 = vmul.f32 %v6040, %v6156
    %v6158 = vsub.f32 1.0, %v6157
    %v6159 = vmul.f32 %v6156, %v6158
    %v6160 = vadd.f32 %v6156, %v6159
    %vm6161 = vweird.f32 %v6040
    %vm6162 = vweird.f32 %v6156
    %vm6163 = vmor %vm6161, %vm6162
    %v6164 = vsel %vm6163, %v6156, %v6160
    %v6165 = vand.u32 2147483647, %v6040
    %vm6166 = vcmp.eq.f32.partialorder %v6165, 8.507059e+37
    %v6167 = vand.u32 %v6040, 2147483648
    %v6168 = vor.u32 1.1754944e-38, %v6167
    %v6169 = vsel %vm6166, %v6168, %v6164
    %v6170 = vmul.f32 1.0, %v6169
    %v6171 = vrcp.pop %v6041
    %v6172 = vmul.f32 %v6041, %v6171
    %v6173 = vsub.f32 1.0, %v6172
    %v6174 = vmul.f32 %v6171, %v6173
    %v6175 = vadd.f32 %v6171, %v6174
    %vm6176 = vweird.f32 %v6041
    %vm6177 = vweird.f32 %v6171
    %vm6178 = vmor %vm6176, %vm6177
    %v6179 = vsel %vm6178, %v6171, %v6175
    %v6180 = vand.u32 2147483647, %v6041
    %vm6181 = vcmp.eq.f32.partialorder %v6180, 8.507059e+37
    %v6182 = vand.u32 %v6041, 2147483648
    %v6183 = vor.u32 1.1754944e-38, %v6182
    %v6184 = vsel %vm6181, %v6183, %v6179
    %v6185 = vmul.f32 1.0, %v6184
    %v6186 = vrcp.pop %v6042
    %v6187 = vmul.f32 %v6042, %v6186
    %v6188 = vsub.f32 1.0, %v6187
    %v6189 = vmul.f32 %v6186, %v6188
    %v6190 = vadd.f32 %v6186, %v6189
    %vm6191 = vweird.f32 %v6042
    %vm6192 = vweird.f32 %v6186
    %vm6193 = vmor %vm6191, %vm6192
    %v6194 = vsel %vm6193, %v6186, %v6190
    %v6195 = vand.u32 2147483647, %v6042
    %vm6196 = vcmp.eq.f32.partialorder %v6195, 8.507059e+37
    %v6197 = vand.u32 %v6042, 2147483648
    %v6198 = vor.u32 1.1754944e-38, %v6197
    %v6199 = vsel %vm6196, %v6198, %v6194
    %v6200 = vmul.f32 1.0, %v6199
    %v6201 = vrcp.pop %v6043
    %v6202 = vmul.f32 %v6043, %v6201
    %v6203 = vsub.f32 1.0, %v6202
    %v6204 = vmul.f32 %v6201, %v6203
    %v6205 = vadd.f32 %v6201, %v6204
    %vm6206 = vweird.f32 %v6043
    %vm6207 = vweird.f32 %v6201
    %vm6208 = vmor %vm6206, %vm6207
    %v6209 = vsel %vm6208, %v6201, %v6205
    %v6210 = vand.u32 2147483647, %v6043
    %vm6211 = vcmp.eq.f32.partialorder %v6210, 8.507059e+37
    %v6212 = vand.u32 %v6043, 2147483648
    %v6213 = vor.u32 1.1754944e-38, %v6212
    %v6214 = vsel %vm6211, %v6213, %v6209
    %v6215 = vmul.f32 1.0, %v6214
    %v6216 = vrcp.pop %v6044
    %v6217 = vmul.f32 %v6044, %v6216
    %v6218 = vsub.f32 1.0, %v6217
    %v6219 = vmul.f32 %v6216, %v6218
    %v6220 = vadd.f32 %v6216, %v6219
    %vm6221 = vweird.f32 %v6044
    %vm6222 = vweird.f32 %v6216
    %vm6223 = vmor %vm6221, %vm6222
    %v6224 = vsel %vm6223, %v6216, %v6220
    %v6225 = vand.u32 2147483647, %v6044
    %vm6226 = vcmp.eq.f32.partialorder %v6225, 8.507059e+37
    %v6227 = vand.u32 %v6044, 2147483648
    %v6228 = vor.u32 1.1754944e-38, %v6227
    %v6229 = vsel %vm6226, %v6228, %v6224
    %v6230 = vmul.f32 1.0, %v6229
    %v6231 = vrcp.pop %v6045
    %v6232 = vmul.f32 %v6045, %v6231
    %v6233 = vsub.f32 1.0, %v6232
    %v6234 = vmul.f32 %v6231, %v6233
    %v6235 = vadd.f32 %v6231, %v6234
    %vm6236 = vweird.f32 %v6045
    %vm6237 = vweird.f32 %v6231
    %vm6238 = vmor %vm6236, %vm6237
    %v6239 = vsel %vm6238, %v6231, %v6235
    %v6240 = vand.u32 2147483647, %v6045
    %vm6241 = vcmp.eq.f32.partialorder %v6240, 8.507059e+37
    %v6242 = vand.u32 %v6045, 2147483648
    %v6243 = vor.u32 1.1754944e-38, %v6242
    %v6244 = vsel %vm6241, %v6243, %v6239
    %v6245 = vmul.f32 1.0, %v6244
    %v6246 = vrcp.pop %v6046
    %v6247 = vmul.f32 %v6046, %v6246
    %v6248 = vsub.f32 1.0, %v6247
    %v6249 = vmul.f32 %v6246, %v6248
    %v6250 = vadd.f32 %v6246, %v6249
    %vm6251 = vweird.f32 %v6046
    %vm6252 = vweird.f32 %v6246
    %vm6253 = vmor %vm6251, %vm6252
    %v6254 = vsel %vm6253, %v6246, %v6250
    %v6255 = vand.u32 2147483647, %v6046
    %vm6256 = vcmp.eq.f32.partialorder %v6255, 8.507059e+37
    %v6257 = vand.u32 %v6046, 2147483648
    %v6258 = vor.u32 1.1754944e-38, %v6257
    %v6259 = vsel %vm6256, %v6258, %v6254
    %v6260 = vmul.f32 1.0, %v6259
    %v6261 = vrcp.pop %v6047
    %v6262 = vmul.f32 %v6047, %v6261
    %v6263 = vsub.f32 1.0, %v6262
    %v6264 = vmul.f32 %v6261, %v6263
    %v6265 = vadd.f32 %v6261, %v6264
    %vm6266 = vweird.f32 %v6047
    %vm6267 = vweird.f32 %v6261
    %vm6268 = vmor %vm6266, %vm6267
    %v6269 = vsel %vm6268, %v6261, %v6265
    %v6270 = vand.u32 2147483647, %v6047
    %vm6271 = vcmp.eq.f32.partialorder %v6270, 8.507059e+37
    %v6272 = vand.u32 %v6047, 2147483648
    %v6273 = vor.u32 1.1754944e-38, %v6272
    %v6274 = vsel %vm6271, %v6273, %v6269
    %v6275 = vmul.f32 1.0, %v6274
    %v6276 = vrcp.pop %v6048
    %v6277 = vmul.f32 %v6048, %v6276
    %v6278 = vsub.f32 1.0, %v6277
    %v6279 = vmul.f32 %v6276, %v6278
    %v6280 = vadd.f32 %v6276, %v6279
    %vm6281 = vweird.f32 %v6048
    %vm6282 = vweird.f32 %v6276
    %vm6283 = vmor %vm6281, %vm6282
    %v6284 = vsel %vm6283, %v6276, %v6280
    %v6285 = vand.u32 2147483647, %v6048
    %vm6286 = vcmp.eq.f32.partialorder %v6285, 8.507059e+37
    %v6287 = vand.u32 %v6048, 2147483648
    %v6288 = vor.u32 1.1754944e-38, %v6287
    %v6289 = vsel %vm6286, %v6288, %v6284
    %v6290 = vmul.f32 1.0, %v6289
    %v6291 = vrcp.pop %v6049
    %v6292 = vmul.f32 %v6049, %v6291
    %v6293 = vsub.f32 1.0, %v6292
    %v6294 = vmul.f32 %v6291, %v6293
    %v6295 = vadd.f32 %v6291, %v6294
    %vm6296 = vweird.f32 %v6049
    %vm6297 = vweird.f32 %v6291
    %vm6298 = vmor %vm6296, %vm6297
    %v6299 = vsel %vm6298, %v6291, %v6295
    %v6300 = vand.u32 2147483647, %v6049
    %vm6301 = vcmp.eq.f32.partialorder %v6300, 8.507059e+37
    %v6302 = vand.u32 %v6049, 2147483648
    %v6303 = vor.u32 1.1754944e-38, %v6302
    %v6304 = vsel %vm6301, %v6303, %v6299
    %v6305 = vmul.f32 1.0, %v6304
    %v6306 = vrcp.pop %v6050
    %v6307 = vmul.f32 %v6050, %v6306
    %v6308 = vsub.f32 1.0, %v6307
    %v6309 = vmul.f32 %v6306, %v6308
    %v6310 = vadd.f32 %v6306, %v6309
    %vm6311 = vweird.f32 %v6050
    %vm6312 = vweird.f32 %v6306
    %vm6313 = vmor %vm6311, %vm6312
    %v6314 = vsel %vm6313, %v6306, %v6310
    %v6315 = vand.u32 2147483647, %v6050
    %vm6316 = vcmp.eq.f32.partialorder %v6315, 8.507059e+37
    %v6317 = vand.u32 %v6050, 2147483648
    %v6318 = vor.u32 1.1754944e-38, %v6317
    %v6319 = vsel %vm6316, %v6318, %v6314
    %v6320 = vmul.f32 1.0, %v6319
    %v6321 = vrcp.pop %v6051
    %v6322 = vmul.f32 %v6051, %v6321
    %v6323 = vsub.f32 1.0, %v6322
    %v6324 = vmul.f32 %v6321, %v6323
    %v6325 = vadd.f32 %v6321, %v6324
    %vm6326 = vweird.f32 %v6051
    %vm6327 = vweird.f32 %v6321
    %vm6328 = vmor %vm6326, %vm6327
    %v6329 = vsel %vm6328, %v6321, %v6325
    %v6330 = vand.u32 2147483647, %v6051
    %vm6331 = vcmp.eq.f32.partialorder %v6330, 8.507059e+37
    %v6332 = vand.u32 %v6051, 2147483648
    %v6333 = vor.u32 1.1754944e-38, %v6332
    %v6334 = vsel %vm6331, %v6333, %v6329
    %v6335 = vmul.f32 1.0, %v6334
    %v6336 = vrcp.pop %v6052
    %v6337 = vmul.f32 %v6052, %v6336
    %v6338 = vsub.f32 1.0, %v6337
    %v6339 = vmul.f32 %v6336, %v6338
    %v6340 = vadd.f32 %v6336, %v6339
    %vm6341 = vweird.f32 %v6052
    %vm6342 = vweird.f32 %v6336
    %vm6343 = vmor %vm6341, %vm6342
    %v6344 = vsel %vm6343, %v6336, %v6340
    %v6345 = vand.u32 2147483647, %v6052
    %vm6346 = vcmp.eq.f32.partialorder %v6345, 8.507059e+37
    %v6347 = vand.u32 %v6052, 2147483648
    %v6348 = vor.u32 1.1754944e-38, %v6347
    %v6349 = vsel %vm6346, %v6348, %v6344
    %v6350 = vmul.f32 1.0, %v6349
    %v6351 = vrcp.pop %v6053
    %v6352 = vmul.f32 %v6053, %v6351
    %v6353 = vsub.f32 1.0, %v6352
    %v6354 = vmul.f32 %v6351, %v6353
    %v6355 = vadd.f32 %v6351, %v6354
    %vm6356 = vweird.f32 %v6053
    %vm6357 = vweird.f32 %v6351
    %vm6358 = vmor %vm6356, %vm6357
    %v6359 = vsel %vm6358, %v6351, %v6355
    %v6360 = vand.u32 2147483647, %v6053
    %vm6361 = vcmp.eq.f32.partialorder %v6360, 8.507059e+37
    %v6362 = vand.u32 %v6053, 2147483648
    %v6363 = vor.u32 1.1754944e-38, %v6362
    %v6364 = vsel %vm6361, %v6363, %v6359
    %v6365 = vmul.f32 1.0, %v6364
    %v6366 = vrcp.pop %v6054
    %v6367 = vmul.f32 %v6054, %v6366
    %v6368 = vsub.f32 1.0, %v6367
    %v6369 = vmul.f32 %v6366, %v6368
    %v6370 = vadd.f32 %v6366, %v6369
    %vm6371 = vweird.f32 %v6054
    %vm6372 = vweird.f32 %v6366
    %vm6373 = vmor %vm6371, %vm6372
    %v6374 = vsel %vm6373, %v6366, %v6370
    %v6375 = vand.u32 2147483647, %v6054
    %vm6376 = vcmp.eq.f32.partialorder %v6375, 8.507059e+37
    %v6377 = vand.u32 %v6054, 2147483648
    %v6378 = vor.u32 1.1754944e-38, %v6377
    %v6379 = vsel %vm6376, %v6378, %v6374
    %v6380 = vmul.f32 1.0, %v6379
    %v6381 = vrcp.pop %v6055
    %v6382 = vmul.f32 %v6055, %v6381
    %v6383 = vsub.f32 1.0, %v6382
    %v6384 = vmul.f32 %v6381, %v6383
    %v6385 = vadd.f32 %v6381, %v6384
    %vm6386 = vweird.f32 %v6055
    %vm6387 = vweird.f32 %v6381
    %vm6388 = vmor %vm6386, %vm6387
    %v6389 = vsel %vm6388, %v6381, %v6385
    %v6390 = vand.u32 2147483647, %v6055
    %vm6391 = vcmp.eq.f32.partialorder %v6390, 8.507059e+37
    %v6392 = vand.u32 %v6055, 2147483648
    %v6393 = vor.u32 1.1754944e-38, %v6392
    %v6394 = vsel %vm6391, %v6393, %v6389
    %v6395 = vmul.f32 1.0, %v6394
    %v6396 = vrcp.pop %v6056
    %v6397 = vmul.f32 %v6056, %v6396
    %v6398 = vsub.f32 1.0, %v6397
    %v6399 = vmul.f32 %v6396, %v6398
    %v6400 = vadd.f32 %v6396, %v6399
    %vm6401 = vweird.f32 %v6056
    %vm6402 = vweird.f32 %v6396
    %vm6403 = vmor %vm6401, %vm6402
    %v6404 = vsel %vm6403, %v6396, %v6400
    %v6405 = vand.u32 2147483647, %v6056
    %vm6406 = vcmp.eq.f32.partialorder %v6405, 8.507059e+37
    %v6407 = vand.u32 %v6056, 2147483648
    %v6408 = vor.u32 1.1754944e-38, %v6407
    %v6409 = vsel %vm6406, %v6408, %v6404
    %v6410 = vmul.f32 1.0, %v6409
    %v6411 = vrcp.pop %v6057
    %v6412 = vmul.f32 %v6057, %v6411
    %v6413 = vsub.f32 1.0, %v6412
    %v6414 = vmul.f32 %v6411, %v6413
    %v6415 = vadd.f32 %v6411, %v6414
    %vm6416 = vweird.f32 %v6057
    %vm6417 = vweird.f32 %v6411
    %vm6418 = vmor %vm6416, %vm6417
    %v6419 = vsel %vm6418, %v6411, %v6415
    %v6420 = vand.u32 2147483647, %v6057
    %vm6421 = vcmp.eq.f32.partialorder %v6420, 8.507059e+37
    %v6422 = vand.u32 %v6057, 2147483648
    %v6423 = vor.u32 1.1754944e-38, %v6422
    %v6424 = vsel %vm6421, %v6423, %v6419
    %v6425 = vmul.f32 1.0, %v6424
    %v6426 = vrcp.pop %v6058
    %v6427 = vmul.f32 %v6058, %v6426
    %v6428 = vsub.f32 1.0, %v6427
    %v6429 = vmul.f32 %v6426, %v6428
    %v6430 = vadd.f32 %v6426, %v6429
    %vm6431 = vweird.f32 %v6058
    %vm6432 = vweird.f32 %v6426
    %vm6433 = vmor %vm6431, %vm6432
    %v6434 = vsel %vm6433, %v6426, %v6430
    %v6435 = vand.u32 2147483647, %v6058
    %vm6436 = vcmp.eq.f32.partialorder %v6435, 8.507059e+37
    %v6437 = vand.u32 %v6058, 2147483648
    %v6438 = vor.u32 1.1754944e-38, %v6437
    %v6439 = vsel %vm6436, %v6438, %v6434
    %v6440 = vmul.f32 1.0, %v6439
    %v6441 = vrcp.pop %v6059
    %v6442 = vmul.f32 %v6059, %v6441
    %v6443 = vsub.f32 1.0, %v6442
    %v6444 = vmul.f32 %v6441, %v6443
    %v6445 = vadd.f32 %v6441, %v6444
    %vm6446 = vweird.f32 %v6059
    %vm6447 = vweird.f32 %v6441
    %vm6448 = vmor %vm6446, %vm6447
    %v6449 = vsel %vm6448, %v6441, %v6445
    %v6450 = vand.u32 2147483647, %v6059
    %vm6451 = vcmp.eq.f32.partialorder %v6450, 8.507059e+37
    %v6452 = vand.u32 %v6059, 2147483648
    %v6453 = vor.u32 1.1754944e-38, %v6452
    %v6454 = vsel %vm6451, %v6453, %v6449
    %v6455 = vmul.f32 1.0, %v6454
    %v6456 = vrcp.pop %v6060
    %v6457 = vmul.f32 %v6060, %v6456
    %v6458 = vsub.f32 1.0, %v6457
    %v6459 = vmul.f32 %v6456, %v6458
    %v6460 = vadd.f32 %v6456, %v6459
    %vm6461 = vweird.f32 %v6060
    %vm6462 = vweird.f32 %v6456
    %vm6463 = vmor %vm6461, %vm6462
    %v6464 = vsel %vm6463, %v6456, %v6460
    %v6465 = vand.u32 2147483647, %v6060
    %vm6466 = vcmp.eq.f32.partialorder %v6465, 8.507059e+37
    %v6467 = vand.u32 %v6060, 2147483648
    %v6468 = vor.u32 1.1754944e-38, %v6467
    %v6469 = vsel %vm6466, %v6468, %v6464
    %v6470 = vmul.f32 1.0, %v6469
    %v6471 = vrcp.pop %v6061
    %v6472 = vmul.f32 %v6061, %v6471
    %v6473 = vsub.f32 1.0, %v6472
    %v6474 = vmul.f32 %v6471, %v6473
    %v6475 = vadd.f32 %v6471, %v6474
    %vm6476 = vweird.f32 %v6061
    %vm6477 = vweird.f32 %v6471
    %vm6478 = vmor %vm6476, %vm6477
    %v6479 = vsel %vm6478, %v6471, %v6475
    %v6480 = vand.u32 2147483647, %v6061
    %vm6481 = vcmp.eq.f32.partialorder %v6480, 8.507059e+37
    %v6482 = vand.u32 %v6061, 2147483648
    %v6483 = vor.u32 1.1754944e-38, %v6482
    %v6484 = vsel %vm6481, %v6483, %v6479
    %v6485 = vmul.f32 1.0, %v6484
    %v6486 = vrcp.pop %v6062
    %v6487 = vmul.f32 %v6062, %v6486
    %v6488 = vsub.f32 1.0, %v6487
    %v6489 = vmul.f32 %v6486, %v6488
    %v6490 = vadd.f32 %v6486, %v6489
    %vm6491 = vweird.f32 %v6062
    %vm6492 = vweird.f32 %v6486
    %vm6493 = vmor %vm6491, %vm6492
    %v6494 = vsel %vm6493, %v6486, %v6490
    %v6495 = vand.u32 2147483647, %v6062
    %vm6496 = vcmp.eq.f32.partialorder %v6495, 8.507059e+37
    %v6497 = vand.u32 %v6062, 2147483648
    %v6498 = vor.u32 1.1754944e-38, %v6497
    %v6499 = vsel %vm6496, %v6498, %v6494
    %v6500 = vmul.f32 1.0, %v6499
    %v6501 = vrcp.pop %v6063
    %v6502 = vmul.f32 %v6063, %v6501
    %v6503 = vsub.f32 1.0, %v6502
    %v6504 = vmul.f32 %v6501, %v6503
    %v6505 = vadd.f32 %v6501, %v6504
    %vm6506 = vweird.f32 %v6063
    %vm6507 = vweird.f32 %v6501
    %vm6508 = vmor %vm6506, %vm6507
    %v6509 = vsel %vm6508, %v6501, %v6505
    %v6510 = vand.u32 2147483647, %v6063
    %vm6511 = vcmp.eq.f32.partialorder %v6510, 8.507059e+37
    %v6512 = vand.u32 %v6063, 2147483648
    %v6513 = vor.u32 1.1754944e-38, %v6512
    %v6514 = vsel %vm6511, %v6513, %v6509
    %v6515 = vmul.f32 1.0, %v6514
    %v6516 = vrcp.pop %v6064
    %v6517 = vmul.f32 %v6064, %v6516
    %v6518 = vsub.f32 1.0, %v6517
    %v6519 = vmul.f32 %v6516, %v6518
    %v6520 = vadd.f32 %v6516, %v6519
    %vm6521 = vweird.f32 %v6064
    %vm6522 = vweird.f32 %v6516
    %vm6523 = vmor %vm6521, %vm6522
    %v6524 = vsel %vm6523, %v6516, %v6520
    %v6525 = vand.u32 2147483647, %v6064
    %vm6526 = vcmp.eq.f32.partialorder %v6525, 8.507059e+37
    %v6527 = vand.u32 %v6064, 2147483648
    %v6528 = vor.u32 1.1754944e-38, %v6527
    %v6529 = vsel %vm6526, %v6528, %v6524
    %v6530 = vmul.f32 1.0, %v6529
    %v6531 = vrcp.pop %v6065
    %v6532 = vmul.f32 %v6065, %v6531
    %v6533 = vsub.f32 1.0, %v6532
    %v6534 = vmul.f32 %v6531, %v6533
    %v6535 = vadd.f32 %v6531, %v6534
    %vm6536 = vweird.f32 %v6065
    %vm6537 = vweird.f32 %v6531
    %vm6538 = vmor %vm6536, %vm6537
    %v6539 = vsel %vm6538, %v6531, %v6535
    %v6540 = vand.u32 2147483647, %v6065
    %vm6541 = vcmp.eq.f32.partialorder %v6540, 8.507059e+37
    %v6542 = vand.u32 %v6065, 2147483648
    %v6543 = vor.u32 1.1754944e-38, %v6542
    %v6544 = vsel %vm6541, %v6543, %v6539
    %v6545 = vmul.f32 1.0, %v6544
    %v6546 = vmul.f32 %v6080, %v582
    %v6547 = vmul.f32 %v6095, %v583
    %v6548 = vmul.f32 %v6110, %v584
    %v6549 = vmul.f32 %v6125, %v585
    %v6550 = vmul.f32 %v6140, %v582
    %v6551 = vmul.f32 %v6155, %v583
    %v6552 = vmul.f32 %v6170, %v584
    %v6553 = vmul.f32 %v6185, %v585
    %v6554 = vmul.f32 %v6200, %v582
    %v6555 = vmul.f32 %v6215, %v583
    %v6556 = vmul.f32 %v6230, %v584
    %v6557 = vmul.f32 %v6245, %v585
    %v6558 = vmul.f32 %v6260, %v582
    %v6559 = vmul.f32 %v6275, %v583
    %v6560 = vmul.f32 %v6290, %v584
    %v6561 = vmul.f32 %v6305, %v585
    %v6562 = vmul.f32 %v6320, %v582
    %v6563 = vmul.f32 %v6335, %v583
    %v6564 = vmul.f32 %v6350, %v584
    %v6565 = vmul.f32 %v6365, %v585
    %v6566 = vmul.f32 %v6380, %v582
    %v6567 = vmul.f32 %v6395, %v583
    %v6568 = vmul.f32 %v6410, %v584
    %v6569 = vmul.f32 %v6425, %v585
    %v6570 = vmul.f32 %v6440, %v582
    %v6571 = vmul.f32 %v6455, %v583
    %v6572 = vmul.f32 %v6470, %v584
    %v6573 = vmul.f32 %v6485, %v585
    %v6574 = vmul.f32 %v6500, %v582
    %v6575 = vmul.f32 %v6515, %v583
    %v6576 = vmul.f32 %v6530, %v584
    %v6577 = vmul.f32 %v6545, %v585
    %v6578 = vsel %vm361, %v6546, 0.0
    %v6579 = vsel %vm361, %v6547, 0.0
    %v6580 = vadd.f32 %v6578, %v6579
    %v6581 = vsel %vm361, %v6548, 0.0
    %v6582 = vadd.f32 %v6580, %v6581
    %v6583 = vsel %vm361, %v6549, 0.0
    %v6584 = vadd.f32 %v6582, %v6583
    %v6585 = vrot.slane %v6584, 4
    %v6586 = vadd.f32 %v6584, %v6585
    %v6587 = vrot.slane %v6586, 2
    %v6588 = vadd.f32 %v6586, %v6587
    %v6589 = vrot.slane %v6588, 1
    %v6590 = vadd.f32 %v6588, %v6589
    %v6591 = vsel %vm361, %v6550, 0.0
    %v6592 = vsel %vm361, %v6551, 0.0
    %v6593 = vadd.f32 %v6591, %v6592
    %v6594 = vsel %vm361, %v6552, 0.0
    %v6595 = vadd.f32 %v6593, %v6594
    %v6596 = vsel %vm361, %v6553, 0.0
    %v6597 = vadd.f32 %v6595, %v6596
    %v6598 = vrot.slane %v6597, 4
    %v6599 = vadd.f32 %v6597, %v6598
    %v6600 = vrot.slane %v6599, 2
    %v6601 = vadd.f32 %v6599, %v6600
    %v6602 = vrot.slane %v6601, 1
    %v6603 = vadd.f32 %v6601, %v6602
    %v6604 = vsel %vm361, %v6554, 0.0
    %v6605 = vsel %vm361, %v6555, 0.0
    %v6606 = vadd.f32 %v6604, %v6605
    %v6607 = vsel %vm361, %v6556, 0.0
    %v6608 = vadd.f32 %v6606, %v6607
    %v6609 = vsel %vm361, %v6557, 0.0
    %v6610 = vadd.f32 %v6608, %v6609
    %v6611 = vrot.slane %v6610, 4
    %v6612 = vadd.f32 %v6610, %v6611
    %v6613 = vrot.slane %v6612, 2
    %v6614 = vadd.f32 %v6612, %v6613
    %v6615 = vrot.slane %v6614, 1
    %v6616 = vadd.f32 %v6614, %v6615
    %v6617 = vsel %vm361, %v6558, 0.0
    %v6618 = vsel %vm361, %v6559, 0.0
    %v6619 = vadd.f32 %v6617, %v6618
    %v6620 = vsel %vm361, %v6560, 0.0
    %v6621 = vadd.f32 %v6619, %v6620
    %v6622 = vsel %vm361, %v6561, 0.0
    %v6623 = vadd.f32 %v6621, %v6622
    %v6624 = vrot.slane %v6623, 4
    %v6625 = vadd.f32 %v6623, %v6624
    %v6626 = vrot.slane %v6625, 2
    %v6627 = vadd.f32 %v6625, %v6626
    %v6628 = vrot.slane %v6627, 1
    %v6629 = vadd.f32 %v6627, %v6628
    %v6630 = vsel %vm361, %v6562, 0.0
    %v6631 = vsel %vm361, %v6563, 0.0
    %v6632 = vadd.f32 %v6630, %v6631
    %v6633 = vsel %vm361, %v6564, 0.0
    %v6634 = vadd.f32 %v6632, %v6633
    %v6635 = vsel %vm361, %v6565, 0.0
    %v6636 = vadd.f32 %v6634, %v6635
    %v6637 = vrot.slane %v6636, 4
    %v6638 = vadd.f32 %v6636, %v6637
    %v6639 = vrot.slane %v6638, 2
    %v6640 = vadd.f32 %v6638, %v6639
    %v6641 = vrot.slane %v6640, 1
    %v6642 = vadd.f32 %v6640, %v6641
    %v6643 = vsel %vm361, %v6566, 0.0
    %v6644 = vsel %vm361, %v6567, 0.0
    %v6645 = vadd.f32 %v6643, %v6644
    %v6646 = vsel %vm361, %v6568, 0.0
    %v6647 = vadd.f32 %v6645, %v6646
    %v6648 = vsel %vm361, %v6569, 0.0
    %v6649 = vadd.f32 %v6647, %v6648
    %v6650 = vrot.slane %v6649, 4
    %v6651 = vadd.f32 %v6649, %v6650
    %v6652 = vrot.slane %v6651, 2
    %v6653 = vadd.f32 %v6651, %v6652
    %v6654 = vrot.slane %v6653, 1
    %v6655 = vadd.f32 %v6653, %v6654
    %v6656 = vsel %vm361, %v6570, 0.0
    %v6657 = vsel %vm361, %v6571, 0.0
    %v6658 = vadd.f32 %v6656, %v6657
    %v6659 = vsel %vm361, %v6572, 0.0
    %v6660 = vadd.f32 %v6658, %v6659
    %v6661 = vsel %vm361, %v6573, 0.0
    %v6662 = vadd.f32 %v6660, %v6661
    %v6663 = vrot.slane %v6662, 4
    %v6664 = vadd.f32 %v6662, %v6663
    %v6665 = vrot.slane %v6664, 2
    %v6666 = vadd.f32 %v6664, %v6665
    %v6667 = vrot.slane %v6666, 1
    %v6668 = vadd.f32 %v6666, %v6667
    %v6669 = vsel %vm361, %v6574, 0.0
    %v6670 = vsel %vm361, %v6575, 0.0
    %v6671 = vadd.f32 %v6669, %v6670
    %v6672 = vsel %vm361, %v6576, 0.0
    %v6673 = vadd.f32 %v6671, %v6672
    %v6674 = vsel %vm361, %v6577, 0.0
    %v6675 = vadd.f32 %v6673, %v6674
    %v6676 = vrot.slane %v6675, 4
    %v6677 = vadd.f32 %v6675, %v6676
    %v6678 = vrot.slane %v6677, 2
    %v6679 = vadd.f32 %v6677, %v6678
    %v6680 = vrot.slane %v6679, 1
    %v6681 = vadd.f32 %v6679, %v6680
    %v6682 = vadd.f32 %v6590, %v368
    %v6683 = vadd.f32 %v6603, %v375
    %v6684 = vadd.f32 %v6616, %v382
    %v6685 = vadd.f32 %v6629, %v389
    %v6686 = vadd.f32 %v6642, %v396
    %v6687 = vadd.f32 %v6655, %v403
    %v6688 = vadd.f32 %v6668, %v410
    %v6689 = vadd.f32 %v6681, %v417
    %v6690 = vmul.f32 %v6080, %v573
    %v6691 = vmul.f32 %v6095, %v574
    %v6692 = vmul.f32 %v6110, %v575
    %v6693 = vmul.f32 %v6125, %v576
    %v6694 = vmul.f32 %v6140, %v573
    %v6695 = vmul.f32 %v6155, %v574
    %v6696 = vmul.f32 %v6170, %v575
    %v6697 = vmul.f32 %v6185, %v576
    %v6698 = vmul.f32 %v6200, %v573
    %v6699 = vmul.f32 %v6215, %v574
    %v6700 = vmul.f32 %v6230, %v575
    %v6701 = vmul.f32 %v6245, %v576
    %v6702 = vmul.f32 %v6260, %v573
    %v6703 = vmul.f32 %v6275, %v574
    %v6704 = vmul.f32 %v6290, %v575
    %v6705 = vmul.f32 %v6305, %v576
    %v6706 = vmul.f32 %v6320, %v573
    %v6707 = vmul.f32 %v6335, %v574
    %v6708 = vmul.f32 %v6350, %v575
    %v6709 = vmul.f32 %v6365, %v576
    %v6710 = vmul.f32 %v6380, %v573
    %v6711 = vmul.f32 %v6395, %v574
    %v6712 = vmul.f32 %v6410, %v575
    %v6713 = vmul.f32 %v6425, %v576
    %v6714 = vmul.f32 %v6440, %v573
    %v6715 = vmul.f32 %v6455, %v574
    %v6716 = vmul.f32 %v6470, %v575
    %v6717 = vmul.f32 %v6485, %v576
    %v6718 = vmul.f32 %v6500, %v573
    %v6719 = vmul.f32 %v6515, %v574
    %v6720 = vmul.f32 %v6530, %v575
    %v6721 = vmul.f32 %v6545, %v576
    %v6722 = vsel %vm361, %v6690, 0.0
    %v6723 = vsel %vm361, %v6691, 0.0
    %v6724 = vadd.f32 %v6722, %v6723
    %v6725 = vsel %vm361, %v6692, 0.0
    %v6726 = vadd.f32 %v6724, %v6725
    %v6727 = vsel %vm361, %v6693, 0.0
    %v6728 = vadd.f32 %v6726, %v6727
    %v6729 = vrot.slane %v6728, 4
    %v6730 = vadd.f32 %v6728, %v6729
    %v6731 = vrot.slane %v6730, 2
    %v6732 = vadd.f32 %v6730, %v6731
    %v6733 = vrot.slane %v6732, 1
    %v6734 = vadd.f32 %v6732, %v6733
    %v6735 = vsel %vm361, %v6694, 0.0
    %v6736 = vsel %vm361, %v6695, 0.0
    %v6737 = vadd.f32 %v6735, %v6736
    %v6738 = vsel %vm361, %v6696, 0.0
    %v6739 = vadd.f32 %v6737, %v6738
    %v6740 = vsel %vm361, %v6697, 0.0
    %v6741 = vadd.f32 %v6739, %v6740
    %v6742 = vrot.slane %v6741, 4
    %v6743 = vadd.f32 %v6741, %v6742
    %v6744 = vrot.slane %v6743, 2
    %v6745 = vadd.f32 %v6743, %v6744
    %v6746 = vrot.slane %v6745, 1
    %v6747 = vadd.f32 %v6745, %v6746
    %v6748 = vsel %vm361, %v6698, 0.0
    %v6749 = vsel %vm361, %v6699, 0.0
    %v6750 = vadd.f32 %v6748, %v6749
    %v6751 = vsel %vm361, %v6700, 0.0
    %v6752 = vadd.f32 %v6750, %v6751
    %v6753 = vsel %vm361, %v6701, 0.0
    %v6754 = vadd.f32 %v6752, %v6753
    %v6755 = vrot.slane %v6754, 4
    %v6756 = vadd.f32 %v6754, %v6755
    %v6757 = vrot.slane %v6756, 2
    %v6758 = vadd.f32 %v6756, %v6757
    %v6759 = vrot.slane %v6758, 1
    %v6760 = vadd.f32 %v6758, %v6759
    %v6761 = vsel %vm361, %v6702, 0.0
    %v6762 = vsel %vm361, %v6703, 0.0
    %v6763 = vadd.f32 %v6761, %v6762
    %v6764 = vsel %vm361, %v6704, 0.0
    %v6765 = vadd.f32 %v6763, %v6764
    %v6766 = vsel %vm361, %v6705, 0.0
    %v6767 = vadd.f32 %v6765, %v6766
    %v6768 = vrot.slane %v6767, 4
    %v6769 = vadd.f32 %v6767, %v6768
    %v6770 = vrot.slane %v6769, 2
    %v6771 = vadd.f32 %v6769, %v6770
    %v6772 = vrot.slane %v6771, 1
    %v6773 = vadd.f32 %v6771, %v6772
    %v6774 = vsel %vm361, %v6706, 0.0
    %v6775 = vsel %vm361, %v6707, 0.0
    %v6776 = vadd.f32 %v6774, %v6775
    %v6777 = vsel %vm361, %v6708, 0.0
    %v6778 = vadd.f32 %v6776, %v6777
    %v6779 = vsel %vm361, %v6709, 0.0
    %v6780 = vadd.f32 %v6778, %v6779
    %v6781 = vrot.slane %v6780, 4
    %v6782 = vadd.f32 %v6780, %v6781
    %v6783 = vrot.slane %v6782, 2
    %v6784 = vadd.f32 %v6782, %v6783
    %v6785 = vrot.slane %v6784, 1
    %v6786 = vadd.f32 %v6784, %v6785
    %v6787 = vsel %vm361, %v6710, 0.0
    %v6788 = vsel %vm361, %v6711, 0.0
    %v6789 = vadd.f32 %v6787, %v6788
    %v6790 = vsel %vm361, %v6712, 0.0
    %v6791 = vadd.f32 %v6789, %v6790
    %v6792 = vsel %vm361, %v6713, 0.0
    %v6793 = vadd.f32 %v6791, %v6792
    %v6794 = vrot.slane %v6793, 4
    %v6795 = vadd.f32 %v6793, %v6794
    %v6796 = vrot.slane %v6795, 2
    %v6797 = vadd.f32 %v6795, %v6796
    %v6798 = vrot.slane %v6797, 1
    %v6799 = vadd.f32 %v6797, %v6798
    %v6800 = vsel %vm361, %v6714, 0.0
    %v6801 = vsel %vm361, %v6715, 0.0
    %v6802 = vadd.f32 %v6800, %v6801
    %v6803 = vsel %vm361, %v6716, 0.0
    %v6804 = vadd.f32 %v6802, %v6803
    %v6805 = vsel %vm361, %v6717, 0.0
    %v6806 = vadd.f32 %v6804, %v6805
    %v6807 = vrot.slane %v6806, 4
    %v6808 = vadd.f32 %v6806, %v6807
    %v6809 = vrot.slane %v6808, 2
    %v6810 = vadd.f32 %v6808, %v6809
    %v6811 = vrot.slane %v6810, 1
    %v6812 = vadd.f32 %v6810, %v6811
    %v6813 = vsel %vm361, %v6718, 0.0
    %v6814 = vsel %vm361, %v6719, 0.0
    %v6815 = vadd.f32 %v6813, %v6814
    %v6816 = vsel %vm361, %v6720, 0.0
    %v6817 = vadd.f32 %v6815, %v6816
    %v6818 = vsel %vm361, %v6721, 0.0
    %v6819 = vadd.f32 %v6817, %v6818
    %v6820 = vrot.slane %v6819, 4
    %v6821 = vadd.f32 %v6819, %v6820
    %v6822 = vrot.slane %v6821, 2
    %v6823 = vadd.f32 %v6821, %v6822
    %v6824 = vrot.slane %v6823, 1
    %v6825 = vadd.f32 %v6823, %v6824
    %v6826 = vadd.f32 %v6734, %v432
    %v6827 = vadd.f32 %v6747, %v439
    %v6828 = vadd.f32 %v6760, %v446
    %v6829 = vadd.f32 %v6773, %v453
    %v6830 = vadd.f32 %v6786, %v460
    %v6831 = vadd.f32 %v6799, %v467
    %v6832 = vadd.f32 %v6812, %v474
    %v6833 = vadd.f32 %v6825, %v481
    %v6834 = vmul.f32 %v763, %v5673
    %v6835 = vadd.f32 %v6834, %v765
    %v6844 = vsel %vm775, %v6683, %v6682
    %v6845 = vsel %vm777, %v6684, %v6844
    %v6846 = vsel %vm779, %v6685, %v6845
    %v6847 = vsel %vm781, %v6686, %v6846
    %v6848 = vsel %vm783, %v6687, %v6847
    %v6849 = vsel %vm785, %v6688, %v6848
    %v6850 = vsel %vm787, %v6689, %v6849
    %v6852 = vadd.f32 %v6835, %v6850
    %v6861 = vsel %vm775, %v6827, %v6826
    %v6862 = vsel %vm777, %v6828, %v6861
    %v6863 = vsel %vm779, %v6829, %v6862
    %v6864 = vsel %vm781, %v6830, %v6863
    %v6865 = vsel %vm783, %v6831, %v6864
    %v6866 = vsel %vm785, %v6832, %v6865
    %v6867 = vsel %vm787, %v6833, %v6866
    %v6869 = vadd.f32 %v792, %v6867
    %v6870 = vadd.f32 %v6869, 1e-08
    %v6871 = vrcp.pop %v6870
    %v6872 = vmul.f32 %v6870, %v6871
    %v6873 = vsub.f32 1.0, %v6872
    %v6874 = vmul.f32 %v6871, %v6873
    %v6875 = vadd.f32 %v6871, %v6874
    %vm6876 = vweird.f32 %v6870
    %vm6877 = vweird.f32 %v6871
    %vm6878 = vmor %vm6876, %vm6877
    %v6879 = vsel %vm6878, %v6871, %v6875
    %v6880 = vand.u32 2147483647, %v6870
    %vm6881 = vcmp.eq.f32.partialorder %v6880, 8.507059e+37
    %v6882 = vand.u32 %v6870, 2147483648
    %v6883 = vor.u32 1.1754944e-38, %v6882
    %v6884 = vsel %vm6881, %v6883, %v6879
    %v6885 = vmul.f32 %v6852, %v6884
    %v6886 = vperm.slane %v627, 0
    %v6887 = vmul.f32 %v6885, %v6886
    %v6888 = vperm.slane %v628, 0
    %v6889 = vadd.f32 %v6887, %v6888
    %6890 = vst.msk [vmem:[#allocation11] sm:$0xff] %vm361, %v6889
    // Predicated region
    $region42: #{tpu_custom_call.1} parent=1 // pred_check
      _
    $region43: #{tpu_custom_call.1} parent=1 // pred_check_branch
      %6892 = sbr.rel (0) target = $region45
    $region44: #{tpu_custom_call.1} parent=1 // pred_region
      %6894 = vsyncadd [#allocation4], 0
      %s6896 = sshll.u32 [#allocation11], 4
      %s6897 = int_to_ptr.vmem [resolvable:$true] %s6896
      %s6898 = sshll.u32 %s5, 4
      %s6899 = int_to_ptr.hbm [resolvable:$true] %s6898
      %6901 = dma.vmem_to_hbm [thread:$0]  %s6897, 128, %s6899, [#allocation4]
    $region45: #{tpu_custom_call.1} parent=1 // pred_fallthru
      _
    // Predicated region
    $region46: #{tpu_custom_call.1} parent=1 // pred_check
      _
    $region47: #{tpu_custom_call.1} parent=1 // pred_check_branch
      %6903 = sbr.rel (0) target = $region49
    $region48: #{tpu_custom_call.1} parent=1 // pred_region
      %6905 = dma.done [#allocation4], 128
    $region49: #{tpu_custom_call.1} parent=1 // pred_fallthru
      _
    %6906 = vsyncpa [#allocation3], 1
    %6907 = vsyncpa [#allocation6], 1
    %6908 = vsyncpa [#allocation9], 1
    %6909 = vsyncpa [#allocation4], 1

</llo_original>
